<compile_context>
chip_gen: v6e
topology: v6e:2x2x1
jax: 0.10.0
libtpu: 0.0.40
codegen_flags: <defaults>
</compile_context>

<pallas_src>
import jax
import jax.numpy as jnp
import numpy as np
from jax import lax
from jax.experimental import pallas as pl
from jax.experimental.pallas import tpu as pltpu

EPS = 1e-5


def _round_up(x, m):
    return (x + m - 1) // m * m


def _pad_axis(a, axis, target):
    if a.shape[axis] == target:
        return a
    cfg = [(0, 0)] * a.ndim
    cfg[axis] = (0, target - a.shape[axis])
    return jnp.pad(a, cfg)


def residual_block_forward(x_nchw, params):
    """Forward pass matching PyTorch ResidualBlock (training-mode BatchNorm)."""
    N, Cin, H, W = x_nchw.shape
    Cout = params["w1"].shape[-1]
    Cp = _round_up(Cout, 128)        # lane-dense output channels
    Cik = _round_up(Cin, 128)        # lane-dense input channels
    HW = H * W
    M = N * HW
    f32, bf16 = jnp.float32, jnp.bfloat16

    # ---- layout / parameter prep (plain-JAX glue) ---------------------------
    x = jnp.transpose(x_nchw, (0, 2, 3, 1)).astype(f32)            # NHWC
    xc = _pad_axis(x, 3, Cik)                                      # (N,H,W,Cik)
    x_flat = xc.reshape(N, HW, Cik).astype(bf16)                   # only x copy

    # conv weights: (3,3,Ci,Co) -> (3, 3*Ci, Co)   (kw-major over Ci, matches
    # the kw-concatenated tap built in-kernel)
    w1 = _pad_axis(_pad_axis(params["w1"], 3, Cp), 2, Cik)
    w1 = w1.reshape(3, 3 * Cik, Cp).astype(bf16)
    w2 = _pad_axis(_pad_axis(params["w2"], 3, Cp), 2, Cp)
    w2 = w2.reshape(3, 3 * Cp, Cp).astype(bf16)
    # residual 1x1 conv; if in_channels == out_channels (Identity) pass wr=I, br=0
    wr = _pad_axis(_pad_axis(params["wr"], 1, Cp), 0, Cik).astype(bf16)
    g1 = _pad_axis(params["g1"], 0, Cp).reshape(1, Cp).astype(f32)
    be1 = _pad_axis(params["be1"], 0, Cp).reshape(1, Cp).astype(f32)
    g2 = _pad_axis(params["g2"], 0, Cp).reshape(1, Cp).astype(f32)
    be2 = _pad_axis(params["be2"], 0, Cp).reshape(1, Cp).astype(f32)
    br = _pad_axis(params["br"], 0, Cp).reshape(1, Cp).astype(f32)
    # NOTE: conv biases b1/b2 intentionally unused (cancelled by training BN).

    def bn_affine(stats, gamma, beta):
        mu = stats[0:1] / M
        var = stats[1:2] / M - mu * mu          # biased variance (PyTorch BN)
        scale = gamma * lax.rsqrt(var + EPS)
        shift = beta - mu * scale
        return scale, shift

    # ---- kernel 1: halo-in-VMEM conv1 + fused residual 1x1 + BN1 stats ------
    def conv1_kernel(x_ref, w1_ref, wr_ref, br_ref,
                     y1_ref, r_ref, st_ref, xpad_ref, acc_ref):
        @pl.when(pl.program_id(0) == 0)
        def _():
            xpad_ref[...] = jnp.zeros_like(xpad_ref)   # halo border stays 0
            st_ref[...] = jnp.zeros_like(st_ref)

        x2d = x_ref[...]                               # (HW, Cik) bf16
        xpad_ref[1:H + 1, 1:W + 1, :] = x2d.reshape(H, W, Cik)

        # residual 1x1 conv (x already in VMEM) -> bf16 side output
        res = jnp.dot(x2d, wr_ref[...], preferred_element_type=f32) + br_ref[...]
        r_ref[...] = res.astype(r_ref.dtype)

        # 3x3 conv as 3 (HW, 3*Cik) x (3*Cik, Cp) MXU matmuls
        for kh in range(3):
            tap = jnp.concatenate(
                [xpad_ref[kh:kh + H, kw:kw + W, :] for kw in range(3)],
                axis=-1).reshape(HW, 3 * Cik)
            contrib = jnp.dot(tap, w1_ref[kh], preferred_element_type=f32)
            if kh == 0:
                acc_ref[...] = contrib
            else:
                acc_ref[...] += contrib

        acc = acc_ref[...]
        st_ref[0:1, :] += jnp.sum(acc, axis=0, keepdims=True)
        st_ref[1:2, :] += jnp.sum(acc * acc, axis=0, keepdims=True)
        y1_ref[...] = acc.astype(y1_ref.dtype)

    (y1, r, st1) = pl.pallas_call(
        conv1_kernel,
        out_shape=[jax.ShapeDtypeStruct((N, HW, Cp), bf16),
                   jax.ShapeDtypeStruct((N, HW, Cp), bf16),
                   jax.ShapeDtypeStruct((2, Cp), f32)],
        grid=(N,),
        in_specs=[pl.BlockSpec((None, HW, Cik), lambda n: (n, 0, 0)),
                  pl.BlockSpec((3, 3 * Cik, Cp), lambda n: (0, 0, 0)),
                  pl.BlockSpec((Cik, Cp), lambda n: (0, 0)),
                  pl.BlockSpec((1, Cp), lambda n: (0, 0))],
        out_specs=[pl.BlockSpec((None, HW, Cp), lambda n: (n, 0, 0)),
                   pl.BlockSpec((None, HW, Cp), lambda n: (n, 0, 0)),
                   pl.BlockSpec((2, Cp), lambda n: (0, 0))],
        scratch_shapes=[pltpu.VMEM((H + 2, W + 2, Cik), bf16),
                        pltpu.VMEM((HW, Cp), f32)],
        compiler_params=pltpu.CompilerParams(
            dimension_semantics=("arbitrary",),     # resident BN-stat block
            vmem_limit_bytes=32 * 1024 * 1024),
    )(x_flat, w1, wr, br)

    sc1, sh1 = bn_affine(st1, g1, be1)

    # ---- kernel 2: BN1 apply + ReLU + conv2 + BN2 stats ---------------------
    def conv2_kernel(y1_ref, sc_ref, sh_ref, w2_ref,
                     y2_ref, st_ref, hpad_ref, acc_ref):
        @pl.when(pl.program_id(0) == 0)
        def _():
            hpad_ref[...] = jnp.zeros_like(hpad_ref)   # halo border stays 0
            st_ref[...] = jnp.zeros_like(st_ref)

        h1 = jnp.maximum(y1_ref[...].astype(f32) * sc_ref[...] + sh_ref[...], 0.0)
        hpad_ref[1:H + 1, 1:W + 1, :] = h1.astype(bf16).reshape(H, W, Cp)

        for kh in range(3):
            tap = jnp.concatenate(
                [hpad_ref[kh:kh + H, kw:kw + W, :] for kw in range(3)],
                axis=-1).reshape(HW, 3 * Cp)
            contrib = jnp.dot(tap, w2_ref[kh], preferred_element_type=f32)
            if kh == 0:
                acc_ref[...] = contrib
            else:
                acc_ref[...] += contrib

        acc = acc_ref[...]
        st_ref[0:1, :] += jnp.sum(acc, axis=0, keepdims=True)
        st_ref[1:2, :] += jnp.sum(acc * acc, axis=0, keepdims=True)
        y2_ref[...] = acc.astype(y2_ref.dtype)

    (y2, st2) = pl.pallas_call(
        conv2_kernel,
        out_shape=[jax.ShapeDtypeStruct((N, HW, Cp), bf16),
                   jax.ShapeDtypeStruct((2, Cp), f32)],
        grid=(N,),
        in_specs=[pl.BlockSpec((None, HW, Cp), lambda n: (n, 0, 0)),
                  pl.BlockSpec((1, Cp), lambda n: (0, 0)),
                  pl.BlockSpec((1, Cp), lambda n: (0, 0)),
                  pl.BlockSpec((3, 3 * Cp, Cp), lambda n: (0, 0, 0))],
        out_specs=[pl.BlockSpec((None, HW, Cp), lambda n: (n, 0, 0)),
                   pl.BlockSpec((2, Cp), lambda n: (0, 0))],
        scratch_shapes=[pltpu.VMEM((H + 2, W + 2, Cp), bf16),
                        pltpu.VMEM((HW, Cp), f32)],
        compiler_params=pltpu.CompilerParams(
            dimension_semantics=("arbitrary",),
            vmem_limit_bytes=32 * 1024 * 1024),
    )(y1, sc1, sh1, w2)

    sc2, sh2 = bn_affine(st2, g2, be2)

    # ---- kernel 3: BN2 apply + residual add + ReLU, NCHW-friendly output ----
    TR = HW
    for cand in (2048, 1024, 512, 256, 128):
        if HW % cand == 0:
            TR = cand
            break
    n_rb = HW // TR

    def out_kernel(y2_ref, r_ref, sc_ref, sh_ref, o_ref):
        y = y2_ref[...].astype(f32) * sc_ref[...] + sh_ref[...]
        o = jnp.maximum(y + r_ref[...].astype(f32), 0.0)     # (TR, Cp)
        o_ref[...] = o.T                                     # (Cp, TR)

    out = pl.pallas_call(
        out_kernel,
        out_shape=jax.ShapeDtypeStruct((N, Cp, HW), f32),
        grid=(N, n_rb),
        in_specs=[pl.BlockSpec((None, TR, Cp), lambda n, t: (n, t, 0)),
                  pl.BlockSpec((None, TR, Cp), lambda n, t: (n, t, 0)),
                  pl.BlockSpec((1, Cp), lambda n, t: (0, 0)),
                  pl.BlockSpec((1, Cp), lambda n, t: (0, 0))],
        out_specs=pl.BlockSpec((None, Cp, TR), lambda n, t: (n, 0, t)),
        compiler_params=pltpu.CompilerParams(
            dimension_semantics=("parallel", "parallel"),
            vmem_limit_bytes=32 * 1024 * 1024),
    )(y2, r, sc2, sh2)

    # channel slice + reshape only -- no XLA transpose of the padded result
    return out[:, :Cout, :].reshape(N, Cout, H, W)


# ------------------------------------------------------------------------
# Pure-JAX reference (bf16 matmul operands to match kernel precision)
# ------------------------------------------------------------------------
def _reference(x_nchw, params):
    x = jnp.transpose(x_nchw, (0, 2, 3, 1)).astype(jnp.float32)

    def conv3x3(a, w, b):
        y = lax.conv_general_dilated(
            a.astype(jnp.bfloat16), w.astype(jnp.bfloat16), (1, 1), "SAME",
            dimension_numbers=("NHWC", "HWIO", "NHWC"),
            preferred_element_type=jnp.float32)
        return y + b

    def bn(a, g, be):
        mu = jnp.mean(a, axis=(0, 1, 2), keepdims=True)
        var = jnp.mean((a - mu) ** 2, axis=(0, 1, 2), keepdims=True)
        return (a - mu) * lax.rsqrt(var + EPS) * g + be

    h = jnp.maximum(bn(conv3x3(x, params["w1"], params["b1"]),
                       params["g1"], params["be1"]), 0.0)
    y = bn(conv3x3(h, params["w2"], params["b2"]), params["g2"], params["be2"])
    res = jnp.einsum("nhwc,cd->nhwd", x.astype(jnp.bfloat16),
                     params["wr"].astype(jnp.bfloat16),
                     preferred_element_type=jnp.float32) + params["br"]
    out = jnp.maximum(y + res, 0.0)
    return jnp.transpose(out, (0, 3, 1, 2))


# ------------------------------------------------------------------------
# Main
# ------------------------------------------------------------------------
if __name__ == "__main__":
    N, Cin, Cout, H, W = 2, 4, 8, 16, 16

    keys = jax.random.split(jax.random.PRNGKey(0), 11)
    params = {
        # conv weights in HWIO layout (kh, kw, cin, cout)
        "w1": 0.2 * jax.random.normal(keys[0], (3, 3, Cin, Cout), jnp.float32),
        "b1": 0.1 * jax.random.normal(keys[1], (Cout,), jnp.float32),
        "g1": 1.0 + 0.1 * jax.random.normal(keys[2], (Cout,), jnp.float32),
        "be1": 0.1 * jax.random.normal(keys[3], (Cout,), jnp.float32),
        "w2": 0.2 * jax.random.normal(keys[4], (3, 3, Cout, Cout), jnp.float32),
        "b2": 0.1 * jax.random.normal(keys[5], (Cout,), jnp.float32),
        "g2": 1.0 + 0.1 * jax.random.normal(keys[6], (Cout,), jnp.float32),
        "be2": 0.1 * jax.random.normal(keys[7], (Cout,), jnp.float32),
        # residual 1x1 conv (present because Cin != Cout; Identity == (I, 0))
        "wr": 0.2 * jax.random.normal(keys[8], (Cin, Cout), jnp.float32),
        "br": 0.1 * jax.random.normal(keys[9], (Cout,), jnp.float32),
    }
    x = jax.random.normal(keys[10], (N, Cin, H, W), jnp.float32)

    fwd = jax.jit(residual_block_forward)
    out = jax.block_until_ready(fwd(x, params))
    assert out.shape == (N, Cout, H, W), out.shape

    ref = jax.block_until_ready(_reference(x, params))
    np.testing.assert_allclose(np.asarray(out), np.asarray(ref),
                               rtol=2e-2, atol=2e-2)

    print("KERNEL_OK")
</pallas_src>

<mosaic_0001>
module attributes {stable_mosaic.version = 11 : i64} {
  func.func @conv1_kernel(%arg0: i32, %arg1: memref<1x256x128xbf16, #tpu.memory_space<vmem>>, %arg2: memref<3x384x128xbf16, #tpu.memory_space<vmem>>, %arg3: memref<128x128xbf16, #tpu.memory_space<vmem>>, %arg4: memref<1x128xf32, #tpu.memory_space<vmem>>, %arg5: memref<1x256x128xbf16, #tpu.memory_space<vmem>>, %arg6: memref<1x256x128xbf16, #tpu.memory_space<vmem>>, %arg7: memref<2x128xf32, #tpu.memory_space<vmem>>, %arg8: memref<18x18x128xbf16, #tpu.memory_space<vmem>>, %arg9: memref<256x128xf32, #tpu.memory_space<vmem>>) attributes {dimension_semantics = [#tpu.dimension_semantics<arbitrary>], iteration_bounds = array<i64: 2>, scalar_prefetch = 0 : i64, scratch_operands = 2 : i64, tpu.core_type = #tpu.core_type<tc>, window_params = [{transform_indices = @transform_0, window_bounds = array<i64: 1, 256, 128>}, {pipeline_mode = #tpu.pipeline_mode<synchronous>, transform_indices = @transform_1, window_bounds = array<i64: 3, 384, 128>}, {pipeline_mode = #tpu.pipeline_mode<synchronous>, transform_indices = @transform_2, window_bounds = array<i64: 128, 128>}, {pipeline_mode = #tpu.pipeline_mode<synchronous>, transform_indices = @transform_3, window_bounds = array<i64: 1, 128>}, {transform_indices = @transform_4, window_bounds = array<i64: 1, 256, 128>}, {transform_indices = @transform_5, window_bounds = array<i64: 1, 256, 128>}, {pipeline_mode = #tpu.pipeline_mode<synchronous>, transform_indices = @transform_6, window_bounds = array<i64: 2, 128>}]} {
    %c0_i32 = arith.constant 0 : i32
    %0 = arith.cmpi eq, %arg0, %c0_i32 : i32
    %1 = arith.extui %0 : i1 to i32
    %c0_i32_0 = arith.constant 0 : i32
    %2 = arith.cmpi ne, %1, %c0_i32_0 : i32
    scf.if %2 {
      %cst_75 = arith.constant 0.000000e+00 : bf16
      %63 = vector.broadcast %cst_75 : bf16 to vector<18x18x128xbf16>
      %c0_76 = arith.constant 0 : index
      %c0_77 = arith.constant 0 : index
      %c0_78 = arith.constant 0 : index
      %64 = vector.load %arg8[%c0_76, %c0_77, %c0_78] : memref<18x18x128xbf16, #tpu.memory_space<vmem>>, vector<18x18x128xbf16>
      tpu.vector_store %arg8[%c0_76, %c0_77, %c0_78], %63 {strides = array<i32>} : memref<18x18x128xbf16, #tpu.memory_space<vmem>>, vector<18x18x128xbf16>,
      %cst_79 = arith.constant 0.000000e+00 : f32
      %65 = vector.broadcast %cst_79 : f32 to vector<2x128xf32>
      %c0_80 = arith.constant 0 : index
      %c0_81 = arith.constant 0 : index
      %66 = vector.load %arg7[%c0_80, %c0_81] : memref<2x128xf32, #tpu.memory_space<vmem>>, vector<2x128xf32>
      tpu.vector_store %arg7[%c0_80, %c0_81], %65 {strides = array<i32>} : memref<2x128xf32, #tpu.memory_space<vmem>>, vector<2x128xf32>,
    } else {
    }
    %c0 = arith.constant 0 : index
    %c0_1 = arith.constant 0 : index
    %c0_2 = arith.constant 0 : index
    %3 = vector.load %arg1[%c0, %c0_1, %c0_2] : memref<1x256x128xbf16, #tpu.memory_space<vmem>>, vector<1x256x128xbf16>
    %4 = vector.shape_cast %3 : vector<1x256x128xbf16> to vector<256x128xbf16>
    %5 = vector.shape_cast %4 : vector<256x128xbf16> to vector<16x16x128xbf16>
    %c1 = arith.constant 1 : index
    %c1_3 = arith.constant 1 : index
    %c0_4 = arith.constant 0 : index
    %6 = vector.load %arg8[%c1, %c1_3, %c0_4] : memref<18x18x128xbf16, #tpu.memory_space<vmem>>, vector<16x16x128xbf16>
    tpu.vector_store %arg8[%c1, %c1_3, %c0_4], %5 {strides = array<i32>} : memref<18x18x128xbf16, #tpu.memory_space<vmem>>, vector<16x16x128xbf16>,
    %c0_5 = arith.constant 0 : index
    %c0_6 = arith.constant 0 : index
    %7 = vector.load %arg3[%c0_5, %c0_6] : memref<128x128xbf16, #tpu.memory_space<vmem>>, vector<128x128xbf16>
    %cst = arith.constant dense<0.000000e+00> : vector<256x128xf32>
    %8 = tpu.matmul %4, %7, %cst {dimension_numbers = #tpu.dot_dimension_numbers<[1], [0], [0], [1], [0, 0, 1, 1], [], []>} : vector<256x128xbf16>, vector<128x128xbf16>, vector<256x128xf32> -> vector<256x128xf32>
    %c0_7 = arith.constant 0 : index
    %c0_8 = arith.constant 0 : index
    %9 = vector.load %arg4[%c0_7, %c0_8] : memref<1x128xf32, #tpu.memory_space<vmem>>, vector<1x128xf32>
    %10 = vector.broadcast %9 : vector<1x128xf32> to vector<256x128xf32>
    %11 = arith.addf %8, %10 : vector<256x128xf32>
    %12 = arith.truncf %11 : vector<256x128xf32> to vector<256x128xbf16>
    %c0_9 = arith.constant 0 : index
    %c0_10 = arith.constant 0 : index
    %c0_11 = arith.constant 0 : index
    %13 = vector.load %arg6[%c0_9, %c0_10, %c0_11] : memref<1x256x128xbf16, #tpu.memory_space<vmem>>, vector<1x256x128xbf16>
    %14 = vector.shape_cast %13 : vector<1x256x128xbf16> to vector<256x128xbf16>
    %15 = vector.shape_cast %12 : vector<256x128xbf16> to vector<1x256x128xbf16>
    tpu.vector_store %arg6[%c0_9, %c0_10, %c0_11], %15 {strides = array<i32>} : memref<1x256x128xbf16, #tpu.memory_space<vmem>>, vector<1x256x128xbf16>,
    %c0_12 = arith.constant 0 : index
    %c0_13 = arith.constant 0 : index
    %c0_14 = arith.constant 0 : index
    %16 = vector.load %arg8[%c0_12, %c0_13, %c0_14] : memref<18x18x128xbf16, #tpu.memory_space<vmem>>, vector<16x16x128xbf16>
    %c0_15 = arith.constant 0 : index
    %c1_16 = arith.constant 1 : index
    %c0_17 = arith.constant 0 : index
    %17 = vector.load %arg8[%c0_15, %c1_16, %c0_17] : memref<18x18x128xbf16, #tpu.memory_space<vmem>>, vector<16x16x128xbf16>
    %c0_18 = arith.constant 0 : index
    %c2 = arith.constant 2 : index
    %c0_19 = arith.constant 0 : index
    %18 = vector.load %arg8[%c0_18, %c2, %c0_19] : memref<18x18x128xbf16, #tpu.memory_space<vmem>>, vector<16x16x128xbf16>
    %19 = tpu.concatenate %16, %17, %18 in 2 : vector<16x16x128xbf16>, vector<16x16x128xbf16>, vector<16x16x128xbf16> -> vector<16x16x384xbf16>
    %20 = vector.shape_cast %19 : vector<16x16x384xbf16> to vector<256x384xbf16>
    %c0_20 = arith.constant 0 : index
    %c0_21 = arith.constant 0 : index
    %c0_22 = arith.constant 0 : index
    %21 = vector.load %arg2[%c0_20, %c0_21, %c0_22] : memref<3x384x128xbf16, #tpu.memory_space<vmem>>, vector<1x384x128xbf16>
    %22 = vector.shape_cast %21 : vector<1x384x128xbf16> to vector<384x128xbf16>
    %cst_23 = arith.constant dense<0.000000e+00> : vector<256x128xf32>
    %23 = tpu.matmul %20, %22, %cst_23 {dimension_numbers = #tpu.dot_dimension_numbers<[1], [0], [0], [1], [0, 0, 1, 1], [], []>} : vector<256x384xbf16>, vector<384x128xbf16>, vector<256x128xf32> -> vector<256x128xf32>
    %c0_24 = arith.constant 0 : index
    %c0_25 = arith.constant 0 : index
    %24 = vector.load %arg9[%c0_24, %c0_25] : memref<256x128xf32, #tpu.memory_space<vmem>>, vector<256x128xf32>
    tpu.vector_store %arg9[%c0_24, %c0_25], %23 {strides = array<i32>} : memref<256x128xf32, #tpu.memory_space<vmem>>, vector<256x128xf32>,
    %c1_26 = arith.constant 1 : index
    %c0_27 = arith.constant 0 : index
    %c0_28 = arith.constant 0 : index
    %25 = vector.load %arg8[%c1_26, %c0_27, %c0_28] : memref<18x18x128xbf16, #tpu.memory_space<vmem>>, vector<16x16x128xbf16>
    %c1_29 = arith.constant 1 : index
    %c1_30 = arith.constant 1 : index
    %c0_31 = arith.constant 0 : index
    %26 = vector.load %arg8[%c1_29, %c1_30, %c0_31] : memref<18x18x128xbf16, #tpu.memory_space<vmem>>, vector<16x16x128xbf16>
    %c1_32 = arith.constant 1 : index
    %c2_33 = arith.constant 2 : index
    %c0_34 = arith.constant 0 : index
    %27 = vector.load %arg8[%c1_32, %c2_33, %c0_34] : memref<18x18x128xbf16, #tpu.memory_space<vmem>>, vector<16x16x128xbf16>
    %28 = tpu.concatenate %25, %26, %27 in 2 : vector<16x16x128xbf16>, vector<16x16x128xbf16>, vector<16x16x128xbf16> -> vector<16x16x384xbf16>
    %29 = vector.shape_cast %28 : vector<16x16x384xbf16> to vector<256x384xbf16>
    %c1_35 = arith.constant 1 : index
    %c0_36 = arith.constant 0 : index
    %c0_37 = arith.constant 0 : index
    %30 = vector.load %arg2[%c1_35, %c0_36, %c0_37] : memref<3x384x128xbf16, #tpu.memory_space<vmem>>, vector<1x384x128xbf16>
    %31 = vector.shape_cast %30 : vector<1x384x128xbf16> to vector<384x128xbf16>
    %cst_38 = arith.constant dense<0.000000e+00> : vector<256x128xf32>
    %32 = tpu.matmul %29, %31, %cst_38 {dimension_numbers = #tpu.dot_dimension_numbers<[1], [0], [0], [1], [0, 0, 1, 1], [], []>} : vector<256x384xbf16>, vector<384x128xbf16>, vector<256x128xf32> -> vector<256x128xf32>
    %c0_39 = arith.constant 0 : index
    %c0_40 = arith.constant 0 : index
    %33 = vector.load %arg9[%c0_39, %c0_40] : memref<256x128xf32, #tpu.memory_space<vmem>>, vector<256x128xf32>
    %34 = arith.addf %33, %32 : vector<256x128xf32>
    %c0_41 = arith.constant 0 : index
    %c0_42 = arith.constant 0 : index
    %35 = vector.load %arg9[%c0_41, %c0_42] : memref<256x128xf32, #tpu.memory_space<vmem>>, vector<256x128xf32>
    tpu.vector_store %arg9[%c0_41, %c0_42], %34 {strides = array<i32>} : memref<256x128xf32, #tpu.memory_space<vmem>>, vector<256x128xf32>,
    %c2_43 = arith.constant 2 : index
    %c0_44 = arith.constant 0 : index
    %c0_45 = arith.constant 0 : index
    %36 = vector.load %arg8[%c2_43, %c0_44, %c0_45] : memref<18x18x128xbf16, #tpu.memory_space<vmem>>, vector<16x16x128xbf16>
    %c2_46 = arith.constant 2 : index
    %c1_47 = arith.constant 1 : index
    %c0_48 = arith.constant 0 : index
    %37 = vector.load %arg8[%c2_46, %c1_47, %c0_48] : memref<18x18x128xbf16, #tpu.memory_space<vmem>>, vector<16x16x128xbf16>
    %c2_49 = arith.constant 2 : index
    %c2_50 = arith.constant 2 : index
    %c0_51 = arith.constant 0 : index
    %38 = vector.load %arg8[%c2_49, %c2_50, %c0_51] : memref<18x18x128xbf16, #tpu.memory_space<vmem>>, vector<16x16x128xbf16>
    %39 = tpu.concatenate %36, %37, %38 in 2 : vector<16x16x128xbf16>, vector<16x16x128xbf16>, vector<16x16x128xbf16> -> vector<16x16x384xbf16>
    %40 = vector.shape_cast %39 : vector<16x16x384xbf16> to vector<256x384xbf16>
    %c2_52 = arith.constant 2 : index
    %c0_53 = arith.constant 0 : index
    %c0_54 = arith.constant 0 : index
    %41 = vector.load %arg2[%c2_52, %c0_53, %c0_54] : memref<3x384x128xbf16, #tpu.memory_space<vmem>>, vector<1x384x128xbf16>
    %42 = vector.shape_cast %41 : vector<1x384x128xbf16> to vector<384x128xbf16>
    %cst_55 = arith.constant dense<0.000000e+00> : vector<256x128xf32>
    %43 = tpu.matmul %40, %42, %cst_55 {dimension_numbers = #tpu.dot_dimension_numbers<[1], [0], [0], [1], [0, 0, 1, 1], [], []>} : vector<256x384xbf16>, vector<384x128xbf16>, vector<256x128xf32> -> vector<256x128xf32>
    %c0_56 = arith.constant 0 : index
    %c0_57 = arith.constant 0 : index
    %44 = vector.load %arg9[%c0_56, %c0_57] : memref<256x128xf32, #tpu.memory_space<vmem>>, vector<256x128xf32>
    %45 = arith.addf %44, %43 : vector<256x128xf32>
    %c0_58 = arith.constant 0 : index
    %c0_59 = arith.constant 0 : index
    %46 = vector.load %arg9[%c0_58, %c0_59] : memref<256x128xf32, #tpu.memory_space<vmem>>, vector<256x128xf32>
    tpu.vector_store %arg9[%c0_58, %c0_59], %45 {strides = array<i32>} : memref<256x128xf32, #tpu.memory_space<vmem>>, vector<256x128xf32>,
    %c0_60 = arith.constant 0 : index
    %c0_61 = arith.constant 0 : index
    %47 = vector.load %arg9[%c0_60, %c0_61] : memref<256x128xf32, #tpu.memory_space<vmem>>, vector<256x128xf32>
    %c0_62 = arith.constant 0 : index
    %c0_63 = arith.constant 0 : index
    %48 = vector.load %arg7[%c0_62, %c0_63] : memref<2x128xf32, #tpu.memory_space<vmem>>, vector<1x128xf32>
    %cst_64 = arith.constant dense<0.000000e+00> : vector<128xf32>
    %49 = vector.multi_reduction <add>, %47, %cst_64 [0] : vector<256x128xf32> to vector<128xf32>
    %50 = vector.shape_cast %49 : vector<128xf32> to vector<1x128xf32>
    %51 = arith.addf %48, %50 : vector<1x128xf32>
    %c0_65 = arith.constant 0 : index
    %c0_66 = arith.constant 0 : index
    %52 = vector.load %arg7[%c0_65, %c0_66] : memref<2x128xf32, #tpu.memory_space<vmem>>, vector<1x128xf32>
    tpu.vector_store %arg7[%c0_65, %c0_66], %51 {strides = array<i32>} : memref<2x128xf32, #tpu.memory_space<vmem>>, vector<1x128xf32>,
    %c1_67 = arith.constant 1 : index
    %c0_68 = arith.constant 0 : index
    %53 = vector.load %arg7[%c1_67, %c0_68] : memref<2x128xf32, #tpu.memory_space<vmem>>, vector<1x128xf32>
    %54 = arith.mulf %47, %47 : vector<256x128xf32>
    %cst_69 = arith.constant dense<0.000000e+00> : vector<128xf32>
    %55 = vector.multi_reduction <add>, %54, %cst_69 [0] : vector<256x128xf32> to vector<128xf32>
    %56 = vector.shape_cast %55 : vector<128xf32> to vector<1x128xf32>
    %57 = arith.addf %53, %56 : vector<1x128xf32>
    %c1_70 = arith.constant 1 : index
    %c0_71 = arith.constant 0 : index
    %58 = vector.load %arg7[%c1_70, %c0_71] : memref<2x128xf32, #tpu.memory_space<vmem>>, vector<1x128xf32>
    tpu.vector_store %arg7[%c1_70, %c0_71], %57 {strides = array<i32>} : memref<2x128xf32, #tpu.memory_space<vmem>>, vector<1x128xf32>,
    %59 = arith.truncf %47 : vector<256x128xf32> to vector<256x128xbf16>
    %c0_72 = arith.constant 0 : index
    %c0_73 = arith.constant 0 : index
    %c0_74 = arith.constant 0 : index
    %60 = vector.load %arg5[%c0_72, %c0_73, %c0_74] : memref<1x256x128xbf16, #tpu.memory_space<vmem>>, vector<1x256x128xbf16>
    %61 = vector.shape_cast %60 : vector<1x256x128xbf16> to vector<256x128xbf16>
    %62 = vector.shape_cast %59 : vector<256x128xbf16> to vector<1x256x128xbf16>
    tpu.vector_store %arg5[%c0_72, %c0_73, %c0_74], %62 {strides = array<i32>} : memref<1x256x128xbf16, #tpu.memory_space<vmem>>, vector<1x256x128xbf16>,
    return
  }
  func.func @transform_0(%arg0: i32) -> (i32, i32, i32) {
    %c0_i32 = arith.constant 0 : i32
    %c0_i32_0 = arith.constant 0 : i32
    %c0_i32_1 = arith.constant 0 : i32
    return %arg0, %c0_i32, %c0_i32_0 : i32, i32, i32
  }
  func.func @transform_1(%arg0: i32) -> (i32, i32, i32) {
    %c0_i32 = arith.constant 0 : i32
    %c0_i32_0 = arith.constant 0 : i32
    %c0_i32_1 = arith.constant 0 : i32
    %c0_i32_2 = arith.constant 0 : i32
    return %c0_i32, %c0_i32_0, %c0_i32_1 : i32, i32, i32
  }
  func.func @transform_2(%arg0: i32) -> (i32, i32) {
    %c0_i32 = arith.constant 0 : i32
    %c0_i32_0 = arith.constant 0 : i32
    %c0_i32_1 = arith.constant 0 : i32
    return %c0_i32, %c0_i32_0 : i32, i32
  }
  func.func @transform_3(%arg0: i32) -> (i32, i32) {
    %c0_i32 = arith.constant 0 : i32
    %c0_i32_0 = arith.constant 0 : i32
    %c0_i32_1 = arith.constant 0 : i32
    return %c0_i32, %c0_i32_0 : i32, i32
  }
  func.func @transform_4(%arg0: i32) -> (i32, i32, i32) {
    %c0_i32 = arith.constant 0 : i32
    %c0_i32_0 = arith.constant 0 : i32
    %c0_i32_1 = arith.constant 0 : i32
    return %arg0, %c0_i32, %c0_i32_0 : i32, i32, i32
  }
  func.func @transform_5(%arg0: i32) -> (i32, i32, i32) {
    %c0_i32 = arith.constant 0 : i32
    %c0_i32_0 = arith.constant 0 : i32
    %c0_i32_1 = arith.constant 0 : i32
    return %arg0, %c0_i32, %c0_i32_0 : i32, i32, i32
  }
  func.func @transform_6(%arg0: i32) -> (i32, i32) {
    %c0_i32 = arith.constant 0 : i32
    %c0_i32_0 = arith.constant 0 : i32
    %c0_i32_1 = arith.constant 0 : i32
    return %c0_i32, %c0_i32_0 : i32, i32
  }
}

module attributes {stable_mosaic.version = 11 : i64} {
  func.func @conv2_kernel(%arg0: i32, %arg1: memref<1x256x128xbf16, #tpu.memory_space<vmem>>, %arg2: memref<1x128xf32, #tpu.memory_space<vmem>>, %arg3: memref<1x128xf32, #tpu.memory_space<vmem>>, %arg4: memref<3x384x128xbf16, #tpu.memory_space<vmem>>, %arg5: memref<1x256x128xbf16, #tpu.memory_space<vmem>>, %arg6: memref<2x128xf32, #tpu.memory_space<vmem>>, %arg7: memref<18x18x128xbf16, #tpu.memory_space<vmem>>, %arg8: memref<256x128xf32, #tpu.memory_space<vmem>>) attributes {dimension_semantics = [#tpu.dimension_semantics<arbitrary>], iteration_bounds = array<i64: 2>, scalar_prefetch = 0 : i64, scratch_operands = 2 : i64, tpu.core_type = #tpu.core_type<tc>, window_params = [{transform_indices = @transform_0, window_bounds = array<i64: 1, 256, 128>}, {pipeline_mode = #tpu.pipeline_mode<synchronous>, transform_indices = @transform_1, window_bounds = array<i64: 1, 128>}, {pipeline_mode = #tpu.pipeline_mode<synchronous>, transform_indices = @transform_2, window_bounds = array<i64: 1, 128>}, {pipeline_mode = #tpu.pipeline_mode<synchronous>, transform_indices = @transform_3, window_bounds = array<i64: 3, 384, 128>}, {transform_indices = @transform_4, window_bounds = array<i64: 1, 256, 128>}, {pipeline_mode = #tpu.pipeline_mode<synchronous>, transform_indices = @transform_5, window_bounds = array<i64: 2, 128>}]} {
    %c0_i32 = arith.constant 0 : i32
    %0 = arith.cmpi eq, %arg0, %c0_i32 : i32
    %1 = arith.extui %0 : i1 to i32
    %c0_i32_0 = arith.constant 0 : i32
    %2 = arith.cmpi ne, %1, %c0_i32_0 : i32
    scf.if %2 {
      %cst_72 = arith.constant 0.000000e+00 : bf16
      %64 = vector.broadcast %cst_72 : bf16 to vector<18x18x128xbf16>
      %c0_73 = arith.constant 0 : index
      %c0_74 = arith.constant 0 : index
      %c0_75 = arith.constant 0 : index
      %65 = vector.load %arg7[%c0_73, %c0_74, %c0_75] : memref<18x18x128xbf16, #tpu.memory_space<vmem>>, vector<18x18x128xbf16>
      tpu.vector_store %arg7[%c0_73, %c0_74, %c0_75], %64 {strides = array<i32>} : memref<18x18x128xbf16, #tpu.memory_space<vmem>>, vector<18x18x128xbf16>,
      %cst_76 = arith.constant 0.000000e+00 : f32
      %66 = vector.broadcast %cst_76 : f32 to vector<2x128xf32>
      %c0_77 = arith.constant 0 : index
      %c0_78 = arith.constant 0 : index
      %67 = vector.load %arg6[%c0_77, %c0_78] : memref<2x128xf32, #tpu.memory_space<vmem>>, vector<2x128xf32>
      tpu.vector_store %arg6[%c0_77, %c0_78], %66 {strides = array<i32>} : memref<2x128xf32, #tpu.memory_space<vmem>>, vector<2x128xf32>,
    } else {
    }
    %c0 = arith.constant 0 : index
    %c0_1 = arith.constant 0 : index
    %c0_2 = arith.constant 0 : index
    %3 = vector.load %arg1[%c0, %c0_1, %c0_2] : memref<1x256x128xbf16, #tpu.memory_space<vmem>>, vector<1x256x128xbf16>
    %4 = vector.shape_cast %3 : vector<1x256x128xbf16> to vector<256x128xbf16>
    %5 = arith.extf %4 : vector<256x128xbf16> to vector<256x128xf32>
    %c0_3 = arith.constant 0 : index
    %c0_4 = arith.constant 0 : index
    %6 = vector.load %arg2[%c0_3, %c0_4] : memref<1x128xf32, #tpu.memory_space<vmem>>, vector<1x128xf32>
    %7 = vector.broadcast %6 : vector<1x128xf32> to vector<256x128xf32>
    %8 = arith.mulf %5, %7 : vector<256x128xf32>
    %c0_5 = arith.constant 0 : index
    %c0_6 = arith.constant 0 : index
    %9 = vector.load %arg3[%c0_5, %c0_6] : memref<1x128xf32, #tpu.memory_space<vmem>>, vector<1x128xf32>
    %10 = vector.broadcast %9 : vector<1x128xf32> to vector<256x128xf32>
    %11 = arith.addf %8, %10 : vector<256x128xf32>
    %cst = arith.constant 0.000000e+00 : f32
    %12 = vector.broadcast %cst : f32 to vector<256x128xf32>
    %13 = arith.maximumf %11, %12 : vector<256x128xf32>
    %14 = arith.truncf %13 : vector<256x128xf32> to vector<256x128xbf16>
    %15 = vector.shape_cast %14 : vector<256x128xbf16> to vector<16x16x128xbf16>
    %c1 = arith.constant 1 : index
    %c1_7 = arith.constant 1 : index
    %c0_8 = arith.constant 0 : index
    %16 = vector.load %arg7[%c1, %c1_7, %c0_8] : memref<18x18x128xbf16, #tpu.memory_space<vmem>>, vector<16x16x128xbf16>
    tpu.vector_store %arg7[%c1, %c1_7, %c0_8], %15 {strides = array<i32>} : memref<18x18x128xbf16, #tpu.memory_space<vmem>>, vector<16x16x128xbf16>,
    %c0_9 = arith.constant 0 : index
    %c0_10 = arith.constant 0 : index
    %c0_11 = arith.constant 0 : index
    %17 = vector.load %arg7[%c0_9, %c0_10, %c0_11] : memref<18x18x128xbf16, #tpu.memory_space<vmem>>, vector<16x16x128xbf16>
    %c0_12 = arith.constant 0 : index
    %c1_13 = arith.constant 1 : index
    %c0_14 = arith.constant 0 : index
    %18 = vector.load %arg7[%c0_12, %c1_13, %c0_14] : memref<18x18x128xbf16, #tpu.memory_space<vmem>>, vector<16x16x128xbf16>
    %c0_15 = arith.constant 0 : index
    %c2 = arith.constant 2 : index
    %c0_16 = arith.constant 0 : index
    %19 = vector.load %arg7[%c0_15, %c2, %c0_16] : memref<18x18x128xbf16, #tpu.memory_space<vmem>>, vector<16x16x128xbf16>
    %20 = tpu.concatenate %17, %18, %19 in 2 : vector<16x16x128xbf16>, vector<16x16x128xbf16>, vector<16x16x128xbf16> -> vector<16x16x384xbf16>
    %21 = vector.shape_cast %20 : vector<16x16x384xbf16> to vector<256x384xbf16>
    %c0_17 = arith.constant 0 : index
    %c0_18 = arith.constant 0 : index
    %c0_19 = arith.constant 0 : index
    %22 = vector.load %arg4[%c0_17, %c0_18, %c0_19] : memref<3x384x128xbf16, #tpu.memory_space<vmem>>, vector<1x384x128xbf16>
    %23 = vector.shape_cast %22 : vector<1x384x128xbf16> to vector<384x128xbf16>
    %cst_20 = arith.constant dense<0.000000e+00> : vector<256x128xf32>
    %24 = tpu.matmul %21, %23, %cst_20 {dimension_numbers = #tpu.dot_dimension_numbers<[1], [0], [0], [1], [0, 0, 1, 1], [], []>} : vector<256x384xbf16>, vector<384x128xbf16>, vector<256x128xf32> -> vector<256x128xf32>
    %c0_21 = arith.constant 0 : index
    %c0_22 = arith.constant 0 : index
    %25 = vector.load %arg8[%c0_21, %c0_22] : memref<256x128xf32, #tpu.memory_space<vmem>>, vector<256x128xf32>
    tpu.vector_store %arg8[%c0_21, %c0_22], %24 {strides = array<i32>} : memref<256x128xf32, #tpu.memory_space<vmem>>, vector<256x128xf32>,
    %c1_23 = arith.constant 1 : index
    %c0_24 = arith.constant 0 : index
    %c0_25 = arith.constant 0 : index
    %26 = vector.load %arg7[%c1_23, %c0_24, %c0_25] : memref<18x18x128xbf16, #tpu.memory_space<vmem>>, vector<16x16x128xbf16>
    %c1_26 = arith.constant 1 : index
    %c1_27 = arith.constant 1 : index
    %c0_28 = arith.constant 0 : index
    %27 = vector.load %arg7[%c1_26, %c1_27, %c0_28] : memref<18x18x128xbf16, #tpu.memory_space<vmem>>, vector<16x16x128xbf16>
    %c1_29 = arith.constant 1 : index
    %c2_30 = arith.constant 2 : index
    %c0_31 = arith.constant 0 : index
    %28 = vector.load %arg7[%c1_29, %c2_30, %c0_31] : memref<18x18x128xbf16, #tpu.memory_space<vmem>>, vector<16x16x128xbf16>
    %29 = tpu.concatenate %26, %27, %28 in 2 : vector<16x16x128xbf16>, vector<16x16x128xbf16>, vector<16x16x128xbf16> -> vector<16x16x384xbf16>
    %30 = vector.shape_cast %29 : vector<16x16x384xbf16> to vector<256x384xbf16>
    %c1_32 = arith.constant 1 : index
    %c0_33 = arith.constant 0 : index
    %c0_34 = arith.constant 0 : index
    %31 = vector.load %arg4[%c1_32, %c0_33, %c0_34] : memref<3x384x128xbf16, #tpu.memory_space<vmem>>, vector<1x384x128xbf16>
    %32 = vector.shape_cast %31 : vector<1x384x128xbf16> to vector<384x128xbf16>
    %cst_35 = arith.constant dense<0.000000e+00> : vector<256x128xf32>
    %33 = tpu.matmul %30, %32, %cst_35 {dimension_numbers = #tpu.dot_dimension_numbers<[1], [0], [0], [1], [0, 0, 1, 1], [], []>} : vector<256x384xbf16>, vector<384x128xbf16>, vector<256x128xf32> -> vector<256x128xf32>
    %c0_36 = arith.constant 0 : index
    %c0_37 = arith.constant 0 : index
    %34 = vector.load %arg8[%c0_36, %c0_37] : memref<256x128xf32, #tpu.memory_space<vmem>>, vector<256x128xf32>
    %35 = arith.addf %34, %33 : vector<256x128xf32>
    %c0_38 = arith.constant 0 : index
    %c0_39 = arith.constant 0 : index
    %36 = vector.load %arg8[%c0_38, %c0_39] : memref<256x128xf32, #tpu.memory_space<vmem>>, vector<256x128xf32>
    tpu.vector_store %arg8[%c0_38, %c0_39], %35 {strides = array<i32>} : memref<256x128xf32, #tpu.memory_space<vmem>>, vector<256x128xf32>,
    %c2_40 = arith.constant 2 : index
    %c0_41 = arith.constant 0 : index
    %c0_42 = arith.constant 0 : index
    %37 = vector.load %arg7[%c2_40, %c0_41, %c0_42] : memref<18x18x128xbf16, #tpu.memory_space<vmem>>, vector<16x16x128xbf16>
    %c2_43 = arith.constant 2 : index
    %c1_44 = arith.constant 1 : index
    %c0_45 = arith.constant 0 : index
    %38 = vector.load %arg7[%c2_43, %c1_44, %c0_45] : memref<18x18x128xbf16, #tpu.memory_space<vmem>>, vector<16x16x128xbf16>
    %c2_46 = arith.constant 2 : index
    %c2_47 = arith.constant 2 : index
    %c0_48 = arith.constant 0 : index
    %39 = vector.load %arg7[%c2_46, %c2_47, %c0_48] : memref<18x18x128xbf16, #tpu.memory_space<vmem>>, vector<16x16x128xbf16>
    %40 = tpu.concatenate %37, %38, %39 in 2 : vector<16x16x128xbf16>, vector<16x16x128xbf16>, vector<16x16x128xbf16> -> vector<16x16x384xbf16>
    %41 = vector.shape_cast %40 : vector<16x16x384xbf16> to vector<256x384xbf16>
    %c2_49 = arith.constant 2 : index
    %c0_50 = arith.constant 0 : index
    %c0_51 = arith.constant 0 : index
    %42 = vector.load %arg4[%c2_49, %c0_50, %c0_51] : memref<3x384x128xbf16, #tpu.memory_space<vmem>>, vector<1x384x128xbf16>
    %43 = vector.shape_cast %42 : vector<1x384x128xbf16> to vector<384x128xbf16>
    %cst_52 = arith.constant dense<0.000000e+00> : vector<256x128xf32>
    %44 = tpu.matmul %41, %43, %cst_52 {dimension_numbers = #tpu.dot_dimension_numbers<[1], [0], [0], [1], [0, 0, 1, 1], [], []>} : vector<256x384xbf16>, vector<384x128xbf16>, vector<256x128xf32> -> vector<256x128xf32>
    %c0_53 = arith.constant 0 : index
    %c0_54 = arith.constant 0 : index
    %45 = vector.load %arg8[%c0_53, %c0_54] : memref<256x128xf32, #tpu.memory_space<vmem>>, vector<256x128xf32>
    %46 = arith.addf %45, %44 : vector<256x128xf32>
    %c0_55 = arith.constant 0 : index
    %c0_56 = arith.constant 0 : index
    %47 = vector.load %arg8[%c0_55, %c0_56] : memref<256x128xf32, #tpu.memory_space<vmem>>, vector<256x128xf32>
    tpu.vector_store %arg8[%c0_55, %c0_56], %46 {strides = array<i32>} : memref<256x128xf32, #tpu.memory_space<vmem>>, vector<256x128xf32>,
    %c0_57 = arith.constant 0 : index
    %c0_58 = arith.constant 0 : index
    %48 = vector.load %arg8[%c0_57, %c0_58] : memref<256x128xf32, #tpu.memory_space<vmem>>, vector<256x128xf32>
    %c0_59 = arith.constant 0 : index
    %c0_60 = arith.constant 0 : index
    %49 = vector.load %arg6[%c0_59, %c0_60] : memref<2x128xf32, #tpu.memory_space<vmem>>, vector<1x128xf32>
    %cst_61 = arith.constant dense<0.000000e+00> : vector<128xf32>
    %50 = vector.multi_reduction <add>, %48, %cst_61 [0] : vector<256x128xf32> to vector<128xf32>
    %51 = vector.shape_cast %50 : vector<128xf32> to vector<1x128xf32>
    %52 = arith.addf %49, %51 : vector<1x128xf32>
    %c0_62 = arith.constant 0 : index
    %c0_63 = arith.constant 0 : index
    %53 = vector.load %arg6[%c0_62, %c0_63] : memref<2x128xf32, #tpu.memory_space<vmem>>, vector<1x128xf32>
    tpu.vector_store %arg6[%c0_62, %c0_63], %52 {strides = array<i32>} : memref<2x128xf32, #tpu.memory_space<vmem>>, vector<1x128xf32>,
    %c1_64 = arith.constant 1 : index
    %c0_65 = arith.constant 0 : index
    %54 = vector.load %arg6[%c1_64, %c0_65] : memref<2x128xf32, #tpu.memory_space<vmem>>, vector<1x128xf32>
    %55 = arith.mulf %48, %48 : vector<256x128xf32>
    %cst_66 = arith.constant dense<0.000000e+00> : vector<128xf32>
    %56 = vector.multi_reduction <add>, %55, %cst_66 [0] : vector<256x128xf32> to vector<128xf32>
    %57 = vector.shape_cast %56 : vector<128xf32> to vector<1x128xf32>
    %58 = arith.addf %54, %57 : vector<1x128xf32>
    %c1_67 = arith.constant 1 : index
    %c0_68 = arith.constant 0 : index
    %59 = vector.load %arg6[%c1_67, %c0_68] : memref<2x128xf32, #tpu.memory_space<vmem>>, vector<1x128xf32>
    tpu.vector_store %arg6[%c1_67, %c0_68], %58 {strides = array<i32>} : memref<2x128xf32, #tpu.memory_space<vmem>>, vector<1x128xf32>,
    %60 = arith.truncf %48 : vector<256x128xf32> to vector<256x128xbf16>
    %c0_69 = arith.constant 0 : index
    %c0_70 = arith.constant 0 : index
    %c0_71 = arith.constant 0 : index
    %61 = vector.load %arg5[%c0_69, %c0_70, %c0_71] : memref<1x256x128xbf16, #tpu.memory_space<vmem>>, vector<1x256x128xbf16>
    %62 = vector.shape_cast %61 : vector<1x256x128xbf16> to vector<256x128xbf16>
    %63 = vector.shape_cast %60 : vector<256x128xbf16> to vector<1x256x128xbf16>
    tpu.vector_store %arg5[%c0_69, %c0_70, %c0_71], %63 {strides = array<i32>} : memref<1x256x128xbf16, #tpu.memory_space<vmem>>, vector<1x256x128xbf16>,
    return
  }
  func.func @transform_0(%arg0: i32) -> (i32, i32, i32) {
    %c0_i32 = arith.constant 0 : i32
    %c0_i32_0 = arith.constant 0 : i32
    %c0_i32_1 = arith.constant 0 : i32
    return %arg0, %c0_i32, %c0_i32_0 : i32, i32, i32
  }
  func.func @transform_1(%arg0: i32) -> (i32, i32) {
    %c0_i32 = arith.constant 0 : i32
    %c0_i32_0 = arith.constant 0 : i32
    %c0_i32_1 = arith.constant 0 : i32
    return %c0_i32, %c0_i32_0 : i32, i32
  }
  func.func @transform_2(%arg0: i32) -> (i32, i32) {
    %c0_i32 = arith.constant 0 : i32
    %c0_i32_0 = arith.constant 0 : i32
    %c0_i32_1 = arith.constant 0 : i32
    return %c0_i32, %c0_i32_0 : i32, i32
  }
  func.func @transform_3(%arg0: i32) -> (i32, i32, i32) {
    %c0_i32 = arith.constant 0 : i32
    %c0_i32_0 = arith.constant 0 : i32
    %c0_i32_1 = arith.constant 0 : i32
    %c0_i32_2 = arith.constant 0 : i32
    return %c0_i32, %c0_i32_0, %c0_i32_1 : i32, i32, i32
  }
  func.func @transform_4(%arg0: i32) -> (i32, i32, i32) {
    %c0_i32 = arith.constant 0 : i32
    %c0_i32_0 = arith.constant 0 : i32
    %c0_i32_1 = arith.constant 0 : i32
    return %arg0, %c0_i32, %c0_i32_0 : i32, i32, i32
  }
  func.func @transform_5(%arg0: i32) -> (i32, i32) {
    %c0_i32 = arith.constant 0 : i32
    %c0_i32_0 = arith.constant 0 : i32
    %c0_i32_1 = arith.constant 0 : i32
    return %c0_i32, %c0_i32_0 : i32, i32
  }
}

module attributes {stable_mosaic.version = 11 : i64} {
  func.func @out_kernel(%arg0: i32, %arg1: i32, %arg2: memref<1x256x128xbf16, #tpu.memory_space<vmem>>, %arg3: memref<1x256x128xbf16, #tpu.memory_space<vmem>>, %arg4: memref<1x128xf32, #tpu.memory_space<vmem>>, %arg5: memref<1x128xf32, #tpu.memory_space<vmem>>, %arg6: memref<1x128x256xf32, #tpu.memory_space<vmem>>) attributes {dimension_semantics = [#tpu.dimension_semantics<parallel>, #tpu.dimension_semantics<parallel>], iteration_bounds = array<i64: 2, 1>, scalar_prefetch = 0 : i64, scratch_operands = 0 : i64, tpu.core_type = #tpu.core_type<tc>, window_params = [{transform_indices = @transform_0, window_bounds = array<i64: 1, 256, 128>}, {transform_indices = @transform_1, window_bounds = array<i64: 1, 256, 128>}, {pipeline_mode = #tpu.pipeline_mode<synchronous>, transform_indices = @transform_2, window_bounds = array<i64: 1, 128>}, {pipeline_mode = #tpu.pipeline_mode<synchronous>, transform_indices = @transform_3, window_bounds = array<i64: 1, 128>}, {transform_indices = @transform_4, window_bounds = array<i64: 1, 128, 256>}]} {
    %c0 = arith.constant 0 : index
    %c0_0 = arith.constant 0 : index
    %c0_1 = arith.constant 0 : index
    %0 = vector.load %arg2[%c0, %c0_0, %c0_1] : memref<1x256x128xbf16, #tpu.memory_space<vmem>>, vector<1x256x128xbf16>
    %1 = vector.shape_cast %0 : vector<1x256x128xbf16> to vector<256x128xbf16>
    %2 = arith.extf %1 : vector<256x128xbf16> to vector<256x128xf32>
    %c0_2 = arith.constant 0 : index
    %c0_3 = arith.constant 0 : index
    %3 = vector.load %arg4[%c0_2, %c0_3] : memref<1x128xf32, #tpu.memory_space<vmem>>, vector<1x128xf32>
    %4 = vector.broadcast %3 : vector<1x128xf32> to vector<256x128xf32>
    %5 = arith.mulf %2, %4 : vector<256x128xf32>
    %c0_4 = arith.constant 0 : index
    %c0_5 = arith.constant 0 : index
    %6 = vector.load %arg5[%c0_4, %c0_5] : memref<1x128xf32, #tpu.memory_space<vmem>>, vector<1x128xf32>
    %7 = vector.broadcast %6 : vector<1x128xf32> to vector<256x128xf32>
    %8 = arith.addf %5, %7 : vector<256x128xf32>
    %c0_6 = arith.constant 0 : index
    %c0_7 = arith.constant 0 : index
    %c0_8 = arith.constant 0 : index
    %9 = vector.load %arg3[%c0_6, %c0_7, %c0_8] : memref<1x256x128xbf16, #tpu.memory_space<vmem>>, vector<1x256x128xbf16>
    %10 = vector.shape_cast %9 : vector<1x256x128xbf16> to vector<256x128xbf16>
    %11 = arith.extf %10 : vector<256x128xbf16> to vector<256x128xf32>
    %12 = arith.addf %8, %11 : vector<256x128xf32>
    %cst = arith.constant 0.000000e+00 : f32
    %13 = vector.broadcast %cst : f32 to vector<256x128xf32>
    %14 = arith.maximumf %12, %13 : vector<256x128xf32>
    %15 = tpu.transpose %14, [1, 0] : vector<256x128xf32> -> vector<128x256xf32>
    %c0_9 = arith.constant 0 : index
    %c0_10 = arith.constant 0 : index
    %c0_11 = arith.constant 0 : index
    %16 = vector.load %arg6[%c0_9, %c0_10, %c0_11] : memref<1x128x256xf32, #tpu.memory_space<vmem>>, vector<1x128x256xf32>
    %17 = vector.shape_cast %16 : vector<1x128x256xf32> to vector<128x256xf32>
    %18 = vector.shape_cast %15 : vector<128x256xf32> to vector<1x128x256xf32>
    tpu.vector_store %arg6[%c0_9, %c0_10, %c0_11], %18 {strides = array<i32>} : memref<1x128x256xf32, #tpu.memory_space<vmem>>, vector<1x128x256xf32>,
    return
  }
  func.func @transform_0(%arg0: i32, %arg1: i32) -> (i32, i32, i32) {
    %c0_i32 = arith.constant 0 : i32
    %c0_i32_0 = arith.constant 0 : i32
    return %arg0, %arg1, %c0_i32 : i32, i32, i32
  }
  func.func @transform_1(%arg0: i32, %arg1: i32) -> (i32, i32, i32) {
    %c0_i32 = arith.constant 0 : i32
    %c0_i32_0 = arith.constant 0 : i32
    return %arg0, %arg1, %c0_i32 : i32, i32, i32
  }
  func.func @transform_2(%arg0: i32, %arg1: i32) -> (i32, i32) {
    %c0_i32 = arith.constant 0 : i32
    %c0_i32_0 = arith.constant 0 : i32
    %c0_i32_1 = arith.constant 0 : i32
    return %c0_i32, %c0_i32_0 : i32, i32
  }
  func.func @transform_3(%arg0: i32, %arg1: i32) -> (i32, i32) {
    %c0_i32 = arith.constant 0 : i32
    %c0_i32_0 = arith.constant 0 : i32
    %c0_i32_1 = arith.constant 0 : i32
    return %c0_i32, %c0_i32_0 : i32, i32
  }
  func.func @transform_4(%arg0: i32, %arg1: i32) -> (i32, i32, i32) {
    %c0_i32 = arith.constant 0 : i32
    %c0_i32_0 = arith.constant 0 : i32
    return %arg0, %c0_i32, %arg1 : i32, i32, i32
  }
}

</mosaic_0001>

<llo_original>
// kernel: residual_block_forward.5
$region0: #{residual_block_forward.5}
  #allocation0 [shape = 'u32[]', space=smem, size = 0x4, offset = 0x4, fixed_abs, tag = 'smem constant byte address 0x4 - core index']
  #allocation1 [shape = 'u32[144,128]{1,0:T(1,128)}', space=vmem, size = 0x12000, scoped, tag = 'internal scratch']
  %s0 = inlined_call_operand.vmem [shape: bf16[2,256,128], index: 0, kind: input, shape index: {}]
  %s1 = inlined_call_operand.vmem [shape: bf16[2,256,128], index: 1, kind: input, shape index: {}]
  %s2 = inlined_call_operand.vmem [shape: f32[1,128], index: 2, kind: input, shape index: {}]
  %s3 = inlined_call_operand.vmem [shape: f32[1,128], index: 3, kind: input, shape index: {}]
  %s4 = inlined_call_operand.vmem [shape: f32[2,128,256], index: 4, kind: output, shape index: {}]
  %s5 = sld [smem:[#allocation0]]
  $region49: #{residual_block_forward.5} parent=0
    _
  %s7 = ssub.s32 1, %s5
  %s8 = scalar_select 0, %s7, %s5
  loop: start=0, step=1, limit=4
  $region2: #{residual_block_forward.5} parent=0 // loop_pre_header
    _
  $region3: #{residual_block_forward.5} parent=0 // loop_header
    %s10 = sphi 0, %s14
    %p11 = scmp.ge.s32.totalorder %s10, 4
    %s17 = sphi 0, %s29
    %s18 = sphi 0, %s25
    %s19 = sphi 0, %s17
    %s20 = sphi 0, %s18
    %s21 = sphi 0, %s19
    %s22 = sphi 0, %s20
    %s34 = sphi 0, %s36
    %s37 = sphi 0, %s34
    %s38 = sphi 0, %s37
    %s54 = sphi 0, %s38
    %s62 = sphi 0, %s64
    %s65 = sphi 0, %s62
    %s66 = sphi 0, %s65
    %s82 = sphi 0, %s66
    %s86 = sphi 0, %s86
    %s88 = sphi 0, %s86
    %s89 = sphi 0, %s88
    %s103 = sphi 0, %s89
    %s107 = sphi 0, %s107
    %s109 = sphi 0, %s107
    %s110 = sphi 0, %s109
    %s124 = sphi 0, %s110
    %s132 = sphi 0, %s134
    %s135 = sphi 0, %s132
    %s136 = sphi 0, %s135
    %s152 = sphi 0, %s136
  $region4: #{residual_block_forward.5} parent=0 // loop_header_branch
    %13 = sbr.rel (%p11) target = $region8
  $region5: #{residual_block_forward.5} parent=0 // loop_body
    %s15 = ssub.s32 %s10, 1
    %s16 = ssub.s32 %s10, 2
    %s23 = sadd.s32 1, %s18
    %p24 = scmp.ge.s32.totalorder %s23, 1
    %s25 = scalar_select %p24, 0, %s23
    %s26 = sadd.s32 1, %s17
    %s27 = scalar_select %p24, %s26, %s17
    %p28 = scmp.ge.s32.totalorder %s27, 2
    %s29 = scalar_select %p28, 0, %s27
    %s30 = ssub.s32 %s17, %s29
    %s31 = ssub.s32 %s18, %s25
    %s32 = sor.u32 %s30, %s31
    %p33 = scmp.eq.s32.totalorder %s32, 0
    %s35 = sadd.s32 %s34, 1
    %s36 = scalar_select %p33, %s34, %s35
    %p39 = pneg %p33
    %p40 = scmp.eq.s32.totalorder %s10, 1
    %p41 = por %p39, %p40
    %p42 = scmp.ne.s32.totalorder %s34, %s37
    %p43 = scmp.eq.s32.totalorder %s10, 0
    %p44 = por %p42, %p43
    %p45 = scmp.ne.s32.totalorder %s34, %s37
    %p46 = scmp.eq.s32.totalorder %s15, 1
    %p47 = por %p45, %p46
    %p48 = scmp.ne.s32.totalorder %s37, %s38
    %p49 = scmp.eq.s32.totalorder %s15, 0
    %p50 = por %p48, %p49
    %p51 = scmp.ne.s32.totalorder %s37, %s38
    %p52 = scmp.eq.s32.totalorder %s16, 1
    %p53 = por %p51, %p52
    %p55 = scmp.ne.s32.totalorder %s38, %s54
    %p56 = scmp.eq.s32.totalorder %s16, 0
    %p57 = por %p55, %p56
    %s58 = ssub.s32 %s17, %s29
    %s59 = ssub.s32 %s18, %s25
    %s60 = sor.u32 %s58, %s59
    %p61 = scmp.eq.s32.totalorder %s60, 0
    %s63 = sadd.s32 %s62, 1
    %s64 = scalar_select %p61, %s62, %s63
    %p67 = pneg %p61
    %p68 = scmp.eq.s32.totalorder %s10, 1
    %p69 = por %p67, %p68
    %p70 = scmp.ne.s32.totalorder %s62, %s65
    %p71 = scmp.eq.s32.totalorder %s10, 0
    %p72 = por %p70, %p71
    %p73 = scmp.ne.s32.totalorder %s62, %s65
    %p74 = scmp.eq.s32.totalorder %s15, 1
    %p75 = por %p73, %p74
    %p76 = scmp.ne.s32.totalorder %s65, %s66
    %p77 = scmp.eq.s32.totalorder %s15, 0
    %p78 = por %p76, %p77
    %p79 = scmp.ne.s32.totalorder %s65, %s66
    %p80 = scmp.eq.s32.totalorder %s16, 1
    %p81 = por %p79, %p80
    %p83 = scmp.ne.s32.totalorder %s66, %s82
    %p84 = scmp.eq.s32.totalorder %s16, 0
    %p85 = por %p83, %p84
    %s87 = sadd.s32 %s86, 1
    %p90 = scmp.eq.s32.totalorder %s10, 1
    %p91 = scmp.ne.s32.totalorder %s86, %s88
    %p92 = scmp.eq.s32.totalorder %s10, 0
    %p93 = por %p91, %p92
    %p94 = scmp.ne.s32.totalorder %s86, %s88
    %p95 = scmp.eq.s32.totalorder %s15, 1
    %p96 = por %p94, %p95
    %p97 = scmp.ne.s32.totalorder %s88, %s89
    %p98 = scmp.eq.s32.totalorder %s15, 0
    %p99 = por %p97, %p98
    %p100 = scmp.ne.s32.totalorder %s88, %s89
    %p101 = scmp.eq.s32.totalorder %s16, 1
    %p102 = por %p100, %p101
    %p104 = scmp.ne.s32.totalorder %s89, %s103
    %p105 = scmp.eq.s32.totalorder %s16, 0
    %p106 = por %p104, %p105
    %s108 = sadd.s32 %s107, 1
    %p111 = scmp.eq.s32.totalorder %s10, 1
    %p112 = scmp.ne.s32.totalorder %s107, %s109
    %p113 = scmp.eq.s32.totalorder %s10, 0
    %p114 = por %p112, %p113
    %p115 = scmp.ne.s32.totalorder %s107, %s109
    %p116 = scmp.eq.s32.totalorder %s15, 1
    %p117 = por %p115, %p116
    %p118 = scmp.ne.s32.totalorder %s109, %s110
    %p119 = scmp.eq.s32.totalorder %s15, 0
    %p120 = por %p118, %p119
    %p121 = scmp.ne.s32.totalorder %s109, %s110
    %p122 = scmp.eq.s32.totalorder %s16, 1
    %p123 = por %p121, %p122
    %p125 = scmp.ne.s32.totalorder %s110, %s124
    %p126 = scmp.eq.s32.totalorder %s16, 0
    %p127 = por %p125, %p126
    %s128 = ssub.s32 %s17, %s29
    %s129 = ssub.s32 %s18, %s25
    %s130 = sor.u32 %s128, %s129
    %p131 = scmp.eq.s32.totalorder %s130, 0
    %s133 = sadd.s32 %s132, 1
    %s134 = scalar_select %p131, %s132, %s133
    %p137 = pneg %p131
    %p138 = scmp.eq.s32.totalorder %s10, 1
    %p139 = por %p137, %p138
    %p140 = scmp.ne.s32.totalorder %s132, %s135
    %p141 = scmp.eq.s32.totalorder %s10, 0
    %p142 = por %p140, %p141
    %p143 = scmp.ne.s32.totalorder %s132, %s135
    %p144 = scmp.eq.s32.totalorder %s15, 1
    %p145 = por %p143, %p144
    %p146 = scmp.ne.s32.totalorder %s135, %s136
    %p147 = scmp.eq.s32.totalorder %s15, 0
    %p148 = por %p146, %p147
    %p149 = scmp.ne.s32.totalorder %s135, %s136
    %p150 = scmp.eq.s32.totalorder %s16, 1
    %p151 = por %p149, %p150
    %p153 = scmp.ne.s32.totalorder %s136, %s152
    %p154 = scmp.eq.s32.totalorder %s16, 0
    %p155 = por %p153, %p154
    %p156 = scmp.le.s32.totalorder 1, %s10
    %p157 = scmp.lt.s32.totalorder %s10, 3
    %p158 = pnand %p156, %p157
    %p159 = pneg %p158
    // Predicated region
    $region9: #{residual_block_forward.5} parent=5 // pred_check
      _
    $region10: #{residual_block_forward.5} parent=5 // pred_check_branch
      %161 = sbr.rel (%p158) target = $region12
    $region11: #{residual_block_forward.5} parent=5 // pred_region
      %s162 = ssub.s32 %s10, 1
      // Predicated region
      $region13: #{residual_block_forward.5} parent=11 // pred_check
        %p163 = pneg %p99
      $region14: #{residual_block_forward.5} parent=11 // pred_check_branch
        %165 = sbr.rel (%p163) target = $region16
      $region15: #{residual_block_forward.5} parent=11 // pred_region
        _
      $region16: #{residual_block_forward.5} parent=11 // pred_fallthru
        _
      // Predicated region
      $region17: #{residual_block_forward.5} parent=11 // pred_check
        %p166 = pneg %p120
      $region18: #{residual_block_forward.5} parent=11 // pred_check_branch
        %168 = sbr.rel (%p166) target = $region20
      $region19: #{residual_block_forward.5} parent=11 // pred_region
        _
      $region20: #{residual_block_forward.5} parent=11 // pred_fallthru
        _
    $region12: #{residual_block_forward.5} parent=5 // pred_fallthru
      _
    %p169 = scmp.lt.s32.totalorder %s10, 2
    // Predicated region
    $region21: #{residual_block_forward.5} parent=5 // pred_check
      %p170 = pneg %p169
    $region22: #{residual_block_forward.5} parent=5 // pred_check_branch
      %172 = sbr.rel (%p170) target = $region24
    $region23: #{residual_block_forward.5} parent=5 // pred_region
      // Predicated region
      $region25: #{residual_block_forward.5} parent=23 // pred_check
        %p173 = pneg %p44
      $region26: #{residual_block_forward.5} parent=23 // pred_check_branch
        %175 = sbr.rel (%p173) target = $region28
      $region27: #{residual_block_forward.5} parent=23 // pred_region
        %s176 = smul.u32 32, %s18
        %p177 = scmp.lt.s32.totalorder %s17, 1
        %s178 = scalar_select %p177, %s17, 1
        %p179 = scmp.lt.s32.totalorder %s176, 31
        %s180 = scalar_select %p179, %s176, 31
        %s181 = smul.addr %s178, 32
        %s182 = sadd.s32 %s180, %s181
        %s183 = smul.addr %s182, 4
        %s184 = scalar_lea.vmem %s0, %s183
        %s185 = smul.u32 32, %s18
      $region28: #{residual_block_forward.5} parent=23 // pred_fallthru
        _
      // Predicated region
      $region29: #{residual_block_forward.5} parent=23 // pred_check
        %p186 = pneg %p72
      $region30: #{residual_block_forward.5} parent=23 // pred_check_branch
        %188 = sbr.rel (%p186) target = $region32
      $region31: #{residual_block_forward.5} parent=23 // pred_region
        %s189 = smul.u32 32, %s18
        %p190 = scmp.lt.s32.totalorder %s17, 1
        %s191 = scalar_select %p190, %s17, 1
        %p192 = scmp.lt.s32.totalorder %s189, 31
        %s193 = scalar_select %p192, %s189, 31
        %s194 = smul.addr %s191, 32
        %s195 = sadd.s32 %s193, %s194
        %s196 = smul.addr %s195, 4
        %s197 = scalar_lea.vmem %s1, %s196
        %s198 = smul.u32 32, %s18
      $region32: #{residual_block_forward.5} parent=23 // pred_fallthru
        _
    $region24: #{residual_block_forward.5} parent=5 // pred_fallthru
      _
    %p199 = scmp.le.s32.totalorder 1, %s10
    %p200 = scmp.lt.s32.totalorder %s10, 3
    %p201 = pnand %p199, %p200
    %p202 = pneg %p201
    // Predicated region
    $region33: #{residual_block_forward.5} parent=5 // pred_check
      _
    $region34: #{residual_block_forward.5} parent=5 // pred_check_branch
      %204 = sbr.rel (%p201) target = $region36
    $region35: #{residual_block_forward.5} parent=5 // pred_region
      %s205 = ssub.s32 %s10, 1
      %s206 = smul.u32 32, %s20
      %p207 = scmp.lt.s32.totalorder %s19, 1
      %s208 = scalar_select %p207, %s19, 1
      %p209 = scmp.lt.s32.totalorder %s206, 31
      %s210 = scalar_select %p209, %s206, 31
      %s211 = smul.addr %s208, 32
      %s212 = sadd.s32 %s210, %s211
      %s213 = smul.addr %s212, 4
      %s214 = scalar_lea.vmem %s0, %s213
      %p215 = pneg %p50
      %p216 = pneg %p47
      %s217 = smul.u32 32, %s20
      %p218 = scmp.lt.s32.totalorder %s19, 1
      %s219 = scalar_select %p218, %s19, 1
      %p220 = scmp.lt.s32.totalorder %s217, 31
      %s221 = scalar_select %p220, %s217, 31
      %s222 = smul.addr %s219, 32
      %s223 = sadd.s32 %s221, %s222
      %s224 = smul.addr %s223, 4
      %s225 = scalar_lea.vmem %s1, %s224
      %p226 = pneg %p78
      %p227 = pneg %p75
      %p228 = pneg %p99
      %p229 = pneg %p96
      %p230 = pneg %p120
      %p231 = pneg %p117
      %p232 = pneg %p148
      %p233 = pneg %p145
      %s234 = smul.u32 2, %s20
      %p235 = scmp.lt.s32.totalorder %s19, 1
      %s236 = scalar_select %p235, %s19, 1
      %p237 = scmp.lt.s32.totalorder %s234, 1
      %s238 = scalar_select %p237, %s234, 1
      %s239 = smul.addr %s236, 32
      %s240 = sadd.s32 %s238, %s239
      %s241 = smul.addr %s240, 8
      %s242 = scalar_lea.vmem %s4, %s241
      %s243 = smul.u32 32, %s20
      %p244 = scmp.lt.s32.totalorder %s19, 1
      %s245 = scalar_select %p244, %s19, 1
      %p246 = scmp.lt.s32.totalorder %s243, 31
      %s247 = scalar_select %p246, %s243, 31
      %s248 = smul.addr %s245, 32
      %s249 = sadd.s32 %s247, %s248
      %s250 = smul.addr %s249, 4
      %s251 = scalar_lea.vmem %s0, %s250
      %s252 = smul.u32 32, %s20
      %s253 = smul.u32 32, %s20
      %p254 = scmp.lt.s32.totalorder %s19, 1
      %s255 = scalar_select %p254, %s19, 1
      %p256 = scmp.lt.s32.totalorder %s253, 31
      %s257 = scalar_select %p256, %s253, 31
      %s258 = smul.addr %s255, 32
      %s259 = sadd.s32 %s257, %s258
      %s260 = smul.addr %s259, 4
      %s261 = scalar_lea.vmem %s1, %s260
      %s262 = smul.u32 32, %s20
      %s263 = smul.u32 2, %s20
      %p264 = scmp.lt.s32.totalorder %s19, 1
      %s265 = scalar_select %p264, %s19, 1
      %p266 = scmp.lt.s32.totalorder %s263, 1
      %s267 = scalar_select %p266, %s263, 1
      %s268 = smul.addr %s265, 32
      %s269 = sadd.s32 %s267, %s268
      %s270 = smul.addr %s269, 8
      %s271 = scalar_lea.vmem %s4, %s270
      %s272 = smul.u32 2, %s20
      %v273 = vld [vmem:[%s251] sm:$0xf]
      %v274 = vld [vmem:[%s251 + $0x4] sm:$0xf]
      %v275 = vld [vmem:[%s251 + $0x8] sm:$0xf]
      %v276 = vld [vmem:[%s251 + $0xc] sm:$0xf]
      %v277 = vld [vmem:[%s251 + $0x10] sm:$0xf]
      %v278 = vld [vmem:[%s251 + $0x14] sm:$0xf]
      %v279 = vld [vmem:[%s251 + $0x18] sm:$0xf]
      %v280 = vld [vmem:[%s251 + $0x1c] sm:$0xf]
      %v281 = vld [vmem:[%s251 + $0x20] sm:$0xf]
      %v282 = vld [vmem:[%s251 + $0x24] sm:$0xf]
      %v283 = vld [vmem:[%s251 + $0x28] sm:$0xf]
      %v284 = vld [vmem:[%s251 + $0x2c] sm:$0xf]
      %v285 = vld [vmem:[%s251 + $0x30] sm:$0xf]
      %v286 = vld [vmem:[%s251 + $0x34] sm:$0xf]
      %v287 = vld [vmem:[%s251 + $0x38] sm:$0xf]
      %v288 = vld [vmem:[%s251 + $0x3c] sm:$0xf]
      %v289 = vld [vmem:[%s251 + $0x40] sm:$0xf]
      %v290 = vld [vmem:[%s251 + $0x44] sm:$0xf]
      %v291 = vld [vmem:[%s251 + $0x48] sm:$0xf]
      %v292 = vld [vmem:[%s251 + $0x4c] sm:$0xf]
      %v293 = vld [vmem:[%s251 + $0x50] sm:$0xf]
      %v294 = vld [vmem:[%s251 + $0x54] sm:$0xf]
      %v295 = vld [vmem:[%s251 + $0x58] sm:$0xf]
      %v296 = vld [vmem:[%s251 + $0x5c] sm:$0xf]
      %v297 = vld [vmem:[%s251 + $0x60] sm:$0xf]
      %v298 = vld [vmem:[%s251 + $0x64] sm:$0xf]
      %v299 = vld [vmem:[%s251 + $0x68] sm:$0xf]
      %v300 = vld [vmem:[%s251 + $0x6c] sm:$0xf]
      %v301 = vld [vmem:[%s251 + $0x70] sm:$0xf]
      %v302 = vld [vmem:[%s251 + $0x74] sm:$0xf]
      %v303 = vld [vmem:[%s251 + $0x78] sm:$0xf]
      %v304 = vld [vmem:[%s251 + $0x7c] sm:$0xf]
      %v305 = vunpack.c.l.bf16 %v273
      %v306 = vunpack.c.l.bf16 %v274
      %v307 = vunpack.c.l.bf16 %v275
      %v308 = vunpack.c.l.bf16 %v276
      %v309 = vunpack.c.l.bf16 %v277
      %v310 = vunpack.c.l.bf16 %v278
      %v311 = vunpack.c.l.bf16 %v279
      %v312 = vunpack.c.l.bf16 %v280
      %v313 = vunpack.c.l.bf16 %v281
      %v314 = vunpack.c.l.bf16 %v282
      %v315 = vunpack.c.l.bf16 %v283
      %v316 = vunpack.c.l.bf16 %v284
      %v317 = vunpack.c.l.bf16 %v285
      %v318 = vunpack.c.l.bf16 %v286
      %v319 = vunpack.c.l.bf16 %v287
      %v320 = vunpack.c.l.bf16 %v288
      %v321 = vunpack.c.l.bf16 %v289
      %v322 = vunpack.c.l.bf16 %v290
      %v323 = vunpack.c.l.bf16 %v291
      %v324 = vunpack.c.l.bf16 %v292
      %v325 = vunpack.c.l.bf16 %v293
      %v326 = vunpack.c.l.bf16 %v294
      %v327 = vunpack.c.l.bf16 %v295
      %v328 = vunpack.c.l.bf16 %v296
      %v329 = vunpack.c.l.bf16 %v297
      %v330 = vunpack.c.l.bf16 %v298
      %v331 = vunpack.c.l.bf16 %v299
      %v332 = vunpack.c.l.bf16 %v300
      %v333 = vunpack.c.l.bf16 %v301
      %v334 = vunpack.c.l.bf16 %v302
      %v335 = vunpack.c.l.bf16 %v303
      %v336 = vunpack.c.l.bf16 %v304
      %v337 = vld [vmem:[%s2] sm:$0x1]
      %v339 = vlaneseq
      %v340 = vshrl.u32 %v339, 7
      %v341 = vsub.s32 0, %v340
      %v342 = vrot.slane %v337, %v341
      %v344 = vmul.f32 %v305, %v342
      %v345 = vmul.f32 %v306, %v342
      %v346 = vmul.f32 %v307, %v342
      %v347 = vmul.f32 %v308, %v342
      %v348 = vmul.f32 %v309, %v342
      %v349 = vmul.f32 %v310, %v342
      %v350 = vmul.f32 %v311, %v342
      %v351 = vmul.f32 %v312, %v342
      %v352 = vmul.f32 %v313, %v342
      %v353 = vmul.f32 %v314, %v342
      %v354 = vmul.f32 %v315, %v342
      %v355 = vmul.f32 %v316, %v342
      %v356 = vmul.f32 %v317, %v342
      %v357 = vmul.f32 %v318, %v342
      %v358 = vmul.f32 %v319, %v342
      %v359 = vmul.f32 %v320, %v342
      %v360 = vmul.f32 %v321, %v342
      %v361 = vmul.f32 %v322, %v342
      %v362 = vmul.f32 %v323, %v342
      %v363 = vmul.f32 %v324, %v342
      %v364 = vmul.f32 %v325, %v342
      %v365 = vmul.f32 %v326, %v342
      %v366 = vmul.f32 %v327, %v342
      %v367 = vmul.f32 %v328, %v342
      %v368 = vmul.f32 %v329, %v342
      %v369 = vmul.f32 %v330, %v342
      %v370 = vmul.f32 %v331, %v342
      %v371 = vmul.f32 %v332, %v342
      %v372 = vmul.f32 %v333, %v342
      %v373 = vmul.f32 %v334, %v342
      %v374 = vmul.f32 %v335, %v342
      %v375 = vmul.f32 %v336, %v342
      %v376 = vld [vmem:[%s3] sm:$0x1]
      %v378 = vlaneseq
      %v379 = vshrl.u32 %v378, 7
      %v380 = vsub.s32 0, %v379
      %v381 = vrot.slane %v376, %v380
      %v383 = vadd.f32 %v344, %v381
      %v384 = vadd.f32 %v345, %v381
      %v385 = vadd.f32 %v346, %v381
      %v386 = vadd.f32 %v347, %v381
      %v387 = vadd.f32 %v348, %v381
      %v388 = vadd.f32 %v349, %v381
      %v389 = vadd.f32 %v350, %v381
      %v390 = vadd.f32 %v351, %v381
      %v391 = vadd.f32 %v352, %v381
      %v392 = vadd.f32 %v353, %v381
      %v393 = vadd.f32 %v354, %v381
      %v394 = vadd.f32 %v355, %v381
      %v395 = vadd.f32 %v356, %v381
      %v396 = vadd.f32 %v357, %v381
      %v397 = vadd.f32 %v358, %v381
      %v398 = vadd.f32 %v359, %v381
      %v399 = vadd.f32 %v360, %v381
      %v400 = vadd.f32 %v361, %v381
      %v401 = vadd.f32 %v362, %v381
      %v402 = vadd.f32 %v363, %v381
      %v403 = vadd.f32 %v364, %v381
      %v404 = vadd.f32 %v365, %v381
      %v405 = vadd.f32 %v366, %v381
      %v406 = vadd.f32 %v367, %v381
      %v407 = vadd.f32 %v368, %v381
      %v408 = vadd.f32 %v369, %v381
      %v409 = vadd.f32 %v370, %v381
      %v410 = vadd.f32 %v371, %v381
      %v411 = vadd.f32 %v372, %v381
      %v412 = vadd.f32 %v373, %v381
      %v413 = vadd.f32 %v374, %v381
      %v414 = vadd.f32 %v375, %v381
      %v415 = vld [vmem:[%s261] sm:$0xf]
      %v416 = vld [vmem:[%s261 + $0x4] sm:$0xf]
      %v417 = vld [vmem:[%s261 + $0x8] sm:$0xf]
      %v418 = vld [vmem:[%s261 + $0xc] sm:$0xf]
      %v419 = vld [vmem:[%s261 + $0x10] sm:$0xf]
      %v420 = vld [vmem:[%s261 + $0x14] sm:$0xf]
      %v421 = vld [vmem:[%s261 + $0x18] sm:$0xf]
      %v422 = vld [vmem:[%s261 + $0x1c] sm:$0xf]
      %v423 = vld [vmem:[%s261 + $0x20] sm:$0xf]
      %v424 = vld [vmem:[%s261 + $0x24] sm:$0xf]
      %v425 = vld [vmem:[%s261 + $0x28] sm:$0xf]
      %v426 = vld [vmem:[%s261 + $0x2c] sm:$0xf]
      %v427 = vld [vmem:[%s261 + $0x30] sm:$0xf]
      %v428 = vld [vmem:[%s261 + $0x34] sm:$0xf]
      %v429 = vld [vmem:[%s261 + $0x38] sm:$0xf]
      %v430 = vld [vmem:[%s261 + $0x3c] sm:$0xf]
      %v431 = vld [vmem:[%s261 + $0x40] sm:$0xf]
      %v432 = vld [vmem:[%s261 + $0x44] sm:$0xf]
      %v433 = vld [vmem:[%s261 + $0x48] sm:$0xf]
      %v434 = vld [vmem:[%s261 + $0x4c] sm:$0xf]
      %v435 = vld [vmem:[%s261 + $0x50] sm:$0xf]
      %v436 = vld [vmem:[%s261 + $0x54] sm:$0xf]
      %v437 = vld [vmem:[%s261 + $0x58] sm:$0xf]
      %v438 = vld [vmem:[%s261 + $0x5c] sm:$0xf]
      %v439 = vld [vmem:[%s261 + $0x60] sm:$0xf]
      %v440 = vld [vmem:[%s261 + $0x64] sm:$0xf]
      %v441 = vld [vmem:[%s261 + $0x68] sm:$0xf]
      %v442 = vld [vmem:[%s261 + $0x6c] sm:$0xf]
      %v443 = vld [vmem:[%s261 + $0x70] sm:$0xf]
      %v444 = vld [vmem:[%s261 + $0x74] sm:$0xf]
      %v445 = vld [vmem:[%s261 + $0x78] sm:$0xf]
      %v446 = vld [vmem:[%s261 + $0x7c] sm:$0xf]
      %v447 = vunpack.c.l.bf16 %v415
      %v448 = vunpack.c.l.bf16 %v416
      %v449 = vunpack.c.l.bf16 %v417
      %v450 = vunpack.c.l.bf16 %v418
      %v451 = vunpack.c.l.bf16 %v419
      %v452 = vunpack.c.l.bf16 %v420
      %v453 = vunpack.c.l.bf16 %v421
      %v454 = vunpack.c.l.bf16 %v422
      %v455 = vunpack.c.l.bf16 %v423
      %v456 = vunpack.c.l.bf16 %v424
      %v457 = vunpack.c.l.bf16 %v425
      %v458 = vunpack.c.l.bf16 %v426
      %v459 = vunpack.c.l.bf16 %v427
      %v460 = vunpack.c.l.bf16 %v428
      %v461 = vunpack.c.l.bf16 %v429
      %v462 = vunpack.c.l.bf16 %v430
      %v463 = vunpack.c.l.bf16 %v431
      %v464 = vunpack.c.l.bf16 %v432
      %v465 = vunpack.c.l.bf16 %v433
      %v466 = vunpack.c.l.bf16 %v434
      %v467 = vunpack.c.l.bf16 %v435
      %v468 = vunpack.c.l.bf16 %v436
      %v469 = vunpack.c.l.bf16 %v437
      %v470 = vunpack.c.l.bf16 %v438
      %v471 = vunpack.c.l.bf16 %v439
      %v472 = vunpack.c.l.bf16 %v440
      %v473 = vunpack.c.l.bf16 %v441
      %v474 = vunpack.c.l.bf16 %v442
      %v475 = vunpack.c.l.bf16 %v443
      %v476 = vunpack.c.l.bf16 %v444
      %v477 = vunpack.c.l.bf16 %v445
      %v478 = vunpack.c.l.bf16 %v446
      %v479 = vadd.f32 %v383, %v447
      %v480 = vadd.f32 %v384, %v448
      %v481 = vadd.f32 %v385, %v449
      %v482 = vadd.f32 %v386, %v450
      %v483 = vadd.f32 %v387, %v451
      %v484 = vadd.f32 %v388, %v452
      %v485 = vadd.f32 %v389, %v453
      %v486 = vadd.f32 %v390, %v454
      %v487 = vadd.f32 %v391, %v455
      %v488 = vadd.f32 %v392, %v456
      %v489 = vadd.f32 %v393, %v457
      %v490 = vadd.f32 %v394, %v458
      %v491 = vadd.f32 %v395, %v459
      %v492 = vadd.f32 %v396, %v460
      %v493 = vadd.f32 %v397, %v461
      %v494 = vadd.f32 %v398, %v462
      %v495 = vadd.f32 %v399, %v463
      %v496 = vadd.f32 %v400, %v464
      %v497 = vadd.f32 %v401, %v465
      %v498 = vadd.f32 %v402, %v466
      %v499 = vadd.f32 %v403, %v467
      %v500 = vadd.f32 %v404, %v468
      %v501 = vadd.f32 %v405, %v469
      %v502 = vadd.f32 %v406, %v470
      %v503 = vadd.f32 %v407, %v471
      %v504 = vadd.f32 %v408, %v472
      %v505 = vadd.f32 %v409, %v473
      %v506 = vadd.f32 %v410, %v474
      %v507 = vadd.f32 %v411, %v475
      %v508 = vadd.f32 %v412, %v476
      %v509 = vadd.f32 %v413, %v477
      %v510 = vadd.f32 %v414, %v478
      %v511 = vmax.f32 %v479, 0.0
      %v512 = vmax.f32 %v480, 0.0
      %v513 = vmax.f32 %v481, 0.0
      %v514 = vmax.f32 %v482, 0.0
      %v515 = vmax.f32 %v483, 0.0
      %v516 = vmax.f32 %v484, 0.0
      %v517 = vmax.f32 %v485, 0.0
      %v518 = vmax.f32 %v486, 0.0
      %v519 = vmax.f32 %v487, 0.0
      %v520 = vmax.f32 %v488, 0.0
      %v521 = vmax.f32 %v489, 0.0
      %v522 = vmax.f32 %v490, 0.0
      %v523 = vmax.f32 %v491, 0.0
      %v524 = vmax.f32 %v492, 0.0
      %v525 = vmax.f32 %v493, 0.0
      %v526 = vmax.f32 %v494, 0.0
      %v527 = vmax.f32 %v495, 0.0
      %v528 = vmax.f32 %v496, 0.0
      %v529 = vmax.f32 %v497, 0.0
      %v530 = vmax.f32 %v498, 0.0
      %v531 = vmax.f32 %v499, 0.0
      %v532 = vmax.f32 %v500, 0.0
      %v533 = vmax.f32 %v501, 0.0
      %v534 = vmax.f32 %v502, 0.0
      %v535 = vmax.f32 %v503, 0.0
      %v536 = vmax.f32 %v504, 0.0
      %v537 = vmax.f32 %v505, 0.0
      %v538 = vmax.f32 %v506, 0.0
      %v539 = vmax.f32 %v507, 0.0
      %v540 = vmax.f32 %v508, 0.0
      %v541 = vmax.f32 %v509, 0.0
      %v542 = vmax.f32 %v510, 0.0
      %543 = vxpose.xlu0.b32.start [1/16] %v511, 128
      %544 = vxpose.xlu0.b32.cont [2/16] %v512, 128
      %545 = vxpose.xlu0.b32.cont [3/16] %v513, 128
      %546 = vxpose.xlu0.b32.cont [4/16] %v514, 128
      %547 = vxpose.xlu0.b32.cont [5/16] %v515, 128
      %548 = vxpose.xlu0.b32.cont [6/16] %v516, 128
      %549 = vxpose.xlu0.b32.cont [7/16] %v517, 128
      %550 = vxpose.xlu0.b32.cont [8/16] %v518, 128
      %551 = vxpose.xlu0.b32.cont [9/16] %v519, 128
      %552 = vxpose.xlu0.b32.cont [10/16] %v520, 128
      %553 = vxpose.xlu0.b32.cont [11/16] %v521, 128
      %554 = vxpose.xlu0.b32.cont [12/16] %v522, 128
      %555 = vxpose.xlu0.b32.cont [13/16] %v523, 128
      %556 = vxpose.xlu0.b32.cont [14/16] %v524, 128
      %557 = vxpose.xlu0.b32.cont [15/16] %v525, 128
      %558 = vxpose.xlu0.b32.end [16/16] %v526, 128
      %v559 = vpop.trf.xlu0
      %v560 = vpop.trf.xlu0
      %v561 = vpop.trf.xlu0
      %v562 = vpop.trf.xlu0
      %v563 = vpop.trf.xlu0
      %v564 = vpop.trf.xlu0
      %v565 = vpop.trf.xlu0
      %v566 = vpop.trf.xlu0
      %v567 = vpop.trf.xlu0
      %v568 = vpop.trf.xlu0
      %v569 = vpop.trf.xlu0
      %v570 = vpop.trf.xlu0
      %v571 = vpop.trf.xlu0
      %v572 = vpop.trf.xlu0
      %v573 = vpop.trf.xlu0
      %v574 = vpop.trf.xlu0
      %575 = vxpose.xlu0.b32.start [1/16] %v527, 128
      %576 = vxpose.xlu0.b32.cont [2/16] %v528, 128
      %577 = vxpose.xlu0.b32.cont [3/16] %v529, 128
      %578 = vxpose.xlu0.b32.cont [4/16] %v530, 128
      %579 = vxpose.xlu0.b32.cont [5/16] %v531, 128
      %580 = vxpose.xlu0.b32.cont [6/16] %v532, 128
      %581 = vxpose.xlu0.b32.cont [7/16] %v533, 128
      %582 = vxpose.xlu0.b32.cont [8/16] %v534, 128
      %583 = vxpose.xlu0.b32.cont [9/16] %v535, 128
      %584 = vxpose.xlu0.b32.cont [10/16] %v536, 128
      %585 = vxpose.xlu0.b32.cont [11/16] %v537, 128
      %586 = vxpose.xlu0.b32.cont [12/16] %v538, 128
      %587 = vxpose.xlu0.b32.cont [13/16] %v539, 128
      %588 = vxpose.xlu0.b32.cont [14/16] %v540, 128
      %589 = vxpose.xlu0.b32.cont [15/16] %v541, 128
      %590 = vxpose.xlu0.b32.end [16/16] %v542, 128
      %v591 = vpop.trf.xlu0
      %v592 = vpop.trf.xlu0
      %v593 = vpop.trf.xlu0
      %v594 = vpop.trf.xlu0
      %v595 = vpop.trf.xlu0
      %v596 = vpop.trf.xlu0
      %v597 = vpop.trf.xlu0
      %v598 = vpop.trf.xlu0
      %v599 = vpop.trf.xlu0
      %v600 = vpop.trf.xlu0
      %v601 = vpop.trf.xlu0
      %v602 = vpop.trf.xlu0
      %v603 = vpop.trf.xlu0
      %v604 = vpop.trf.xlu0
      %v605 = vpop.trf.xlu0
      %v606 = vpop.trf.xlu0
      %607 = vst [vmem:[%s271] sm:$0xff] %v559
      %608 = vst [vmem:[%s271 + $0x8] sm:$0xff] %v591
      %609 = vst [vmem:[%s271 + $0x10] sm:$0xff] %v560
      %610 = vst [vmem:[%s271 + $0x18] sm:$0xff] %v592
      %611 = vst [vmem:[%s271 + $0x20] sm:$0xff] %v561
      %612 = vst [vmem:[%s271 + $0x28] sm:$0xff] %v593
      %613 = vst [vmem:[%s271 + $0x30] sm:$0xff] %v562
      %614 = vst [vmem:[%s271 + $0x38] sm:$0xff] %v594
      %615 = vst [vmem:[%s271 + $0x40] sm:$0xff] %v563
      %616 = vst [vmem:[%s271 + $0x48] sm:$0xff] %v595
      %617 = vst [vmem:[%s271 + $0x50] sm:$0xff] %v564
      %618 = vst [vmem:[%s271 + $0x58] sm:$0xff] %v596
      %619 = vst [vmem:[%s271 + $0x60] sm:$0xff] %v565
      %620 = vst [vmem:[%s271 + $0x68] sm:$0xff] %v597
      %621 = vst [vmem:[%s271 + $0x70] sm:$0xff] %v566
      %622 = vst [vmem:[%s271 + $0x78] sm:$0xff] %v598
      %623 = vst [vmem:[%s271 + $0x80] sm:$0xff] %v567
      %624 = vst [vmem:[%s271 + $0x88] sm:$0xff] %v599
      %625 = vst [vmem:[%s271 + $0x90] sm:$0xff] %v568
      %626 = vst [vmem:[%s271 + $0x98] sm:$0xff] %v600
      %627 = vst [vmem:[%s271 + $0xa0] sm:$0xff] %v569
      %628 = vst [vmem:[%s271 + $0xa8] sm:$0xff] %v601
      %629 = vst [vmem:[%s271 + $0xb0] sm:$0xff] %v570
      %630 = vst [vmem:[%s271 + $0xb8] sm:$0xff] %v602
      %631 = vst [vmem:[%s271 + $0xc0] sm:$0xff] %v571
      %632 = vst [vmem:[%s271 + $0xc8] sm:$0xff] %v603
      %633 = vst [vmem:[%s271 + $0xd0] sm:$0xff] %v572
      %634 = vst [vmem:[%s271 + $0xd8] sm:$0xff] %v604
      %635 = vst [vmem:[%s271 + $0xe0] sm:$0xff] %v573
      %636 = vst [vmem:[%s271 + $0xe8] sm:$0xff] %v605
      %637 = vst [vmem:[%s271 + $0xf0] sm:$0xff] %v574
      %638 = vst [vmem:[%s271 + $0xf8] sm:$0xff] %v606
      %s639 = smul.u32 2, %s20
      %p640 = scmp.lt.s32.totalorder %s19, 1
      %s641 = scalar_select %p640, %s19, 1
      %p642 = scmp.lt.s32.totalorder %s639, 1
      %s643 = scalar_select %p642, %s639, 1
      %s644 = smul.addr %s641, 32
      %s645 = sadd.s32 %s643, %s644
      %s646 = smul.addr %s645, 8
      %s647 = scalar_lea.vmem %s4, %s646
      // Predicated region
      $region37: #{residual_block_forward.5} parent=35 // pred_check
        %p648 = pneg %p145
      $region38: #{residual_block_forward.5} parent=35 // pred_check_branch
        %650 = sbr.rel (%p648) target = $region40
      $region39: #{residual_block_forward.5} parent=35 // pred_region
        %s651 = smul.u32 2, %s20
      $region40: #{residual_block_forward.5} parent=35 // pred_fallthru
        _
    $region36: #{residual_block_forward.5} parent=5 // pred_fallthru
      _
    %p652 = scmp.le.s32.totalorder 2, %s10
    // Predicated region
    $region41: #{residual_block_forward.5} parent=5 // pred_check
      %p653 = pneg %p652
    $region42: #{residual_block_forward.5} parent=5 // pred_check_branch
      %655 = sbr.rel (%p653) target = $region44
    $region43: #{residual_block_forward.5} parent=5 // pred_region
      %s656 = ssub.s32 %s10, 2
      // Predicated region
      $region45: #{residual_block_forward.5} parent=43 // pred_check
        %p657 = pneg %p151
      $region46: #{residual_block_forward.5} parent=43 // pred_check_branch
        %659 = sbr.rel (%p657) target = $region48
      $region47: #{residual_block_forward.5} parent=43 // pred_region
        %s660 = smul.u32 2, %s22
        %p661 = scmp.lt.s32.totalorder %s21, 1
        %s662 = scalar_select %p661, %s21, 1
        %p663 = scmp.lt.s32.totalorder %s660, 1
        %s664 = scalar_select %p663, %s660, 1
        %s665 = smul.addr %s662, 32
        %s666 = sadd.s32 %s664, %s665
        %s667 = smul.addr %s666, 8
        %s668 = scalar_lea.vmem %s4, %s667
      $region48: #{residual_block_forward.5} parent=43 // pred_fallthru
        _
    $region44: #{residual_block_forward.5} parent=5 // pred_fallthru
      _
  $region6: #{residual_block_forward.5} parent=0 // loop_footer
    %s14 = sadd.s32 1, %s10
  $region7: #{residual_block_forward.5} parent=0 // loop_footer_branch
    %9 = sbr.rel target = $region3
  $region8: #{residual_block_forward.5} parent=0 // loop_exit
    _

// kernel: residual_block_forward.4
$region0: #{residual_block_forward.4}
  #allocation0 [shape = 'u32[]', space=smem, size = 0x4, offset = 0x4, fixed_abs, tag = 'smem constant byte address 0x4 - core index']
  #allocation1 [shape = 'u32[144,128]{1,0:T(1,128)}', space=vmem, size = 0x12000, scoped, tag = 'internal scratch']
  #allocation2 [shape = 'bf16[18,18,128]{2,1,0:T(8,128)(2,1)}', space=vmem, size = 0x1b000, scoped, tag = 'scratch operand']
  #allocation3 [shape = 'f32[256,128]{1,0:T(8,128)}', space=vmem, size = 0x20000, scoped, tag = 'scratch operand']
  %s0 = inlined_call_operand.vmem [shape: bf16[2,256,128], index: 0, kind: input, shape index: {}]
  %s1 = inlined_call_operand.vmem [shape: f32[1,128], index: 1, kind: input, shape index: {}]
  %s2 = inlined_call_operand.vmem [shape: f32[1,128], index: 2, kind: input, shape index: {}]
  %s3 = inlined_call_operand.vmem [shape: bf16[3,384,128], index: 3, kind: input, shape index: {}]
  %s4 = inlined_call_operand.vmem [shape: bf16[2,256,128], index: 4, kind: output, shape index: {0}]
  %s5 = inlined_call_operand.vmem [shape: f32[2,128], index: 5, kind: output, shape index: {1}]
  %6 = xla_tuple %s4, %s5
  %s7 = sld [smem:[#allocation0]]
  $region61: #{residual_block_forward.4} parent=0
    _
  %s9 = ssub.s32 1, %s7
  %s10 = scalar_select 0, %s9, %s7
  loop: start=0, step=1, limit=4
  $region2: #{residual_block_forward.4} parent=0 // loop_pre_header
    _
  $region3: #{residual_block_forward.4} parent=0 // loop_header
    %s12 = sphi 0, %s16
    %p13 = scmp.ge.s32.totalorder %s12, 4
    %s22 = sphi 0, %s24
    %s25 = sphi 0, %s22
    %s26 = sphi 0, %s25
    %s42 = sphi 0, %s26
    %s46 = sphi 0, %s46
    %s48 = sphi 0, %s46
    %s49 = sphi 0, %s48
    %s63 = sphi 0, %s49
    %s67 = sphi 0, %s67
    %s69 = sphi 0, %s67
    %s70 = sphi 0, %s69
    %s84 = sphi 0, %s70
    %s88 = sphi 0, %s88
    %s90 = sphi 0, %s88
    %s91 = sphi 0, %s90
    %s105 = sphi 0, %s91
    %s111 = sphi 0, %s113
    %s114 = sphi 0, %s111
    %s115 = sphi 0, %s114
    %s131 = sphi 0, %s115
    %s135 = sphi 0, %s135
    %s137 = sphi 0, %s135
    %s138 = sphi 0, %s137
    %s152 = sphi 0, %s138
  $region4: #{residual_block_forward.4} parent=0 // loop_header_branch
    %15 = sbr.rel (%p13) target = $region8
  $region5: #{residual_block_forward.4} parent=0 // loop_body
    %s17 = ssub.s32 %s12, 1
    %s18 = ssub.s32 %s12, 2
    %s19 = sadd.s32 %s12, 1
    %s20 = ssub.s32 %s12, %s19
    %p21 = scmp.eq.s32.totalorder %s20, 0
    %s23 = sadd.s32 %s22, 1
    %s24 = scalar_select %p21, %s22, %s23
    %p27 = pneg %p21
    %p28 = scmp.eq.s32.totalorder %s12, 1
    %p29 = por %p27, %p28
    %p30 = scmp.ne.s32.totalorder %s22, %s25
    %p31 = scmp.eq.s32.totalorder %s12, 0
    %p32 = por %p30, %p31
    %p33 = scmp.ne.s32.totalorder %s22, %s25
    %p34 = scmp.eq.s32.totalorder %s17, 1
    %p35 = por %p33, %p34
    %p36 = scmp.ne.s32.totalorder %s25, %s26
    %p37 = scmp.eq.s32.totalorder %s17, 0
    %p38 = por %p36, %p37
    %p39 = scmp.ne.s32.totalorder %s25, %s26
    %p40 = scmp.eq.s32.totalorder %s18, 1
    %p41 = por %p39, %p40
    %p43 = scmp.ne.s32.totalorder %s26, %s42
    %p44 = scmp.eq.s32.totalorder %s18, 0
    %p45 = por %p43, %p44
    %s47 = sadd.s32 %s46, 1
    %p50 = scmp.eq.s32.totalorder %s12, 1
    %p51 = scmp.ne.s32.totalorder %s46, %s48
    %p52 = scmp.eq.s32.totalorder %s12, 0
    %p53 = por %p51, %p52
    %p54 = scmp.ne.s32.totalorder %s46, %s48
    %p55 = scmp.eq.s32.totalorder %s17, 1
    %p56 = por %p54, %p55
    %p57 = scmp.ne.s32.totalorder %s48, %s49
    %p58 = scmp.eq.s32.totalorder %s17, 0
    %p59 = por %p57, %p58
    %p60 = scmp.ne.s32.totalorder %s48, %s49
    %p61 = scmp.eq.s32.totalorder %s18, 1
    %p62 = por %p60, %p61
    %p64 = scmp.ne.s32.totalorder %s49, %s63
    %p65 = scmp.eq.s32.totalorder %s18, 0
    %p66 = por %p64, %p65
    %s68 = sadd.s32 %s67, 1
    %p71 = scmp.eq.s32.totalorder %s12, 1
    %p72 = scmp.ne.s32.totalorder %s67, %s69
    %p73 = scmp.eq.s32.totalorder %s12, 0
    %p74 = por %p72, %p73
    %p75 = scmp.ne.s32.totalorder %s67, %s69
    %p76 = scmp.eq.s32.totalorder %s17, 1
    %p77 = por %p75, %p76
    %p78 = scmp.ne.s32.totalorder %s69, %s70
    %p79 = scmp.eq.s32.totalorder %s17, 0
    %p80 = por %p78, %p79
    %p81 = scmp.ne.s32.totalorder %s69, %s70
    %p82 = scmp.eq.s32.totalorder %s18, 1
    %p83 = por %p81, %p82
    %p85 = scmp.ne.s32.totalorder %s70, %s84
    %p86 = scmp.eq.s32.totalorder %s18, 0
    %p87 = por %p85, %p86
    %s89 = sadd.s32 %s88, 1
    %p92 = scmp.eq.s32.totalorder %s12, 1
    %p93 = scmp.ne.s32.totalorder %s88, %s90
    %p94 = scmp.eq.s32.totalorder %s12, 0
    %p95 = por %p93, %p94
    %p96 = scmp.ne.s32.totalorder %s88, %s90
    %p97 = scmp.eq.s32.totalorder %s17, 1
    %p98 = por %p96, %p97
    %p99 = scmp.ne.s32.totalorder %s90, %s91
    %p100 = scmp.eq.s32.totalorder %s17, 0
    %p101 = por %p99, %p100
    %p102 = scmp.ne.s32.totalorder %s90, %s91
    %p103 = scmp.eq.s32.totalorder %s18, 1
    %p104 = por %p102, %p103
    %p106 = scmp.ne.s32.totalorder %s91, %s105
    %p107 = scmp.eq.s32.totalorder %s18, 0
    %p108 = por %p106, %p107
    %s109 = ssub.s32 %s12, %s19
    %p110 = scmp.eq.s32.totalorder %s109, 0
    %s112 = sadd.s32 %s111, 1
    %s113 = scalar_select %p110, %s111, %s112
    %p116 = pneg %p110
    %p117 = scmp.eq.s32.totalorder %s12, 1
    %p118 = por %p116, %p117
    %p119 = scmp.ne.s32.totalorder %s111, %s114
    %p120 = scmp.eq.s32.totalorder %s12, 0
    %p121 = por %p119, %p120
    %p122 = scmp.ne.s32.totalorder %s111, %s114
    %p123 = scmp.eq.s32.totalorder %s17, 1
    %p124 = por %p122, %p123
    %p125 = scmp.ne.s32.totalorder %s114, %s115
    %p126 = scmp.eq.s32.totalorder %s17, 0
    %p127 = por %p125, %p126
    %p128 = scmp.ne.s32.totalorder %s114, %s115
    %p129 = scmp.eq.s32.totalorder %s18, 1
    %p130 = por %p128, %p129
    %p132 = scmp.ne.s32.totalorder %s115, %s131
    %p133 = scmp.eq.s32.totalorder %s18, 0
    %p134 = por %p132, %p133
    %s136 = sadd.s32 %s135, 1
    %p139 = scmp.eq.s32.totalorder %s12, 1
    %p140 = scmp.ne.s32.totalorder %s135, %s137
    %p141 = scmp.eq.s32.totalorder %s12, 0
    %p142 = por %p140, %p141
    %p143 = scmp.ne.s32.totalorder %s135, %s137
    %p144 = scmp.eq.s32.totalorder %s17, 1
    %p145 = por %p143, %p144
    %p146 = scmp.ne.s32.totalorder %s137, %s138
    %p147 = scmp.eq.s32.totalorder %s17, 0
    %p148 = por %p146, %p147
    %p149 = scmp.ne.s32.totalorder %s137, %s138
    %p150 = scmp.eq.s32.totalorder %s18, 1
    %p151 = por %p149, %p150
    %p153 = scmp.ne.s32.totalorder %s138, %s152
    %p154 = scmp.eq.s32.totalorder %s18, 0
    %p155 = por %p153, %p154
    %p156 = scmp.le.s32.totalorder 1, %s12
    %p157 = scmp.lt.s32.totalorder %s12, 3
    %p158 = pnand %p156, %p157
    %p159 = pneg %p158
    // Predicated region
    $region9: #{residual_block_forward.4} parent=5 // pred_check
      _
    $region10: #{residual_block_forward.4} parent=5 // pred_check_branch
      %161 = sbr.rel (%p158) target = $region12
    $region11: #{residual_block_forward.4} parent=5 // pred_region
      %s162 = ssub.s32 %s12, 1
      // Predicated region
      $region13: #{residual_block_forward.4} parent=11 // pred_check
        %p163 = pneg %p59
      $region14: #{residual_block_forward.4} parent=11 // pred_check_branch
        %165 = sbr.rel (%p163) target = $region16
      $region15: #{residual_block_forward.4} parent=11 // pred_region
        _
      $region16: #{residual_block_forward.4} parent=11 // pred_fallthru
        _
      // Predicated region
      $region17: #{residual_block_forward.4} parent=11 // pred_check
        %p166 = pneg %p80
      $region18: #{residual_block_forward.4} parent=11 // pred_check_branch
        %168 = sbr.rel (%p166) target = $region20
      $region19: #{residual_block_forward.4} parent=11 // pred_region
        _
      $region20: #{residual_block_forward.4} parent=11 // pred_fallthru
        _
      // Predicated region
      $region21: #{residual_block_forward.4} parent=11 // pred_check
        %p169 = pneg %p101
      $region22: #{residual_block_forward.4} parent=11 // pred_check_branch
        %171 = sbr.rel (%p169) target = $region24
      $region23: #{residual_block_forward.4} parent=11 // pred_region
        _
      $region24: #{residual_block_forward.4} parent=11 // pred_fallthru
        _
    $region12: #{residual_block_forward.4} parent=5 // pred_fallthru
      _
    %p172 = scmp.lt.s32.totalorder %s12, 2
    // Predicated region
    $region25: #{residual_block_forward.4} parent=5 // pred_check
      %p173 = pneg %p172
    $region26: #{residual_block_forward.4} parent=5 // pred_check_branch
      %175 = sbr.rel (%p173) target = $region28
    $region27: #{residual_block_forward.4} parent=5 // pred_region
      // Predicated region
      $region29: #{residual_block_forward.4} parent=27 // pred_check
        %p176 = pneg %p32
      $region30: #{residual_block_forward.4} parent=27 // pred_check_branch
        %178 = sbr.rel (%p176) target = $region32
      $region31: #{residual_block_forward.4} parent=27 // pred_region
        %p179 = scmp.lt.s32.totalorder %s12, 1
        %s180 = scalar_select %p179, %s12, 1
        %s181 = smul.addr %s180, 32
        %s182 = smul.addr %s181, 4
        %s183 = scalar_lea.vmem %s0, %s182
      $region32: #{residual_block_forward.4} parent=27 // pred_fallthru
        _
    $region28: #{residual_block_forward.4} parent=5 // pred_fallthru
      _
    %p184 = scmp.le.s32.totalorder 1, %s12
    %p185 = scmp.lt.s32.totalorder %s12, 3
    %p186 = pnand %p184, %p185
    %p187 = pneg %p186
    // Predicated region
    $region33: #{residual_block_forward.4} parent=5 // pred_check
      _
    $region34: #{residual_block_forward.4} parent=5 // pred_check_branch
      %189 = sbr.rel (%p186) target = $region36
    $region35: #{residual_block_forward.4} parent=5 // pred_region
      %s190 = ssub.s32 %s12, 1
      %p191 = scmp.lt.s32.totalorder %s17, 1
      %s192 = scalar_select %p191, %s17, 1
      %s193 = smul.addr %s192, 32
      %s194 = smul.addr %s193, 4
      %s195 = scalar_lea.vmem %s0, %s194
      %p196 = pneg %p38
      %p197 = pneg %p35
      %p198 = pneg %p59
      %p199 = pneg %p56
      %p200 = pneg %p80
      %p201 = pneg %p77
      %p202 = pneg %p101
      %p203 = pneg %p98
      %p204 = pneg %p127
      %p205 = pneg %p124
      %p206 = scmp.lt.s32.totalorder %s17, 1
      %s207 = scalar_select %p206, %s17, 1
      %s208 = smul.addr %s207, 32
      %s209 = smul.addr %s208, 4
      %s210 = scalar_lea.vmem %s4, %s209
      %p211 = pneg %p148
      %p212 = pneg %p145
      %p213 = scmp.lt.s32.totalorder %s17, 1
      %s214 = scalar_select %p213, %s17, 1
      %s215 = smul.addr %s214, 32
      %s216 = smul.addr %s215, 4
      %s217 = scalar_lea.vmem %s0, %s216
      %p218 = scmp.lt.s32.totalorder %s17, 1
      %s219 = scalar_select %p218, %s17, 1
      %s220 = smul.addr %s219, 32
      %s221 = smul.addr %s220, 4
      %s222 = scalar_lea.vmem %s4, %s221
      %p224 = scmp.eq.s32.totalorder %s17, 0
      // Predicated region
      $region37: #{residual_block_forward.4} parent=35 // pred_check
        %p225 = pneg %p224
      $region38: #{residual_block_forward.4} parent=35 // pred_check_branch
        %227 = sbr.rel (%p225) target = $region40
      $region39: #{residual_block_forward.4} parent=35 // pred_region
        %228 = vst [vmem:[#allocation2] sm:$0xf] 0
        %229 = vst [vmem:[#allocation2 + $0x4] sm:$0xf] 0
        %230 = vst [vmem:[#allocation2 + $0x8] sm:$0x1] 0
        %231 = vst [vmem:[#allocation2 + $0xc] sm:$0xf] 0
        %232 = vst [vmem:[#allocation2 + $0x10] sm:$0xf] 0
        %233 = vst [vmem:[#allocation2 + $0x14] sm:$0x1] 0
        %234 = vst [vmem:[#allocation2 + $0x18] sm:$0xf] 0
        %235 = vst [vmem:[#allocation2 + $0x1c] sm:$0xf] 0
        %236 = vst [vmem:[#allocation2 + $0x20] sm:$0x1] 0
        %237 = vst [vmem:[#allocation2 + $0x24] sm:$0xf] 0
        %238 = vst [vmem:[#allocation2 + $0x28] sm:$0xf] 0
        %239 = vst [vmem:[#allocation2 + $0x2c] sm:$0x1] 0
        %240 = vst [vmem:[#allocation2 + $0x30] sm:$0xf] 0
        %241 = vst [vmem:[#allocation2 + $0x34] sm:$0xf] 0
        %242 = vst [vmem:[#allocation2 + $0x38] sm:$0x1] 0
        %243 = vst [vmem:[#allocation2 + $0x3c] sm:$0xf] 0
        %244 = vst [vmem:[#allocation2 + $0x40] sm:$0xf] 0
        %245 = vst [vmem:[#allocation2 + $0x44] sm:$0x1] 0
        %246 = vst [vmem:[#allocation2 + $0x48] sm:$0xf] 0
        %247 = vst [vmem:[#allocation2 + $0x4c] sm:$0xf] 0
        %248 = vst [vmem:[#allocation2 + $0x50] sm:$0x1] 0
        %249 = vst [vmem:[#allocation2 + $0x54] sm:$0xf] 0
        %250 = vst [vmem:[#allocation2 + $0x58] sm:$0xf] 0
        %251 = vst [vmem:[#allocation2 + $0x5c] sm:$0x1] 0
        %252 = vst [vmem:[#allocation2 + $0x60] sm:$0xf] 0
        %253 = vst [vmem:[#allocation2 + $0x64] sm:$0xf] 0
        %254 = vst [vmem:[#allocation2 + $0x68] sm:$0x1] 0
        %255 = vst [vmem:[#allocation2 + $0x6c] sm:$0xf] 0
        %256 = vst [vmem:[#allocation2 + $0x70] sm:$0xf] 0
        %257 = vst [vmem:[#allocation2 + $0x74] sm:$0x1] 0
        %258 = vst [vmem:[#allocation2 + $0x78] sm:$0xf] 0
        %259 = vst [vmem:[#allocation2 + $0x7c] sm:$0xf] 0
        %260 = vst [vmem:[#allocation2 + $0x80] sm:$0x1] 0
        %261 = vst [vmem:[#allocation2 + $0x84] sm:$0xf] 0
        %262 = vst [vmem:[#allocation2 + $0x88] sm:$0xf] 0
        %263 = vst [vmem:[#allocation2 + $0x8c] sm:$0x1] 0
        %264 = vst [vmem:[#allocation2 + $0x90] sm:$0xf] 0
        %265 = vst [vmem:[#allocation2 + $0x94] sm:$0xf] 0
        %266 = vst [vmem:[#allocation2 + $0x98] sm:$0x1] 0
        %267 = vst [vmem:[#allocation2 + $0x9c] sm:$0xf] 0
        %268 = vst [vmem:[#allocation2 + $0xa0] sm:$0xf] 0
        %269 = vst [vmem:[#allocation2 + $0xa4] sm:$0x1] 0
        %270 = vst [vmem:[#allocation2 + $0xa8] sm:$0xf] 0
        %271 = vst [vmem:[#allocation2 + $0xac] sm:$0xf] 0
        %272 = vst [vmem:[#allocation2 + $0xb0] sm:$0x1] 0
        %273 = vst [vmem:[#allocation2 + $0xb4] sm:$0xf] 0
        %274 = vst [vmem:[#allocation2 + $0xb8] sm:$0xf] 0
        %275 = vst [vmem:[#allocation2 + $0xbc] sm:$0x1] 0
        %276 = vst [vmem:[#allocation2 + $0xc0] sm:$0xf] 0
        %277 = vst [vmem:[#allocation2 + $0xc4] sm:$0xf] 0
        %278 = vst [vmem:[#allocation2 + $0xc8] sm:$0x1] 0
        %279 = vst [vmem:[#allocation2 + $0xcc] sm:$0xf] 0
        %280 = vst [vmem:[#allocation2 + $0xd0] sm:$0xf] 0
        %281 = vst [vmem:[#allocation2 + $0xd4] sm:$0x1] 0
        %282 = vst [vmem:[%s5] sm:$0x3] 0.0
      $region40: #{residual_block_forward.4} parent=35 // pred_fallthru
        _
      %v283 = vld [vmem:[%s217] sm:$0xf]
      %v284 = vld [vmem:[%s217 + $0x4] sm:$0xf]
      %v285 = vld [vmem:[%s217 + $0x8] sm:$0xf]
      %v286 = vld [vmem:[%s217 + $0xc] sm:$0xf]
      %v287 = vld [vmem:[%s217 + $0x10] sm:$0xf]
      %v288 = vld [vmem:[%s217 + $0x14] sm:$0xf]
      %v289 = vld [vmem:[%s217 + $0x18] sm:$0xf]
      %v290 = vld [vmem:[%s217 + $0x1c] sm:$0xf]
      %v291 = vld [vmem:[%s217 + $0x20] sm:$0xf]
      %v292 = vld [vmem:[%s217 + $0x24] sm:$0xf]
      %v293 = vld [vmem:[%s217 + $0x28] sm:$0xf]
      %v294 = vld [vmem:[%s217 + $0x2c] sm:$0xf]
      %v295 = vld [vmem:[%s217 + $0x30] sm:$0xf]
      %v296 = vld [vmem:[%s217 + $0x34] sm:$0xf]
      %v297 = vld [vmem:[%s217 + $0x38] sm:$0xf]
      %v298 = vld [vmem:[%s217 + $0x3c] sm:$0xf]
      %v299 = vld [vmem:[%s217 + $0x40] sm:$0xf]
      %v300 = vld [vmem:[%s217 + $0x44] sm:$0xf]
      %v301 = vld [vmem:[%s217 + $0x48] sm:$0xf]
      %v302 = vld [vmem:[%s217 + $0x4c] sm:$0xf]
      %v303 = vld [vmem:[%s217 + $0x50] sm:$0xf]
      %v304 = vld [vmem:[%s217 + $0x54] sm:$0xf]
      %v305 = vld [vmem:[%s217 + $0x58] sm:$0xf]
      %v306 = vld [vmem:[%s217 + $0x5c] sm:$0xf]
      %v307 = vld [vmem:[%s217 + $0x60] sm:$0xf]
      %v308 = vld [vmem:[%s217 + $0x64] sm:$0xf]
      %v309 = vld [vmem:[%s217 + $0x68] sm:$0xf]
      %v310 = vld [vmem:[%s217 + $0x6c] sm:$0xf]
      %v311 = vld [vmem:[%s217 + $0x70] sm:$0xf]
      %v312 = vld [vmem:[%s217 + $0x74] sm:$0xf]
      %v313 = vld [vmem:[%s217 + $0x78] sm:$0xf]
      %v314 = vld [vmem:[%s217 + $0x7c] sm:$0xf]
      %v315 = vunpack.c.l.bf16 %v283
      %v316 = vunpack.c.l.bf16 %v284
      %v317 = vunpack.c.l.bf16 %v285
      %v318 = vunpack.c.l.bf16 %v286
      %v319 = vunpack.c.l.bf16 %v287
      %v320 = vunpack.c.l.bf16 %v288
      %v321 = vunpack.c.l.bf16 %v289
      %v322 = vunpack.c.l.bf16 %v290
      %v323 = vunpack.c.l.bf16 %v291
      %v324 = vunpack.c.l.bf16 %v292
      %v325 = vunpack.c.l.bf16 %v293
      %v326 = vunpack.c.l.bf16 %v294
      %v327 = vunpack.c.l.bf16 %v295
      %v328 = vunpack.c.l.bf16 %v296
      %v329 = vunpack.c.l.bf16 %v297
      %v330 = vunpack.c.l.bf16 %v298
      %v331 = vunpack.c.l.bf16 %v299
      %v332 = vunpack.c.l.bf16 %v300
      %v333 = vunpack.c.l.bf16 %v301
      %v334 = vunpack.c.l.bf16 %v302
      %v335 = vunpack.c.l.bf16 %v303
      %v336 = vunpack.c.l.bf16 %v304
      %v337 = vunpack.c.l.bf16 %v305
      %v338 = vunpack.c.l.bf16 %v306
      %v339 = vunpack.c.l.bf16 %v307
      %v340 = vunpack.c.l.bf16 %v308
      %v341 = vunpack.c.l.bf16 %v309
      %v342 = vunpack.c.l.bf16 %v310
      %v343 = vunpack.c.l.bf16 %v311
      %v344 = vunpack.c.l.bf16 %v312
      %v345 = vunpack.c.l.bf16 %v313
      %v346 = vunpack.c.l.bf16 %v314
      %v347 = vld [vmem:[%s1] sm:$0x1]
      %v349 = vlaneseq
      %v350 = vshrl.u32 %v349, 7
      %v351 = vsub.s32 0, %v350
      %v352 = vrot.slane %v347, %v351
      %v354 = vmul.f32 %v315, %v352
      %v355 = vmul.f32 %v316, %v352
      %v356 = vmul.f32 %v317, %v352
      %v357 = vmul.f32 %v318, %v352
      %v358 = vmul.f32 %v319, %v352
      %v359 = vmul.f32 %v320, %v352
      %v360 = vmul.f32 %v321, %v352
      %v361 = vmul.f32 %v322, %v352
      %v362 = vmul.f32 %v323, %v352
      %v363 = vmul.f32 %v324, %v352
      %v364 = vmul.f32 %v325, %v352
      %v365 = vmul.f32 %v326, %v352
      %v366 = vmul.f32 %v327, %v352
      %v367 = vmul.f32 %v328, %v352
      %v368 = vmul.f32 %v329, %v352
      %v369 = vmul.f32 %v330, %v352
      %v370 = vmul.f32 %v331, %v352
      %v371 = vmul.f32 %v332, %v352
      %v372 = vmul.f32 %v333, %v352
      %v373 = vmul.f32 %v334, %v352
      %v374 = vmul.f32 %v335, %v352
      %v375 = vmul.f32 %v336, %v352
      %v376 = vmul.f32 %v337, %v352
      %v377 = vmul.f32 %v338, %v352
      %v378 = vmul.f32 %v339, %v352
      %v379 = vmul.f32 %v340, %v352
      %v380 = vmul.f32 %v341, %v352
      %v381 = vmul.f32 %v342, %v352
      %v382 = vmul.f32 %v343, %v352
      %v383 = vmul.f32 %v344, %v352
      %v384 = vmul.f32 %v345, %v352
      %v385 = vmul.f32 %v346, %v352
      %v386 = vld [vmem:[%s2] sm:$0x1]
      %v388 = vlaneseq
      %v389 = vshrl.u32 %v388, 7
      %v390 = vsub.s32 0, %v389
      %v391 = vrot.slane %v386, %v390
      %v393 = vadd.f32 %v354, %v391
      %v394 = vadd.f32 %v355, %v391
      %v395 = vadd.f32 %v356, %v391
      %v396 = vadd.f32 %v357, %v391
      %v397 = vadd.f32 %v358, %v391
      %v398 = vadd.f32 %v359, %v391
      %v399 = vadd.f32 %v360, %v391
      %v400 = vadd.f32 %v361, %v391
      %v401 = vadd.f32 %v362, %v391
      %v402 = vadd.f32 %v363, %v391
      %v403 = vadd.f32 %v364, %v391
      %v404 = vadd.f32 %v365, %v391
      %v405 = vadd.f32 %v366, %v391
      %v406 = vadd.f32 %v367, %v391
      %v407 = vadd.f32 %v368, %v391
      %v408 = vadd.f32 %v369, %v391
      %v409 = vadd.f32 %v370, %v391
      %v410 = vadd.f32 %v371, %v391
      %v411 = vadd.f32 %v372, %v391
      %v412 = vadd.f32 %v373, %v391
      %v413 = vadd.f32 %v374, %v391
      %v414 = vadd.f32 %v375, %v391
      %v415 = vadd.f32 %v376, %v391
      %v416 = vadd.f32 %v377, %v391
      %v417 = vadd.f32 %v378, %v391
      %v418 = vadd.f32 %v379, %v391
      %v419 = vadd.f32 %v380, %v391
      %v420 = vadd.f32 %v381, %v391
      %v421 = vadd.f32 %v382, %v391
      %v422 = vadd.f32 %v383, %v391
      %v423 = vadd.f32 %v384, %v391
      %v424 = vadd.f32 %v385, %v391
      %v425 = vmax.f32 %v393, 0.0
      %v426 = vmax.f32 %v394, 0.0
      %v427 = vmax.f32 %v395, 0.0
      %v428 = vmax.f32 %v396, 0.0
      %v429 = vmax.f32 %v397, 0.0
      %v430 = vmax.f32 %v398, 0.0
      %v431 = vmax.f32 %v399, 0.0
      %v432 = vmax.f32 %v400, 0.0
      %v433 = vmax.f32 %v401, 0.0
      %v434 = vmax.f32 %v402, 0.0
      %v435 = vmax.f32 %v403, 0.0
      %v436 = vmax.f32 %v404, 0.0
      %v437 = vmax.f32 %v405, 0.0
      %v438 = vmax.f32 %v406, 0.0
      %v439 = vmax.f32 %v407, 0.0
      %v440 = vmax.f32 %v408, 0.0
      %v441 = vmax.f32 %v409, 0.0
      %v442 = vmax.f32 %v410, 0.0
      %v443 = vmax.f32 %v411, 0.0
      %v444 = vmax.f32 %v412, 0.0
      %v445 = vmax.f32 %v413, 0.0
      %v446 = vmax.f32 %v414, 0.0
      %v447 = vmax.f32 %v415, 0.0
      %v448 = vmax.f32 %v416, 0.0
      %v449 = vmax.f32 %v417, 0.0
      %v450 = vmax.f32 %v418, 0.0
      %v451 = vmax.f32 %v419, 0.0
      %v452 = vmax.f32 %v420, 0.0
      %v453 = vmax.f32 %v421, 0.0
      %v454 = vmax.f32 %v422, 0.0
      %v455 = vmax.f32 %v423, 0.0
      %v456 = vmax.f32 %v424, 0.0
      %v457 = vpack.c.bf16 %v426, %v425
      %v458 = vpack.c.bf16 %v428, %v427
      %v459 = vpack.c.bf16 %v430, %v429
      %v460 = vpack.c.bf16 %v432, %v431
      %v461 = vpack.c.bf16 %v434, %v433
      %v462 = vpack.c.bf16 %v436, %v435
      %v463 = vpack.c.bf16 %v438, %v437
      %v464 = vpack.c.bf16 %v440, %v439
      %v465 = vpack.c.bf16 %v442, %v441
      %v466 = vpack.c.bf16 %v444, %v443
      %v467 = vpack.c.bf16 %v446, %v445
      %v468 = vpack.c.bf16 %v448, %v447
      %v469 = vpack.c.bf16 %v450, %v449
      %v470 = vpack.c.bf16 %v452, %v451
      %v471 = vpack.c.bf16 %v454, %v453
      %v472 = vpack.c.bf16 %v456, %v455
      %v489 = vunpack.c.l.b16 %v457
      %v490 = vunpack.c.h.b16 %v457
      %v491 = vunpack.c.l.b16 %v458
      %v492 = vunpack.c.h.b16 %v458
      %v493 = vunpack.c.l.b16 %v459
      %v494 = vunpack.c.h.b16 %v459
      %v495 = vunpack.c.l.b16 %v460
      %v496 = vunpack.c.h.b16 %v460
      %v497 = vunpack.c.l.b16 %v461
      %v498 = vunpack.c.h.b16 %v461
      %v499 = vunpack.c.l.b16 %v462
      %v500 = vunpack.c.h.b16 %v462
      %v501 = vunpack.c.l.b16 %v463
      %v502 = vunpack.c.h.b16 %v463
      %v503 = vunpack.c.l.b16 %v464
      %v504 = vunpack.c.h.b16 %v464
      %v505 = vunpack.c.l.b16 %v465
      %v506 = vunpack.c.h.b16 %v465
      %v507 = vunpack.c.l.b16 %v466
      %v508 = vunpack.c.h.b16 %v466
      %v509 = vunpack.c.l.b16 %v467
      %v510 = vunpack.c.h.b16 %v467
      %v511 = vunpack.c.l.b16 %v468
      %v512 = vunpack.c.h.b16 %v468
      %v513 = vunpack.c.l.b16 %v469
      %v514 = vunpack.c.h.b16 %v469
      %v515 = vunpack.c.l.b16 %v470
      %v516 = vunpack.c.h.b16 %v470
      %v517 = vunpack.c.l.b16 %v471
      %v518 = vunpack.c.h.b16 %v471
      %v519 = vunpack.c.l.b16 %v472
      %v520 = vunpack.c.h.b16 %v472
      %v521 = vpack.c.b16 %v489, %v489
      %v522 = vpack.c.b16 %v490, %v490
      %v523 = vpack.c.b16 %v491, %v491
      %v524 = vpack.c.b16 %v492, %v492
      %v525 = vpack.c.b16 %v493, %v493
      %v526 = vpack.c.b16 %v494, %v494
      %v527 = vpack.c.b16 %v495, %v495
      %v528 = vpack.c.b16 %v496, %v496
      %v529 = vpack.c.b16 %v497, %v497
      %v530 = vpack.c.b16 %v498, %v498
      %v531 = vpack.c.b16 %v499, %v499
      %v532 = vpack.c.b16 %v500, %v500
      %v533 = vpack.c.b16 %v501, %v501
      %v534 = vpack.c.b16 %v502, %v502
      %v535 = vpack.c.b16 %v503, %v503
      %v536 = vpack.c.b16 %v504, %v504
      %v537 = vpack.c.b16 %v505, %v505
      %v538 = vpack.c.b16 %v506, %v506
      %v539 = vpack.c.b16 %v507, %v507
      %v540 = vpack.c.b16 %v508, %v508
      %v541 = vpack.c.b16 %v509, %v509
      %v542 = vpack.c.b16 %v510, %v510
      %v543 = vpack.c.b16 %v511, %v511
      %v544 = vpack.c.b16 %v512, %v512
      %v545 = vpack.c.b16 %v513, %v513
      %v546 = vpack.c.b16 %v514, %v514
      %v547 = vpack.c.b16 %v515, %v515
      %v548 = vpack.c.b16 %v516, %v516
      %v549 = vpack.c.b16 %v517, %v517
      %v550 = vpack.c.b16 %v518, %v518
      %v551 = vpack.c.b16 %v519, %v519
      %v552 = vpack.c.b16 %v520, %v520
      %vm553 = vsmask.f32 256
      %vm554 = vsmask.f32 4368
      %vm555 = vmor %vm553, %vm554
      %v557 = vshrl.u32 %v521, 16
      %v559 = vrot.slane %v557, 7
      %v560 = vshll.u32 %v521, 16
      %v562 = vor.u32 %v559, %v560
      %v563 = vrot.slane %v559, 4
      %v565 = vshrl.u32 %v522, 16
      %v567 = vrot.slane %v565, 7
      %v568 = vshll.u32 %v522, 16
      %v570 = vor.u32 %v567, %v568
      %v571 = vsel %vm555, %v563, %v570
      %v572 = vrot.slane %v567, 4
      %v574 = vshrl.u32 %v523, 16
      %v576 = vrot.slane %v574, 7
      %v577 = vshll.u32 %v523, 16
      %v579 = vor.u32 %v576, %v577
      %v580 = vrot.slane %v576, 4
      %v582 = vshrl.u32 %v524, 16
      %v584 = vrot.slane %v582, 7
      %v585 = vshll.u32 %v524, 16
      %v587 = vor.u32 %v584, %v585
      %v588 = vsel %vm555, %v580, %v587
      %v589 = vrot.slane %v584, 4
      %v591 = vshrl.u32 %v525, 16
      %v593 = vrot.slane %v591, 7
      %v594 = vshll.u32 %v525, 16
      %v596 = vor.u32 %v593, %v594
      %v597 = vrot.slane %v593, 4
      %v599 = vshrl.u32 %v526, 16
      %v601 = vrot.slane %v599, 7
      %v602 = vshll.u32 %v526, 16
      %v604 = vor.u32 %v601, %v602
      %v605 = vsel %vm555, %v597, %v604
      %v606 = vrot.slane %v601, 4
      %v608 = vshrl.u32 %v527, 16
      %v610 = vrot.slane %v608, 7
      %v611 = vshll.u32 %v527, 16
      %v613 = vor.u32 %v610, %v611
      %v614 = vrot.slane %v610, 4
      %v616 = vshrl.u32 %v528, 16
      %v618 = vrot.slane %v616, 7
      %v619 = vshll.u32 %v528, 16
      %v621 = vor.u32 %v618, %v619
      %v622 = vsel %vm555, %v614, %v621
      %v623 = vrot.slane %v618, 4
      %v625 = vshrl.u32 %v529, 16
      %v627 = vrot.slane %v625, 7
      %v628 = vshll.u32 %v529, 16
      %v630 = vor.u32 %v627, %v628
      %v631 = vrot.slane %v627, 4
      %v633 = vshrl.u32 %v530, 16
      %v635 = vrot.slane %v633, 7
      %v636 = vshll.u32 %v530, 16
      %v638 = vor.u32 %v635, %v636
      %v639 = vsel %vm555, %v631, %v638
      %v640 = vrot.slane %v635, 4
      %v642 = vshrl.u32 %v531, 16
      %v644 = vrot.slane %v642, 7
      %v645 = vshll.u32 %v531, 16
      %v647 = vor.u32 %v644, %v645
      %v648 = vrot.slane %v644, 4
      %v650 = vshrl.u32 %v532, 16
      %v652 = vrot.slane %v650, 7
      %v653 = vshll.u32 %v532, 16
      %v655 = vor.u32 %v652, %v653
      %v656 = vsel %vm555, %v648, %v655
      %v657 = vrot.slane %v652, 4
      %v659 = vshrl.u32 %v533, 16
      %v661 = vrot.slane %v659, 7
      %v662 = vshll.u32 %v533, 16
      %v664 = vor.u32 %v661, %v662
      %v665 = vrot.slane %v661, 4
      %v667 = vshrl.u32 %v534, 16
      %v669 = vrot.slane %v667, 7
      %v670 = vshll.u32 %v534, 16
      %v672 = vor.u32 %v669, %v670
      %v673 = vsel %vm555, %v665, %v672
      %v674 = vrot.slane %v669, 4
      %v676 = vshrl.u32 %v535, 16
      %v678 = vrot.slane %v676, 7
      %v679 = vshll.u32 %v535, 16
      %v681 = vor.u32 %v678, %v679
      %v682 = vrot.slane %v678, 4
      %v684 = vshrl.u32 %v536, 16
      %v686 = vrot.slane %v684, 7
      %v687 = vshll.u32 %v536, 16
      %v689 = vor.u32 %v686, %v687
      %v690 = vsel %vm555, %v682, %v689
      %v691 = vrot.slane %v686, 4
      %v693 = vshrl.u32 %v537, 16
      %v695 = vrot.slane %v693, 7
      %v696 = vshll.u32 %v537, 16
      %v698 = vor.u32 %v695, %v696
      %v699 = vrot.slane %v695, 4
      %v701 = vshrl.u32 %v538, 16
      %v703 = vrot.slane %v701, 7
      %v704 = vshll.u32 %v538, 16
      %v706 = vor.u32 %v703, %v704
      %v707 = vsel %vm555, %v699, %v706
      %v708 = vrot.slane %v703, 4
      %v710 = vshrl.u32 %v539, 16
      %v712 = vrot.slane %v710, 7
      %v713 = vshll.u32 %v539, 16
      %v715 = vor.u32 %v712, %v713
      %v716 = vrot.slane %v712, 4
      %v718 = vshrl.u32 %v540, 16
      %v720 = vrot.slane %v718, 7
      %v721 = vshll.u32 %v540, 16
      %v723 = vor.u32 %v720, %v721
      %v724 = vsel %vm555, %v716, %v723
      %v725 = vrot.slane %v720, 4
      %v727 = vshrl.u32 %v541, 16
      %v729 = vrot.slane %v727, 7
      %v730 = vshll.u32 %v541, 16
      %v732 = vor.u32 %v729, %v730
      %v733 = vrot.slane %v729, 4
      %v735 = vshrl.u32 %v542, 16
      %v737 = vrot.slane %v735, 7
      %v738 = vshll.u32 %v542, 16
      %v740 = vor.u32 %v737, %v738
      %v741 = vsel %vm555, %v733, %v740
      %v742 = vrot.slane %v737, 4
      %v744 = vshrl.u32 %v543, 16
      %v746 = vrot.slane %v744, 7
      %v747 = vshll.u32 %v543, 16
      %v749 = vor.u32 %v746, %v747
      %v750 = vrot.slane %v746, 4
      %v752 = vshrl.u32 %v544, 16
      %v754 = vrot.slane %v752, 7
      %v755 = vshll.u32 %v544, 16
      %v757 = vor.u32 %v754, %v755
      %v758 = vsel %vm555, %v750, %v757
      %v759 = vrot.slane %v754, 4
      %v761 = vshrl.u32 %v545, 16
      %v763 = vrot.slane %v761, 7
      %v764 = vshll.u32 %v545, 16
      %v766 = vor.u32 %v763, %v764
      %v767 = vrot.slane %v763, 4
      %v769 = vshrl.u32 %v546, 16
      %v771 = vrot.slane %v769, 7
      %v772 = vshll.u32 %v546, 16
      %v774 = vor.u32 %v771, %v772
      %v775 = vsel %vm555, %v767, %v774
      %v776 = vrot.slane %v771, 4
      %v778 = vshrl.u32 %v547, 16
      %v780 = vrot.slane %v778, 7
      %v781 = vshll.u32 %v547, 16
      %v783 = vor.u32 %v780, %v781
      %v784 = vrot.slane %v780, 4
      %v786 = vshrl.u32 %v548, 16
      %v788 = vrot.slane %v786, 7
      %v789 = vshll.u32 %v548, 16
      %v791 = vor.u32 %v788, %v789
      %v792 = vsel %vm555, %v784, %v791
      %v793 = vrot.slane %v788, 4
      %v795 = vshrl.u32 %v549, 16
      %v797 = vrot.slane %v795, 7
      %v798 = vshll.u32 %v549, 16
      %v800 = vor.u32 %v797, %v798
      %v801 = vrot.slane %v797, 4
      %v803 = vshrl.u32 %v550, 16
      %v805 = vrot.slane %v803, 7
      %v806 = vshll.u32 %v550, 16
      %v808 = vor.u32 %v805, %v806
      %v809 = vsel %vm555, %v801, %v808
      %v810 = vrot.slane %v805, 4
      %v812 = vshrl.u32 %v551, 16
      %v814 = vrot.slane %v812, 7
      %v815 = vshll.u32 %v551, 16
      %v817 = vor.u32 %v814, %v815
      %v818 = vrot.slane %v814, 4
      %v820 = vshrl.u32 %v552, 16
      %v822 = vrot.slane %v820, 7
      %v823 = vshll.u32 %v552, 16
      %v825 = vor.u32 %v822, %v823
      %v826 = vsel %vm555, %v818, %v825
      %v827 = vrot.slane %v822, 4
      %s876 = scalar_lea.vmem [#allocation2], 12
      %vm877 = vcmask 1043456
      %vm878 = vsmask.f32 7938
      %vm879 = vmand %vm877, %vm878
      %v880 = vld [vmem:[%s876] sm:$0xf]
      %v881 = vsel %vm879, %v562, %v880
      %882 = vst [vmem:[%s876] sm:$0xf] %v881
      %883 = vst [vmem:[%s876 + $0x4] sm:$0xf] %v571
      %vm884 = vcmask 1040384
      %vm885 = vmand %vm884, %vm553
      %v886 = vld [vmem:[%s876 + $0x8] sm:$0x1]
      %v887 = vsel %vm885, %v572, %v886
      %888 = vst [vmem:[%s876 + $0x8] sm:$0x1] %v887
      %v889 = vld [vmem:[%s876 + $0xc] sm:$0xf]
      %v890 = vsel %vm879, %v579, %v889
      %891 = vst [vmem:[%s876 + $0xc] sm:$0xf] %v890
      %892 = vst [vmem:[%s876 + $0x10] sm:$0xf] %v588
      %v893 = vld [vmem:[%s876 + $0x14] sm:$0x1]
      %v894 = vsel %vm885, %v589, %v893
      %895 = vst [vmem:[%s876 + $0x14] sm:$0x1] %v894
      %v896 = vld [vmem:[%s876 + $0x18] sm:$0xf]
      %v897 = vsel %vm879, %v596, %v896
      %898 = vst [vmem:[%s876 + $0x18] sm:$0xf] %v897
      %899 = vst [vmem:[%s876 + $0x1c] sm:$0xf] %v605
      %v900 = vld [vmem:[%s876 + $0x20] sm:$0x1]
      %v901 = vsel %vm885, %v606, %v900
      %902 = vst [vmem:[%s876 + $0x20] sm:$0x1] %v901
      %v903 = vld [vmem:[%s876 + $0x24] sm:$0xf]
      %v904 = vsel %vm879, %v613, %v903
      %905 = vst [vmem:[%s876 + $0x24] sm:$0xf] %v904
      %906 = vst [vmem:[%s876 + $0x28] sm:$0xf] %v622
      %v907 = vld [vmem:[%s876 + $0x2c] sm:$0x1]
      %v908 = vsel %vm885, %v623, %v907
      %909 = vst [vmem:[%s876 + $0x2c] sm:$0x1] %v908
      %v910 = vld [vmem:[%s876 + $0x30] sm:$0xf]
      %v911 = vsel %vm879, %v630, %v910
      %912 = vst [vmem:[%s876 + $0x30] sm:$0xf] %v911
      %913 = vst [vmem:[%s876 + $0x34] sm:$0xf] %v639
      %v914 = vld [vmem:[%s876 + $0x38] sm:$0x1]
      %v915 = vsel %vm885, %v640, %v914
      %916 = vst [vmem:[%s876 + $0x38] sm:$0x1] %v915
      %v917 = vld [vmem:[%s876 + $0x3c] sm:$0xf]
      %v918 = vsel %vm879, %v647, %v917
      %919 = vst [vmem:[%s876 + $0x3c] sm:$0xf] %v918
      %920 = vst [vmem:[%s876 + $0x40] sm:$0xf] %v656
      %v921 = vld [vmem:[%s876 + $0x44] sm:$0x1]
      %v922 = vsel %vm885, %v657, %v921
      %923 = vst [vmem:[%s876 + $0x44] sm:$0x1] %v922
      %v924 = vld [vmem:[%s876 + $0x48] sm:$0xf]
      %v925 = vsel %vm879, %v664, %v924
      %926 = vst [vmem:[%s876 + $0x48] sm:$0xf] %v925
      %927 = vst [vmem:[%s876 + $0x4c] sm:$0xf] %v673
      %v928 = vld [vmem:[%s876 + $0x50] sm:$0x1]
      %v929 = vsel %vm885, %v674, %v928
      %930 = vst [vmem:[%s876 + $0x50] sm:$0x1] %v929
      %v931 = vld [vmem:[%s876 + $0x54] sm:$0xf]
      %v932 = vsel %vm879, %v681, %v931
      %933 = vst [vmem:[%s876 + $0x54] sm:$0xf] %v932
      %934 = vst [vmem:[%s876 + $0x58] sm:$0xf] %v690
      %v935 = vld [vmem:[%s876 + $0x5c] sm:$0x1]
      %v936 = vsel %vm885, %v691, %v935
      %937 = vst [vmem:[%s876 + $0x5c] sm:$0x1] %v936
      %v938 = vld [vmem:[%s876 + $0x60] sm:$0xf]
      %v939 = vsel %vm879, %v698, %v938
      %940 = vst [vmem:[%s876 + $0x60] sm:$0xf] %v939
      %941 = vst [vmem:[%s876 + $0x64] sm:$0xf] %v707
      %v942 = vld [vmem:[%s876 + $0x68] sm:$0x1]
      %v943 = vsel %vm885, %v708, %v942
      %944 = vst [vmem:[%s876 + $0x68] sm:$0x1] %v943
      %v945 = vld [vmem:[%s876 + $0x6c] sm:$0xf]
      %v946 = vsel %vm879, %v715, %v945
      %947 = vst [vmem:[%s876 + $0x6c] sm:$0xf] %v946
      %948 = vst [vmem:[%s876 + $0x70] sm:$0xf] %v724
      %v949 = vld [vmem:[%s876 + $0x74] sm:$0x1]
      %v950 = vsel %vm885, %v725, %v949
      %951 = vst [vmem:[%s876 + $0x74] sm:$0x1] %v950
      %v952 = vld [vmem:[%s876 + $0x78] sm:$0xf]
      %v953 = vsel %vm879, %v732, %v952
      %954 = vst [vmem:[%s876 + $0x78] sm:$0xf] %v953
      %955 = vst [vmem:[%s876 + $0x7c] sm:$0xf] %v741
      %v956 = vld [vmem:[%s876 + $0x80] sm:$0x1]
      %v957 = vsel %vm885, %v742, %v956
      %958 = vst [vmem:[%s876 + $0x80] sm:$0x1] %v957
      %v959 = vld [vmem:[%s876 + $0x84] sm:$0xf]
      %v960 = vsel %vm879, %v749, %v959
      %961 = vst [vmem:[%s876 + $0x84] sm:$0xf] %v960
      %962 = vst [vmem:[%s876 + $0x88] sm:$0xf] %v758
      %v963 = vld [vmem:[%s876 + $0x8c] sm:$0x1]
      %v964 = vsel %vm885, %v759, %v963
      %965 = vst [vmem:[%s876 + $0x8c] sm:$0x1] %v964
      %v966 = vld [vmem:[%s876 + $0x90] sm:$0xf]
      %v967 = vsel %vm879, %v766, %v966
      %968 = vst [vmem:[%s876 + $0x90] sm:$0xf] %v967
      %969 = vst [vmem:[%s876 + $0x94] sm:$0xf] %v775
      %v970 = vld [vmem:[%s876 + $0x98] sm:$0x1]
      %v971 = vsel %vm885, %v776, %v970
      %972 = vst [vmem:[%s876 + $0x98] sm:$0x1] %v971
      %v973 = vld [vmem:[%s876 + $0x9c] sm:$0xf]
      %v974 = vsel %vm879, %v783, %v973
      %975 = vst [vmem:[%s876 + $0x9c] sm:$0xf] %v974
      %976 = vst [vmem:[%s876 + $0xa0] sm:$0xf] %v792
      %v977 = vld [vmem:[%s876 + $0xa4] sm:$0x1]
      %v978 = vsel %vm885, %v793, %v977
      %979 = vst [vmem:[%s876 + $0xa4] sm:$0x1] %v978
      %v980 = vld [vmem:[%s876 + $0xa8] sm:$0xf]
      %v981 = vsel %vm879, %v800, %v980
      %982 = vst [vmem:[%s876 + $0xa8] sm:$0xf] %v981
      %983 = vst [vmem:[%s876 + $0xac] sm:$0xf] %v809
      %v984 = vld [vmem:[%s876 + $0xb0] sm:$0x1]
      %v985 = vsel %vm885, %v810, %v984
      %986 = vst [vmem:[%s876 + $0xb0] sm:$0x1] %v985
      %v987 = vld [vmem:[%s876 + $0xb4] sm:$0xf]
      %v988 = vsel %vm879, %v817, %v987
      %989 = vst [vmem:[%s876 + $0xb4] sm:$0xf] %v988
      %990 = vst [vmem:[%s876 + $0xb8] sm:$0xf] %v826
      %v991 = vld [vmem:[%s876 + $0xbc] sm:$0x1]
      %v992 = vsel %vm885, %v827, %v991
      %993 = vst [vmem:[%s876 + $0xbc] sm:$0x1] %v992
      %v994 = vld [vmem:[#allocation2] sm:$0xf]
      %v995 = vld [vmem:[#allocation2 + $0x4] sm:$0xf]
      %v996 = vld [vmem:[#allocation2 + $0xc] sm:$0xf]
      %v997 = vld [vmem:[#allocation2 + $0x10] sm:$0xf]
      %v998 = vld [vmem:[#allocation2 + $0x18] sm:$0xf]
      %v999 = vld [vmem:[#allocation2 + $0x1c] sm:$0xf]
      %v1000 = vld [vmem:[#allocation2 + $0x24] sm:$0xf]
      %v1001 = vld [vmem:[#allocation2 + $0x28] sm:$0xf]
      %v1002 = vld [vmem:[#allocation2 + $0x30] sm:$0xf]
      %v1003 = vld [vmem:[#allocation2 + $0x34] sm:$0xf]
      %v1004 = vld [vmem:[#allocation2 + $0x3c] sm:$0xf]
      %v1005 = vld [vmem:[#allocation2 + $0x40] sm:$0xf]
      %v1006 = vld [vmem:[#allocation2 + $0x48] sm:$0xf]
      %v1007 = vld [vmem:[#allocation2 + $0x4c] sm:$0xf]
      %v1008 = vld [vmem:[#allocation2 + $0x54] sm:$0xf]
      %v1009 = vld [vmem:[#allocation2 + $0x58] sm:$0xf]
      %v1010 = vld [vmem:[#allocation2 + $0x60] sm:$0xf]
      %v1011 = vld [vmem:[#allocation2 + $0x64] sm:$0xf]
      %v1012 = vld [vmem:[#allocation2 + $0x6c] sm:$0xf]
      %v1013 = vld [vmem:[#allocation2 + $0x70] sm:$0xf]
      %v1014 = vld [vmem:[#allocation2 + $0x78] sm:$0xf]
      %v1015 = vld [vmem:[#allocation2 + $0x7c] sm:$0xf]
      %v1016 = vld [vmem:[#allocation2 + $0x84] sm:$0xf]
      %v1017 = vld [vmem:[#allocation2 + $0x88] sm:$0xf]
      %v1018 = vld [vmem:[#allocation2 + $0x90] sm:$0xf]
      %v1019 = vld [vmem:[#allocation2 + $0x94] sm:$0xf]
      %v1020 = vld [vmem:[#allocation2 + $0x9c] sm:$0xf]
      %v1021 = vld [vmem:[#allocation2 + $0xa0] sm:$0xf]
      %v1022 = vld [vmem:[#allocation2 + $0xa8] sm:$0xf]
      %v1023 = vld [vmem:[#allocation2 + $0xac] sm:$0xf]
      %v1024 = vld [vmem:[#allocation2 + $0xb4] sm:$0xf]
      %v1025 = vld [vmem:[#allocation2 + $0xb8] sm:$0xf]
      %v1026 = vld [vmem:[#allocation2 + $0x8] sm:$0x1]
      %v1027 = vld [vmem:[#allocation2 + $0x14] sm:$0x1]
      %v1028 = vld [vmem:[#allocation2 + $0x20] sm:$0x1]
      %v1029 = vld [vmem:[#allocation2 + $0x2c] sm:$0x1]
      %v1030 = vld [vmem:[#allocation2 + $0x38] sm:$0x1]
      %v1031 = vld [vmem:[#allocation2 + $0x44] sm:$0x1]
      %v1032 = vld [vmem:[#allocation2 + $0x50] sm:$0x1]
      %v1033 = vld [vmem:[#allocation2 + $0x5c] sm:$0x1]
      %v1034 = vld [vmem:[#allocation2 + $0x68] sm:$0x1]
      %v1035 = vld [vmem:[#allocation2 + $0x74] sm:$0x1]
      %v1036 = vld [vmem:[#allocation2 + $0x80] sm:$0x1]
      %v1037 = vld [vmem:[#allocation2 + $0x8c] sm:$0x1]
      %v1038 = vld [vmem:[#allocation2 + $0x98] sm:$0x1]
      %v1039 = vld [vmem:[#allocation2 + $0xa4] sm:$0x1]
      %v1040 = vld [vmem:[#allocation2 + $0xb0] sm:$0x1]
      %v1041 = vld [vmem:[#allocation2 + $0xbc] sm:$0x1]
      %v1042 = vld [vmem:[#allocation2] sm:$0xe]
      %v1043 = vld [vmem:[#allocation2 + $0xc] sm:$0xe]
      %v1044 = vld [vmem:[#allocation2 + $0x18] sm:$0xe]
      %v1045 = vld [vmem:[#allocation2 + $0x24] sm:$0xe]
      %v1046 = vld [vmem:[#allocation2 + $0x30] sm:$0xe]
      %v1047 = vld [vmem:[#allocation2 + $0x3c] sm:$0xe]
      %v1048 = vld [vmem:[#allocation2 + $0x48] sm:$0xe]
      %v1049 = vld [vmem:[#allocation2 + $0x54] sm:$0xe]
      %v1050 = vld [vmem:[#allocation2 + $0x60] sm:$0xe]
      %v1051 = vld [vmem:[#allocation2 + $0x6c] sm:$0xe]
      %v1052 = vld [vmem:[#allocation2 + $0x78] sm:$0xe]
      %v1053 = vld [vmem:[#allocation2 + $0x84] sm:$0xe]
      %v1054 = vld [vmem:[#allocation2 + $0x90] sm:$0xe]
      %v1055 = vld [vmem:[#allocation2 + $0x9c] sm:$0xe]
      %v1056 = vld [vmem:[#allocation2 + $0xa8] sm:$0xe]
      %v1057 = vld [vmem:[#allocation2 + $0xb4] sm:$0xe]
      %v1090 = vunpack.c.l.b16 %v994
      %v1091 = vunpack.c.l.b16 %v995
      %v1092 = vunpack.c.l.b16 %v996
      %v1093 = vunpack.c.l.b16 %v997
      %v1094 = vunpack.c.l.b16 %v998
      %v1095 = vunpack.c.l.b16 %v999
      %v1096 = vunpack.c.l.b16 %v1000
      %v1097 = vunpack.c.l.b16 %v1001
      %v1098 = vunpack.c.l.b16 %v1002
      %v1099 = vunpack.c.l.b16 %v1003
      %v1100 = vunpack.c.l.b16 %v1004
      %v1101 = vunpack.c.l.b16 %v1005
      %v1102 = vunpack.c.l.b16 %v1006
      %v1103 = vunpack.c.l.b16 %v1007
      %v1104 = vunpack.c.l.b16 %v1008
      %v1105 = vunpack.c.l.b16 %v1009
      %v1106 = vunpack.c.l.b16 %v1010
      %v1107 = vunpack.c.l.b16 %v1011
      %v1108 = vunpack.c.l.b16 %v1012
      %v1109 = vunpack.c.l.b16 %v1013
      %v1110 = vunpack.c.l.b16 %v1014
      %v1111 = vunpack.c.l.b16 %v1015
      %v1112 = vunpack.c.l.b16 %v1016
      %v1113 = vunpack.c.l.b16 %v1017
      %v1114 = vunpack.c.l.b16 %v1018
      %v1115 = vunpack.c.l.b16 %v1019
      %v1116 = vunpack.c.l.b16 %v1020
      %v1117 = vunpack.c.l.b16 %v1021
      %v1118 = vunpack.c.l.b16 %v1022
      %v1119 = vunpack.c.l.b16 %v1023
      %v1120 = vunpack.c.l.b16 %v1024
      %v1121 = vunpack.c.l.b16 %v1025
      %v1122 = vpack.c.b16 %v1091, %v1090
      %v1123 = vpack.c.b16 %v1093, %v1092
      %v1124 = vpack.c.b16 %v1095, %v1094
      %v1125 = vpack.c.b16 %v1097, %v1096
      %v1126 = vpack.c.b16 %v1099, %v1098
      %v1127 = vpack.c.b16 %v1101, %v1100
      %v1128 = vpack.c.b16 %v1103, %v1102
      %v1129 = vpack.c.b16 %v1105, %v1104
      %v1130 = vpack.c.b16 %v1107, %v1106
      %v1131 = vpack.c.b16 %v1109, %v1108
      %v1132 = vpack.c.b16 %v1111, %v1110
      %v1133 = vpack.c.b16 %v1113, %v1112
      %v1134 = vpack.c.b16 %v1115, %v1114
      %v1135 = vpack.c.b16 %v1117, %v1116
      %v1136 = vpack.c.b16 %v1119, %v1118
      %v1137 = vpack.c.b16 %v1121, %v1120
      %v1170 = vunpack.c.l.b16 %v1026
      %v1171 = vunpack.c.l.b16 %v1027
      %v1172 = vunpack.c.l.b16 %v1028
      %v1173 = vunpack.c.l.b16 %v1029
      %v1174 = vunpack.c.l.b16 %v1030
      %v1175 = vunpack.c.l.b16 %v1031
      %v1176 = vunpack.c.l.b16 %v1032
      %v1177 = vunpack.c.l.b16 %v1033
      %v1178 = vunpack.c.l.b16 %v1034
      %v1179 = vunpack.c.l.b16 %v1035
      %v1180 = vunpack.c.l.b16 %v1036
      %v1181 = vunpack.c.l.b16 %v1037
      %v1182 = vunpack.c.l.b16 %v1038
      %v1183 = vunpack.c.l.b16 %v1039
      %v1184 = vunpack.c.l.b16 %v1040
      %v1185 = vunpack.c.l.b16 %v1041
      %v1186 = vpack.c.b16 %v1170, %v1170
      %v1187 = vpack.c.b16 %v1171, %v1171
      %v1188 = vpack.c.b16 %v1172, %v1172
      %v1189 = vpack.c.b16 %v1173, %v1173
      %v1190 = vpack.c.b16 %v1174, %v1174
      %v1191 = vpack.c.b16 %v1175, %v1175
      %v1192 = vpack.c.b16 %v1176, %v1176
      %v1193 = vpack.c.b16 %v1177, %v1177
      %v1194 = vpack.c.b16 %v1178, %v1178
      %v1195 = vpack.c.b16 %v1179, %v1179
      %v1196 = vpack.c.b16 %v1180, %v1180
      %v1197 = vpack.c.b16 %v1181, %v1181
      %v1198 = vpack.c.b16 %v1182, %v1182
      %v1199 = vpack.c.b16 %v1183, %v1183
      %v1200 = vpack.c.b16 %v1184, %v1184
      %v1201 = vpack.c.b16 %v1185, %v1185
      %vm1202 = vsmask.f32 7424
      %v1204 = vshrl.u32 %v1122, 16
      %v1206 = vshll.u32 %v1122, 16
      %v1208 = vrot.slane %v1206, 1
      %v1209 = vor.u32 %v1204, %v1208
      %v1211 = vshll.u32 %v1186, 16
      %v1213 = vrot.slane %v1211, 1
      %v1214 = vsel %vm1202, %v1209, %v1213
      %v1216 = vshrl.u32 %v1123, 16
      %v1218 = vshll.u32 %v1123, 16
      %v1220 = vrot.slane %v1218, 1
      %v1221 = vor.u32 %v1216, %v1220
      %v1223 = vshll.u32 %v1187, 16
      %v1225 = vrot.slane %v1223, 1
      %v1226 = vsel %vm1202, %v1221, %v1225
      %v1228 = vshrl.u32 %v1124, 16
      %v1230 = vshll.u32 %v1124, 16
      %v1232 = vrot.slane %v1230, 1
      %v1233 = vor.u32 %v1228, %v1232
      %v1235 = vshll.u32 %v1188, 16
      %v1237 = vrot.slane %v1235, 1
      %v1238 = vsel %vm1202, %v1233, %v1237
      %v1240 = vshrl.u32 %v1125, 16
      %v1242 = vshll.u32 %v1125, 16
      %v1244 = vrot.slane %v1242, 1
      %v1245 = vor.u32 %v1240, %v1244
      %v1247 = vshll.u32 %v1189, 16
      %v1249 = vrot.slane %v1247, 1
      %v1250 = vsel %vm1202, %v1245, %v1249
      %v1252 = vshrl.u32 %v1126, 16
      %v1254 = vshll.u32 %v1126, 16
      %v1256 = vrot.slane %v1254, 1
      %v1257 = vor.u32 %v1252, %v1256
      %v1259 = vshll.u32 %v1190, 16
      %v1261 = vrot.slane %v1259, 1
      %v1262 = vsel %vm1202, %v1257, %v1261
      %v1264 = vshrl.u32 %v1127, 16
      %v1266 = vshll.u32 %v1127, 16
      %v1268 = vrot.slane %v1266, 1
      %v1269 = vor.u32 %v1264, %v1268
      %v1271 = vshll.u32 %v1191, 16
      %v1273 = vrot.slane %v1271, 1
      %v1274 = vsel %vm1202, %v1269, %v1273
      %v1276 = vshrl.u32 %v1128, 16
      %v1278 = vshll.u32 %v1128, 16
      %v1280 = vrot.slane %v1278, 1
      %v1281 = vor.u32 %v1276, %v1280
      %v1283 = vshll.u32 %v1192, 16
      %v1285 = vrot.slane %v1283, 1
      %v1286 = vsel %vm1202, %v1281, %v1285
      %v1288 = vshrl.u32 %v1129, 16
      %v1290 = vshll.u32 %v1129, 16
      %v1292 = vrot.slane %v1290, 1
      %v1293 = vor.u32 %v1288, %v1292
      %v1295 = vshll.u32 %v1193, 16
      %v1297 = vrot.slane %v1295, 1
      %v1298 = vsel %vm1202, %v1293, %v1297
      %v1300 = vshrl.u32 %v1130, 16
      %v1302 = vshll.u32 %v1130, 16
      %v1304 = vrot.slane %v1302, 1
      %v1305 = vor.u32 %v1300, %v1304
      %v1307 = vshll.u32 %v1194, 16
      %v1309 = vrot.slane %v1307, 1
      %v1310 = vsel %vm1202, %v1305, %v1309
      %v1312 = vshrl.u32 %v1131, 16
      %v1314 = vshll.u32 %v1131, 16
      %v1316 = vrot.slane %v1314, 1
      %v1317 = vor.u32 %v1312, %v1316
      %v1319 = vshll.u32 %v1195, 16
      %v1321 = vrot.slane %v1319, 1
      %v1322 = vsel %vm1202, %v1317, %v1321
      %v1324 = vshrl.u32 %v1132, 16
      %v1326 = vshll.u32 %v1132, 16
      %v1328 = vrot.slane %v1326, 1
      %v1329 = vor.u32 %v1324, %v1328
      %v1331 = vshll.u32 %v1196, 16
      %v1333 = vrot.slane %v1331, 1
      %v1334 = vsel %vm1202, %v1329, %v1333
      %v1336 = vshrl.u32 %v1133, 16
      %v1338 = vshll.u32 %v1133, 16
      %v1340 = vrot.slane %v1338, 1
      %v1341 = vor.u32 %v1336, %v1340
      %v1343 = vshll.u32 %v1197, 16
      %v1345 = vrot.slane %v1343, 1
      %v1346 = vsel %vm1202, %v1341, %v1345
      %v1348 = vshrl.u32 %v1134, 16
      %v1350 = vshll.u32 %v1134, 16
      %v1352 = vrot.slane %v1350, 1
      %v1353 = vor.u32 %v1348, %v1352
      %v1355 = vshll.u32 %v1198, 16
      %v1357 = vrot.slane %v1355, 1
      %v1358 = vsel %vm1202, %v1353, %v1357
      %v1360 = vshrl.u32 %v1135, 16
      %v1362 = vshll.u32 %v1135, 16
      %v1364 = vrot.slane %v1362, 1
      %v1365 = vor.u32 %v1360, %v1364
      %v1367 = vshll.u32 %v1199, 16
      %v1369 = vrot.slane %v1367, 1
      %v1370 = vsel %vm1202, %v1365, %v1369
      %v1372 = vshrl.u32 %v1136, 16
      %v1374 = vshll.u32 %v1136, 16
      %v1376 = vrot.slane %v1374, 1
      %v1377 = vor.u32 %v1372, %v1376
      %v1379 = vshll.u32 %v1200, 16
      %v1381 = vrot.slane %v1379, 1
      %v1382 = vsel %vm1202, %v1377, %v1381
      %v1384 = vshrl.u32 %v1137, 16
      %v1386 = vshll.u32 %v1137, 16
      %v1388 = vrot.slane %v1386, 1
      %v1389 = vor.u32 %v1384, %v1388
      %v1391 = vshll.u32 %v1201, 16
      %v1393 = vrot.slane %v1391, 1
      %v1394 = vsel %vm1202, %v1389, %v1393
      %v1427 = vunpack.c.l.b16 %v1042
      %v1428 = vunpack.c.l.b16 %v1043
      %v1429 = vunpack.c.l.b16 %v1044
      %v1430 = vunpack.c.l.b16 %v1045
      %v1431 = vunpack.c.l.b16 %v1046
      %v1432 = vunpack.c.l.b16 %v1047
      %v1433 = vunpack.c.l.b16 %v1048
      %v1434 = vunpack.c.l.b16 %v1049
      %v1435 = vunpack.c.l.b16 %v1050
      %v1436 = vunpack.c.l.b16 %v1051
      %v1437 = vunpack.c.l.b16 %v1052
      %v1438 = vunpack.c.l.b16 %v1053
      %v1439 = vunpack.c.l.b16 %v1054
      %v1440 = vunpack.c.l.b16 %v1055
      %v1441 = vunpack.c.l.b16 %v1056
      %v1442 = vunpack.c.l.b16 %v1057
      %v1443 = vpack.c.b16 %v1091, %v1427
      %v1444 = vpack.c.b16 %v1093, %v1428
      %v1445 = vpack.c.b16 %v1095, %v1429
      %v1446 = vpack.c.b16 %v1097, %v1430
      %v1447 = vpack.c.b16 %v1099, %v1431
      %v1448 = vpack.c.b16 %v1101, %v1432
      %v1449 = vpack.c.b16 %v1103, %v1433
      %v1450 = vpack.c.b16 %v1105, %v1434
      %v1451 = vpack.c.b16 %v1107, %v1435
      %v1452 = vpack.c.b16 %v1109, %v1436
      %v1453 = vpack.c.b16 %v1111, %v1437
      %v1454 = vpack.c.b16 %v1113, %v1438
      %v1455 = vpack.c.b16 %v1115, %v1439
      %v1456 = vpack.c.b16 %v1117, %v1440
      %v1457 = vpack.c.b16 %v1119, %v1441
      %v1458 = vpack.c.b16 %v1121, %v1442
      %vm1459 = vcmask 1046528
      %v1460 = vrot.slane %v1443, 1
      %v1461 = vrot.slane %v1186, 1
      %v1462 = vsel %vm1459, %v1460, %v1461
      %v1463 = vrot.slane %v1444, 1
      %v1464 = vrot.slane %v1187, 1
      %v1465 = vsel %vm1459, %v1463, %v1464
      %v1466 = vrot.slane %v1445, 1
      %v1467 = vrot.slane %v1188, 1
      %v1468 = vsel %vm1459, %v1466, %v1467
      %v1469 = vrot.slane %v1446, 1
      %v1470 = vrot.slane %v1189, 1
      %v1471 = vsel %vm1459, %v1469, %v1470
      %v1472 = vrot.slane %v1447, 1
      %v1473 = vrot.slane %v1190, 1
      %v1474 = vsel %vm1459, %v1472, %v1473
      %v1475 = vrot.slane %v1448, 1
      %v1476 = vrot.slane %v1191, 1
      %v1477 = vsel %vm1459, %v1475, %v1476
      %v1478 = vrot.slane %v1449, 1
      %v1479 = vrot.slane %v1192, 1
      %v1480 = vsel %vm1459, %v1478, %v1479
      %v1481 = vrot.slane %v1450, 1
      %v1482 = vrot.slane %v1193, 1
      %v1483 = vsel %vm1459, %v1481, %v1482
      %v1484 = vrot.slane %v1451, 1
      %v1485 = vrot.slane %v1194, 1
      %v1486 = vsel %vm1459, %v1484, %v1485
      %v1487 = vrot.slane %v1452, 1
      %v1488 = vrot.slane %v1195, 1
      %v1489 = vsel %vm1459, %v1487, %v1488
      %v1490 = vrot.slane %v1453, 1
      %v1491 = vrot.slane %v1196, 1
      %v1492 = vsel %vm1459, %v1490, %v1491
      %v1493 = vrot.slane %v1454, 1
      %v1494 = vrot.slane %v1197, 1
      %v1495 = vsel %vm1459, %v1493, %v1494
      %v1496 = vrot.slane %v1455, 1
      %v1497 = vrot.slane %v1198, 1
      %v1498 = vsel %vm1459, %v1496, %v1497
      %v1499 = vrot.slane %v1456, 1
      %v1500 = vrot.slane %v1199, 1
      %v1501 = vsel %vm1459, %v1499, %v1500
      %v1502 = vrot.slane %v1457, 1
      %v1503 = vrot.slane %v1200, 1
      %v1504 = vsel %vm1459, %v1502, %v1503
      %v1505 = vrot.slane %v1458, 1
      %v1506 = vrot.slane %v1201, 1
      %v1507 = vsel %vm1459, %v1505, %v1506
      %v1524 = vld [vmem:[%s3] sm:$0xf]
      %v1525 = vld [vmem:[%s3 + $0x4] sm:$0xf]
      %v1526 = vld [vmem:[%s3 + $0x8] sm:$0xf]
      %v1527 = vld [vmem:[%s3 + $0xc] sm:$0xf]
      %v1528 = vld [vmem:[%s3 + $0x10] sm:$0xf]
      %v1529 = vld [vmem:[%s3 + $0x14] sm:$0xf]
      %v1530 = vld [vmem:[%s3 + $0x18] sm:$0xf]
      %v1531 = vld [vmem:[%s3 + $0x1c] sm:$0xf]
      %v1532 = vld [vmem:[%s3 + $0x20] sm:$0xf]
      %v1533 = vld [vmem:[%s3 + $0x24] sm:$0xf]
      %v1534 = vld [vmem:[%s3 + $0x28] sm:$0xf]
      %v1535 = vld [vmem:[%s3 + $0x2c] sm:$0xf]
      %v1536 = vld [vmem:[%s3 + $0x30] sm:$0xf]
      %v1537 = vld [vmem:[%s3 + $0x34] sm:$0xf]
      %v1538 = vld [vmem:[%s3 + $0x38] sm:$0xf]
      %v1539 = vld [vmem:[%s3 + $0x3c] sm:$0xf]
      %v1540 = vld [vmem:[%s3 + $0x40] sm:$0xf]
      %v1541 = vld [vmem:[%s3 + $0x44] sm:$0xf]
      %v1542 = vld [vmem:[%s3 + $0x48] sm:$0xf]
      %v1543 = vld [vmem:[%s3 + $0x4c] sm:$0xf]
      %v1544 = vld [vmem:[%s3 + $0x50] sm:$0xf]
      %v1545 = vld [vmem:[%s3 + $0x54] sm:$0xf]
      %v1546 = vld [vmem:[%s3 + $0x58] sm:$0xf]
      %v1547 = vld [vmem:[%s3 + $0x5c] sm:$0xf]
      %v1548 = vld [vmem:[%s3 + $0x60] sm:$0xf]
      %v1549 = vld [vmem:[%s3 + $0x64] sm:$0xf]
      %v1550 = vld [vmem:[%s3 + $0x68] sm:$0xf]
      %v1551 = vld [vmem:[%s3 + $0x6c] sm:$0xf]
      %v1552 = vld [vmem:[%s3 + $0x70] sm:$0xf]
      %v1553 = vld [vmem:[%s3 + $0x74] sm:$0xf]
      %v1554 = vld [vmem:[%s3 + $0x78] sm:$0xf]
      %v1555 = vld [vmem:[%s3 + $0x7c] sm:$0xf]
      %v1556 = vld [vmem:[%s3 + $0x80] sm:$0xf]
      %v1557 = vld [vmem:[%s3 + $0x84] sm:$0xf]
      %v1558 = vld [vmem:[%s3 + $0x88] sm:$0xf]
      %v1559 = vld [vmem:[%s3 + $0x8c] sm:$0xf]
      %v1560 = vld [vmem:[%s3 + $0x90] sm:$0xf]
      %v1561 = vld [vmem:[%s3 + $0x94] sm:$0xf]
      %v1562 = vld [vmem:[%s3 + $0x98] sm:$0xf]
      %v1563 = vld [vmem:[%s3 + $0x9c] sm:$0xf]
      %v1564 = vld [vmem:[%s3 + $0xa0] sm:$0xf]
      %v1565 = vld [vmem:[%s3 + $0xa4] sm:$0xf]
      %v1566 = vld [vmem:[%s3 + $0xa8] sm:$0xf]
      %v1567 = vld [vmem:[%s3 + $0xac] sm:$0xf]
      %v1568 = vld [vmem:[%s3 + $0xb0] sm:$0xf]
      %v1569 = vld [vmem:[%s3 + $0xb4] sm:$0xf]
      %v1570 = vld [vmem:[%s3 + $0xb8] sm:$0xf]
      %v1571 = vld [vmem:[%s3 + $0xbc] sm:$0xf]
      %v1620 = vunpack.c.l.b16 %v1524
      %v1621 = vunpack.c.l.b16 %v1525
      %v1622 = vunpack.c.l.b16 %v1526
      %v1623 = vunpack.c.l.b16 %v1527
      %v1624 = vunpack.c.l.b16 %v1528
      %v1625 = vunpack.c.l.b16 %v1529
      %v1626 = vunpack.c.l.b16 %v1530
      %v1627 = vunpack.c.l.b16 %v1531
      %v1628 = vunpack.c.l.b16 %v1532
      %v1629 = vunpack.c.l.b16 %v1533
      %v1630 = vunpack.c.l.b16 %v1534
      %v1631 = vunpack.c.l.b16 %v1535
      %v1632 = vunpack.c.l.b16 %v1536
      %v1633 = vunpack.c.l.b16 %v1537
      %v1634 = vunpack.c.l.b16 %v1538
      %v1635 = vunpack.c.l.b16 %v1539
      %v1636 = vunpack.c.l.b16 %v1540
      %v1637 = vunpack.c.l.b16 %v1541
      %v1638 = vunpack.c.l.b16 %v1542
      %v1639 = vunpack.c.l.b16 %v1543
      %v1640 = vunpack.c.l.b16 %v1544
      %v1641 = vunpack.c.l.b16 %v1545
      %v1642 = vunpack.c.l.b16 %v1546
      %v1643 = vunpack.c.l.b16 %v1547
      %v1644 = vunpack.c.l.b16 %v1548
      %v1645 = vunpack.c.l.b16 %v1549
      %v1646 = vunpack.c.l.b16 %v1550
      %v1647 = vunpack.c.l.b16 %v1551
      %v1648 = vunpack.c.l.b16 %v1552
      %v1649 = vunpack.c.l.b16 %v1553
      %v1650 = vunpack.c.l.b16 %v1554
      %v1651 = vunpack.c.l.b16 %v1555
      %v1652 = vunpack.c.l.b16 %v1556
      %v1653 = vunpack.c.l.b16 %v1557
      %v1654 = vunpack.c.l.b16 %v1558
      %v1655 = vunpack.c.l.b16 %v1559
      %v1656 = vunpack.c.l.b16 %v1560
      %v1657 = vunpack.c.l.b16 %v1561
      %v1658 = vunpack.c.l.b16 %v1562
      %v1659 = vunpack.c.l.b16 %v1563
      %v1660 = vunpack.c.l.b16 %v1564
      %v1661 = vunpack.c.l.b16 %v1565
      %v1662 = vunpack.c.l.b16 %v1566
      %v1663 = vunpack.c.l.b16 %v1567
      %v1664 = vunpack.c.l.b16 %v1568
      %v1665 = vunpack.c.l.b16 %v1569
      %v1666 = vunpack.c.l.b16 %v1570
      %v1667 = vunpack.c.l.b16 %v1571
      %v1668 = vpack.c.b16 %v1621, %v1620
      %v1669 = vpack.c.b16 %v1623, %v1622
      %v1670 = vpack.c.b16 %v1625, %v1624
      %v1671 = vpack.c.b16 %v1627, %v1626
      %v1672 = vpack.c.b16 %v1629, %v1628
      %v1673 = vpack.c.b16 %v1631, %v1630
      %v1674 = vpack.c.b16 %v1633, %v1632
      %v1675 = vpack.c.b16 %v1635, %v1634
      %v1676 = vpack.c.b16 %v1637, %v1636
      %v1677 = vpack.c.b16 %v1639, %v1638
      %v1678 = vpack.c.b16 %v1641, %v1640
      %v1679 = vpack.c.b16 %v1643, %v1642
      %v1680 = vpack.c.b16 %v1645, %v1644
      %v1681 = vpack.c.b16 %v1647, %v1646
      %v1682 = vpack.c.b16 %v1649, %v1648
      %v1683 = vpack.c.b16 %v1651, %v1650
      %v1684 = vpack.c.b16 %v1653, %v1652
      %v1685 = vpack.c.b16 %v1655, %v1654
      %v1686 = vpack.c.b16 %v1657, %v1656
      %v1687 = vpack.c.b16 %v1659, %v1658
      %v1688 = vpack.c.b16 %v1661, %v1660
      %v1689 = vpack.c.b16 %v1663, %v1662
      %v1690 = vpack.c.b16 %v1665, %v1664
      %v1691 = vpack.c.b16 %v1667, %v1666
      %1716 = vmatprep.subr.bf16.mxu0 0
      %1717 = vmatpush1.bf16.msra.mxu0 %v1675
      %1718 = vmatprep.subr.bf16.mxu0 0
      %1719 = vmatpush1.bf16.msra.mxu0 %v1674
      %1720 = vmatprep.subr.bf16.mxu0 0
      %1721 = vmatpush1.bf16.msra.mxu0 %v1673
      %1722 = vmatprep.subr.bf16.mxu0 0
      %1723 = vmatpush1.bf16.msra.mxu0 %v1672
      %1724 = vmatprep.subr.bf16.mxu0 0
      %1725 = vmatpush1.bf16.msra.mxu0 %v1671
      %1726 = vmatprep.subr.bf16.mxu0 0
      %1727 = vmatpush1.bf16.msra.mxu0 %v1670
      %1728 = vmatprep.subr.bf16.mxu0 0
      %1729 = vmatpush1.bf16.msra.mxu0 %v1669
      %1730 = vmatprep.subr.bf16.mxu0 0
      %1731 = vmatpush1.bf16.msra.mxu0 %v1668
      %1732 = vmatprep.subr.bf16.mxu0 0
      %1733 = vmatpush2.bf16.msra.mxu0 %v1683
      %1734 = vmatprep.subr.bf16.mxu0 0
      %1735 = vmatpush2.bf16.msra.mxu0 %v1682
      %1736 = vmatprep.subr.bf16.mxu0 0
      %1737 = vmatpush2.bf16.msra.mxu0 %v1681
      %1738 = vmatprep.subr.bf16.mxu0 0
      %1739 = vmatpush2.bf16.msra.mxu0 %v1680
      %1740 = vmatprep.subr.bf16.mxu0 0
      %1741 = vmatpush2.bf16.msra.mxu0 %v1679
      %1742 = vmatprep.subr.bf16.mxu0 0
      %1743 = vmatpush2.bf16.msra.mxu0 %v1678
      %1744 = vmatprep.subr.bf16.mxu0 0
      %1745 = vmatpush2.bf16.msra.mxu0 %v1677
      %1746 = vmatprep.subr.bf16.mxu0 0
      %1747 = vmatpush2.bf16.msra.mxu0 %v1676
      %1748 = vmatprep.mubr.bf16.mxu0 %v1214
      %1749 = vmatmul.mubr.bf16.gmra.mxu0 %v1122
      %v1750 = vpop.f32.mrf.mxu0
      %v1751 = vadd.f32 0.0, %v1750
      %v1752 = vpop.f32.mrf.mxu0
      %v1753 = vpop.f32.mrf.mxu0
      %v1754 = vadd.f32 0.0, %v1753
      %v1755 = vpop.f32.mrf.mxu0
      %1756 = vmatprep.mubr.bf16.mxu0 %v1226
      %1757 = vmatmul.mubr.bf16.gmra.mxu0 %v1123
      %v1758 = vpop.f32.mrf.mxu0
      %v1759 = vadd.f32 0.0, %v1758
      %v1760 = vpop.f32.mrf.mxu0
      %v1761 = vpop.f32.mrf.mxu0
      %v1762 = vadd.f32 0.0, %v1761
      %v1763 = vpop.f32.mrf.mxu0
      %1764 = vmatprep.mubr.bf16.mxu0 %v1238
      %1765 = vmatmul.mubr.bf16.gmra.mxu0 %v1124
      %v1766 = vpop.f32.mrf.mxu0
      %v1767 = vadd.f32 0.0, %v1766
      %v1768 = vpop.f32.mrf.mxu0
      %v1769 = vpop.f32.mrf.mxu0
      %v1770 = vadd.f32 0.0, %v1769
      %v1771 = vpop.f32.mrf.mxu0
      %1772 = vmatprep.mubr.bf16.mxu0 %v1250
      %1773 = vmatmul.mubr.bf16.gmra.mxu0 %v1125
      %v1774 = vpop.f32.mrf.mxu0
      %v1775 = vadd.f32 0.0, %v1774
      %v1776 = vpop.f32.mrf.mxu0
      %v1777 = vpop.f32.mrf.mxu0
      %v1778 = vadd.f32 0.0, %v1777
      %v1779 = vpop.f32.mrf.mxu0
      %1780 = vmatprep.mubr.bf16.mxu0 %v1262
      %1781 = vmatmul.mubr.bf16.gmra.mxu0 %v1126
      %v1782 = vpop.f32.mrf.mxu0
      %v1783 = vadd.f32 0.0, %v1782
      %v1784 = vpop.f32.mrf.mxu0
      %v1785 = vpop.f32.mrf.mxu0
      %v1786 = vadd.f32 0.0, %v1785
      %v1787 = vpop.f32.mrf.mxu0
      %1788 = vmatprep.mubr.bf16.mxu0 %v1274
      %1789 = vmatmul.mubr.bf16.gmra.mxu0 %v1127
      %v1790 = vpop.f32.mrf.mxu0
      %v1791 = vadd.f32 0.0, %v1790
      %v1792 = vpop.f32.mrf.mxu0
      %v1793 = vpop.f32.mrf.mxu0
      %v1794 = vadd.f32 0.0, %v1793
      %v1795 = vpop.f32.mrf.mxu0
      %1796 = vmatprep.mubr.bf16.mxu0 %v1286
      %1797 = vmatmul.mubr.bf16.gmra.mxu0 %v1128
      %v1798 = vpop.f32.mrf.mxu0
      %v1799 = vadd.f32 0.0, %v1798
      %v1800 = vpop.f32.mrf.mxu0
      %v1801 = vpop.f32.mrf.mxu0
      %v1802 = vadd.f32 0.0, %v1801
      %v1803 = vpop.f32.mrf.mxu0
      %1804 = vmatprep.mubr.bf16.mxu0 %v1298
      %1805 = vmatmul.mubr.bf16.gmra.mxu0 %v1129
      %v1806 = vpop.f32.mrf.mxu0
      %v1807 = vadd.f32 0.0, %v1806
      %v1808 = vpop.f32.mrf.mxu0
      %v1809 = vpop.f32.mrf.mxu0
      %v1810 = vadd.f32 0.0, %v1809
      %v1811 = vpop.f32.mrf.mxu0
      %1812 = vmatprep.mubr.bf16.mxu0 %v1310
      %1813 = vmatmul.mubr.bf16.gmra.mxu0 %v1130
      %v1814 = vpop.f32.mrf.mxu0
      %v1815 = vadd.f32 0.0, %v1814
      %v1816 = vpop.f32.mrf.mxu0
      %v1817 = vpop.f32.mrf.mxu0
      %v1818 = vadd.f32 0.0, %v1817
      %v1819 = vpop.f32.mrf.mxu0
      %1820 = vmatprep.mubr.bf16.mxu0 %v1322
      %1821 = vmatmul.mubr.bf16.gmra.mxu0 %v1131
      %v1822 = vpop.f32.mrf.mxu0
      %v1823 = vadd.f32 0.0, %v1822
      %v1824 = vpop.f32.mrf.mxu0
      %v1825 = vpop.f32.mrf.mxu0
      %v1826 = vadd.f32 0.0, %v1825
      %v1827 = vpop.f32.mrf.mxu0
      %1828 = vmatprep.mubr.bf16.mxu0 %v1334
      %1829 = vmatmul.mubr.bf16.gmra.mxu0 %v1132
      %v1830 = vpop.f32.mrf.mxu0
      %v1831 = vadd.f32 0.0, %v1830
      %v1832 = vpop.f32.mrf.mxu0
      %v1833 = vpop.f32.mrf.mxu0
      %v1834 = vadd.f32 0.0, %v1833
      %v1835 = vpop.f32.mrf.mxu0
      %1836 = vmatprep.mubr.bf16.mxu0 %v1346
      %1837 = vmatmul.mubr.bf16.gmra.mxu0 %v1133
      %v1838 = vpop.f32.mrf.mxu0
      %v1839 = vadd.f32 0.0, %v1838
      %v1840 = vpop.f32.mrf.mxu0
      %v1841 = vpop.f32.mrf.mxu0
      %v1842 = vadd.f32 0.0, %v1841
      %v1843 = vpop.f32.mrf.mxu0
      %1844 = vmatprep.mubr.bf16.mxu0 %v1358
      %1845 = vmatmul.mubr.bf16.gmra.mxu0 %v1134
      %v1846 = vpop.f32.mrf.mxu0
      %v1847 = vadd.f32 0.0, %v1846
      %v1848 = vpop.f32.mrf.mxu0
      %v1849 = vpop.f32.mrf.mxu0
      %v1850 = vadd.f32 0.0, %v1849
      %v1851 = vpop.f32.mrf.mxu0
      %1852 = vmatprep.mubr.bf16.mxu0 %v1370
      %1853 = vmatmul.mubr.bf16.gmra.mxu0 %v1135
      %v1854 = vpop.f32.mrf.mxu0
      %v1855 = vadd.f32 0.0, %v1854
      %v1856 = vpop.f32.mrf.mxu0
      %v1857 = vpop.f32.mrf.mxu0
      %v1858 = vadd.f32 0.0, %v1857
      %v1859 = vpop.f32.mrf.mxu0
      %1860 = vmatprep.mubr.bf16.mxu0 %v1382
      %1861 = vmatmul.mubr.bf16.gmra.mxu0 %v1136
      %v1862 = vpop.f32.mrf.mxu0
      %v1863 = vadd.f32 0.0, %v1862
      %v1864 = vpop.f32.mrf.mxu0
      %v1865 = vpop.f32.mrf.mxu0
      %v1866 = vadd.f32 0.0, %v1865
      %v1867 = vpop.f32.mrf.mxu0
      %1868 = vmatprep.mubr.bf16.mxu0 %v1394
      %1869 = vmatmul.mubr.bf16.gmra.mxu0 %v1137
      %v1870 = vpop.f32.mrf.mxu0
      %v1871 = vadd.f32 0.0, %v1870
      %v1872 = vpop.f32.mrf.mxu0
      %v1873 = vpop.f32.mrf.mxu0
      %v1874 = vadd.f32 0.0, %v1873
      %v1875 = vpop.f32.mrf.mxu0
      %1876 = vdwg.mxu0
      %1877 = vmatprep.subr.bf16.mxu0 0
      %1878 = vmatpush1.bf16.msra.mxu0 %v1691
      %1879 = vmatprep.subr.bf16.mxu0 0
      %1880 = vmatpush1.bf16.msra.mxu0 %v1690
      %1881 = vmatprep.subr.bf16.mxu0 0
      %1882 = vmatpush1.bf16.msra.mxu0 %v1689
      %1883 = vmatprep.subr.bf16.mxu0 0
      %1884 = vmatpush1.bf16.msra.mxu0 %v1688
      %1885 = vmatprep.subr.bf16.mxu0 0
      %1886 = vmatpush1.bf16.msra.mxu0 %v1687
      %1887 = vmatprep.subr.bf16.mxu0 0
      %1888 = vmatpush1.bf16.msra.mxu0 %v1686
      %1889 = vmatprep.subr.bf16.mxu0 0
      %1890 = vmatpush1.bf16.msra.mxu0 %v1685
      %1891 = vmatprep.subr.bf16.mxu0 0
      %1892 = vmatpush1.bf16.msra.mxu0 %v1684
      %1893 = vmatprep.subr.bf16.mxu0 0
      %1894 = vmatpush2.bf16.msra.mxu0 0
      %1895 = vmatprep.subr.bf16.mxu0 0
      %1896 = vmatpush2.bf16.msra.mxu0 0
      %1897 = vmatprep.subr.bf16.mxu0 0
      %1898 = vmatpush2.bf16.msra.mxu0 0
      %1899 = vmatprep.subr.bf16.mxu0 0
      %1900 = vmatpush2.bf16.msra.mxu0 0
      %1901 = vmatprep.subr.bf16.mxu0 0
      %1902 = vmatpush2.bf16.msra.mxu0 0
      %1903 = vmatprep.subr.bf16.mxu0 0
      %1904 = vmatpush2.bf16.msra.mxu0 0
      %1905 = vmatprep.subr.bf16.mxu0 0
      %1906 = vmatpush2.bf16.msra.mxu0 0
      %1907 = vmatprep.subr.bf16.mxu0 0
      %1908 = vmatpush2.bf16.msra.mxu0 0
      %1909 = vmatprep.mubr.bf16.mxu0 0
      %1910 = vmatmul.mubr.bf16.gmra.mxu0 %v1462
      %v1911 = vpop.f32.mrf.mxu0
      %v1912 = vadd.f32 %v1751, %v1911
      %v1913 = vpop.f32.mrf.mxu0
      %v1914 = vpop.f32.mrf.mxu0
      %v1915 = vadd.f32 %v1754, %v1914
      %v1916 = vpop.f32.mrf.mxu0
      %1917 = vmatprep.mubr.bf16.mxu0 0
      %1918 = vmatmul.mubr.bf16.gmra.mxu0 %v1465
      %v1919 = vpop.f32.mrf.mxu0
      %v1920 = vadd.f32 %v1759, %v1919
      %v1921 = vpop.f32.mrf.mxu0
      %v1922 = vpop.f32.mrf.mxu0
      %v1923 = vadd.f32 %v1762, %v1922
      %v1924 = vpop.f32.mrf.mxu0
      %1925 = vmatprep.mubr.bf16.mxu0 0
      %1926 = vmatmul.mubr.bf16.gmra.mxu0 %v1468
      %v1927 = vpop.f32.mrf.mxu0
      %v1928 = vadd.f32 %v1767, %v1927
      %v1929 = vpop.f32.mrf.mxu0
      %v1930 = vpop.f32.mrf.mxu0
      %v1931 = vadd.f32 %v1770, %v1930
      %v1932 = vpop.f32.mrf.mxu0
      %1933 = vmatprep.mubr.bf16.mxu0 0
      %1934 = vmatmul.mubr.bf16.gmra.mxu0 %v1471
      %v1935 = vpop.f32.mrf.mxu0
      %v1936 = vadd.f32 %v1775, %v1935
      %v1937 = vpop.f32.mrf.mxu0
      %v1938 = vpop.f32.mrf.mxu0
      %v1939 = vadd.f32 %v1778, %v1938
      %v1940 = vpop.f32.mrf.mxu0
      %1941 = vmatprep.mubr.bf16.mxu0 0
      %1942 = vmatmul.mubr.bf16.gmra.mxu0 %v1474
      %v1943 = vpop.f32.mrf.mxu0
      %v1944 = vadd.f32 %v1783, %v1943
      %v1945 = vpop.f32.mrf.mxu0
      %v1946 = vpop.f32.mrf.mxu0
      %v1947 = vadd.f32 %v1786, %v1946
      %v1948 = vpop.f32.mrf.mxu0
      %1949 = vmatprep.mubr.bf16.mxu0 0
      %1950 = vmatmul.mubr.bf16.gmra.mxu0 %v1477
      %v1951 = vpop.f32.mrf.mxu0
      %v1952 = vadd.f32 %v1791, %v1951
      %v1953 = vpop.f32.mrf.mxu0
      %v1954 = vpop.f32.mrf.mxu0
      %v1955 = vadd.f32 %v1794, %v1954
      %v1956 = vpop.f32.mrf.mxu0
      %1957 = vmatprep.mubr.bf16.mxu0 0
      %1958 = vmatmul.mubr.bf16.gmra.mxu0 %v1480
      %v1959 = vpop.f32.mrf.mxu0
      %v1960 = vadd.f32 %v1799, %v1959
      %v1961 = vpop.f32.mrf.mxu0
      %v1962 = vpop.f32.mrf.mxu0
      %v1963 = vadd.f32 %v1802, %v1962
      %v1964 = vpop.f32.mrf.mxu0
      %1965 = vmatprep.mubr.bf16.mxu0 0
      %1966 = vmatmul.mubr.bf16.gmra.mxu0 %v1483
      %v1967 = vpop.f32.mrf.mxu0
      %v1968 = vadd.f32 %v1807, %v1967
      %v1969 = vpop.f32.mrf.mxu0
      %v1970 = vpop.f32.mrf.mxu0
      %v1971 = vadd.f32 %v1810, %v1970
      %v1972 = vpop.f32.mrf.mxu0
      %1973 = vmatprep.mubr.bf16.mxu0 0
      %1974 = vmatmul.mubr.bf16.gmra.mxu0 %v1486
      %v1975 = vpop.f32.mrf.mxu0
      %v1976 = vadd.f32 %v1815, %v1975
      %v1977 = vpop.f32.mrf.mxu0
      %v1978 = vpop.f32.mrf.mxu0
      %v1979 = vadd.f32 %v1818, %v1978
      %v1980 = vpop.f32.mrf.mxu0
      %1981 = vmatprep.mubr.bf16.mxu0 0
      %1982 = vmatmul.mubr.bf16.gmra.mxu0 %v1489
      %v1983 = vpop.f32.mrf.mxu0
      %v1984 = vadd.f32 %v1823, %v1983
      %v1985 = vpop.f32.mrf.mxu0
      %v1986 = vpop.f32.mrf.mxu0
      %v1987 = vadd.f32 %v1826, %v1986
      %v1988 = vpop.f32.mrf.mxu0
      %1989 = vmatprep.mubr.bf16.mxu0 0
      %1990 = vmatmul.mubr.bf16.gmra.mxu0 %v1492
      %v1991 = vpop.f32.mrf.mxu0
      %v1992 = vadd.f32 %v1831, %v1991
      %v1993 = vpop.f32.mrf.mxu0
      %v1994 = vpop.f32.mrf.mxu0
      %v1995 = vadd.f32 %v1834, %v1994
      %v1996 = vpop.f32.mrf.mxu0
      %1997 = vmatprep.mubr.bf16.mxu0 0
      %1998 = vmatmul.mubr.bf16.gmra.mxu0 %v1495
      %v1999 = vpop.f32.mrf.mxu0
      %v2000 = vadd.f32 %v1839, %v1999
      %v2001 = vpop.f32.mrf.mxu0
      %v2002 = vpop.f32.mrf.mxu0
      %v2003 = vadd.f32 %v1842, %v2002
      %v2004 = vpop.f32.mrf.mxu0
      %2005 = vmatprep.mubr.bf16.mxu0 0
      %2006 = vmatmul.mubr.bf16.gmra.mxu0 %v1498
      %v2007 = vpop.f32.mrf.mxu0
      %v2008 = vadd.f32 %v1847, %v2007
      %v2009 = vpop.f32.mrf.mxu0
      %v2010 = vpop.f32.mrf.mxu0
      %v2011 = vadd.f32 %v1850, %v2010
      %v2012 = vpop.f32.mrf.mxu0
      %2013 = vmatprep.mubr.bf16.mxu0 0
      %2014 = vmatmul.mubr.bf16.gmra.mxu0 %v1501
      %v2015 = vpop.f32.mrf.mxu0
      %v2016 = vadd.f32 %v1855, %v2015
      %v2017 = vpop.f32.mrf.mxu0
      %v2018 = vpop.f32.mrf.mxu0
      %v2019 = vadd.f32 %v1858, %v2018
      %v2020 = vpop.f32.mrf.mxu0
      %2021 = vmatprep.mubr.bf16.mxu0 0
      %2022 = vmatmul.mubr.bf16.gmra.mxu0 %v1504
      %v2023 = vpop.f32.mrf.mxu0
      %v2024 = vadd.f32 %v1863, %v2023
      %v2025 = vpop.f32.mrf.mxu0
      %v2026 = vpop.f32.mrf.mxu0
      %v2027 = vadd.f32 %v1866, %v2026
      %v2028 = vpop.f32.mrf.mxu0
      %2029 = vmatprep.mubr.bf16.mxu0 0
      %2030 = vmatmul.mubr.bf16.gmra.mxu0 %v1507
      %v2031 = vpop.f32.mrf.mxu0
      %v2032 = vadd.f32 %v1871, %v2031
      %v2033 = vpop.f32.mrf.mxu0
      %v2034 = vpop.f32.mrf.mxu0
      %v2035 = vadd.f32 %v1874, %v2034
      %v2036 = vpop.f32.mrf.mxu0
      %2037 = vdwg.mxu0
      %2038 = vst [vmem:[#allocation3] sm:$0xff] %v1912
      %2039 = vst [vmem:[#allocation3 + $0x8] sm:$0xff] %v1915
      %2040 = vst [vmem:[#allocation3 + $0x10] sm:$0xff] %v1920
      %2041 = vst [vmem:[#allocation3 + $0x18] sm:$0xff] %v1923
      %2042 = vst [vmem:[#allocation3 + $0x20] sm:$0xff] %v1928
      %2043 = vst [vmem:[#allocation3 + $0x28] sm:$0xff] %v1931
      %2044 = vst [vmem:[#allocation3 + $0x30] sm:$0xff] %v1936
      %2045 = vst [vmem:[#allocation3 + $0x38] sm:$0xff] %v1939
      %2046 = vst [vmem:[#allocation3 + $0x40] sm:$0xff] %v1944
      %2047 = vst [vmem:[#allocation3 + $0x48] sm:$0xff] %v1947
      %2048 = vst [vmem:[#allocation3 + $0x50] sm:$0xff] %v1952
      %2049 = vst [vmem:[#allocation3 + $0x58] sm:$0xff] %v1955
      %2050 = vst [vmem:[#allocation3 + $0x60] sm:$0xff] %v1960
      %2051 = vst [vmem:[#allocation3 + $0x68] sm:$0xff] %v1963
      %2052 = vst [vmem:[#allocation3 + $0x70] sm:$0xff] %v1968
      %2053 = vst [vmem:[#allocation3 + $0x78] sm:$0xff] %v1971
      %2054 = vst [vmem:[#allocation3 + $0x80] sm:$0xff] %v1976
      %2055 = vst [vmem:[#allocation3 + $0x88] sm:$0xff] %v1979
      %2056 = vst [vmem:[#allocation3 + $0x90] sm:$0xff] %v1984
      %2057 = vst [vmem:[#allocation3 + $0x98] sm:$0xff] %v1987
      %2058 = vst [vmem:[#allocation3 + $0xa0] sm:$0xff] %v1992
      %2059 = vst [vmem:[#allocation3 + $0xa8] sm:$0xff] %v1995
      %2060 = vst [vmem:[#allocation3 + $0xb0] sm:$0xff] %v2000
      %2061 = vst [vmem:[#allocation3 + $0xb8] sm:$0xff] %v2003
      %2062 = vst [vmem:[#allocation3 + $0xc0] sm:$0xff] %v2008
      %2063 = vst [vmem:[#allocation3 + $0xc8] sm:$0xff] %v2011
      %2064 = vst [vmem:[#allocation3 + $0xd0] sm:$0xff] %v2016
      %2065 = vst [vmem:[#allocation3 + $0xd8] sm:$0xff] %v2019
      %2066 = vst [vmem:[#allocation3 + $0xe0] sm:$0xff] %v2024
      %2067 = vst [vmem:[#allocation3 + $0xe8] sm:$0xff] %v2027
      %2068 = vst [vmem:[#allocation3 + $0xf0] sm:$0xff] %v2032
      %2069 = vst [vmem:[#allocation3 + $0xf8] sm:$0xff] %v2035
      %v2070 = vld [vmem:[%s876] sm:$0xf]
      %v2071 = vld [vmem:[%s876 + $0x4] sm:$0xf]
      %v2072 = vld [vmem:[%s876 + $0xc] sm:$0xf]
      %v2073 = vld [vmem:[%s876 + $0x10] sm:$0xf]
      %v2074 = vld [vmem:[%s876 + $0x18] sm:$0xf]
      %v2075 = vld [vmem:[%s876 + $0x1c] sm:$0xf]
      %v2076 = vld [vmem:[%s876 + $0x24] sm:$0xf]
      %v2077 = vld [vmem:[%s876 + $0x28] sm:$0xf]
      %v2078 = vld [vmem:[%s876 + $0x30] sm:$0xf]
      %v2079 = vld [vmem:[%s876 + $0x34] sm:$0xf]
      %v2080 = vld [vmem:[%s876 + $0x3c] sm:$0xf]
      %v2081 = vld [vmem:[%s876 + $0x40] sm:$0xf]
      %v2082 = vld [vmem:[%s876 + $0x48] sm:$0xf]
      %v2083 = vld [vmem:[%s876 + $0x4c] sm:$0xf]
      %v2084 = vld [vmem:[%s876 + $0x54] sm:$0xf]
      %v2085 = vld [vmem:[%s876 + $0x58] sm:$0xf]
      %v2086 = vld [vmem:[%s876 + $0x60] sm:$0xf]
      %v2087 = vld [vmem:[%s876 + $0x64] sm:$0xf]
      %v2088 = vld [vmem:[%s876 + $0x6c] sm:$0xf]
      %v2089 = vld [vmem:[%s876 + $0x70] sm:$0xf]
      %v2090 = vld [vmem:[%s876 + $0x78] sm:$0xf]
      %v2091 = vld [vmem:[%s876 + $0x7c] sm:$0xf]
      %v2092 = vld [vmem:[%s876 + $0x84] sm:$0xf]
      %v2093 = vld [vmem:[%s876 + $0x88] sm:$0xf]
      %v2094 = vld [vmem:[%s876 + $0x90] sm:$0xf]
      %v2095 = vld [vmem:[%s876 + $0x94] sm:$0xf]
      %v2096 = vld [vmem:[%s876 + $0x9c] sm:$0xf]
      %v2097 = vld [vmem:[%s876 + $0xa0] sm:$0xf]
      %v2098 = vld [vmem:[%s876 + $0xa8] sm:$0xf]
      %v2099 = vld [vmem:[%s876 + $0xac] sm:$0xf]
      %v2100 = vld [vmem:[%s876 + $0xb4] sm:$0xf]
      %v2101 = vld [vmem:[%s876 + $0xb8] sm:$0xf]
      %v2102 = vld [vmem:[%s876 + $0x8] sm:$0x1]
      %v2103 = vld [vmem:[%s876 + $0x14] sm:$0x1]
      %v2104 = vld [vmem:[%s876 + $0x20] sm:$0x1]
      %v2105 = vld [vmem:[%s876 + $0x2c] sm:$0x1]
      %v2106 = vld [vmem:[%s876 + $0x38] sm:$0x1]
      %v2107 = vld [vmem:[%s876 + $0x44] sm:$0x1]
      %v2108 = vld [vmem:[%s876 + $0x50] sm:$0x1]
      %v2109 = vld [vmem:[%s876 + $0x5c] sm:$0x1]
      %v2110 = vld [vmem:[%s876 + $0x68] sm:$0x1]
      %v2111 = vld [vmem:[%s876 + $0x74] sm:$0x1]
      %v2112 = vld [vmem:[%s876 + $0x80] sm:$0x1]
      %v2113 = vld [vmem:[%s876 + $0x8c] sm:$0x1]
      %v2114 = vld [vmem:[%s876 + $0x98] sm:$0x1]
      %v2115 = vld [vmem:[%s876 + $0xa4] sm:$0x1]
      %v2116 = vld [vmem:[%s876 + $0xb0] sm:$0x1]
      %v2117 = vld [vmem:[%s876 + $0xbc] sm:$0x1]
      %v2118 = vld [vmem:[%s876] sm:$0xe]
      %v2119 = vld [vmem:[%s876 + $0xc] sm:$0xe]
      %v2120 = vld [vmem:[%s876 + $0x18] sm:$0xe]
      %v2121 = vld [vmem:[%s876 + $0x24] sm:$0xe]
      %v2122 = vld [vmem:[%s876 + $0x30] sm:$0xe]
      %v2123 = vld [vmem:[%s876 + $0x3c] sm:$0xe]
      %v2124 = vld [vmem:[%s876 + $0x48] sm:$0xe]
      %v2125 = vld [vmem:[%s876 + $0x54] sm:$0xe]
      %v2126 = vld [vmem:[%s876 + $0x60] sm:$0xe]
      %v2127 = vld [vmem:[%s876 + $0x6c] sm:$0xe]
      %v2128 = vld [vmem:[%s876 + $0x78] sm:$0xe]
      %v2129 = vld [vmem:[%s876 + $0x84] sm:$0xe]
      %v2130 = vld [vmem:[%s876 + $0x90] sm:$0xe]
      %v2131 = vld [vmem:[%s876 + $0x9c] sm:$0xe]
      %v2132 = vld [vmem:[%s876 + $0xa8] sm:$0xe]
      %v2133 = vld [vmem:[%s876 + $0xb4] sm:$0xe]
      %v2166 = vunpack.c.l.b16 %v2070
      %v2167 = vunpack.c.l.b16 %v2071
      %v2168 = vunpack.c.l.b16 %v2072
      %v2169 = vunpack.c.l.b16 %v2073
      %v2170 = vunpack.c.l.b16 %v2074
      %v2171 = vunpack.c.l.b16 %v2075
      %v2172 = vunpack.c.l.b16 %v2076
      %v2173 = vunpack.c.l.b16 %v2077
      %v2174 = vunpack.c.l.b16 %v2078
      %v2175 = vunpack.c.l.b16 %v2079
      %v2176 = vunpack.c.l.b16 %v2080
      %v2177 = vunpack.c.l.b16 %v2081
      %v2178 = vunpack.c.l.b16 %v2082
      %v2179 = vunpack.c.l.b16 %v2083
      %v2180 = vunpack.c.l.b16 %v2084
      %v2181 = vunpack.c.l.b16 %v2085
      %v2182 = vunpack.c.l.b16 %v2086
      %v2183 = vunpack.c.l.b16 %v2087
      %v2184 = vunpack.c.l.b16 %v2088
      %v2185 = vunpack.c.l.b16 %v2089
      %v2186 = vunpack.c.l.b16 %v2090
      %v2187 = vunpack.c.l.b16 %v2091
      %v2188 = vunpack.c.l.b16 %v2092
      %v2189 = vunpack.c.l.b16 %v2093
      %v2190 = vunpack.c.l.b16 %v2094
      %v2191 = vunpack.c.l.b16 %v2095
      %v2192 = vunpack.c.l.b16 %v2096
      %v2193 = vunpack.c.l.b16 %v2097
      %v2194 = vunpack.c.l.b16 %v2098
      %v2195 = vunpack.c.l.b16 %v2099
      %v2196 = vunpack.c.l.b16 %v2100
      %v2197 = vunpack.c.l.b16 %v2101
      %v2198 = vpack.c.b16 %v2167, %v2166
      %v2199 = vpack.c.b16 %v2169, %v2168
      %v2200 = vpack.c.b16 %v2171, %v2170
      %v2201 = vpack.c.b16 %v2173, %v2172
      %v2202 = vpack.c.b16 %v2175, %v2174
      %v2203 = vpack.c.b16 %v2177, %v2176
      %v2204 = vpack.c.b16 %v2179, %v2178
      %v2205 = vpack.c.b16 %v2181, %v2180
      %v2206 = vpack.c.b16 %v2183, %v2182
      %v2207 = vpack.c.b16 %v2185, %v2184
      %v2208 = vpack.c.b16 %v2187, %v2186
      %v2209 = vpack.c.b16 %v2189, %v2188
      %v2210 = vpack.c.b16 %v2191, %v2190
      %v2211 = vpack.c.b16 %v2193, %v2192
      %v2212 = vpack.c.b16 %v2195, %v2194
      %v2213 = vpack.c.b16 %v2197, %v2196
      %v2246 = vunpack.c.l.b16 %v2102
      %v2247 = vunpack.c.l.b16 %v2103
      %v2248 = vunpack.c.l.b16 %v2104
      %v2249 = vunpack.c.l.b16 %v2105
      %v2250 = vunpack.c.l.b16 %v2106
      %v2251 = vunpack.c.l.b16 %v2107
      %v2252 = vunpack.c.l.b16 %v2108
      %v2253 = vunpack.c.l.b16 %v2109
      %v2254 = vunpack.c.l.b16 %v2110
      %v2255 = vunpack.c.l.b16 %v2111
      %v2256 = vunpack.c.l.b16 %v2112
      %v2257 = vunpack.c.l.b16 %v2113
      %v2258 = vunpack.c.l.b16 %v2114
      %v2259 = vunpack.c.l.b16 %v2115
      %v2260 = vunpack.c.l.b16 %v2116
      %v2261 = vunpack.c.l.b16 %v2117
      %v2262 = vpack.c.b16 %v2246, %v2246
      %v2263 = vpack.c.b16 %v2247, %v2247
      %v2264 = vpack.c.b16 %v2248, %v2248
      %v2265 = vpack.c.b16 %v2249, %v2249
      %v2266 = vpack.c.b16 %v2250, %v2250
      %v2267 = vpack.c.b16 %v2251, %v2251
      %v2268 = vpack.c.b16 %v2252, %v2252
      %v2269 = vpack.c.b16 %v2253, %v2253
      %v2270 = vpack.c.b16 %v2254, %v2254
      %v2271 = vpack.c.b16 %v2255, %v2255
      %v2272 = vpack.c.b16 %v2256, %v2256
      %v2273 = vpack.c.b16 %v2257, %v2257
      %v2274 = vpack.c.b16 %v2258, %v2258
      %v2275 = vpack.c.b16 %v2259, %v2259
      %v2276 = vpack.c.b16 %v2260, %v2260
      %v2277 = vpack.c.b16 %v2261, %v2261
      %v2279 = vshrl.u32 %v2198, 16
      %v2281 = vshll.u32 %v2198, 16
      %v2283 = vrot.slane %v2281, 1
      %v2284 = vor.u32 %v2279, %v2283
      %v2286 = vshll.u32 %v2262, 16
      %v2288 = vrot.slane %v2286, 1
      %v2289 = vsel %vm1202, %v2284, %v2288
      %v2291 = vshrl.u32 %v2199, 16
      %v2293 = vshll.u32 %v2199, 16
      %v2295 = vrot.slane %v2293, 1
      %v2296 = vor.u32 %v2291, %v2295
      %v2298 = vshll.u32 %v2263, 16
      %v2300 = vrot.slane %v2298, 1
      %v2301 = vsel %vm1202, %v2296, %v2300
      %v2303 = vshrl.u32 %v2200, 16
      %v2305 = vshll.u32 %v2200, 16
      %v2307 = vrot.slane %v2305, 1
      %v2308 = vor.u32 %v2303, %v2307
      %v2310 = vshll.u32 %v2264, 16
      %v2312 = vrot.slane %v2310, 1
      %v2313 = vsel %vm1202, %v2308, %v2312
      %v2315 = vshrl.u32 %v2201, 16
      %v2317 = vshll.u32 %v2201, 16
      %v2319 = vrot.slane %v2317, 1
      %v2320 = vor.u32 %v2315, %v2319
      %v2322 = vshll.u32 %v2265, 16
      %v2324 = vrot.slane %v2322, 1
      %v2325 = vsel %vm1202, %v2320, %v2324
      %v2327 = vshrl.u32 %v2202, 16
      %v2329 = vshll.u32 %v2202, 16
      %v2331 = vrot.slane %v2329, 1
      %v2332 = vor.u32 %v2327, %v2331
      %v2334 = vshll.u32 %v2266, 16
      %v2336 = vrot.slane %v2334, 1
      %v2337 = vsel %vm1202, %v2332, %v2336
      %v2339 = vshrl.u32 %v2203, 16
      %v2341 = vshll.u32 %v2203, 16
      %v2343 = vrot.slane %v2341, 1
      %v2344 = vor.u32 %v2339, %v2343
      %v2346 = vshll.u32 %v2267, 16
      %v2348 = vrot.slane %v2346, 1
      %v2349 = vsel %vm1202, %v2344, %v2348
      %v2351 = vshrl.u32 %v2204, 16
      %v2353 = vshll.u32 %v2204, 16
      %v2355 = vrot.slane %v2353, 1
      %v2356 = vor.u32 %v2351, %v2355
      %v2358 = vshll.u32 %v2268, 16
      %v2360 = vrot.slane %v2358, 1
      %v2361 = vsel %vm1202, %v2356, %v2360
      %v2363 = vshrl.u32 %v2205, 16
      %v2365 = vshll.u32 %v2205, 16
      %v2367 = vrot.slane %v2365, 1
      %v2368 = vor.u32 %v2363, %v2367
      %v2370 = vshll.u32 %v2269, 16
      %v2372 = vrot.slane %v2370, 1
      %v2373 = vsel %vm1202, %v2368, %v2372
      %v2375 = vshrl.u32 %v2206, 16
      %v2377 = vshll.u32 %v2206, 16
      %v2379 = vrot.slane %v2377, 1
      %v2380 = vor.u32 %v2375, %v2379
      %v2382 = vshll.u32 %v2270, 16
      %v2384 = vrot.slane %v2382, 1
      %v2385 = vsel %vm1202, %v2380, %v2384
      %v2387 = vshrl.u32 %v2207, 16
      %v2389 = vshll.u32 %v2207, 16
      %v2391 = vrot.slane %v2389, 1
      %v2392 = vor.u32 %v2387, %v2391
      %v2394 = vshll.u32 %v2271, 16
      %v2396 = vrot.slane %v2394, 1
      %v2397 = vsel %vm1202, %v2392, %v2396
      %v2399 = vshrl.u32 %v2208, 16
      %v2401 = vshll.u32 %v2208, 16
      %v2403 = vrot.slane %v2401, 1
      %v2404 = vor.u32 %v2399, %v2403
      %v2406 = vshll.u32 %v2272, 16
      %v2408 = vrot.slane %v2406, 1
      %v2409 = vsel %vm1202, %v2404, %v2408
      %v2411 = vshrl.u32 %v2209, 16
      %v2413 = vshll.u32 %v2209, 16
      %v2415 = vrot.slane %v2413, 1
      %v2416 = vor.u32 %v2411, %v2415
      %v2418 = vshll.u32 %v2273, 16
      %v2420 = vrot.slane %v2418, 1
      %v2421 = vsel %vm1202, %v2416, %v2420
      %v2423 = vshrl.u32 %v2210, 16
      %v2425 = vshll.u32 %v2210, 16
      %v2427 = vrot.slane %v2425, 1
      %v2428 = vor.u32 %v2423, %v2427
      %v2430 = vshll.u32 %v2274, 16
      %v2432 = vrot.slane %v2430, 1
      %v2433 = vsel %vm1202, %v2428, %v2432
      %v2435 = vshrl.u32 %v2211, 16
      %v2437 = vshll.u32 %v2211, 16
      %v2439 = vrot.slane %v2437, 1
      %v2440 = vor.u32 %v2435, %v2439
      %v2442 = vshll.u32 %v2275, 16
      %v2444 = vrot.slane %v2442, 1
      %v2445 = vsel %vm1202, %v2440, %v2444
      %v2447 = vshrl.u32 %v2212, 16
      %v2449 = vshll.u32 %v2212, 16
      %v2451 = vrot.slane %v2449, 1
      %v2452 = vor.u32 %v2447, %v2451
      %v2454 = vshll.u32 %v2276, 16
      %v2456 = vrot.slane %v2454, 1
      %v2457 = vsel %vm1202, %v2452, %v2456
      %v2459 = vshrl.u32 %v2213, 16
      %v2461 = vshll.u32 %v2213, 16
      %v2463 = vrot.slane %v2461, 1
      %v2464 = vor.u32 %v2459, %v2463
      %v2466 = vshll.u32 %v2277, 16
      %v2468 = vrot.slane %v2466, 1
      %v2469 = vsel %vm1202, %v2464, %v2468
      %v2502 = vunpack.c.l.b16 %v2118
      %v2503 = vunpack.c.l.b16 %v2119
      %v2504 = vunpack.c.l.b16 %v2120
      %v2505 = vunpack.c.l.b16 %v2121
      %v2506 = vunpack.c.l.b16 %v2122
      %v2507 = vunpack.c.l.b16 %v2123
      %v2508 = vunpack.c.l.b16 %v2124
      %v2509 = vunpack.c.l.b16 %v2125
      %v2510 = vunpack.c.l.b16 %v2126
      %v2511 = vunpack.c.l.b16 %v2127
      %v2512 = vunpack.c.l.b16 %v2128
      %v2513 = vunpack.c.l.b16 %v2129
      %v2514 = vunpack.c.l.b16 %v2130
      %v2515 = vunpack.c.l.b16 %v2131
      %v2516 = vunpack.c.l.b16 %v2132
      %v2517 = vunpack.c.l.b16 %v2133
      %v2518 = vpack.c.b16 %v2167, %v2502
      %v2519 = vpack.c.b16 %v2169, %v2503
      %v2520 = vpack.c.b16 %v2171, %v2504
      %v2521 = vpack.c.b16 %v2173, %v2505
      %v2522 = vpack.c.b16 %v2175, %v2506
      %v2523 = vpack.c.b16 %v2177, %v2507
      %v2524 = vpack.c.b16 %v2179, %v2508
      %v2525 = vpack.c.b16 %v2181, %v2509
      %v2526 = vpack.c.b16 %v2183, %v2510
      %v2527 = vpack.c.b16 %v2185, %v2511
      %v2528 = vpack.c.b16 %v2187, %v2512
      %v2529 = vpack.c.b16 %v2189, %v2513
      %v2530 = vpack.c.b16 %v2191, %v2514
      %v2531 = vpack.c.b16 %v2193, %v2515
      %v2532 = vpack.c.b16 %v2195, %v2516
      %v2533 = vpack.c.b16 %v2197, %v2517
      %v2534 = vrot.slane %v2518, 1
      %v2535 = vrot.slane %v2262, 1
      %v2536 = vsel %vm1459, %v2534, %v2535
      %v2537 = vrot.slane %v2519, 1
      %v2538 = vrot.slane %v2263, 1
      %v2539 = vsel %vm1459, %v2537, %v2538
      %v2540 = vrot.slane %v2520, 1
      %v2541 = vrot.slane %v2264, 1
      %v2542 = vsel %vm1459, %v2540, %v2541
      %v2543 = vrot.slane %v2521, 1
      %v2544 = vrot.slane %v2265, 1
      %v2545 = vsel %vm1459, %v2543, %v2544
      %v2546 = vrot.slane %v2522, 1
      %v2547 = vrot.slane %v2266, 1
      %v2548 = vsel %vm1459, %v2546, %v2547
      %v2549 = vrot.slane %v2523, 1
      %v2550 = vrot.slane %v2267, 1
      %v2551 = vsel %vm1459, %v2549, %v2550
      %v2552 = vrot.slane %v2524, 1
      %v2553 = vrot.slane %v2268, 1
      %v2554 = vsel %vm1459, %v2552, %v2553
      %v2555 = vrot.slane %v2525, 1
      %v2556 = vrot.slane %v2269, 1
      %v2557 = vsel %vm1459, %v2555, %v2556
      %v2558 = vrot.slane %v2526, 1
      %v2559 = vrot.slane %v2270, 1
      %v2560 = vsel %vm1459, %v2558, %v2559
      %v2561 = vrot.slane %v2527, 1
      %v2562 = vrot.slane %v2271, 1
      %v2563 = vsel %vm1459, %v2561, %v2562
      %v2564 = vrot.slane %v2528, 1
      %v2565 = vrot.slane %v2272, 1
      %v2566 = vsel %vm1459, %v2564, %v2565
      %v2567 = vrot.slane %v2529, 1
      %v2568 = vrot.slane %v2273, 1
      %v2569 = vsel %vm1459, %v2567, %v2568
      %v2570 = vrot.slane %v2530, 1
      %v2571 = vrot.slane %v2274, 1
      %v2572 = vsel %vm1459, %v2570, %v2571
      %v2573 = vrot.slane %v2531, 1
      %v2574 = vrot.slane %v2275, 1
      %v2575 = vsel %vm1459, %v2573, %v2574
      %v2576 = vrot.slane %v2532, 1
      %v2577 = vrot.slane %v2276, 1
      %v2578 = vsel %vm1459, %v2576, %v2577
      %v2579 = vrot.slane %v2533, 1
      %v2580 = vrot.slane %v2277, 1
      %v2581 = vsel %vm1459, %v2579, %v2580
      %s2598 = scalar_lea.vmem %s3, 192
      %v2599 = vld [vmem:[%s2598] sm:$0xf]
      %v2600 = vld [vmem:[%s2598 + $0x4] sm:$0xf]
      %v2601 = vld [vmem:[%s2598 + $0x8] sm:$0xf]
      %v2602 = vld [vmem:[%s2598 + $0xc] sm:$0xf]
      %v2603 = vld [vmem:[%s2598 + $0x10] sm:$0xf]
      %v2604 = vld [vmem:[%s2598 + $0x14] sm:$0xf]
      %v2605 = vld [vmem:[%s2598 + $0x18] sm:$0xf]
      %v2606 = vld [vmem:[%s2598 + $0x1c] sm:$0xf]
      %v2607 = vld [vmem:[%s2598 + $0x20] sm:$0xf]
      %v2608 = vld [vmem:[%s2598 + $0x24] sm:$0xf]
      %v2609 = vld [vmem:[%s2598 + $0x28] sm:$0xf]
      %v2610 = vld [vmem:[%s2598 + $0x2c] sm:$0xf]
      %v2611 = vld [vmem:[%s2598 + $0x30] sm:$0xf]
      %v2612 = vld [vmem:[%s2598 + $0x34] sm:$0xf]
      %v2613 = vld [vmem:[%s2598 + $0x38] sm:$0xf]
      %v2614 = vld [vmem:[%s2598 + $0x3c] sm:$0xf]
      %v2615 = vld [vmem:[%s2598 + $0x40] sm:$0xf]
      %v2616 = vld [vmem:[%s2598 + $0x44] sm:$0xf]
      %v2617 = vld [vmem:[%s2598 + $0x48] sm:$0xf]
      %v2618 = vld [vmem:[%s2598 + $0x4c] sm:$0xf]
      %v2619 = vld [vmem:[%s2598 + $0x50] sm:$0xf]
      %v2620 = vld [vmem:[%s2598 + $0x54] sm:$0xf]
      %v2621 = vld [vmem:[%s2598 + $0x58] sm:$0xf]
      %v2622 = vld [vmem:[%s2598 + $0x5c] sm:$0xf]
      %v2623 = vld [vmem:[%s2598 + $0x60] sm:$0xf]
      %v2624 = vld [vmem:[%s2598 + $0x64] sm:$0xf]
      %v2625 = vld [vmem:[%s2598 + $0x68] sm:$0xf]
      %v2626 = vld [vmem:[%s2598 + $0x6c] sm:$0xf]
      %v2627 = vld [vmem:[%s2598 + $0x70] sm:$0xf]
      %v2628 = vld [vmem:[%s2598 + $0x74] sm:$0xf]
      %v2629 = vld [vmem:[%s2598 + $0x78] sm:$0xf]
      %v2630 = vld [vmem:[%s2598 + $0x7c] sm:$0xf]
      %v2631 = vld [vmem:[%s2598 + $0x80] sm:$0xf]
      %v2632 = vld [vmem:[%s2598 + $0x84] sm:$0xf]
      %v2633 = vld [vmem:[%s2598 + $0x88] sm:$0xf]
      %v2634 = vld [vmem:[%s2598 + $0x8c] sm:$0xf]
      %v2635 = vld [vmem:[%s2598 + $0x90] sm:$0xf]
      %v2636 = vld [vmem:[%s2598 + $0x94] sm:$0xf]
      %v2637 = vld [vmem:[%s2598 + $0x98] sm:$0xf]
      %v2638 = vld [vmem:[%s2598 + $0x9c] sm:$0xf]
      %v2639 = vld [vmem:[%s2598 + $0xa0] sm:$0xf]
      %v2640 = vld [vmem:[%s2598 + $0xa4] sm:$0xf]
      %v2641 = vld [vmem:[%s2598 + $0xa8] sm:$0xf]
      %v2642 = vld [vmem:[%s2598 + $0xac] sm:$0xf]
      %v2643 = vld [vmem:[%s2598 + $0xb0] sm:$0xf]
      %v2644 = vld [vmem:[%s2598 + $0xb4] sm:$0xf]
      %v2645 = vld [vmem:[%s2598 + $0xb8] sm:$0xf]
      %v2646 = vld [vmem:[%s2598 + $0xbc] sm:$0xf]
      %v2695 = vunpack.c.l.b16 %v2599
      %v2696 = vunpack.c.l.b16 %v2600
      %v2697 = vunpack.c.l.b16 %v2601
      %v2698 = vunpack.c.l.b16 %v2602
      %v2699 = vunpack.c.l.b16 %v2603
      %v2700 = vunpack.c.l.b16 %v2604
      %v2701 = vunpack.c.l.b16 %v2605
      %v2702 = vunpack.c.l.b16 %v2606
      %v2703 = vunpack.c.l.b16 %v2607
      %v2704 = vunpack.c.l.b16 %v2608
      %v2705 = vunpack.c.l.b16 %v2609
      %v2706 = vunpack.c.l.b16 %v2610
      %v2707 = vunpack.c.l.b16 %v2611
      %v2708 = vunpack.c.l.b16 %v2612
      %v2709 = vunpack.c.l.b16 %v2613
      %v2710 = vunpack.c.l.b16 %v2614
      %v2711 = vunpack.c.l.b16 %v2615
      %v2712 = vunpack.c.l.b16 %v2616
      %v2713 = vunpack.c.l.b16 %v2617
      %v2714 = vunpack.c.l.b16 %v2618
      %v2715 = vunpack.c.l.b16 %v2619
      %v2716 = vunpack.c.l.b16 %v2620
      %v2717 = vunpack.c.l.b16 %v2621
      %v2718 = vunpack.c.l.b16 %v2622
      %v2719 = vunpack.c.l.b16 %v2623
      %v2720 = vunpack.c.l.b16 %v2624
      %v2721 = vunpack.c.l.b16 %v2625
      %v2722 = vunpack.c.l.b16 %v2626
      %v2723 = vunpack.c.l.b16 %v2627
      %v2724 = vunpack.c.l.b16 %v2628
      %v2725 = vunpack.c.l.b16 %v2629
      %v2726 = vunpack.c.l.b16 %v2630
      %v2727 = vunpack.c.l.b16 %v2631
      %v2728 = vunpack.c.l.b16 %v2632
      %v2729 = vunpack.c.l.b16 %v2633
      %v2730 = vunpack.c.l.b16 %v2634
      %v2731 = vunpack.c.l.b16 %v2635
      %v2732 = vunpack.c.l.b16 %v2636
      %v2733 = vunpack.c.l.b16 %v2637
      %v2734 = vunpack.c.l.b16 %v2638
      %v2735 = vunpack.c.l.b16 %v2639
      %v2736 = vunpack.c.l.b16 %v2640
      %v2737 = vunpack.c.l.b16 %v2641
      %v2738 = vunpack.c.l.b16 %v2642
      %v2739 = vunpack.c.l.b16 %v2643
      %v2740 = vunpack.c.l.b16 %v2644
      %v2741 = vunpack.c.l.b16 %v2645
      %v2742 = vunpack.c.l.b16 %v2646
      %v2743 = vpack.c.b16 %v2696, %v2695
      %v2744 = vpack.c.b16 %v2698, %v2697
      %v2745 = vpack.c.b16 %v2700, %v2699
      %v2746 = vpack.c.b16 %v2702, %v2701
      %v2747 = vpack.c.b16 %v2704, %v2703
      %v2748 = vpack.c.b16 %v2706, %v2705
      %v2749 = vpack.c.b16 %v2708, %v2707
      %v2750 = vpack.c.b16 %v2710, %v2709
      %v2751 = vpack.c.b16 %v2712, %v2711
      %v2752 = vpack.c.b16 %v2714, %v2713
      %v2753 = vpack.c.b16 %v2716, %v2715
      %v2754 = vpack.c.b16 %v2718, %v2717
      %v2755 = vpack.c.b16 %v2720, %v2719
      %v2756 = vpack.c.b16 %v2722, %v2721
      %v2757 = vpack.c.b16 %v2724, %v2723
      %v2758 = vpack.c.b16 %v2726, %v2725
      %v2759 = vpack.c.b16 %v2728, %v2727
      %v2760 = vpack.c.b16 %v2730, %v2729
      %v2761 = vpack.c.b16 %v2732, %v2731
      %v2762 = vpack.c.b16 %v2734, %v2733
      %v2763 = vpack.c.b16 %v2736, %v2735
      %v2764 = vpack.c.b16 %v2738, %v2737
      %v2765 = vpack.c.b16 %v2740, %v2739
      %v2766 = vpack.c.b16 %v2742, %v2741
      %2791 = vmatprep.subr.bf16.mxu0 0
      %2792 = vmatpush1.bf16.msra.mxu0 %v2750
      %2793 = vmatprep.subr.bf16.mxu0 0
      %2794 = vmatpush1.bf16.msra.mxu0 %v2749
      %2795 = vmatprep.subr.bf16.mxu0 0
      %2796 = vmatpush1.bf16.msra.mxu0 %v2748
      %2797 = vmatprep.subr.bf16.mxu0 0
      %2798 = vmatpush1.bf16.msra.mxu0 %v2747
      %2799 = vmatprep.subr.bf16.mxu0 0
      %2800 = vmatpush1.bf16.msra.mxu0 %v2746
      %2801 = vmatprep.subr.bf16.mxu0 0
      %2802 = vmatpush1.bf16.msra.mxu0 %v2745
      %2803 = vmatprep.subr.bf16.mxu0 0
      %2804 = vmatpush1.bf16.msra.mxu0 %v2744
      %2805 = vmatprep.subr.bf16.mxu0 0
      %2806 = vmatpush1.bf16.msra.mxu0 %v2743
      %2807 = vmatprep.subr.bf16.mxu0 0
      %2808 = vmatpush2.bf16.msra.mxu0 %v2758
      %2809 = vmatprep.subr.bf16.mxu0 0
      %2810 = vmatpush2.bf16.msra.mxu0 %v2757
      %2811 = vmatprep.subr.bf16.mxu0 0
      %2812 = vmatpush2.bf16.msra.mxu0 %v2756
      %2813 = vmatprep.subr.bf16.mxu0 0
      %2814 = vmatpush2.bf16.msra.mxu0 %v2755
      %2815 = vmatprep.subr.bf16.mxu0 0
      %2816 = vmatpush2.bf16.msra.mxu0 %v2754
      %2817 = vmatprep.subr.bf16.mxu0 0
      %2818 = vmatpush2.bf16.msra.mxu0 %v2753
      %2819 = vmatprep.subr.bf16.mxu0 0
      %2820 = vmatpush2.bf16.msra.mxu0 %v2752
      %2821 = vmatprep.subr.bf16.mxu0 0
      %2822 = vmatpush2.bf16.msra.mxu0 %v2751
      %2823 = vmatprep.mubr.bf16.mxu0 %v2289
      %2824 = vmatmul.mubr.bf16.gmra.mxu0 %v2198
      %v2825 = vpop.f32.mrf.mxu0
      %v2826 = vadd.f32 0.0, %v2825
      %v2827 = vpop.f32.mrf.mxu0
      %v2828 = vpop.f32.mrf.mxu0
      %v2829 = vadd.f32 0.0, %v2828
      %v2830 = vpop.f32.mrf.mxu0
      %2831 = vmatprep.mubr.bf16.mxu0 %v2301
      %2832 = vmatmul.mubr.bf16.gmra.mxu0 %v2199
      %v2833 = vpop.f32.mrf.mxu0
      %v2834 = vadd.f32 0.0, %v2833
      %v2835 = vpop.f32.mrf.mxu0
      %v2836 = vpop.f32.mrf.mxu0
      %v2837 = vadd.f32 0.0, %v2836
      %v2838 = vpop.f32.mrf.mxu0
      %2839 = vmatprep.mubr.bf16.mxu0 %v2313
      %2840 = vmatmul.mubr.bf16.gmra.mxu0 %v2200
      %v2841 = vpop.f32.mrf.mxu0
      %v2842 = vadd.f32 0.0, %v2841
      %v2843 = vpop.f32.mrf.mxu0
      %v2844 = vpop.f32.mrf.mxu0
      %v2845 = vadd.f32 0.0, %v2844
      %v2846 = vpop.f32.mrf.mxu0
      %2847 = vmatprep.mubr.bf16.mxu0 %v2325
      %2848 = vmatmul.mubr.bf16.gmra.mxu0 %v2201
      %v2849 = vpop.f32.mrf.mxu0
      %v2850 = vadd.f32 0.0, %v2849
      %v2851 = vpop.f32.mrf.mxu0
      %v2852 = vpop.f32.mrf.mxu0
      %v2853 = vadd.f32 0.0, %v2852
      %v2854 = vpop.f32.mrf.mxu0
      %2855 = vmatprep.mubr.bf16.mxu0 %v2337
      %2856 = vmatmul.mubr.bf16.gmra.mxu0 %v2202
      %v2857 = vpop.f32.mrf.mxu0
      %v2858 = vadd.f32 0.0, %v2857
      %v2859 = vpop.f32.mrf.mxu0
      %v2860 = vpop.f32.mrf.mxu0
      %v2861 = vadd.f32 0.0, %v2860
      %v2862 = vpop.f32.mrf.mxu0
      %2863 = vmatprep.mubr.bf16.mxu0 %v2349
      %2864 = vmatmul.mubr.bf16.gmra.mxu0 %v2203
      %v2865 = vpop.f32.mrf.mxu0
      %v2866 = vadd.f32 0.0, %v2865
      %v2867 = vpop.f32.mrf.mxu0
      %v2868 = vpop.f32.mrf.mxu0
      %v2869 = vadd.f32 0.0, %v2868
      %v2870 = vpop.f32.mrf.mxu0
      %2871 = vmatprep.mubr.bf16.mxu0 %v2361
      %2872 = vmatmul.mubr.bf16.gmra.mxu0 %v2204
      %v2873 = vpop.f32.mrf.mxu0
      %v2874 = vadd.f32 0.0, %v2873
      %v2875 = vpop.f32.mrf.mxu0
      %v2876 = vpop.f32.mrf.mxu0
      %v2877 = vadd.f32 0.0, %v2876
      %v2878 = vpop.f32.mrf.mxu0
      %2879 = vmatprep.mubr.bf16.mxu0 %v2373
      %2880 = vmatmul.mubr.bf16.gmra.mxu0 %v2205
      %v2881 = vpop.f32.mrf.mxu0
      %v2882 = vadd.f32 0.0, %v2881
      %v2883 = vpop.f32.mrf.mxu0
      %v2884 = vpop.f32.mrf.mxu0
      %v2885 = vadd.f32 0.0, %v2884
      %v2886 = vpop.f32.mrf.mxu0
      %2887 = vmatprep.mubr.bf16.mxu0 %v2385
      %2888 = vmatmul.mubr.bf16.gmra.mxu0 %v2206
      %v2889 = vpop.f32.mrf.mxu0
      %v2890 = vadd.f32 0.0, %v2889
      %v2891 = vpop.f32.mrf.mxu0
      %v2892 = vpop.f32.mrf.mxu0
      %v2893 = vadd.f32 0.0, %v2892
      %v2894 = vpop.f32.mrf.mxu0
      %2895 = vmatprep.mubr.bf16.mxu0 %v2397
      %2896 = vmatmul.mubr.bf16.gmra.mxu0 %v2207
      %v2897 = vpop.f32.mrf.mxu0
      %v2898 = vadd.f32 0.0, %v2897
      %v2899 = vpop.f32.mrf.mxu0
      %v2900 = vpop.f32.mrf.mxu0
      %v2901 = vadd.f32 0.0, %v2900
      %v2902 = vpop.f32.mrf.mxu0
      %2903 = vmatprep.mubr.bf16.mxu0 %v2409
      %2904 = vmatmul.mubr.bf16.gmra.mxu0 %v2208
      %v2905 = vpop.f32.mrf.mxu0
      %v2906 = vadd.f32 0.0, %v2905
      %v2907 = vpop.f32.mrf.mxu0
      %v2908 = vpop.f32.mrf.mxu0
      %v2909 = vadd.f32 0.0, %v2908
      %v2910 = vpop.f32.mrf.mxu0
      %2911 = vmatprep.mubr.bf16.mxu0 %v2421
      %2912 = vmatmul.mubr.bf16.gmra.mxu0 %v2209
      %v2913 = vpop.f32.mrf.mxu0
      %v2914 = vadd.f32 0.0, %v2913
      %v2915 = vpop.f32.mrf.mxu0
      %v2916 = vpop.f32.mrf.mxu0
      %v2917 = vadd.f32 0.0, %v2916
      %v2918 = vpop.f32.mrf.mxu0
      %2919 = vmatprep.mubr.bf16.mxu0 %v2433
      %2920 = vmatmul.mubr.bf16.gmra.mxu0 %v2210
      %v2921 = vpop.f32.mrf.mxu0
      %v2922 = vadd.f32 0.0, %v2921
      %v2923 = vpop.f32.mrf.mxu0
      %v2924 = vpop.f32.mrf.mxu0
      %v2925 = vadd.f32 0.0, %v2924
      %v2926 = vpop.f32.mrf.mxu0
      %2927 = vmatprep.mubr.bf16.mxu0 %v2445
      %2928 = vmatmul.mubr.bf16.gmra.mxu0 %v2211
      %v2929 = vpop.f32.mrf.mxu0
      %v2930 = vadd.f32 0.0, %v2929
      %v2931 = vpop.f32.mrf.mxu0
      %v2932 = vpop.f32.mrf.mxu0
      %v2933 = vadd.f32 0.0, %v2932
      %v2934 = vpop.f32.mrf.mxu0
      %2935 = vmatprep.mubr.bf16.mxu0 %v2457
      %2936 = vmatmul.mubr.bf16.gmra.mxu0 %v2212
      %v2937 = vpop.f32.mrf.mxu0
      %v2938 = vadd.f32 0.0, %v2937
      %v2939 = vpop.f32.mrf.mxu0
      %v2940 = vpop.f32.mrf.mxu0
      %v2941 = vadd.f32 0.0, %v2940
      %v2942 = vpop.f32.mrf.mxu0
      %2943 = vmatprep.mubr.bf16.mxu0 %v2469
      %2944 = vmatmul.mubr.bf16.gmra.mxu0 %v2213
      %v2945 = vpop.f32.mrf.mxu0
      %v2946 = vadd.f32 0.0, %v2945
      %v2947 = vpop.f32.mrf.mxu0
      %v2948 = vpop.f32.mrf.mxu0
      %v2949 = vadd.f32 0.0, %v2948
      %v2950 = vpop.f32.mrf.mxu0
      %2951 = vdwg.mxu0
      %2952 = vmatprep.subr.bf16.mxu0 0
      %2953 = vmatpush1.bf16.msra.mxu0 %v2766
      %2954 = vmatprep.subr.bf16.mxu0 0
      %2955 = vmatpush1.bf16.msra.mxu0 %v2765
      %2956 = vmatprep.subr.bf16.mxu0 0
      %2957 = vmatpush1.bf16.msra.mxu0 %v2764
      %2958 = vmatprep.subr.bf16.mxu0 0
      %2959 = vmatpush1.bf16.msra.mxu0 %v2763
      %2960 = vmatprep.subr.bf16.mxu0 0
      %2961 = vmatpush1.bf16.msra.mxu0 %v2762
      %2962 = vmatprep.subr.bf16.mxu0 0
      %2963 = vmatpush1.bf16.msra.mxu0 %v2761
      %2964 = vmatprep.subr.bf16.mxu0 0
      %2965 = vmatpush1.bf16.msra.mxu0 %v2760
      %2966 = vmatprep.subr.bf16.mxu0 0
      %2967 = vmatpush1.bf16.msra.mxu0 %v2759
      %2968 = vmatprep.subr.bf16.mxu0 0
      %2969 = vmatpush2.bf16.msra.mxu0 0
      %2970 = vmatprep.subr.bf16.mxu0 0
      %2971 = vmatpush2.bf16.msra.mxu0 0
      %2972 = vmatprep.subr.bf16.mxu0 0
      %2973 = vmatpush2.bf16.msra.mxu0 0
      %2974 = vmatprep.subr.bf16.mxu0 0
      %2975 = vmatpush2.bf16.msra.mxu0 0
      %2976 = vmatprep.subr.bf16.mxu0 0
      %2977 = vmatpush2.bf16.msra.mxu0 0
      %2978 = vmatprep.subr.bf16.mxu0 0
      %2979 = vmatpush2.bf16.msra.mxu0 0
      %2980 = vmatprep.subr.bf16.mxu0 0
      %2981 = vmatpush2.bf16.msra.mxu0 0
      %2982 = vmatprep.subr.bf16.mxu0 0
      %2983 = vmatpush2.bf16.msra.mxu0 0
      %2984 = vmatprep.mubr.bf16.mxu0 0
      %2985 = vmatmul.mubr.bf16.gmra.mxu0 %v2536
      %v2986 = vpop.f32.mrf.mxu0
      %v2987 = vadd.f32 %v2826, %v2986
      %v2988 = vpop.f32.mrf.mxu0
      %v2989 = vpop.f32.mrf.mxu0
      %v2990 = vadd.f32 %v2829, %v2989
      %v2991 = vpop.f32.mrf.mxu0
      %2992 = vmatprep.mubr.bf16.mxu0 0
      %2993 = vmatmul.mubr.bf16.gmra.mxu0 %v2539
      %v2994 = vpop.f32.mrf.mxu0
      %v2995 = vadd.f32 %v2834, %v2994
      %v2996 = vpop.f32.mrf.mxu0
      %v2997 = vpop.f32.mrf.mxu0
      %v2998 = vadd.f32 %v2837, %v2997
      %v2999 = vpop.f32.mrf.mxu0
      %3000 = vmatprep.mubr.bf16.mxu0 0
      %3001 = vmatmul.mubr.bf16.gmra.mxu0 %v2542
      %v3002 = vpop.f32.mrf.mxu0
      %v3003 = vadd.f32 %v2842, %v3002
      %v3004 = vpop.f32.mrf.mxu0
      %v3005 = vpop.f32.mrf.mxu0
      %v3006 = vadd.f32 %v2845, %v3005
      %v3007 = vpop.f32.mrf.mxu0
      %3008 = vmatprep.mubr.bf16.mxu0 0
      %3009 = vmatmul.mubr.bf16.gmra.mxu0 %v2545
      %v3010 = vpop.f32.mrf.mxu0
      %v3011 = vadd.f32 %v2850, %v3010
      %v3012 = vpop.f32.mrf.mxu0
      %v3013 = vpop.f32.mrf.mxu0
      %v3014 = vadd.f32 %v2853, %v3013
      %v3015 = vpop.f32.mrf.mxu0
      %3016 = vmatprep.mubr.bf16.mxu0 0
      %3017 = vmatmul.mubr.bf16.gmra.mxu0 %v2548
      %v3018 = vpop.f32.mrf.mxu0
      %v3019 = vadd.f32 %v2858, %v3018
      %v3020 = vpop.f32.mrf.mxu0
      %v3021 = vpop.f32.mrf.mxu0
      %v3022 = vadd.f32 %v2861, %v3021
      %v3023 = vpop.f32.mrf.mxu0
      %3024 = vmatprep.mubr.bf16.mxu0 0
      %3025 = vmatmul.mubr.bf16.gmra.mxu0 %v2551
      %v3026 = vpop.f32.mrf.mxu0
      %v3027 = vadd.f32 %v2866, %v3026
      %v3028 = vpop.f32.mrf.mxu0
      %v3029 = vpop.f32.mrf.mxu0
      %v3030 = vadd.f32 %v2869, %v3029
      %v3031 = vpop.f32.mrf.mxu0
      %3032 = vmatprep.mubr.bf16.mxu0 0
      %3033 = vmatmul.mubr.bf16.gmra.mxu0 %v2554
      %v3034 = vpop.f32.mrf.mxu0
      %v3035 = vadd.f32 %v2874, %v3034
      %v3036 = vpop.f32.mrf.mxu0
      %v3037 = vpop.f32.mrf.mxu0
      %v3038 = vadd.f32 %v2877, %v3037
      %v3039 = vpop.f32.mrf.mxu0
      %3040 = vmatprep.mubr.bf16.mxu0 0
      %3041 = vmatmul.mubr.bf16.gmra.mxu0 %v2557
      %v3042 = vpop.f32.mrf.mxu0
      %v3043 = vadd.f32 %v2882, %v3042
      %v3044 = vpop.f32.mrf.mxu0
      %v3045 = vpop.f32.mrf.mxu0
      %v3046 = vadd.f32 %v2885, %v3045
      %v3047 = vpop.f32.mrf.mxu0
      %3048 = vmatprep.mubr.bf16.mxu0 0
      %3049 = vmatmul.mubr.bf16.gmra.mxu0 %v2560
      %v3050 = vpop.f32.mrf.mxu0
      %v3051 = vadd.f32 %v2890, %v3050
      %v3052 = vpop.f32.mrf.mxu0
      %v3053 = vpop.f32.mrf.mxu0
      %v3054 = vadd.f32 %v2893, %v3053
      %v3055 = vpop.f32.mrf.mxu0
      %3056 = vmatprep.mubr.bf16.mxu0 0
      %3057 = vmatmul.mubr.bf16.gmra.mxu0 %v2563
      %v3058 = vpop.f32.mrf.mxu0
      %v3059 = vadd.f32 %v2898, %v3058
      %v3060 = vpop.f32.mrf.mxu0
      %v3061 = vpop.f32.mrf.mxu0
      %v3062 = vadd.f32 %v2901, %v3061
      %v3063 = vpop.f32.mrf.mxu0
      %3064 = vmatprep.mubr.bf16.mxu0 0
      %3065 = vmatmul.mubr.bf16.gmra.mxu0 %v2566
      %v3066 = vpop.f32.mrf.mxu0
      %v3067 = vadd.f32 %v2906, %v3066
      %v3068 = vpop.f32.mrf.mxu0
      %v3069 = vpop.f32.mrf.mxu0
      %v3070 = vadd.f32 %v2909, %v3069
      %v3071 = vpop.f32.mrf.mxu0
      %3072 = vmatprep.mubr.bf16.mxu0 0
      %3073 = vmatmul.mubr.bf16.gmra.mxu0 %v2569
      %v3074 = vpop.f32.mrf.mxu0
      %v3075 = vadd.f32 %v2914, %v3074
      %v3076 = vpop.f32.mrf.mxu0
      %v3077 = vpop.f32.mrf.mxu0
      %v3078 = vadd.f32 %v2917, %v3077
      %v3079 = vpop.f32.mrf.mxu0
      %3080 = vmatprep.mubr.bf16.mxu0 0
      %3081 = vmatmul.mubr.bf16.gmra.mxu0 %v2572
      %v3082 = vpop.f32.mrf.mxu0
      %v3083 = vadd.f32 %v2922, %v3082
      %v3084 = vpop.f32.mrf.mxu0
      %v3085 = vpop.f32.mrf.mxu0
      %v3086 = vadd.f32 %v2925, %v3085
      %v3087 = vpop.f32.mrf.mxu0
      %3088 = vmatprep.mubr.bf16.mxu0 0
      %3089 = vmatmul.mubr.bf16.gmra.mxu0 %v2575
      %v3090 = vpop.f32.mrf.mxu0
      %v3091 = vadd.f32 %v2930, %v3090
      %v3092 = vpop.f32.mrf.mxu0
      %v3093 = vpop.f32.mrf.mxu0
      %v3094 = vadd.f32 %v2933, %v3093
      %v3095 = vpop.f32.mrf.mxu0
      %3096 = vmatprep.mubr.bf16.mxu0 0
      %3097 = vmatmul.mubr.bf16.gmra.mxu0 %v2578
      %v3098 = vpop.f32.mrf.mxu0
      %v3099 = vadd.f32 %v2938, %v3098
      %v3100 = vpop.f32.mrf.mxu0
      %v3101 = vpop.f32.mrf.mxu0
      %v3102 = vadd.f32 %v2941, %v3101
      %v3103 = vpop.f32.mrf.mxu0
      %3104 = vmatprep.mubr.bf16.mxu0 0
      %3105 = vmatmul.mubr.bf16.gmra.mxu0 %v2581
      %v3106 = vpop.f32.mrf.mxu0
      %v3107 = vadd.f32 %v2946, %v3106
      %v3108 = vpop.f32.mrf.mxu0
      %v3109 = vpop.f32.mrf.mxu0
      %v3110 = vadd.f32 %v2949, %v3109
      %v3111 = vpop.f32.mrf.mxu0
      %3112 = vdwg.mxu0
      %v3113 = vld [vmem:[#allocation3] sm:$0xff]
      %v3114 = vld [vmem:[#allocation3 + $0x8] sm:$0xff]
      %v3115 = vld [vmem:[#allocation3 + $0x10] sm:$0xff]
      %v3116 = vld [vmem:[#allocation3 + $0x18] sm:$0xff]
      %v3117 = vld [vmem:[#allocation3 + $0x20] sm:$0xff]
      %v3118 = vld [vmem:[#allocation3 + $0x28] sm:$0xff]
      %v3119 = vld [vmem:[#allocation3 + $0x30] sm:$0xff]
      %v3120 = vld [vmem:[#allocation3 + $0x38] sm:$0xff]
      %v3121 = vld [vmem:[#allocation3 + $0x40] sm:$0xff]
      %v3122 = vld [vmem:[#allocation3 + $0x48] sm:$0xff]
      %v3123 = vld [vmem:[#allocation3 + $0x50] sm:$0xff]
      %v3124 = vld [vmem:[#allocation3 + $0x58] sm:$0xff]
      %v3125 = vld [vmem:[#allocation3 + $0x60] sm:$0xff]
      %v3126 = vld [vmem:[#allocation3 + $0x68] sm:$0xff]
      %v3127 = vld [vmem:[#allocation3 + $0x70] sm:$0xff]
      %v3128 = vld [vmem:[#allocation3 + $0x78] sm:$0xff]
      %v3129 = vld [vmem:[#allocation3 + $0x80] sm:$0xff]
      %v3130 = vld [vmem:[#allocation3 + $0x88] sm:$0xff]
      %v3131 = vld [vmem:[#allocation3 + $0x90] sm:$0xff]
      %v3132 = vld [vmem:[#allocation3 + $0x98] sm:$0xff]
      %v3133 = vld [vmem:[#allocation3 + $0xa0] sm:$0xff]
      %v3134 = vld [vmem:[#allocation3 + $0xa8] sm:$0xff]
      %v3135 = vld [vmem:[#allocation3 + $0xb0] sm:$0xff]
      %v3136 = vld [vmem:[#allocation3 + $0xb8] sm:$0xff]
      %v3137 = vld [vmem:[#allocation3 + $0xc0] sm:$0xff]
      %v3138 = vld [vmem:[#allocation3 + $0xc8] sm:$0xff]
      %v3139 = vld [vmem:[#allocation3 + $0xd0] sm:$0xff]
      %v3140 = vld [vmem:[#allocation3 + $0xd8] sm:$0xff]
      %v3141 = vld [vmem:[#allocation3 + $0xe0] sm:$0xff]
      %v3142 = vld [vmem:[#allocation3 + $0xe8] sm:$0xff]
      %v3143 = vld [vmem:[#allocation3 + $0xf0] sm:$0xff]
      %v3144 = vld [vmem:[#allocation3 + $0xf8] sm:$0xff]
      %v3145 = vadd.f32 %v3113, %v2987
      %v3146 = vadd.f32 %v3114, %v2990
      %v3147 = vadd.f32 %v3115, %v2995
      %v3148 = vadd.f32 %v3116, %v2998
      %v3149 = vadd.f32 %v3117, %v3003
      %v3150 = vadd.f32 %v3118, %v3006
      %v3151 = vadd.f32 %v3119, %v3011
      %v3152 = vadd.f32 %v3120, %v3014
      %v3153 = vadd.f32 %v3121, %v3019
      %v3154 = vadd.f32 %v3122, %v3022
      %v3155 = vadd.f32 %v3123, %v3027
      %v3156 = vadd.f32 %v3124, %v3030
      %v3157 = vadd.f32 %v3125, %v3035
      %v3158 = vadd.f32 %v3126, %v3038
      %v3159 = vadd.f32 %v3127, %v3043
      %v3160 = vadd.f32 %v3128, %v3046
      %v3161 = vadd.f32 %v3129, %v3051
      %v3162 = vadd.f32 %v3130, %v3054
      %v3163 = vadd.f32 %v3131, %v3059
      %v3164 = vadd.f32 %v3132, %v3062
      %v3165 = vadd.f32 %v3133, %v3067
      %v3166 = vadd.f32 %v3134, %v3070
      %v3167 = vadd.f32 %v3135, %v3075
      %v3168 = vadd.f32 %v3136, %v3078
      %v3169 = vadd.f32 %v3137, %v3083
      %v3170 = vadd.f32 %v3138, %v3086
      %v3171 = vadd.f32 %v3139, %v3091
      %v3172 = vadd.f32 %v3140, %v3094
      %v3173 = vadd.f32 %v3141, %v3099
      %v3174 = vadd.f32 %v3142, %v3102
      %v3175 = vadd.f32 %v3143, %v3107
      %v3176 = vadd.f32 %v3144, %v3110
      %3177 = vst [vmem:[#allocation3] sm:$0xff] %v3145
      %3178 = vst [vmem:[#allocation3 + $0x8] sm:$0xff] %v3146
      %3179 = vst [vmem:[#allocation3 + $0x10] sm:$0xff] %v3147
      %3180 = vst [vmem:[#allocation3 + $0x18] sm:$0xff] %v3148
      %3181 = vst [vmem:[#allocation3 + $0x20] sm:$0xff] %v3149
      %3182 = vst [vmem:[#allocation3 + $0x28] sm:$0xff] %v3150
      %3183 = vst [vmem:[#allocation3 + $0x30] sm:$0xff] %v3151
      %3184 = vst [vmem:[#allocation3 + $0x38] sm:$0xff] %v3152
      %3185 = vst [vmem:[#allocation3 + $0x40] sm:$0xff] %v3153
      %3186 = vst [vmem:[#allocation3 + $0x48] sm:$0xff] %v3154
      %3187 = vst [vmem:[#allocation3 + $0x50] sm:$0xff] %v3155
      %3188 = vst [vmem:[#allocation3 + $0x58] sm:$0xff] %v3156
      %3189 = vst [vmem:[#allocation3 + $0x60] sm:$0xff] %v3157
      %3190 = vst [vmem:[#allocation3 + $0x68] sm:$0xff] %v3158
      %3191 = vst [vmem:[#allocation3 + $0x70] sm:$0xff] %v3159
      %3192 = vst [vmem:[#allocation3 + $0x78] sm:$0xff] %v3160
      %3193 = vst [vmem:[#allocation3 + $0x80] sm:$0xff] %v3161
      %3194 = vst [vmem:[#allocation3 + $0x88] sm:$0xff] %v3162
      %3195 = vst [vmem:[#allocation3 + $0x90] sm:$0xff] %v3163
      %3196 = vst [vmem:[#allocation3 + $0x98] sm:$0xff] %v3164
      %3197 = vst [vmem:[#allocation3 + $0xa0] sm:$0xff] %v3165
      %3198 = vst [vmem:[#allocation3 + $0xa8] sm:$0xff] %v3166
      %3199 = vst [vmem:[#allocation3 + $0xb0] sm:$0xff] %v3167
      %3200 = vst [vmem:[#allocation3 + $0xb8] sm:$0xff] %v3168
      %3201 = vst [vmem:[#allocation3 + $0xc0] sm:$0xff] %v3169
      %3202 = vst [vmem:[#allocation3 + $0xc8] sm:$0xff] %v3170
      %3203 = vst [vmem:[#allocation3 + $0xd0] sm:$0xff] %v3171
      %3204 = vst [vmem:[#allocation3 + $0xd8] sm:$0xff] %v3172
      %3205 = vst [vmem:[#allocation3 + $0xe0] sm:$0xff] %v3173
      %3206 = vst [vmem:[#allocation3 + $0xe8] sm:$0xff] %v3174
      %3207 = vst [vmem:[#allocation3 + $0xf0] sm:$0xff] %v3175
      %3208 = vst [vmem:[#allocation3 + $0xf8] sm:$0xff] %v3176
      %s3209 = scalar_lea.vmem [#allocation2], 24
      %v3210 = vld [vmem:[%s3209] sm:$0xf]
      %v3211 = vld [vmem:[%s3209 + $0x4] sm:$0xf]
      %v3212 = vld [vmem:[%s3209 + $0xc] sm:$0xf]
      %v3213 = vld [vmem:[%s3209 + $0x10] sm:$0xf]
      %v3214 = vld [vmem:[%s3209 + $0x18] sm:$0xf]
      %v3215 = vld [vmem:[%s3209 + $0x1c] sm:$0xf]
      %v3216 = vld [vmem:[%s3209 + $0x24] sm:$0xf]
      %v3217 = vld [vmem:[%s3209 + $0x28] sm:$0xf]
      %v3218 = vld [vmem:[%s3209 + $0x30] sm:$0xf]
      %v3219 = vld [vmem:[%s3209 + $0x34] sm:$0xf]
      %v3220 = vld [vmem:[%s3209 + $0x3c] sm:$0xf]
      %v3221 = vld [vmem:[%s3209 + $0x40] sm:$0xf]
      %v3222 = vld [vmem:[%s3209 + $0x48] sm:$0xf]
      %v3223 = vld [vmem:[%s3209 + $0x4c] sm:$0xf]
      %v3224 = vld [vmem:[%s3209 + $0x54] sm:$0xf]
      %v3225 = vld [vmem:[%s3209 + $0x58] sm:$0xf]
      %v3226 = vld [vmem:[%s3209 + $0x60] sm:$0xf]
      %v3227 = vld [vmem:[%s3209 + $0x64] sm:$0xf]
      %v3228 = vld [vmem:[%s3209 + $0x6c] sm:$0xf]
      %v3229 = vld [vmem:[%s3209 + $0x70] sm:$0xf]
      %v3230 = vld [vmem:[%s3209 + $0x78] sm:$0xf]
      %v3231 = vld [vmem:[%s3209 + $0x7c] sm:$0xf]
      %v3232 = vld [vmem:[%s3209 + $0x84] sm:$0xf]
      %v3233 = vld [vmem:[%s3209 + $0x88] sm:$0xf]
      %v3234 = vld [vmem:[%s3209 + $0x90] sm:$0xf]
      %v3235 = vld [vmem:[%s3209 + $0x94] sm:$0xf]
      %v3236 = vld [vmem:[%s3209 + $0x9c] sm:$0xf]
      %v3237 = vld [vmem:[%s3209 + $0xa0] sm:$0xf]
      %v3238 = vld [vmem:[%s3209 + $0xa8] sm:$0xf]
      %v3239 = vld [vmem:[%s3209 + $0xac] sm:$0xf]
      %v3240 = vld [vmem:[%s3209 + $0xb4] sm:$0xf]
      %v3241 = vld [vmem:[%s3209 + $0xb8] sm:$0xf]
      %v3242 = vld [vmem:[%s3209 + $0x8] sm:$0x1]
      %v3243 = vld [vmem:[%s3209 + $0x14] sm:$0x1]
      %v3244 = vld [vmem:[%s3209 + $0x20] sm:$0x1]
      %v3245 = vld [vmem:[%s3209 + $0x2c] sm:$0x1]
      %v3246 = vld [vmem:[%s3209 + $0x38] sm:$0x1]
      %v3247 = vld [vmem:[%s3209 + $0x44] sm:$0x1]
      %v3248 = vld [vmem:[%s3209 + $0x50] sm:$0x1]
      %v3249 = vld [vmem:[%s3209 + $0x5c] sm:$0x1]
      %v3250 = vld [vmem:[%s3209 + $0x68] sm:$0x1]
      %v3251 = vld [vmem:[%s3209 + $0x74] sm:$0x1]
      %v3252 = vld [vmem:[%s3209 + $0x80] sm:$0x1]
      %v3253 = vld [vmem:[%s3209 + $0x8c] sm:$0x1]
      %v3254 = vld [vmem:[%s3209 + $0x98] sm:$0x1]
      %v3255 = vld [vmem:[%s3209 + $0xa4] sm:$0x1]
      %v3256 = vld [vmem:[%s3209 + $0xb0] sm:$0x1]
      %v3257 = vld [vmem:[%s3209 + $0xbc] sm:$0x1]
      %v3258 = vld [vmem:[%s3209] sm:$0xe]
      %v3259 = vld [vmem:[%s3209 + $0xc] sm:$0xe]
      %v3260 = vld [vmem:[%s3209 + $0x18] sm:$0xe]
      %v3261 = vld [vmem:[%s3209 + $0x24] sm:$0xe]
      %v3262 = vld [vmem:[%s3209 + $0x30] sm:$0xe]
      %v3263 = vld [vmem:[%s3209 + $0x3c] sm:$0xe]
      %v3264 = vld [vmem:[%s3209 + $0x48] sm:$0xe]
      %v3265 = vld [vmem:[%s3209 + $0x54] sm:$0xe]
      %v3266 = vld [vmem:[%s3209 + $0x60] sm:$0xe]
      %v3267 = vld [vmem:[%s3209 + $0x6c] sm:$0xe]
      %v3268 = vld [vmem:[%s3209 + $0x78] sm:$0xe]
      %v3269 = vld [vmem:[%s3209 + $0x84] sm:$0xe]
      %v3270 = vld [vmem:[%s3209 + $0x90] sm:$0xe]
      %v3271 = vld [vmem:[%s3209 + $0x9c] sm:$0xe]
      %v3272 = vld [vmem:[%s3209 + $0xa8] sm:$0xe]
      %v3273 = vld [vmem:[%s3209 + $0xb4] sm:$0xe]
      %v3306 = vunpack.c.l.b16 %v3210
      %v3307 = vunpack.c.l.b16 %v3211
      %v3308 = vunpack.c.l.b16 %v3212
      %v3309 = vunpack.c.l.b16 %v3213
      %v3310 = vunpack.c.l.b16 %v3214
      %v3311 = vunpack.c.l.b16 %v3215
      %v3312 = vunpack.c.l.b16 %v3216
      %v3313 = vunpack.c.l.b16 %v3217
      %v3314 = vunpack.c.l.b16 %v3218
      %v3315 = vunpack.c.l.b16 %v3219
      %v3316 = vunpack.c.l.b16 %v3220
      %v3317 = vunpack.c.l.b16 %v3221
      %v3318 = vunpack.c.l.b16 %v3222
      %v3319 = vunpack.c.l.b16 %v3223
      %v3320 = vunpack.c.l.b16 %v3224
      %v3321 = vunpack.c.l.b16 %v3225
      %v3322 = vunpack.c.l.b16 %v3226
      %v3323 = vunpack.c.l.b16 %v3227
      %v3324 = vunpack.c.l.b16 %v3228
      %v3325 = vunpack.c.l.b16 %v3229
      %v3326 = vunpack.c.l.b16 %v3230
      %v3327 = vunpack.c.l.b16 %v3231
      %v3328 = vunpack.c.l.b16 %v3232
      %v3329 = vunpack.c.l.b16 %v3233
      %v3330 = vunpack.c.l.b16 %v3234
      %v3331 = vunpack.c.l.b16 %v3235
      %v3332 = vunpack.c.l.b16 %v3236
      %v3333 = vunpack.c.l.b16 %v3237
      %v3334 = vunpack.c.l.b16 %v3238
      %v3335 = vunpack.c.l.b16 %v3239
      %v3336 = vunpack.c.l.b16 %v3240
      %v3337 = vunpack.c.l.b16 %v3241
      %v3338 = vpack.c.b16 %v3307, %v3306
      %v3339 = vpack.c.b16 %v3309, %v3308
      %v3340 = vpack.c.b16 %v3311, %v3310
      %v3341 = vpack.c.b16 %v3313, %v3312
      %v3342 = vpack.c.b16 %v3315, %v3314
      %v3343 = vpack.c.b16 %v3317, %v3316
      %v3344 = vpack.c.b16 %v3319, %v3318
      %v3345 = vpack.c.b16 %v3321, %v3320
      %v3346 = vpack.c.b16 %v3323, %v3322
      %v3347 = vpack.c.b16 %v3325, %v3324
      %v3348 = vpack.c.b16 %v3327, %v3326
      %v3349 = vpack.c.b16 %v3329, %v3328
      %v3350 = vpack.c.b16 %v3331, %v3330
      %v3351 = vpack.c.b16 %v3333, %v3332
      %v3352 = vpack.c.b16 %v3335, %v3334
      %v3353 = vpack.c.b16 %v3337, %v3336
      %v3386 = vunpack.c.l.b16 %v3242
      %v3387 = vunpack.c.l.b16 %v3243
      %v3388 = vunpack.c.l.b16 %v3244
      %v3389 = vunpack.c.l.b16 %v3245
      %v3390 = vunpack.c.l.b16 %v3246
      %v3391 = vunpack.c.l.b16 %v3247
      %v3392 = vunpack.c.l.b16 %v3248
      %v3393 = vunpack.c.l.b16 %v3249
      %v3394 = vunpack.c.l.b16 %v3250
      %v3395 = vunpack.c.l.b16 %v3251
      %v3396 = vunpack.c.l.b16 %v3252
      %v3397 = vunpack.c.l.b16 %v3253
      %v3398 = vunpack.c.l.b16 %v3254
      %v3399 = vunpack.c.l.b16 %v3255
      %v3400 = vunpack.c.l.b16 %v3256
      %v3401 = vunpack.c.l.b16 %v3257
      %v3402 = vpack.c.b16 %v3386, %v3386
      %v3403 = vpack.c.b16 %v3387, %v3387
      %v3404 = vpack.c.b16 %v3388, %v3388
      %v3405 = vpack.c.b16 %v3389, %v3389
      %v3406 = vpack.c.b16 %v3390, %v3390
      %v3407 = vpack.c.b16 %v3391, %v3391
      %v3408 = vpack.c.b16 %v3392, %v3392
      %v3409 = vpack.c.b16 %v3393, %v3393
      %v3410 = vpack.c.b16 %v3394, %v3394
      %v3411 = vpack.c.b16 %v3395, %v3395
      %v3412 = vpack.c.b16 %v3396, %v3396
      %v3413 = vpack.c.b16 %v3397, %v3397
      %v3414 = vpack.c.b16 %v3398, %v3398
      %v3415 = vpack.c.b16 %v3399, %v3399
      %v3416 = vpack.c.b16 %v3400, %v3400
      %v3417 = vpack.c.b16 %v3401, %v3401
      %v3419 = vshrl.u32 %v3338, 16
      %v3421 = vshll.u32 %v3338, 16
      %v3423 = vrot.slane %v3421, 1
      %v3424 = vor.u32 %v3419, %v3423
      %v3426 = vshll.u32 %v3402, 16
      %v3428 = vrot.slane %v3426, 1
      %v3429 = vsel %vm1202, %v3424, %v3428
      %v3431 = vshrl.u32 %v3339, 16
      %v3433 = vshll.u32 %v3339, 16
      %v3435 = vrot.slane %v3433, 1
      %v3436 = vor.u32 %v3431, %v3435
      %v3438 = vshll.u32 %v3403, 16
      %v3440 = vrot.slane %v3438, 1
      %v3441 = vsel %vm1202, %v3436, %v3440
      %v3443 = vshrl.u32 %v3340, 16
      %v3445 = vshll.u32 %v3340, 16
      %v3447 = vrot.slane %v3445, 1
      %v3448 = vor.u32 %v3443, %v3447
      %v3450 = vshll.u32 %v3404, 16
      %v3452 = vrot.slane %v3450, 1
      %v3453 = vsel %vm1202, %v3448, %v3452
      %v3455 = vshrl.u32 %v3341, 16
      %v3457 = vshll.u32 %v3341, 16
      %v3459 = vrot.slane %v3457, 1
      %v3460 = vor.u32 %v3455, %v3459
      %v3462 = vshll.u32 %v3405, 16
      %v3464 = vrot.slane %v3462, 1
      %v3465 = vsel %vm1202, %v3460, %v3464
      %v3467 = vshrl.u32 %v3342, 16
      %v3469 = vshll.u32 %v3342, 16
      %v3471 = vrot.slane %v3469, 1
      %v3472 = vor.u32 %v3467, %v3471
      %v3474 = vshll.u32 %v3406, 16
      %v3476 = vrot.slane %v3474, 1
      %v3477 = vsel %vm1202, %v3472, %v3476
      %v3479 = vshrl.u32 %v3343, 16
      %v3481 = vshll.u32 %v3343, 16
      %v3483 = vrot.slane %v3481, 1
      %v3484 = vor.u32 %v3479, %v3483
      %v3486 = vshll.u32 %v3407, 16
      %v3488 = vrot.slane %v3486, 1
      %v3489 = vsel %vm1202, %v3484, %v3488
      %v3491 = vshrl.u32 %v3344, 16
      %v3493 = vshll.u32 %v3344, 16
      %v3495 = vrot.slane %v3493, 1
      %v3496 = vor.u32 %v3491, %v3495
      %v3498 = vshll.u32 %v3408, 16
      %v3500 = vrot.slane %v3498, 1
      %v3501 = vsel %vm1202, %v3496, %v3500
      %v3503 = vshrl.u32 %v3345, 16
      %v3505 = vshll.u32 %v3345, 16
      %v3507 = vrot.slane %v3505, 1
      %v3508 = vor.u32 %v3503, %v3507
      %v3510 = vshll.u32 %v3409, 16
      %v3512 = vrot.slane %v3510, 1
      %v3513 = vsel %vm1202, %v3508, %v3512
      %v3515 = vshrl.u32 %v3346, 16
      %v3517 = vshll.u32 %v3346, 16
      %v3519 = vrot.slane %v3517, 1
      %v3520 = vor.u32 %v3515, %v3519
      %v3522 = vshll.u32 %v3410, 16
      %v3524 = vrot.slane %v3522, 1
      %v3525 = vsel %vm1202, %v3520, %v3524
      %v3527 = vshrl.u32 %v3347, 16
      %v3529 = vshll.u32 %v3347, 16
      %v3531 = vrot.slane %v3529, 1
      %v3532 = vor.u32 %v3527, %v3531
      %v3534 = vshll.u32 %v3411, 16
      %v3536 = vrot.slane %v3534, 1
      %v3537 = vsel %vm1202, %v3532, %v3536
      %v3539 = vshrl.u32 %v3348, 16
      %v3541 = vshll.u32 %v3348, 16
      %v3543 = vrot.slane %v3541, 1
      %v3544 = vor.u32 %v3539, %v3543
      %v3546 = vshll.u32 %v3412, 16
      %v3548 = vrot.slane %v3546, 1
      %v3549 = vsel %vm1202, %v3544, %v3548
      %v3551 = vshrl.u32 %v3349, 16
      %v3553 = vshll.u32 %v3349, 16
      %v3555 = vrot.slane %v3553, 1
      %v3556 = vor.u32 %v3551, %v3555
      %v3558 = vshll.u32 %v3413, 16
      %v3560 = vrot.slane %v3558, 1
      %v3561 = vsel %vm1202, %v3556, %v3560
      %v3563 = vshrl.u32 %v3350, 16
      %v3565 = vshll.u32 %v3350, 16
      %v3567 = vrot.slane %v3565, 1
      %v3568 = vor.u32 %v3563, %v3567
      %v3570 = vshll.u32 %v3414, 16
      %v3572 = vrot.slane %v3570, 1
      %v3573 = vsel %vm1202, %v3568, %v3572
      %v3575 = vshrl.u32 %v3351, 16
      %v3577 = vshll.u32 %v3351, 16
      %v3579 = vrot.slane %v3577, 1
      %v3580 = vor.u32 %v3575, %v3579
      %v3582 = vshll.u32 %v3415, 16
      %v3584 = vrot.slane %v3582, 1
      %v3585 = vsel %vm1202, %v3580, %v3584
      %v3587 = vshrl.u32 %v3352, 16
      %v3589 = vshll.u32 %v3352, 16
      %v3591 = vrot.slane %v3589, 1
      %v3592 = vor.u32 %v3587, %v3591
      %v3594 = vshll.u32 %v3416, 16
      %v3596 = vrot.slane %v3594, 1
      %v3597 = vsel %vm1202, %v3592, %v3596
      %v3599 = vshrl.u32 %v3353, 16
      %v3601 = vshll.u32 %v3353, 16
      %v3603 = vrot.slane %v3601, 1
      %v3604 = vor.u32 %v3599, %v3603
      %v3606 = vshll.u32 %v3417, 16
      %v3608 = vrot.slane %v3606, 1
      %v3609 = vsel %vm1202, %v3604, %v3608
      %v3642 = vunpack.c.l.b16 %v3258
      %v3643 = vunpack.c.l.b16 %v3259
      %v3644 = vunpack.c.l.b16 %v3260
      %v3645 = vunpack.c.l.b16 %v3261
      %v3646 = vunpack.c.l.b16 %v3262
      %v3647 = vunpack.c.l.b16 %v3263
      %v3648 = vunpack.c.l.b16 %v3264
      %v3649 = vunpack.c.l.b16 %v3265
      %v3650 = vunpack.c.l.b16 %v3266
      %v3651 = vunpack.c.l.b16 %v3267
      %v3652 = vunpack.c.l.b16 %v3268
      %v3653 = vunpack.c.l.b16 %v3269
      %v3654 = vunpack.c.l.b16 %v3270
      %v3655 = vunpack.c.l.b16 %v3271
      %v3656 = vunpack.c.l.b16 %v3272
      %v3657 = vunpack.c.l.b16 %v3273
      %v3658 = vpack.c.b16 %v3307, %v3642
      %v3659 = vpack.c.b16 %v3309, %v3643
      %v3660 = vpack.c.b16 %v3311, %v3644
      %v3661 = vpack.c.b16 %v3313, %v3645
      %v3662 = vpack.c.b16 %v3315, %v3646
      %v3663 = vpack.c.b16 %v3317, %v3647
      %v3664 = vpack.c.b16 %v3319, %v3648
      %v3665 = vpack.c.b16 %v3321, %v3649
      %v3666 = vpack.c.b16 %v3323, %v3650
      %v3667 = vpack.c.b16 %v3325, %v3651
      %v3668 = vpack.c.b16 %v3327, %v3652
      %v3669 = vpack.c.b16 %v3329, %v3653
      %v3670 = vpack.c.b16 %v3331, %v3654
      %v3671 = vpack.c.b16 %v3333, %v3655
      %v3672 = vpack.c.b16 %v3335, %v3656
      %v3673 = vpack.c.b16 %v3337, %v3657
      %v3674 = vrot.slane %v3658, 1
      %v3675 = vrot.slane %v3402, 1
      %v3676 = vsel %vm1459, %v3674, %v3675
      %v3677 = vrot.slane %v3659, 1
      %v3678 = vrot.slane %v3403, 1
      %v3679 = vsel %vm1459, %v3677, %v3678
      %v3680 = vrot.slane %v3660, 1
      %v3681 = vrot.slane %v3404, 1
      %v3682 = vsel %vm1459, %v3680, %v3681
      %v3683 = vrot.slane %v3661, 1
      %v3684 = vrot.slane %v3405, 1
      %v3685 = vsel %vm1459, %v3683, %v3684
      %v3686 = vrot.slane %v3662, 1
      %v3687 = vrot.slane %v3406, 1
      %v3688 = vsel %vm1459, %v3686, %v3687
      %v3689 = vrot.slane %v3663, 1
      %v3690 = vrot.slane %v3407, 1
      %v3691 = vsel %vm1459, %v3689, %v3690
      %v3692 = vrot.slane %v3664, 1
      %v3693 = vrot.slane %v3408, 1
      %v3694 = vsel %vm1459, %v3692, %v3693
      %v3695 = vrot.slane %v3665, 1
      %v3696 = vrot.slane %v3409, 1
      %v3697 = vsel %vm1459, %v3695, %v3696
      %v3698 = vrot.slane %v3666, 1
      %v3699 = vrot.slane %v3410, 1
      %v3700 = vsel %vm1459, %v3698, %v3699
      %v3701 = vrot.slane %v3667, 1
      %v3702 = vrot.slane %v3411, 1
      %v3703 = vsel %vm1459, %v3701, %v3702
      %v3704 = vrot.slane %v3668, 1
      %v3705 = vrot.slane %v3412, 1
      %v3706 = vsel %vm1459, %v3704, %v3705
      %v3707 = vrot.slane %v3669, 1
      %v3708 = vrot.slane %v3413, 1
      %v3709 = vsel %vm1459, %v3707, %v3708
      %v3710 = vrot.slane %v3670, 1
      %v3711 = vrot.slane %v3414, 1
      %v3712 = vsel %vm1459, %v3710, %v3711
      %v3713 = vrot.slane %v3671, 1
      %v3714 = vrot.slane %v3415, 1
      %v3715 = vsel %vm1459, %v3713, %v3714
      %v3716 = vrot.slane %v3672, 1
      %v3717 = vrot.slane %v3416, 1
      %v3718 = vsel %vm1459, %v3716, %v3717
      %v3719 = vrot.slane %v3673, 1
      %v3720 = vrot.slane %v3417, 1
      %v3721 = vsel %vm1459, %v3719, %v3720
      %s3738 = scalar_lea.vmem %s3, 384
      %v3739 = vld [vmem:[%s3738] sm:$0xf]
      %v3740 = vld [vmem:[%s3738 + $0x4] sm:$0xf]
      %v3741 = vld [vmem:[%s3738 + $0x8] sm:$0xf]
      %v3742 = vld [vmem:[%s3738 + $0xc] sm:$0xf]
      %v3743 = vld [vmem:[%s3738 + $0x10] sm:$0xf]
      %v3744 = vld [vmem:[%s3738 + $0x14] sm:$0xf]
      %v3745 = vld [vmem:[%s3738 + $0x18] sm:$0xf]
      %v3746 = vld [vmem:[%s3738 + $0x1c] sm:$0xf]
      %v3747 = vld [vmem:[%s3738 + $0x20] sm:$0xf]
      %v3748 = vld [vmem:[%s3738 + $0x24] sm:$0xf]
      %v3749 = vld [vmem:[%s3738 + $0x28] sm:$0xf]
      %v3750 = vld [vmem:[%s3738 + $0x2c] sm:$0xf]
      %v3751 = vld [vmem:[%s3738 + $0x30] sm:$0xf]
      %v3752 = vld [vmem:[%s3738 + $0x34] sm:$0xf]
      %v3753 = vld [vmem:[%s3738 + $0x38] sm:$0xf]
      %v3754 = vld [vmem:[%s3738 + $0x3c] sm:$0xf]
      %v3755 = vld [vmem:[%s3738 + $0x40] sm:$0xf]
      %v3756 = vld [vmem:[%s3738 + $0x44] sm:$0xf]
      %v3757 = vld [vmem:[%s3738 + $0x48] sm:$0xf]
      %v3758 = vld [vmem:[%s3738 + $0x4c] sm:$0xf]
      %v3759 = vld [vmem:[%s3738 + $0x50] sm:$0xf]
      %v3760 = vld [vmem:[%s3738 + $0x54] sm:$0xf]
      %v3761 = vld [vmem:[%s3738 + $0x58] sm:$0xf]
      %v3762 = vld [vmem:[%s3738 + $0x5c] sm:$0xf]
      %v3763 = vld [vmem:[%s3738 + $0x60] sm:$0xf]
      %v3764 = vld [vmem:[%s3738 + $0x64] sm:$0xf]
      %v3765 = vld [vmem:[%s3738 + $0x68] sm:$0xf]
      %v3766 = vld [vmem:[%s3738 + $0x6c] sm:$0xf]
      %v3767 = vld [vmem:[%s3738 + $0x70] sm:$0xf]
      %v3768 = vld [vmem:[%s3738 + $0x74] sm:$0xf]
      %v3769 = vld [vmem:[%s3738 + $0x78] sm:$0xf]
      %v3770 = vld [vmem:[%s3738 + $0x7c] sm:$0xf]
      %v3771 = vld [vmem:[%s3738 + $0x80] sm:$0xf]
      %v3772 = vld [vmem:[%s3738 + $0x84] sm:$0xf]
      %v3773 = vld [vmem:[%s3738 + $0x88] sm:$0xf]
      %v3774 = vld [vmem:[%s3738 + $0x8c] sm:$0xf]
      %v3775 = vld [vmem:[%s3738 + $0x90] sm:$0xf]
      %v3776 = vld [vmem:[%s3738 + $0x94] sm:$0xf]
      %v3777 = vld [vmem:[%s3738 + $0x98] sm:$0xf]
      %v3778 = vld [vmem:[%s3738 + $0x9c] sm:$0xf]
      %v3779 = vld [vmem:[%s3738 + $0xa0] sm:$0xf]
      %v3780 = vld [vmem:[%s3738 + $0xa4] sm:$0xf]
      %v3781 = vld [vmem:[%s3738 + $0xa8] sm:$0xf]
      %v3782 = vld [vmem:[%s3738 + $0xac] sm:$0xf]
      %v3783 = vld [vmem:[%s3738 + $0xb0] sm:$0xf]
      %v3784 = vld [vmem:[%s3738 + $0xb4] sm:$0xf]
      %v3785 = vld [vmem:[%s3738 + $0xb8] sm:$0xf]
      %v3786 = vld [vmem:[%s3738 + $0xbc] sm:$0xf]
      %v3835 = vunpack.c.l.b16 %v3739
      %v3836 = vunpack.c.l.b16 %v3740
      %v3837 = vunpack.c.l.b16 %v3741
      %v3838 = vunpack.c.l.b16 %v3742
      %v3839 = vunpack.c.l.b16 %v3743
      %v3840 = vunpack.c.l.b16 %v3744
      %v3841 = vunpack.c.l.b16 %v3745
      %v3842 = vunpack.c.l.b16 %v3746
      %v3843 = vunpack.c.l.b16 %v3747
      %v3844 = vunpack.c.l.b16 %v3748
      %v3845 = vunpack.c.l.b16 %v3749
      %v3846 = vunpack.c.l.b16 %v3750
      %v3847 = vunpack.c.l.b16 %v3751
      %v3848 = vunpack.c.l.b16 %v3752
      %v3849 = vunpack.c.l.b16 %v3753
      %v3850 = vunpack.c.l.b16 %v3754
      %v3851 = vunpack.c.l.b16 %v3755
      %v3852 = vunpack.c.l.b16 %v3756
      %v3853 = vunpack.c.l.b16 %v3757
      %v3854 = vunpack.c.l.b16 %v3758
      %v3855 = vunpack.c.l.b16 %v3759
      %v3856 = vunpack.c.l.b16 %v3760
      %v3857 = vunpack.c.l.b16 %v3761
      %v3858 = vunpack.c.l.b16 %v3762
      %v3859 = vunpack.c.l.b16 %v3763
      %v3860 = vunpack.c.l.b16 %v3764
      %v3861 = vunpack.c.l.b16 %v3765
      %v3862 = vunpack.c.l.b16 %v3766
      %v3863 = vunpack.c.l.b16 %v3767
      %v3864 = vunpack.c.l.b16 %v3768
      %v3865 = vunpack.c.l.b16 %v3769
      %v3866 = vunpack.c.l.b16 %v3770
      %v3867 = vunpack.c.l.b16 %v3771
      %v3868 = vunpack.c.l.b16 %v3772
      %v3869 = vunpack.c.l.b16 %v3773
      %v3870 = vunpack.c.l.b16 %v3774
      %v3871 = vunpack.c.l.b16 %v3775
      %v3872 = vunpack.c.l.b16 %v3776
      %v3873 = vunpack.c.l.b16 %v3777
      %v3874 = vunpack.c.l.b16 %v3778
      %v3875 = vunpack.c.l.b16 %v3779
      %v3876 = vunpack.c.l.b16 %v3780
      %v3877 = vunpack.c.l.b16 %v3781
      %v3878 = vunpack.c.l.b16 %v3782
      %v3879 = vunpack.c.l.b16 %v3783
      %v3880 = vunpack.c.l.b16 %v3784
      %v3881 = vunpack.c.l.b16 %v3785
      %v3882 = vunpack.c.l.b16 %v3786
      %v3883 = vpack.c.b16 %v3836, %v3835
      %v3884 = vpack.c.b16 %v3838, %v3837
      %v3885 = vpack.c.b16 %v3840, %v3839
      %v3886 = vpack.c.b16 %v3842, %v3841
      %v3887 = vpack.c.b16 %v3844, %v3843
      %v3888 = vpack.c.b16 %v3846, %v3845
      %v3889 = vpack.c.b16 %v3848, %v3847
      %v3890 = vpack.c.b16 %v3850, %v3849
      %v3891 = vpack.c.b16 %v3852, %v3851
      %v3892 = vpack.c.b16 %v3854, %v3853
      %v3893 = vpack.c.b16 %v3856, %v3855
      %v3894 = vpack.c.b16 %v3858, %v3857
      %v3895 = vpack.c.b16 %v3860, %v3859
      %v3896 = vpack.c.b16 %v3862, %v3861
      %v3897 = vpack.c.b16 %v3864, %v3863
      %v3898 = vpack.c.b16 %v3866, %v3865
      %v3899 = vpack.c.b16 %v3868, %v3867
      %v3900 = vpack.c.b16 %v3870, %v3869
      %v3901 = vpack.c.b16 %v3872, %v3871
      %v3902 = vpack.c.b16 %v3874, %v3873
      %v3903 = vpack.c.b16 %v3876, %v3875
      %v3904 = vpack.c.b16 %v3878, %v3877
      %v3905 = vpack.c.b16 %v3880, %v3879
      %v3906 = vpack.c.b16 %v3882, %v3881
      %3931 = vmatprep.subr.bf16.mxu0 0
      %3932 = vmatpush1.bf16.msra.mxu0 %v3890
      %3933 = vmatprep.subr.bf16.mxu0 0
      %3934 = vmatpush1.bf16.msra.mxu0 %v3889
      %3935 = vmatprep.subr.bf16.mxu0 0
      %3936 = vmatpush1.bf16.msra.mxu0 %v3888
      %3937 = vmatprep.subr.bf16.mxu0 0
      %3938 = vmatpush1.bf16.msra.mxu0 %v3887
      %3939 = vmatprep.subr.bf16.mxu0 0
      %3940 = vmatpush1.bf16.msra.mxu0 %v3886
      %3941 = vmatprep.subr.bf16.mxu0 0
      %3942 = vmatpush1.bf16.msra.mxu0 %v3885
      %3943 = vmatprep.subr.bf16.mxu0 0
      %3944 = vmatpush1.bf16.msra.mxu0 %v3884
      %3945 = vmatprep.subr.bf16.mxu0 0
      %3946 = vmatpush1.bf16.msra.mxu0 %v3883
      %3947 = vmatprep.subr.bf16.mxu0 0
      %3948 = vmatpush2.bf16.msra.mxu0 %v3898
      %3949 = vmatprep.subr.bf16.mxu0 0
      %3950 = vmatpush2.bf16.msra.mxu0 %v3897
      %3951 = vmatprep.subr.bf16.mxu0 0
      %3952 = vmatpush2.bf16.msra.mxu0 %v3896
      %3953 = vmatprep.subr.bf16.mxu0 0
      %3954 = vmatpush2.bf16.msra.mxu0 %v3895
      %3955 = vmatprep.subr.bf16.mxu0 0
      %3956 = vmatpush2.bf16.msra.mxu0 %v3894
      %3957 = vmatprep.subr.bf16.mxu0 0
      %3958 = vmatpush2.bf16.msra.mxu0 %v3893
      %3959 = vmatprep.subr.bf16.mxu0 0
      %3960 = vmatpush2.bf16.msra.mxu0 %v3892
      %3961 = vmatprep.subr.bf16.mxu0 0
      %3962 = vmatpush2.bf16.msra.mxu0 %v3891
      %3963 = vmatprep.mubr.bf16.mxu0 %v3429
      %3964 = vmatmul.mubr.bf16.gmra.mxu0 %v3338
      %v3965 = vpop.f32.mrf.mxu0
      %v3966 = vadd.f32 0.0, %v3965
      %v3967 = vpop.f32.mrf.mxu0
      %v3968 = vpop.f32.mrf.mxu0
      %v3969 = vadd.f32 0.0, %v3968
      %v3970 = vpop.f32.mrf.mxu0
      %3971 = vmatprep.mubr.bf16.mxu0 %v3441
      %3972 = vmatmul.mubr.bf16.gmra.mxu0 %v3339
      %v3973 = vpop.f32.mrf.mxu0
      %v3974 = vadd.f32 0.0, %v3973
      %v3975 = vpop.f32.mrf.mxu0
      %v3976 = vpop.f32.mrf.mxu0
      %v3977 = vadd.f32 0.0, %v3976
      %v3978 = vpop.f32.mrf.mxu0
      %3979 = vmatprep.mubr.bf16.mxu0 %v3453
      %3980 = vmatmul.mubr.bf16.gmra.mxu0 %v3340
      %v3981 = vpop.f32.mrf.mxu0
      %v3982 = vadd.f32 0.0, %v3981
      %v3983 = vpop.f32.mrf.mxu0
      %v3984 = vpop.f32.mrf.mxu0
      %v3985 = vadd.f32 0.0, %v3984
      %v3986 = vpop.f32.mrf.mxu0
      %3987 = vmatprep.mubr.bf16.mxu0 %v3465
      %3988 = vmatmul.mubr.bf16.gmra.mxu0 %v3341
      %v3989 = vpop.f32.mrf.mxu0
      %v3990 = vadd.f32 0.0, %v3989
      %v3991 = vpop.f32.mrf.mxu0
      %v3992 = vpop.f32.mrf.mxu0
      %v3993 = vadd.f32 0.0, %v3992
      %v3994 = vpop.f32.mrf.mxu0
      %3995 = vmatprep.mubr.bf16.mxu0 %v3477
      %3996 = vmatmul.mubr.bf16.gmra.mxu0 %v3342
      %v3997 = vpop.f32.mrf.mxu0
      %v3998 = vadd.f32 0.0, %v3997
      %v3999 = vpop.f32.mrf.mxu0
      %v4000 = vpop.f32.mrf.mxu0
      %v4001 = vadd.f32 0.0, %v4000
      %v4002 = vpop.f32.mrf.mxu0
      %4003 = vmatprep.mubr.bf16.mxu0 %v3489
      %4004 = vmatmul.mubr.bf16.gmra.mxu0 %v3343
      %v4005 = vpop.f32.mrf.mxu0
      %v4006 = vadd.f32 0.0, %v4005
      %v4007 = vpop.f32.mrf.mxu0
      %v4008 = vpop.f32.mrf.mxu0
      %v4009 = vadd.f32 0.0, %v4008
      %v4010 = vpop.f32.mrf.mxu0
      %4011 = vmatprep.mubr.bf16.mxu0 %v3501
      %4012 = vmatmul.mubr.bf16.gmra.mxu0 %v3344
      %v4013 = vpop.f32.mrf.mxu0
      %v4014 = vadd.f32 0.0, %v4013
      %v4015 = vpop.f32.mrf.mxu0
      %v4016 = vpop.f32.mrf.mxu0
      %v4017 = vadd.f32 0.0, %v4016
      %v4018 = vpop.f32.mrf.mxu0
      %4019 = vmatprep.mubr.bf16.mxu0 %v3513
      %4020 = vmatmul.mubr.bf16.gmra.mxu0 %v3345
      %v4021 = vpop.f32.mrf.mxu0
      %v4022 = vadd.f32 0.0, %v4021
      %v4023 = vpop.f32.mrf.mxu0
      %v4024 = vpop.f32.mrf.mxu0
      %v4025 = vadd.f32 0.0, %v4024
      %v4026 = vpop.f32.mrf.mxu0
      %4027 = vmatprep.mubr.bf16.mxu0 %v3525
      %4028 = vmatmul.mubr.bf16.gmra.mxu0 %v3346
      %v4029 = vpop.f32.mrf.mxu0
      %v4030 = vadd.f32 0.0, %v4029
      %v4031 = vpop.f32.mrf.mxu0
      %v4032 = vpop.f32.mrf.mxu0
      %v4033 = vadd.f32 0.0, %v4032
      %v4034 = vpop.f32.mrf.mxu0
      %4035 = vmatprep.mubr.bf16.mxu0 %v3537
      %4036 = vmatmul.mubr.bf16.gmra.mxu0 %v3347
      %v4037 = vpop.f32.mrf.mxu0
      %v4038 = vadd.f32 0.0, %v4037
      %v4039 = vpop.f32.mrf.mxu0
      %v4040 = vpop.f32.mrf.mxu0
      %v4041 = vadd.f32 0.0, %v4040
      %v4042 = vpop.f32.mrf.mxu0
      %4043 = vmatprep.mubr.bf16.mxu0 %v3549
      %4044 = vmatmul.mubr.bf16.gmra.mxu0 %v3348
      %v4045 = vpop.f32.mrf.mxu0
      %v4046 = vadd.f32 0.0, %v4045
      %v4047 = vpop.f32.mrf.mxu0
      %v4048 = vpop.f32.mrf.mxu0
      %v4049 = vadd.f32 0.0, %v4048
      %v4050 = vpop.f32.mrf.mxu0
      %4051 = vmatprep.mubr.bf16.mxu0 %v3561
      %4052 = vmatmul.mubr.bf16.gmra.mxu0 %v3349
      %v4053 = vpop.f32.mrf.mxu0
      %v4054 = vadd.f32 0.0, %v4053
      %v4055 = vpop.f32.mrf.mxu0
      %v4056 = vpop.f32.mrf.mxu0
      %v4057 = vadd.f32 0.0, %v4056
      %v4058 = vpop.f32.mrf.mxu0
      %4059 = vmatprep.mubr.bf16.mxu0 %v3573
      %4060 = vmatmul.mubr.bf16.gmra.mxu0 %v3350
      %v4061 = vpop.f32.mrf.mxu0
      %v4062 = vadd.f32 0.0, %v4061
      %v4063 = vpop.f32.mrf.mxu0
      %v4064 = vpop.f32.mrf.mxu0
      %v4065 = vadd.f32 0.0, %v4064
      %v4066 = vpop.f32.mrf.mxu0
      %4067 = vmatprep.mubr.bf16.mxu0 %v3585
      %4068 = vmatmul.mubr.bf16.gmra.mxu0 %v3351
      %v4069 = vpop.f32.mrf.mxu0
      %v4070 = vadd.f32 0.0, %v4069
      %v4071 = vpop.f32.mrf.mxu0
      %v4072 = vpop.f32.mrf.mxu0
      %v4073 = vadd.f32 0.0, %v4072
      %v4074 = vpop.f32.mrf.mxu0
      %4075 = vmatprep.mubr.bf16.mxu0 %v3597
      %4076 = vmatmul.mubr.bf16.gmra.mxu0 %v3352
      %v4077 = vpop.f32.mrf.mxu0
      %v4078 = vadd.f32 0.0, %v4077
      %v4079 = vpop.f32.mrf.mxu0
      %v4080 = vpop.f32.mrf.mxu0
      %v4081 = vadd.f32 0.0, %v4080
      %v4082 = vpop.f32.mrf.mxu0
      %4083 = vmatprep.mubr.bf16.mxu0 %v3609
      %4084 = vmatmul.mubr.bf16.gmra.mxu0 %v3353
      %v4085 = vpop.f32.mrf.mxu0
      %v4086 = vadd.f32 0.0, %v4085
      %v4087 = vpop.f32.mrf.mxu0
      %v4088 = vpop.f32.mrf.mxu0
      %v4089 = vadd.f32 0.0, %v4088
      %v4090 = vpop.f32.mrf.mxu0
      %4091 = vdwg.mxu0
      %4092 = vmatprep.subr.bf16.mxu0 0
      %4093 = vmatpush1.bf16.msra.mxu0 %v3906
      %4094 = vmatprep.subr.bf16.mxu0 0
      %4095 = vmatpush1.bf16.msra.mxu0 %v3905
      %4096 = vmatprep.subr.bf16.mxu0 0
      %4097 = vmatpush1.bf16.msra.mxu0 %v3904
      %4098 = vmatprep.subr.bf16.mxu0 0
      %4099 = vmatpush1.bf16.msra.mxu0 %v3903
      %4100 = vmatprep.subr.bf16.mxu0 0
      %4101 = vmatpush1.bf16.msra.mxu0 %v3902
      %4102 = vmatprep.subr.bf16.mxu0 0
      %4103 = vmatpush1.bf16.msra.mxu0 %v3901
      %4104 = vmatprep.subr.bf16.mxu0 0
      %4105 = vmatpush1.bf16.msra.mxu0 %v3900
      %4106 = vmatprep.subr.bf16.mxu0 0
      %4107 = vmatpush1.bf16.msra.mxu0 %v3899
      %4108 = vmatprep.subr.bf16.mxu0 0
      %4109 = vmatpush2.bf16.msra.mxu0 0
      %4110 = vmatprep.subr.bf16.mxu0 0
      %4111 = vmatpush2.bf16.msra.mxu0 0
      %4112 = vmatprep.subr.bf16.mxu0 0
      %4113 = vmatpush2.bf16.msra.mxu0 0
      %4114 = vmatprep.subr.bf16.mxu0 0
      %4115 = vmatpush2.bf16.msra.mxu0 0
      %4116 = vmatprep.subr.bf16.mxu0 0
      %4117 = vmatpush2.bf16.msra.mxu0 0
      %4118 = vmatprep.subr.bf16.mxu0 0
      %4119 = vmatpush2.bf16.msra.mxu0 0
      %4120 = vmatprep.subr.bf16.mxu0 0
      %4121 = vmatpush2.bf16.msra.mxu0 0
      %4122 = vmatprep.subr.bf16.mxu0 0
      %4123 = vmatpush2.bf16.msra.mxu0 0
      %4124 = vmatprep.mubr.bf16.mxu0 0
      %4125 = vmatmul.mubr.bf16.gmra.mxu0 %v3676
      %v4126 = vpop.f32.mrf.mxu0
      %v4127 = vadd.f32 %v3966, %v4126
      %v4128 = vpop.f32.mrf.mxu0
      %v4129 = vpop.f32.mrf.mxu0
      %v4130 = vadd.f32 %v3969, %v4129
      %v4131 = vpop.f32.mrf.mxu0
      %4132 = vmatprep.mubr.bf16.mxu0 0
      %4133 = vmatmul.mubr.bf16.gmra.mxu0 %v3679
      %v4134 = vpop.f32.mrf.mxu0
      %v4135 = vadd.f32 %v3974, %v4134
      %v4136 = vpop.f32.mrf.mxu0
      %v4137 = vpop.f32.mrf.mxu0
      %v4138 = vadd.f32 %v3977, %v4137
      %v4139 = vpop.f32.mrf.mxu0
      %4140 = vmatprep.mubr.bf16.mxu0 0
      %4141 = vmatmul.mubr.bf16.gmra.mxu0 %v3682
      %v4142 = vpop.f32.mrf.mxu0
      %v4143 = vadd.f32 %v3982, %v4142
      %v4144 = vpop.f32.mrf.mxu0
      %v4145 = vpop.f32.mrf.mxu0
      %v4146 = vadd.f32 %v3985, %v4145
      %v4147 = vpop.f32.mrf.mxu0
      %4148 = vmatprep.mubr.bf16.mxu0 0
      %4149 = vmatmul.mubr.bf16.gmra.mxu0 %v3685
      %v4150 = vpop.f32.mrf.mxu0
      %v4151 = vadd.f32 %v3990, %v4150
      %v4152 = vpop.f32.mrf.mxu0
      %v4153 = vpop.f32.mrf.mxu0
      %v4154 = vadd.f32 %v3993, %v4153
      %v4155 = vpop.f32.mrf.mxu0
      %4156 = vmatprep.mubr.bf16.mxu0 0
      %4157 = vmatmul.mubr.bf16.gmra.mxu0 %v3688
      %v4158 = vpop.f32.mrf.mxu0
      %v4159 = vadd.f32 %v3998, %v4158
      %v4160 = vpop.f32.mrf.mxu0
      %v4161 = vpop.f32.mrf.mxu0
      %v4162 = vadd.f32 %v4001, %v4161
      %v4163 = vpop.f32.mrf.mxu0
      %4164 = vmatprep.mubr.bf16.mxu0 0
      %4165 = vmatmul.mubr.bf16.gmra.mxu0 %v3691
      %v4166 = vpop.f32.mrf.mxu0
      %v4167 = vadd.f32 %v4006, %v4166
      %v4168 = vpop.f32.mrf.mxu0
      %v4169 = vpop.f32.mrf.mxu0
      %v4170 = vadd.f32 %v4009, %v4169
      %v4171 = vpop.f32.mrf.mxu0
      %4172 = vmatprep.mubr.bf16.mxu0 0
      %4173 = vmatmul.mubr.bf16.gmra.mxu0 %v3694
      %v4174 = vpop.f32.mrf.mxu0
      %v4175 = vadd.f32 %v4014, %v4174
      %v4176 = vpop.f32.mrf.mxu0
      %v4177 = vpop.f32.mrf.mxu0
      %v4178 = vadd.f32 %v4017, %v4177
      %v4179 = vpop.f32.mrf.mxu0
      %4180 = vmatprep.mubr.bf16.mxu0 0
      %4181 = vmatmul.mubr.bf16.gmra.mxu0 %v3697
      %v4182 = vpop.f32.mrf.mxu0
      %v4183 = vadd.f32 %v4022, %v4182
      %v4184 = vpop.f32.mrf.mxu0
      %v4185 = vpop.f32.mrf.mxu0
      %v4186 = vadd.f32 %v4025, %v4185
      %v4187 = vpop.f32.mrf.mxu0
      %4188 = vmatprep.mubr.bf16.mxu0 0
      %4189 = vmatmul.mubr.bf16.gmra.mxu0 %v3700
      %v4190 = vpop.f32.mrf.mxu0
      %v4191 = vadd.f32 %v4030, %v4190
      %v4192 = vpop.f32.mrf.mxu0
      %v4193 = vpop.f32.mrf.mxu0
      %v4194 = vadd.f32 %v4033, %v4193
      %v4195 = vpop.f32.mrf.mxu0
      %4196 = vmatprep.mubr.bf16.mxu0 0
      %4197 = vmatmul.mubr.bf16.gmra.mxu0 %v3703
      %v4198 = vpop.f32.mrf.mxu0
      %v4199 = vadd.f32 %v4038, %v4198
      %v4200 = vpop.f32.mrf.mxu0
      %v4201 = vpop.f32.mrf.mxu0
      %v4202 = vadd.f32 %v4041, %v4201
      %v4203 = vpop.f32.mrf.mxu0
      %4204 = vmatprep.mubr.bf16.mxu0 0
      %4205 = vmatmul.mubr.bf16.gmra.mxu0 %v3706
      %v4206 = vpop.f32.mrf.mxu0
      %v4207 = vadd.f32 %v4046, %v4206
      %v4208 = vpop.f32.mrf.mxu0
      %v4209 = vpop.f32.mrf.mxu0
      %v4210 = vadd.f32 %v4049, %v4209
      %v4211 = vpop.f32.mrf.mxu0
      %4212 = vmatprep.mubr.bf16.mxu0 0
      %4213 = vmatmul.mubr.bf16.gmra.mxu0 %v3709
      %v4214 = vpop.f32.mrf.mxu0
      %v4215 = vadd.f32 %v4054, %v4214
      %v4216 = vpop.f32.mrf.mxu0
      %v4217 = vpop.f32.mrf.mxu0
      %v4218 = vadd.f32 %v4057, %v4217
      %v4219 = vpop.f32.mrf.mxu0
      %4220 = vmatprep.mubr.bf16.mxu0 0
      %4221 = vmatmul.mubr.bf16.gmra.mxu0 %v3712
      %v4222 = vpop.f32.mrf.mxu0
      %v4223 = vadd.f32 %v4062, %v4222
      %v4224 = vpop.f32.mrf.mxu0
      %v4225 = vpop.f32.mrf.mxu0
      %v4226 = vadd.f32 %v4065, %v4225
      %v4227 = vpop.f32.mrf.mxu0
      %4228 = vmatprep.mubr.bf16.mxu0 0
      %4229 = vmatmul.mubr.bf16.gmra.mxu0 %v3715
      %v4230 = vpop.f32.mrf.mxu0
      %v4231 = vadd.f32 %v4070, %v4230
      %v4232 = vpop.f32.mrf.mxu0
      %v4233 = vpop.f32.mrf.mxu0
      %v4234 = vadd.f32 %v4073, %v4233
      %v4235 = vpop.f32.mrf.mxu0
      %4236 = vmatprep.mubr.bf16.mxu0 0
      %4237 = vmatmul.mubr.bf16.gmra.mxu0 %v3718
      %v4238 = vpop.f32.mrf.mxu0
      %v4239 = vadd.f32 %v4078, %v4238
      %v4240 = vpop.f32.mrf.mxu0
      %v4241 = vpop.f32.mrf.mxu0
      %v4242 = vadd.f32 %v4081, %v4241
      %v4243 = vpop.f32.mrf.mxu0
      %4244 = vmatprep.mubr.bf16.mxu0 0
      %4245 = vmatmul.mubr.bf16.gmra.mxu0 %v3721
      %v4246 = vpop.f32.mrf.mxu0
      %v4247 = vadd.f32 %v4086, %v4246
      %v4248 = vpop.f32.mrf.mxu0
      %v4249 = vpop.f32.mrf.mxu0
      %v4250 = vadd.f32 %v4089, %v4249
      %v4251 = vpop.f32.mrf.mxu0
      %4252 = vdwg.mxu0
      %v4253 = vld [vmem:[#allocation3] sm:$0xff]
      %v4254 = vld [vmem:[#allocation3 + $0x8] sm:$0xff]
      %v4255 = vld [vmem:[#allocation3 + $0x10] sm:$0xff]
      %v4256 = vld [vmem:[#allocation3 + $0x18] sm:$0xff]
      %v4257 = vld [vmem:[#allocation3 + $0x20] sm:$0xff]
      %v4258 = vld [vmem:[#allocation3 + $0x28] sm:$0xff]
      %v4259 = vld [vmem:[#allocation3 + $0x30] sm:$0xff]
      %v4260 = vld [vmem:[#allocation3 + $0x38] sm:$0xff]
      %v4261 = vld [vmem:[#allocation3 + $0x40] sm:$0xff]
      %v4262 = vld [vmem:[#allocation3 + $0x48] sm:$0xff]
      %v4263 = vld [vmem:[#allocation3 + $0x50] sm:$0xff]
      %v4264 = vld [vmem:[#allocation3 + $0x58] sm:$0xff]
      %v4265 = vld [vmem:[#allocation3 + $0x60] sm:$0xff]
      %v4266 = vld [vmem:[#allocation3 + $0x68] sm:$0xff]
      %v4267 = vld [vmem:[#allocation3 + $0x70] sm:$0xff]
      %v4268 = vld [vmem:[#allocation3 + $0x78] sm:$0xff]
      %v4269 = vld [vmem:[#allocation3 + $0x80] sm:$0xff]
      %v4270 = vld [vmem:[#allocation3 + $0x88] sm:$0xff]
      %v4271 = vld [vmem:[#allocation3 + $0x90] sm:$0xff]
      %v4272 = vld [vmem:[#allocation3 + $0x98] sm:$0xff]
      %v4273 = vld [vmem:[#allocation3 + $0xa0] sm:$0xff]
      %v4274 = vld [vmem:[#allocation3 + $0xa8] sm:$0xff]
      %v4275 = vld [vmem:[#allocation3 + $0xb0] sm:$0xff]
      %v4276 = vld [vmem:[#allocation3 + $0xb8] sm:$0xff]
      %v4277 = vld [vmem:[#allocation3 + $0xc0] sm:$0xff]
      %v4278 = vld [vmem:[#allocation3 + $0xc8] sm:$0xff]
      %v4279 = vld [vmem:[#allocation3 + $0xd0] sm:$0xff]
      %v4280 = vld [vmem:[#allocation3 + $0xd8] sm:$0xff]
      %v4281 = vld [vmem:[#allocation3 + $0xe0] sm:$0xff]
      %v4282 = vld [vmem:[#allocation3 + $0xe8] sm:$0xff]
      %v4283 = vld [vmem:[#allocation3 + $0xf0] sm:$0xff]
      %v4284 = vld [vmem:[#allocation3 + $0xf8] sm:$0xff]
      %v4285 = vadd.f32 %v4253, %v4127
      %v4286 = vadd.f32 %v4254, %v4130
      %v4287 = vadd.f32 %v4255, %v4135
      %v4288 = vadd.f32 %v4256, %v4138
      %v4289 = vadd.f32 %v4257, %v4143
      %v4290 = vadd.f32 %v4258, %v4146
      %v4291 = vadd.f32 %v4259, %v4151
      %v4292 = vadd.f32 %v4260, %v4154
      %v4293 = vadd.f32 %v4261, %v4159
      %v4294 = vadd.f32 %v4262, %v4162
      %v4295 = vadd.f32 %v4263, %v4167
      %v4296 = vadd.f32 %v4264, %v4170
      %v4297 = vadd.f32 %v4265, %v4175
      %v4298 = vadd.f32 %v4266, %v4178
      %v4299 = vadd.f32 %v4267, %v4183
      %v4300 = vadd.f32 %v4268, %v4186
      %v4301 = vadd.f32 %v4269, %v4191
      %v4302 = vadd.f32 %v4270, %v4194
      %v4303 = vadd.f32 %v4271, %v4199
      %v4304 = vadd.f32 %v4272, %v4202
      %v4305 = vadd.f32 %v4273, %v4207
      %v4306 = vadd.f32 %v4274, %v4210
      %v4307 = vadd.f32 %v4275, %v4215
      %v4308 = vadd.f32 %v4276, %v4218
      %v4309 = vadd.f32 %v4277, %v4223
      %v4310 = vadd.f32 %v4278, %v4226
      %v4311 = vadd.f32 %v4279, %v4231
      %v4312 = vadd.f32 %v4280, %v4234
      %v4313 = vadd.f32 %v4281, %v4239
      %v4314 = vadd.f32 %v4282, %v4242
      %v4315 = vadd.f32 %v4283, %v4247
      %v4316 = vadd.f32 %v4284, %v4250
      %4317 = vst [vmem:[#allocation3] sm:$0xff] %v4285
      %4318 = vst [vmem:[#allocation3 + $0x8] sm:$0xff] %v4286
      %4319 = vst [vmem:[#allocation3 + $0x10] sm:$0xff] %v4287
      %4320 = vst [vmem:[#allocation3 + $0x18] sm:$0xff] %v4288
      %4321 = vst [vmem:[#allocation3 + $0x20] sm:$0xff] %v4289
      %4322 = vst [vmem:[#allocation3 + $0x28] sm:$0xff] %v4290
      %4323 = vst [vmem:[#allocation3 + $0x30] sm:$0xff] %v4291
      %4324 = vst [vmem:[#allocation3 + $0x38] sm:$0xff] %v4292
      %4325 = vst [vmem:[#allocation3 + $0x40] sm:$0xff] %v4293
      %4326 = vst [vmem:[#allocation3 + $0x48] sm:$0xff] %v4294
      %4327 = vst [vmem:[#allocation3 + $0x50] sm:$0xff] %v4295
      %4328 = vst [vmem:[#allocation3 + $0x58] sm:$0xff] %v4296
      %4329 = vst [vmem:[#allocation3 + $0x60] sm:$0xff] %v4297
      %4330 = vst [vmem:[#allocation3 + $0x68] sm:$0xff] %v4298
      %4331 = vst [vmem:[#allocation3 + $0x70] sm:$0xff] %v4299
      %4332 = vst [vmem:[#allocation3 + $0x78] sm:$0xff] %v4300
      %4333 = vst [vmem:[#allocation3 + $0x80] sm:$0xff] %v4301
      %4334 = vst [vmem:[#allocation3 + $0x88] sm:$0xff] %v4302
      %4335 = vst [vmem:[#allocation3 + $0x90] sm:$0xff] %v4303
      %4336 = vst [vmem:[#allocation3 + $0x98] sm:$0xff] %v4304
      %4337 = vst [vmem:[#allocation3 + $0xa0] sm:$0xff] %v4305
      %4338 = vst [vmem:[#allocation3 + $0xa8] sm:$0xff] %v4306
      %4339 = vst [vmem:[#allocation3 + $0xb0] sm:$0xff] %v4307
      %4340 = vst [vmem:[#allocation3 + $0xb8] sm:$0xff] %v4308
      %4341 = vst [vmem:[#allocation3 + $0xc0] sm:$0xff] %v4309
      %4342 = vst [vmem:[#allocation3 + $0xc8] sm:$0xff] %v4310
      %4343 = vst [vmem:[#allocation3 + $0xd0] sm:$0xff] %v4311
      %4344 = vst [vmem:[#allocation3 + $0xd8] sm:$0xff] %v4312
      %4345 = vst [vmem:[#allocation3 + $0xe0] sm:$0xff] %v4313
      %4346 = vst [vmem:[#allocation3 + $0xe8] sm:$0xff] %v4314
      %4347 = vst [vmem:[#allocation3 + $0xf0] sm:$0xff] %v4315
      %4348 = vst [vmem:[#allocation3 + $0xf8] sm:$0xff] %v4316
      %v4349 = vld [vmem:[#allocation3] sm:$0xff]
      %v4350 = vld [vmem:[#allocation3 + $0x8] sm:$0xff]
      %v4351 = vld [vmem:[#allocation3 + $0x10] sm:$0xff]
      %v4352 = vld [vmem:[#allocation3 + $0x18] sm:$0xff]
      %v4353 = vld [vmem:[#allocation3 + $0x20] sm:$0xff]
      %v4354 = vld [vmem:[#allocation3 + $0x28] sm:$0xff]
      %v4355 = vld [vmem:[#allocation3 + $0x30] sm:$0xff]
      %v4356 = vld [vmem:[#allocation3 + $0x38] sm:$0xff]
      %v4357 = vld [vmem:[#allocation3 + $0x40] sm:$0xff]
      %v4358 = vld [vmem:[#allocation3 + $0x48] sm:$0xff]
      %v4359 = vld [vmem:[#allocation3 + $0x50] sm:$0xff]
      %v4360 = vld [vmem:[#allocation3 + $0x58] sm:$0xff]
      %v4361 = vld [vmem:[#allocation3 + $0x60] sm:$0xff]
      %v4362 = vld [vmem:[#allocation3 + $0x68] sm:$0xff]
      %v4363 = vld [vmem:[#allocation3 + $0x70] sm:$0xff]
      %v4364 = vld [vmem:[#allocation3 + $0x78] sm:$0xff]
      %v4365 = vld [vmem:[#allocation3 + $0x80] sm:$0xff]
      %v4366 = vld [vmem:[#allocation3 + $0x88] sm:$0xff]
      %v4367 = vld [vmem:[#allocation3 + $0x90] sm:$0xff]
      %v4368 = vld [vmem:[#allocation3 + $0x98] sm:$0xff]
      %v4369 = vld [vmem:[#allocation3 + $0xa0] sm:$0xff]
      %v4370 = vld [vmem:[#allocation3 + $0xa8] sm:$0xff]
      %v4371 = vld [vmem:[#allocation3 + $0xb0] sm:$0xff]
      %v4372 = vld [vmem:[#allocation3 + $0xb8] sm:$0xff]
      %v4373 = vld [vmem:[#allocation3 + $0xc0] sm:$0xff]
      %v4374 = vld [vmem:[#allocation3 + $0xc8] sm:$0xff]
      %v4375 = vld [vmem:[#allocation3 + $0xd0] sm:$0xff]
      %v4376 = vld [vmem:[#allocation3 + $0xd8] sm:$0xff]
      %v4377 = vld [vmem:[#allocation3 + $0xe0] sm:$0xff]
      %v4378 = vld [vmem:[#allocation3 + $0xe8] sm:$0xff]
      %v4379 = vld [vmem:[#allocation3 + $0xf0] sm:$0xff]
      %v4380 = vld [vmem:[#allocation3 + $0xf8] sm:$0xff]
      %v4381 = vld [vmem:[%s5] sm:$0x1]
      %v4382 = vadd.f32 %v4349, %v4350
      %v4383 = vadd.f32 %v4382, %v4351
      %v4384 = vadd.f32 %v4383, %v4352
      %v4385 = vadd.f32 %v4384, %v4353
      %v4386 = vadd.f32 %v4385, %v4354
      %v4387 = vadd.f32 %v4386, %v4355
      %v4388 = vadd.f32 %v4387, %v4356
      %v4389 = vadd.f32 %v4388, %v4357
      %v4390 = vadd.f32 %v4389, %v4358
      %v4391 = vadd.f32 %v4390, %v4359
      %v4392 = vadd.f32 %v4391, %v4360
      %v4393 = vadd.f32 %v4392, %v4361
      %v4394 = vadd.f32 %v4393, %v4362
      %v4395 = vadd.f32 %v4394, %v4363
      %v4396 = vadd.f32 %v4395, %v4364
      %v4397 = vadd.f32 %v4396, %v4365
      %v4398 = vadd.f32 %v4397, %v4366
      %v4399 = vadd.f32 %v4398, %v4367
      %v4400 = vadd.f32 %v4399, %v4368
      %v4401 = vadd.f32 %v4400, %v4369
      %v4402 = vadd.f32 %v4401, %v4370
      %v4403 = vadd.f32 %v4402, %v4371
      %v4404 = vadd.f32 %v4403, %v4372
      %v4405 = vadd.f32 %v4404, %v4373
      %v4406 = vadd.f32 %v4405, %v4374
      %v4407 = vadd.f32 %v4406, %v4375
      %v4408 = vadd.f32 %v4407, %v4376
      %v4409 = vadd.f32 %v4408, %v4377
      %v4410 = vadd.f32 %v4409, %v4378
      %v4411 = vadd.f32 %v4410, %v4379
      %v4412 = vadd.f32 %v4411, %v4380
      %v4413 = vrot.slane %v4412, 4
      %v4414 = vadd.f32 %v4412, %v4413
      %v4415 = vrot.slane %v4414, 2
      %v4416 = vadd.f32 %v4414, %v4415
      %v4417 = vrot.slane %v4416, 1
      %v4418 = vadd.f32 %v4416, %v4417
      %v4419 = vadd.f32 %v4381, %v4418
      %4420 = vst [vmem:[%s5] sm:$0x1] %v4419
      %v4421 = vld [vmem:[%s5 + $0x1] sm:$0x1]
      %v4422 = vmul.f32 %v4349, %v4349
      %v4423 = vmul.f32 %v4350, %v4350
      %v4424 = vmul.f32 %v4351, %v4351
      %v4425 = vmul.f32 %v4352, %v4352
      %v4426 = vmul.f32 %v4353, %v4353
      %v4427 = vmul.f32 %v4354, %v4354
      %v4428 = vmul.f32 %v4355, %v4355
      %v4429 = vmul.f32 %v4356, %v4356
      %v4430 = vmul.f32 %v4357, %v4357
      %v4431 = vmul.f32 %v4358, %v4358
      %v4432 = vmul.f32 %v4359, %v4359
      %v4433 = vmul.f32 %v4360, %v4360
      %v4434 = vmul.f32 %v4361, %v4361
      %v4435 = vmul.f32 %v4362, %v4362
      %v4436 = vmul.f32 %v4363, %v4363
      %v4437 = vmul.f32 %v4364, %v4364
      %v4438 = vmul.f32 %v4365, %v4365
      %v4439 = vmul.f32 %v4366, %v4366
      %v4440 = vmul.f32 %v4367, %v4367
      %v4441 = vmul.f32 %v4368, %v4368
      %v4442 = vmul.f32 %v4369, %v4369
      %v4443 = vmul.f32 %v4370, %v4370
      %v4444 = vmul.f32 %v4371, %v4371
      %v4445 = vmul.f32 %v4372, %v4372
      %v4446 = vmul.f32 %v4373, %v4373
      %v4447 = vmul.f32 %v4374, %v4374
      %v4448 = vmul.f32 %v4375, %v4375
      %v4449 = vmul.f32 %v4376, %v4376
      %v4450 = vmul.f32 %v4377, %v4377
      %v4451 = vmul.f32 %v4378, %v4378
      %v4452 = vmul.f32 %v4379, %v4379
      %v4453 = vmul.f32 %v4380, %v4380
      %v4454 = vadd.f32 %v4422, %v4423
      %v4455 = vadd.f32 %v4454, %v4424
      %v4456 = vadd.f32 %v4455, %v4425
      %v4457 = vadd.f32 %v4456, %v4426
      %v4458 = vadd.f32 %v4457, %v4427
      %v4459 = vadd.f32 %v4458, %v4428
      %v4460 = vadd.f32 %v4459, %v4429
      %v4461 = vadd.f32 %v4460, %v4430
      %v4462 = vadd.f32 %v4461, %v4431
      %v4463 = vadd.f32 %v4462, %v4432
      %v4464 = vadd.f32 %v4463, %v4433
      %v4465 = vadd.f32 %v4464, %v4434
      %v4466 = vadd.f32 %v4465, %v4435
      %v4467 = vadd.f32 %v4466, %v4436
      %v4468 = vadd.f32 %v4467, %v4437
      %v4469 = vadd.f32 %v4468, %v4438
      %v4470 = vadd.f32 %v4469, %v4439
      %v4471 = vadd.f32 %v4470, %v4440
      %v4472 = vadd.f32 %v4471, %v4441
      %v4473 = vadd.f32 %v4472, %v4442
      %v4474 = vadd.f32 %v4473, %v4443
      %v4475 = vadd.f32 %v4474, %v4444
      %v4476 = vadd.f32 %v4475, %v4445
      %v4477 = vadd.f32 %v4476, %v4446
      %v4478 = vadd.f32 %v4477, %v4447
      %v4479 = vadd.f32 %v4478, %v4448
      %v4480 = vadd.f32 %v4479, %v4449
      %v4481 = vadd.f32 %v4480, %v4450
      %v4482 = vadd.f32 %v4481, %v4451
      %v4483 = vadd.f32 %v4482, %v4452
      %v4484 = vadd.f32 %v4483, %v4453
      %v4485 = vrot.slane %v4484, 4
      %v4486 = vadd.f32 %v4484, %v4485
      %v4487 = vrot.slane %v4486, 2
      %v4488 = vadd.f32 %v4486, %v4487
      %v4489 = vrot.slane %v4488, 1
      %v4490 = vadd.f32 %v4488, %v4489
      %v4491 = vadd.f32 %v4421, %v4490
      %4492 = vst [vmem:[%s5 + $0x1] sm:$0x1] %v4491
      %v4493 = vpack.c.bf16 %v4350, %v4349
      %v4494 = vpack.c.bf16 %v4352, %v4351
      %v4495 = vpack.c.bf16 %v4354, %v4353
      %v4496 = vpack.c.bf16 %v4356, %v4355
      %v4497 = vpack.c.bf16 %v4358, %v4357
      %v4498 = vpack.c.bf16 %v4360, %v4359
      %v4499 = vpack.c.bf16 %v4362, %v4361
      %v4500 = vpack.c.bf16 %v4364, %v4363
      %v4501 = vpack.c.bf16 %v4366, %v4365
      %v4502 = vpack.c.bf16 %v4368, %v4367
      %v4503 = vpack.c.bf16 %v4370, %v4369
      %v4504 = vpack.c.bf16 %v4372, %v4371
      %v4505 = vpack.c.bf16 %v4374, %v4373
      %v4506 = vpack.c.bf16 %v4376, %v4375
      %v4507 = vpack.c.bf16 %v4378, %v4377
      %v4508 = vpack.c.bf16 %v4380, %v4379
      %v4525 = vunpack.c.l.b16 %v4493
      %v4526 = vunpack.c.h.b16 %v4493
      %v4527 = vunpack.c.l.b16 %v4494
      %v4528 = vunpack.c.h.b16 %v4494
      %v4529 = vunpack.c.l.b16 %v4495
      %v4530 = vunpack.c.h.b16 %v4495
      %v4531 = vunpack.c.l.b16 %v4496
      %v4532 = vunpack.c.h.b16 %v4496
      %v4533 = vunpack.c.l.b16 %v4497
      %v4534 = vunpack.c.h.b16 %v4497
      %v4535 = vunpack.c.l.b16 %v4498
      %v4536 = vunpack.c.h.b16 %v4498
      %v4537 = vunpack.c.l.b16 %v4499
      %v4538 = vunpack.c.h.b16 %v4499
      %v4539 = vunpack.c.l.b16 %v4500
      %v4540 = vunpack.c.h.b16 %v4500
      %v4541 = vunpack.c.l.b16 %v4501
      %v4542 = vunpack.c.h.b16 %v4501
      %v4543 = vunpack.c.l.b16 %v4502
      %v4544 = vunpack.c.h.b16 %v4502
      %v4545 = vunpack.c.l.b16 %v4503
      %v4546 = vunpack.c.h.b16 %v4503
      %v4547 = vunpack.c.l.b16 %v4504
      %v4548 = vunpack.c.h.b16 %v4504
      %v4549 = vunpack.c.l.b16 %v4505
      %v4550 = vunpack.c.h.b16 %v4505
      %v4551 = vunpack.c.l.b16 %v4506
      %v4552 = vunpack.c.h.b16 %v4506
      %v4553 = vunpack.c.l.b16 %v4507
      %v4554 = vunpack.c.h.b16 %v4507
      %v4555 = vunpack.c.l.b16 %v4508
      %v4556 = vunpack.c.h.b16 %v4508
      %v4557 = vpack.c.b16 %v4525, %v4525
      %v4558 = vpack.c.b16 %v4526, %v4526
      %v4559 = vpack.c.b16 %v4527, %v4527
      %v4560 = vpack.c.b16 %v4528, %v4528
      %v4561 = vpack.c.b16 %v4529, %v4529
      %v4562 = vpack.c.b16 %v4530, %v4530
      %v4563 = vpack.c.b16 %v4531, %v4531
      %v4564 = vpack.c.b16 %v4532, %v4532
      %v4565 = vpack.c.b16 %v4533, %v4533
      %v4566 = vpack.c.b16 %v4534, %v4534
      %v4567 = vpack.c.b16 %v4535, %v4535
      %v4568 = vpack.c.b16 %v4536, %v4536
      %v4569 = vpack.c.b16 %v4537, %v4537
      %v4570 = vpack.c.b16 %v4538, %v4538
      %v4571 = vpack.c.b16 %v4539, %v4539
      %v4572 = vpack.c.b16 %v4540, %v4540
      %v4573 = vpack.c.b16 %v4541, %v4541
      %v4574 = vpack.c.b16 %v4542, %v4542
      %v4575 = vpack.c.b16 %v4543, %v4543
      %v4576 = vpack.c.b16 %v4544, %v4544
      %v4577 = vpack.c.b16 %v4545, %v4545
      %v4578 = vpack.c.b16 %v4546, %v4546
      %v4579 = vpack.c.b16 %v4547, %v4547
      %v4580 = vpack.c.b16 %v4548, %v4548
      %v4581 = vpack.c.b16 %v4549, %v4549
      %v4582 = vpack.c.b16 %v4550, %v4550
      %v4583 = vpack.c.b16 %v4551, %v4551
      %v4584 = vpack.c.b16 %v4552, %v4552
      %v4585 = vpack.c.b16 %v4553, %v4553
      %v4586 = vpack.c.b16 %v4554, %v4554
      %v4587 = vpack.c.b16 %v4555, %v4555
      %v4588 = vpack.c.b16 %v4556, %v4556
      %4621 = vst [vmem:[%s222] sm:$0xf] %v4557
      %4622 = vst [vmem:[%s222 + $0x4] sm:$0xf] %v4558
      %4623 = vst [vmem:[%s222 + $0x8] sm:$0xf] %v4559
      %4624 = vst [vmem:[%s222 + $0xc] sm:$0xf] %v4560
      %4625 = vst [vmem:[%s222 + $0x10] sm:$0xf] %v4561
      %4626 = vst [vmem:[%s222 + $0x14] sm:$0xf] %v4562
      %4627 = vst [vmem:[%s222 + $0x18] sm:$0xf] %v4563
      %4628 = vst [vmem:[%s222 + $0x1c] sm:$0xf] %v4564
      %4629 = vst [vmem:[%s222 + $0x20] sm:$0xf] %v4565
      %4630 = vst [vmem:[%s222 + $0x24] sm:$0xf] %v4566
      %4631 = vst [vmem:[%s222 + $0x28] sm:$0xf] %v4567
      %4632 = vst [vmem:[%s222 + $0x2c] sm:$0xf] %v4568
      %4633 = vst [vmem:[%s222 + $0x30] sm:$0xf] %v4569
      %4634 = vst [vmem:[%s222 + $0x34] sm:$0xf] %v4570
      %4635 = vst [vmem:[%s222 + $0x38] sm:$0xf] %v4571
      %4636 = vst [vmem:[%s222 + $0x3c] sm:$0xf] %v4572
      %4637 = vst [vmem:[%s222 + $0x40] sm:$0xf] %v4573
      %4638 = vst [vmem:[%s222 + $0x44] sm:$0xf] %v4574
      %4639 = vst [vmem:[%s222 + $0x48] sm:$0xf] %v4575
      %4640 = vst [vmem:[%s222 + $0x4c] sm:$0xf] %v4576
      %4641 = vst [vmem:[%s222 + $0x50] sm:$0xf] %v4577
      %4642 = vst [vmem:[%s222 + $0x54] sm:$0xf] %v4578
      %4643 = vst [vmem:[%s222 + $0x58] sm:$0xf] %v4579
      %4644 = vst [vmem:[%s222 + $0x5c] sm:$0xf] %v4580
      %4645 = vst [vmem:[%s222 + $0x60] sm:$0xf] %v4581
      %4646 = vst [vmem:[%s222 + $0x64] sm:$0xf] %v4582
      %4647 = vst [vmem:[%s222 + $0x68] sm:$0xf] %v4583
      %4648 = vst [vmem:[%s222 + $0x6c] sm:$0xf] %v4584
      %4649 = vst [vmem:[%s222 + $0x70] sm:$0xf] %v4585
      %4650 = vst [vmem:[%s222 + $0x74] sm:$0xf] %v4586
      %4651 = vst [vmem:[%s222 + $0x78] sm:$0xf] %v4587
      %4652 = vst [vmem:[%s222 + $0x7c] sm:$0xf] %v4588
      %p4653 = scmp.lt.s32.totalorder %s17, 1
      %s4654 = scalar_select %p4653, %s17, 1
      %s4655 = smul.addr %s4654, 32
      %s4656 = smul.addr %s4655, 4
      %s4657 = scalar_lea.vmem %s4, %s4656
      // Predicated region
      $region41: #{residual_block_forward.4} parent=35 // pred_check
        %p4658 = pneg %p124
      $region42: #{residual_block_forward.4} parent=35 // pred_check_branch
        %4660 = sbr.rel (%p4658) target = $region44
      $region43: #{residual_block_forward.4} parent=35 // pred_region
        _
      $region44: #{residual_block_forward.4} parent=35 // pred_fallthru
        _
      // Predicated region
      $region45: #{residual_block_forward.4} parent=35 // pred_check
        %p4661 = pneg %p145
      $region46: #{residual_block_forward.4} parent=35 // pred_check_branch
        %4663 = sbr.rel (%p4661) target = $region48
      $region47: #{residual_block_forward.4} parent=35 // pred_region
        _
      $region48: #{residual_block_forward.4} parent=35 // pred_fallthru
        _
      // Predicated region
      $region49: #{residual_block_forward.4} parent=35 // pred_check
        %p4664 = pneg %p145
      $region50: #{residual_block_forward.4} parent=35 // pred_check_branch
        %4666 = sbr.rel (%p4664) target = $region52
      $region51: #{residual_block_forward.4} parent=35 // pred_region
        _
      $region52: #{residual_block_forward.4} parent=35 // pred_fallthru
        _
    $region36: #{residual_block_forward.4} parent=5 // pred_fallthru
      _
    %p4667 = scmp.le.s32.totalorder 2, %s12
    // Predicated region
    $region53: #{residual_block_forward.4} parent=5 // pred_check
      %p4668 = pneg %p4667
    $region54: #{residual_block_forward.4} parent=5 // pred_check_branch
      %4670 = sbr.rel (%p4668) target = $region56
    $region55: #{residual_block_forward.4} parent=5 // pred_region
      %s4671 = ssub.s32 %s12, 2
      // Predicated region
      $region57: #{residual_block_forward.4} parent=55 // pred_check
        %p4672 = pneg %p130
      $region58: #{residual_block_forward.4} parent=55 // pred_check_branch
        %4674 = sbr.rel (%p4672) target = $region60
      $region59: #{residual_block_forward.4} parent=55 // pred_region
        %p4675 = scmp.lt.s32.totalorder %s18, 1
        %s4676 = scalar_select %p4675, %s18, 1
        %s4677 = smul.addr %s4676, 32
        %s4678 = smul.addr %s4677, 4
        %s4679 = scalar_lea.vmem %s4, %s4678
      $region60: #{residual_block_forward.4} parent=55 // pred_fallthru
        _
    $region56: #{residual_block_forward.4} parent=5 // pred_fallthru
      _
  $region6: #{residual_block_forward.4} parent=0 // loop_footer
    %s16 = sadd.s32 1, %s12
  $region7: #{residual_block_forward.4} parent=0 // loop_footer_branch
    %11 = sbr.rel target = $region3
  $region8: #{residual_block_forward.4} parent=0 // loop_exit
    _

// kernel: residual_block_forward.3
$region0: #{residual_block_forward.3}
  #allocation0 [shape = 'u32[]', space=smem, size = 0x4, offset = 0x4, fixed_abs, tag = 'smem constant byte address 0x4 - core index']
  #allocation1 [shape = 'u32[144,128]{1,0:T(1,128)}', space=vmem, size = 0x12000, scoped, tag = 'internal scratch']
  #allocation2 [shape = 'bf16[18,18,128]{2,1,0:T(8,128)(2,1)}', space=vmem, size = 0x1b000, scoped, tag = 'scratch operand']
  #allocation3 [shape = 'f32[256,128]{1,0:T(8,128)}', space=vmem, size = 0x20000, scoped, tag = 'scratch operand']
  %s0 = inlined_call_operand.vmem [shape: bf16[2,256,128], index: 0, kind: input, shape index: {}]
  %s1 = inlined_call_operand.vmem [shape: bf16[3,384,128], index: 1, kind: input, shape index: {}]
  %s2 = inlined_call_operand.vmem [shape: bf16[128,128], index: 2, kind: input, shape index: {}]
  %s3 = inlined_call_operand.vmem [shape: f32[1,128], index: 3, kind: input, shape index: {}]
  %s4 = inlined_call_operand.vmem [shape: bf16[2,256,128], index: 4, kind: output, shape index: {0}]
  %s5 = inlined_call_operand.vmem [shape: bf16[2,256,128], index: 5, kind: output, shape index: {1}]
  %s6 = inlined_call_operand.vmem [shape: f32[2,128], index: 6, kind: output, shape index: {2}]
  %7 = xla_tuple %s4, %s5, %s6
  %s8 = sld [smem:[#allocation0]]
  $region69: #{residual_block_forward.3} parent=0
    _
  %s10 = ssub.s32 1, %s8
  %s11 = scalar_select 0, %s10, %s8
  loop: start=0, step=1, limit=4
  $region2: #{residual_block_forward.3} parent=0 // loop_pre_header
    _
  $region3: #{residual_block_forward.3} parent=0 // loop_header
    %s13 = sphi 0, %s17
    %p14 = scmp.ge.s32.totalorder %s13, 4
    %s23 = sphi 0, %s25
    %s26 = sphi 0, %s23
    %s27 = sphi 0, %s26
    %s43 = sphi 0, %s27
    %s47 = sphi 0, %s47
    %s49 = sphi 0, %s47
    %s50 = sphi 0, %s49
    %s64 = sphi 0, %s50
    %s68 = sphi 0, %s68
    %s70 = sphi 0, %s68
    %s71 = sphi 0, %s70
    %s85 = sphi 0, %s71
    %s89 = sphi 0, %s89
    %s91 = sphi 0, %s89
    %s92 = sphi 0, %s91
    %s106 = sphi 0, %s92
    %s112 = sphi 0, %s114
    %s115 = sphi 0, %s112
    %s116 = sphi 0, %s115
    %s132 = sphi 0, %s116
    %s138 = sphi 0, %s140
    %s141 = sphi 0, %s138
    %s142 = sphi 0, %s141
    %s158 = sphi 0, %s142
    %s162 = sphi 0, %s162
    %s164 = sphi 0, %s162
    %s165 = sphi 0, %s164
    %s179 = sphi 0, %s165
  $region4: #{residual_block_forward.3} parent=0 // loop_header_branch
    %16 = sbr.rel (%p14) target = $region8
  $region5: #{residual_block_forward.3} parent=0 // loop_body
    %s18 = ssub.s32 %s13, 1
    %s19 = ssub.s32 %s13, 2
    %s20 = sadd.s32 %s13, 1
    %s21 = ssub.s32 %s13, %s20
    %p22 = scmp.eq.s32.totalorder %s21, 0
    %s24 = sadd.s32 %s23, 1
    %s25 = scalar_select %p22, %s23, %s24
    %p28 = pneg %p22
    %p29 = scmp.eq.s32.totalorder %s13, 1
    %p30 = por %p28, %p29
    %p31 = scmp.ne.s32.totalorder %s23, %s26
    %p32 = scmp.eq.s32.totalorder %s13, 0
    %p33 = por %p31, %p32
    %p34 = scmp.ne.s32.totalorder %s23, %s26
    %p35 = scmp.eq.s32.totalorder %s18, 1
    %p36 = por %p34, %p35
    %p37 = scmp.ne.s32.totalorder %s26, %s27
    %p38 = scmp.eq.s32.totalorder %s18, 0
    %p39 = por %p37, %p38
    %p40 = scmp.ne.s32.totalorder %s26, %s27
    %p41 = scmp.eq.s32.totalorder %s19, 1
    %p42 = por %p40, %p41
    %p44 = scmp.ne.s32.totalorder %s27, %s43
    %p45 = scmp.eq.s32.totalorder %s19, 0
    %p46 = por %p44, %p45
    %s48 = sadd.s32 %s47, 1
    %p51 = scmp.eq.s32.totalorder %s13, 1
    %p52 = scmp.ne.s32.totalorder %s47, %s49
    %p53 = scmp.eq.s32.totalorder %s13, 0
    %p54 = por %p52, %p53
    %p55 = scmp.ne.s32.totalorder %s47, %s49
    %p56 = scmp.eq.s32.totalorder %s18, 1
    %p57 = por %p55, %p56
    %p58 = scmp.ne.s32.totalorder %s49, %s50
    %p59 = scmp.eq.s32.totalorder %s18, 0
    %p60 = por %p58, %p59
    %p61 = scmp.ne.s32.totalorder %s49, %s50
    %p62 = scmp.eq.s32.totalorder %s19, 1
    %p63 = por %p61, %p62
    %p65 = scmp.ne.s32.totalorder %s50, %s64
    %p66 = scmp.eq.s32.totalorder %s19, 0
    %p67 = por %p65, %p66
    %s69 = sadd.s32 %s68, 1
    %p72 = scmp.eq.s32.totalorder %s13, 1
    %p73 = scmp.ne.s32.totalorder %s68, %s70
    %p74 = scmp.eq.s32.totalorder %s13, 0
    %p75 = por %p73, %p74
    %p76 = scmp.ne.s32.totalorder %s68, %s70
    %p77 = scmp.eq.s32.totalorder %s18, 1
    %p78 = por %p76, %p77
    %p79 = scmp.ne.s32.totalorder %s70, %s71
    %p80 = scmp.eq.s32.totalorder %s18, 0
    %p81 = por %p79, %p80
    %p82 = scmp.ne.s32.totalorder %s70, %s71
    %p83 = scmp.eq.s32.totalorder %s19, 1
    %p84 = por %p82, %p83
    %p86 = scmp.ne.s32.totalorder %s71, %s85
    %p87 = scmp.eq.s32.totalorder %s19, 0
    %p88 = por %p86, %p87
    %s90 = sadd.s32 %s89, 1
    %p93 = scmp.eq.s32.totalorder %s13, 1
    %p94 = scmp.ne.s32.totalorder %s89, %s91
    %p95 = scmp.eq.s32.totalorder %s13, 0
    %p96 = por %p94, %p95
    %p97 = scmp.ne.s32.totalorder %s89, %s91
    %p98 = scmp.eq.s32.totalorder %s18, 1
    %p99 = por %p97, %p98
    %p100 = scmp.ne.s32.totalorder %s91, %s92
    %p101 = scmp.eq.s32.totalorder %s18, 0
    %p102 = por %p100, %p101
    %p103 = scmp.ne.s32.totalorder %s91, %s92
    %p104 = scmp.eq.s32.totalorder %s19, 1
    %p105 = por %p103, %p104
    %p107 = scmp.ne.s32.totalorder %s92, %s106
    %p108 = scmp.eq.s32.totalorder %s19, 0
    %p109 = por %p107, %p108
    %s110 = ssub.s32 %s13, %s20
    %p111 = scmp.eq.s32.totalorder %s110, 0
    %s113 = sadd.s32 %s112, 1
    %s114 = scalar_select %p111, %s112, %s113
    %p117 = pneg %p111
    %p118 = scmp.eq.s32.totalorder %s13, 1
    %p119 = por %p117, %p118
    %p120 = scmp.ne.s32.totalorder %s112, %s115
    %p121 = scmp.eq.s32.totalorder %s13, 0
    %p122 = por %p120, %p121
    %p123 = scmp.ne.s32.totalorder %s112, %s115
    %p124 = scmp.eq.s32.totalorder %s18, 1
    %p125 = por %p123, %p124
    %p126 = scmp.ne.s32.totalorder %s115, %s116
    %p127 = scmp.eq.s32.totalorder %s18, 0
    %p128 = por %p126, %p127
    %p129 = scmp.ne.s32.totalorder %s115, %s116
    %p130 = scmp.eq.s32.totalorder %s19, 1
    %p131 = por %p129, %p130
    %p133 = scmp.ne.s32.totalorder %s116, %s132
    %p134 = scmp.eq.s32.totalorder %s19, 0
    %p135 = por %p133, %p134
    %s136 = ssub.s32 %s13, %s20
    %p137 = scmp.eq.s32.totalorder %s136, 0
    %s139 = sadd.s32 %s138, 1
    %s140 = scalar_select %p137, %s138, %s139
    %p143 = pneg %p137
    %p144 = scmp.eq.s32.totalorder %s13, 1
    %p145 = por %p143, %p144
    %p146 = scmp.ne.s32.totalorder %s138, %s141
    %p147 = scmp.eq.s32.totalorder %s13, 0
    %p148 = por %p146, %p147
    %p149 = scmp.ne.s32.totalorder %s138, %s141
    %p150 = scmp.eq.s32.totalorder %s18, 1
    %p151 = por %p149, %p150
    %p152 = scmp.ne.s32.totalorder %s141, %s142
    %p153 = scmp.eq.s32.totalorder %s18, 0
    %p154 = por %p152, %p153
    %p155 = scmp.ne.s32.totalorder %s141, %s142
    %p156 = scmp.eq.s32.totalorder %s19, 1
    %p157 = por %p155, %p156
    %p159 = scmp.ne.s32.totalorder %s142, %s158
    %p160 = scmp.eq.s32.totalorder %s19, 0
    %p161 = por %p159, %p160
    %s163 = sadd.s32 %s162, 1
    %p166 = scmp.eq.s32.totalorder %s13, 1
    %p167 = scmp.ne.s32.totalorder %s162, %s164
    %p168 = scmp.eq.s32.totalorder %s13, 0
    %p169 = por %p167, %p168
    %p170 = scmp.ne.s32.totalorder %s162, %s164
    %p171 = scmp.eq.s32.totalorder %s18, 1
    %p172 = por %p170, %p171
    %p173 = scmp.ne.s32.totalorder %s164, %s165
    %p174 = scmp.eq.s32.totalorder %s18, 0
    %p175 = por %p173, %p174
    %p176 = scmp.ne.s32.totalorder %s164, %s165
    %p177 = scmp.eq.s32.totalorder %s19, 1
    %p178 = por %p176, %p177
    %p180 = scmp.ne.s32.totalorder %s165, %s179
    %p181 = scmp.eq.s32.totalorder %s19, 0
    %p182 = por %p180, %p181
    %p183 = scmp.le.s32.totalorder 1, %s13
    %p184 = scmp.lt.s32.totalorder %s13, 3
    %p185 = pnand %p183, %p184
    %p186 = pneg %p185
    // Predicated region
    $region9: #{residual_block_forward.3} parent=5 // pred_check
      _
    $region10: #{residual_block_forward.3} parent=5 // pred_check_branch
      %188 = sbr.rel (%p185) target = $region12
    $region11: #{residual_block_forward.3} parent=5 // pred_region
      %s189 = ssub.s32 %s13, 1
      // Predicated region
      $region13: #{residual_block_forward.3} parent=11 // pred_check
        %p190 = pneg %p60
      $region14: #{residual_block_forward.3} parent=11 // pred_check_branch
        %192 = sbr.rel (%p190) target = $region16
      $region15: #{residual_block_forward.3} parent=11 // pred_region
        _
      $region16: #{residual_block_forward.3} parent=11 // pred_fallthru
        _
      // Predicated region
      $region17: #{residual_block_forward.3} parent=11 // pred_check
        %p193 = pneg %p81
      $region18: #{residual_block_forward.3} parent=11 // pred_check_branch
        %195 = sbr.rel (%p193) target = $region20
      $region19: #{residual_block_forward.3} parent=11 // pred_region
        _
      $region20: #{residual_block_forward.3} parent=11 // pred_fallthru
        _
      // Predicated region
      $region21: #{residual_block_forward.3} parent=11 // pred_check
        %p196 = pneg %p102
      $region22: #{residual_block_forward.3} parent=11 // pred_check_branch
        %198 = sbr.rel (%p196) target = $region24
      $region23: #{residual_block_forward.3} parent=11 // pred_region
        _
      $region24: #{residual_block_forward.3} parent=11 // pred_fallthru
        _
    $region12: #{residual_block_forward.3} parent=5 // pred_fallthru
      _
    %p199 = scmp.lt.s32.totalorder %s13, 2
    // Predicated region
    $region25: #{residual_block_forward.3} parent=5 // pred_check
      %p200 = pneg %p199
    $region26: #{residual_block_forward.3} parent=5 // pred_check_branch
      %202 = sbr.rel (%p200) target = $region28
    $region27: #{residual_block_forward.3} parent=5 // pred_region
      // Predicated region
      $region29: #{residual_block_forward.3} parent=27 // pred_check
        %p203 = pneg %p33
      $region30: #{residual_block_forward.3} parent=27 // pred_check_branch
        %205 = sbr.rel (%p203) target = $region32
      $region31: #{residual_block_forward.3} parent=27 // pred_region
        %p206 = scmp.lt.s32.totalorder %s13, 1
        %s207 = scalar_select %p206, %s13, 1
        %s208 = smul.addr %s207, 32
        %s209 = smul.addr %s208, 4
        %s210 = scalar_lea.vmem %s0, %s209
      $region32: #{residual_block_forward.3} parent=27 // pred_fallthru
        _
    $region28: #{residual_block_forward.3} parent=5 // pred_fallthru
      _
    %p211 = scmp.le.s32.totalorder 1, %s13
    %p212 = scmp.lt.s32.totalorder %s13, 3
    %p213 = pnand %p211, %p212
    %p214 = pneg %p213
    // Predicated region
    $region33: #{residual_block_forward.3} parent=5 // pred_check
      _
    $region34: #{residual_block_forward.3} parent=5 // pred_check_branch
      %216 = sbr.rel (%p213) target = $region36
    $region35: #{residual_block_forward.3} parent=5 // pred_region
      %s217 = ssub.s32 %s13, 1
      %p218 = scmp.lt.s32.totalorder %s18, 1
      %s219 = scalar_select %p218, %s18, 1
      %s220 = smul.addr %s219, 32
      %s221 = smul.addr %s220, 4
      %s222 = scalar_lea.vmem %s0, %s221
      %p223 = pneg %p39
      %p224 = pneg %p36
      %p225 = pneg %p60
      %p226 = pneg %p57
      %p227 = pneg %p81
      %p228 = pneg %p78
      %p229 = pneg %p102
      %p230 = pneg %p99
      %p231 = pneg %p128
      %p232 = pneg %p125
      %p233 = scmp.lt.s32.totalorder %s18, 1
      %s234 = scalar_select %p233, %s18, 1
      %s235 = smul.addr %s234, 32
      %s236 = smul.addr %s235, 4
      %s237 = scalar_lea.vmem %s4, %s236
      %p238 = pneg %p154
      %p239 = pneg %p151
      %p240 = scmp.lt.s32.totalorder %s18, 1
      %s241 = scalar_select %p240, %s18, 1
      %s242 = smul.addr %s241, 32
      %s243 = smul.addr %s242, 4
      %s244 = scalar_lea.vmem %s5, %s243
      %p245 = pneg %p175
      %p246 = pneg %p172
      %p247 = scmp.lt.s32.totalorder %s18, 1
      %s248 = scalar_select %p247, %s18, 1
      %s249 = smul.addr %s248, 32
      %s250 = smul.addr %s249, 4
      %s251 = scalar_lea.vmem %s0, %s250
      %p252 = scmp.lt.s32.totalorder %s18, 1
      %s253 = scalar_select %p252, %s18, 1
      %s254 = smul.addr %s253, 32
      %s255 = smul.addr %s254, 4
      %s256 = scalar_lea.vmem %s4, %s255
      %p257 = scmp.lt.s32.totalorder %s18, 1
      %s258 = scalar_select %p257, %s18, 1
      %s259 = smul.addr %s258, 32
      %s260 = smul.addr %s259, 4
      %s261 = scalar_lea.vmem %s5, %s260
      %p263 = scmp.eq.s32.totalorder %s18, 0
      // Predicated region
      $region37: #{residual_block_forward.3} parent=35 // pred_check
        %p264 = pneg %p263
      $region38: #{residual_block_forward.3} parent=35 // pred_check_branch
        %266 = sbr.rel (%p264) target = $region40
      $region39: #{residual_block_forward.3} parent=35 // pred_region
        %267 = vst [vmem:[#allocation2] sm:$0xf] 0
        %268 = vst [vmem:[#allocation2 + $0x4] sm:$0xf] 0
        %269 = vst [vmem:[#allocation2 + $0x8] sm:$0x1] 0
        %270 = vst [vmem:[#allocation2 + $0xc] sm:$0xf] 0
        %271 = vst [vmem:[#allocation2 + $0x10] sm:$0xf] 0
        %272 = vst [vmem:[#allocation2 + $0x14] sm:$0x1] 0
        %273 = vst [vmem:[#allocation2 + $0x18] sm:$0xf] 0
        %274 = vst [vmem:[#allocation2 + $0x1c] sm:$0xf] 0
        %275 = vst [vmem:[#allocation2 + $0x20] sm:$0x1] 0
        %276 = vst [vmem:[#allocation2 + $0x24] sm:$0xf] 0
        %277 = vst [vmem:[#allocation2 + $0x28] sm:$0xf] 0
        %278 = vst [vmem:[#allocation2 + $0x2c] sm:$0x1] 0
        %279 = vst [vmem:[#allocation2 + $0x30] sm:$0xf] 0
        %280 = vst [vmem:[#allocation2 + $0x34] sm:$0xf] 0
        %281 = vst [vmem:[#allocation2 + $0x38] sm:$0x1] 0
        %282 = vst [vmem:[#allocation2 + $0x3c] sm:$0xf] 0
        %283 = vst [vmem:[#allocation2 + $0x40] sm:$0xf] 0
        %284 = vst [vmem:[#allocation2 + $0x44] sm:$0x1] 0
        %285 = vst [vmem:[#allocation2 + $0x48] sm:$0xf] 0
        %286 = vst [vmem:[#allocation2 + $0x4c] sm:$0xf] 0
        %287 = vst [vmem:[#allocation2 + $0x50] sm:$0x1] 0
        %288 = vst [vmem:[#allocation2 + $0x54] sm:$0xf] 0
        %289 = vst [vmem:[#allocation2 + $0x58] sm:$0xf] 0
        %290 = vst [vmem:[#allocation2 + $0x5c] sm:$0x1] 0
        %291 = vst [vmem:[#allocation2 + $0x60] sm:$0xf] 0
        %292 = vst [vmem:[#allocation2 + $0x64] sm:$0xf] 0
        %293 = vst [vmem:[#allocation2 + $0x68] sm:$0x1] 0
        %294 = vst [vmem:[#allocation2 + $0x6c] sm:$0xf] 0
        %295 = vst [vmem:[#allocation2 + $0x70] sm:$0xf] 0
        %296 = vst [vmem:[#allocation2 + $0x74] sm:$0x1] 0
        %297 = vst [vmem:[#allocation2 + $0x78] sm:$0xf] 0
        %298 = vst [vmem:[#allocation2 + $0x7c] sm:$0xf] 0
        %299 = vst [vmem:[#allocation2 + $0x80] sm:$0x1] 0
        %300 = vst [vmem:[#allocation2 + $0x84] sm:$0xf] 0
        %301 = vst [vmem:[#allocation2 + $0x88] sm:$0xf] 0
        %302 = vst [vmem:[#allocation2 + $0x8c] sm:$0x1] 0
        %303 = vst [vmem:[#allocation2 + $0x90] sm:$0xf] 0
        %304 = vst [vmem:[#allocation2 + $0x94] sm:$0xf] 0
        %305 = vst [vmem:[#allocation2 + $0x98] sm:$0x1] 0
        %306 = vst [vmem:[#allocation2 + $0x9c] sm:$0xf] 0
        %307 = vst [vmem:[#allocation2 + $0xa0] sm:$0xf] 0
        %308 = vst [vmem:[#allocation2 + $0xa4] sm:$0x1] 0
        %309 = vst [vmem:[#allocation2 + $0xa8] sm:$0xf] 0
        %310 = vst [vmem:[#allocation2 + $0xac] sm:$0xf] 0
        %311 = vst [vmem:[#allocation2 + $0xb0] sm:$0x1] 0
        %312 = vst [vmem:[#allocation2 + $0xb4] sm:$0xf] 0
        %313 = vst [vmem:[#allocation2 + $0xb8] sm:$0xf] 0
        %314 = vst [vmem:[#allocation2 + $0xbc] sm:$0x1] 0
        %315 = vst [vmem:[#allocation2 + $0xc0] sm:$0xf] 0
        %316 = vst [vmem:[#allocation2 + $0xc4] sm:$0xf] 0
        %317 = vst [vmem:[#allocation2 + $0xc8] sm:$0x1] 0
        %318 = vst [vmem:[#allocation2 + $0xcc] sm:$0xf] 0
        %319 = vst [vmem:[#allocation2 + $0xd0] sm:$0xf] 0
        %320 = vst [vmem:[#allocation2 + $0xd4] sm:$0x1] 0
        %321 = vst [vmem:[%s6] sm:$0x3] 0.0
      $region40: #{residual_block_forward.3} parent=35 // pred_fallthru
        _
      %v322 = vld [vmem:[%s251] sm:$0xf]
      %v323 = vld [vmem:[%s251 + $0x4] sm:$0xf]
      %v324 = vld [vmem:[%s251 + $0x8] sm:$0xf]
      %v325 = vld [vmem:[%s251 + $0xc] sm:$0xf]
      %v326 = vld [vmem:[%s251 + $0x10] sm:$0xf]
      %v327 = vld [vmem:[%s251 + $0x14] sm:$0xf]
      %v328 = vld [vmem:[%s251 + $0x18] sm:$0xf]
      %v329 = vld [vmem:[%s251 + $0x1c] sm:$0xf]
      %v330 = vld [vmem:[%s251 + $0x20] sm:$0xf]
      %v331 = vld [vmem:[%s251 + $0x24] sm:$0xf]
      %v332 = vld [vmem:[%s251 + $0x28] sm:$0xf]
      %v333 = vld [vmem:[%s251 + $0x2c] sm:$0xf]
      %v334 = vld [vmem:[%s251 + $0x30] sm:$0xf]
      %v335 = vld [vmem:[%s251 + $0x34] sm:$0xf]
      %v336 = vld [vmem:[%s251 + $0x38] sm:$0xf]
      %v337 = vld [vmem:[%s251 + $0x3c] sm:$0xf]
      %v338 = vld [vmem:[%s251 + $0x40] sm:$0xf]
      %v339 = vld [vmem:[%s251 + $0x44] sm:$0xf]
      %v340 = vld [vmem:[%s251 + $0x48] sm:$0xf]
      %v341 = vld [vmem:[%s251 + $0x4c] sm:$0xf]
      %v342 = vld [vmem:[%s251 + $0x50] sm:$0xf]
      %v343 = vld [vmem:[%s251 + $0x54] sm:$0xf]
      %v344 = vld [vmem:[%s251 + $0x58] sm:$0xf]
      %v345 = vld [vmem:[%s251 + $0x5c] sm:$0xf]
      %v346 = vld [vmem:[%s251 + $0x60] sm:$0xf]
      %v347 = vld [vmem:[%s251 + $0x64] sm:$0xf]
      %v348 = vld [vmem:[%s251 + $0x68] sm:$0xf]
      %v349 = vld [vmem:[%s251 + $0x6c] sm:$0xf]
      %v350 = vld [vmem:[%s251 + $0x70] sm:$0xf]
      %v351 = vld [vmem:[%s251 + $0x74] sm:$0xf]
      %v352 = vld [vmem:[%s251 + $0x78] sm:$0xf]
      %v353 = vld [vmem:[%s251 + $0x7c] sm:$0xf]
      %vm354 = vsmask.f32 256
      %vm355 = vsmask.f32 4368
      %vm356 = vmor %vm354, %vm355
      %v358 = vshrl.u32 %v322, 16
      %v360 = vrot.slane %v358, 7
      %v361 = vshll.u32 %v322, 16
      %v363 = vor.u32 %v360, %v361
      %v364 = vrot.slane %v360, 4
      %v366 = vshrl.u32 %v323, 16
      %v368 = vrot.slane %v366, 7
      %v369 = vshll.u32 %v323, 16
      %v371 = vor.u32 %v368, %v369
      %v372 = vsel %vm356, %v364, %v371
      %v373 = vrot.slane %v368, 4
      %v375 = vshrl.u32 %v324, 16
      %v377 = vrot.slane %v375, 7
      %v378 = vshll.u32 %v324, 16
      %v380 = vor.u32 %v377, %v378
      %v381 = vrot.slane %v377, 4
      %v383 = vshrl.u32 %v325, 16
      %v385 = vrot.slane %v383, 7
      %v386 = vshll.u32 %v325, 16
      %v388 = vor.u32 %v385, %v386
      %v389 = vsel %vm356, %v381, %v388
      %v390 = vrot.slane %v385, 4
      %v392 = vshrl.u32 %v326, 16
      %v394 = vrot.slane %v392, 7
      %v395 = vshll.u32 %v326, 16
      %v397 = vor.u32 %v394, %v395
      %v398 = vrot.slane %v394, 4
      %v400 = vshrl.u32 %v327, 16
      %v402 = vrot.slane %v400, 7
      %v403 = vshll.u32 %v327, 16
      %v405 = vor.u32 %v402, %v403
      %v406 = vsel %vm356, %v398, %v405
      %v407 = vrot.slane %v402, 4
      %v409 = vshrl.u32 %v328, 16
      %v411 = vrot.slane %v409, 7
      %v412 = vshll.u32 %v328, 16
      %v414 = vor.u32 %v411, %v412
      %v415 = vrot.slane %v411, 4
      %v417 = vshrl.u32 %v329, 16
      %v419 = vrot.slane %v417, 7
      %v420 = vshll.u32 %v329, 16
      %v422 = vor.u32 %v419, %v420
      %v423 = vsel %vm356, %v415, %v422
      %v424 = vrot.slane %v419, 4
      %v426 = vshrl.u32 %v330, 16
      %v428 = vrot.slane %v426, 7
      %v429 = vshll.u32 %v330, 16
      %v431 = vor.u32 %v428, %v429
      %v432 = vrot.slane %v428, 4
      %v434 = vshrl.u32 %v331, 16
      %v436 = vrot.slane %v434, 7
      %v437 = vshll.u32 %v331, 16
      %v439 = vor.u32 %v436, %v437
      %v440 = vsel %vm356, %v432, %v439
      %v441 = vrot.slane %v436, 4
      %v443 = vshrl.u32 %v332, 16
      %v445 = vrot.slane %v443, 7
      %v446 = vshll.u32 %v332, 16
      %v448 = vor.u32 %v445, %v446
      %v449 = vrot.slane %v445, 4
      %v451 = vshrl.u32 %v333, 16
      %v453 = vrot.slane %v451, 7
      %v454 = vshll.u32 %v333, 16
      %v456 = vor.u32 %v453, %v454
      %v457 = vsel %vm356, %v449, %v456
      %v458 = vrot.slane %v453, 4
      %v460 = vshrl.u32 %v334, 16
      %v462 = vrot.slane %v460, 7
      %v463 = vshll.u32 %v334, 16
      %v465 = vor.u32 %v462, %v463
      %v466 = vrot.slane %v462, 4
      %v468 = vshrl.u32 %v335, 16
      %v470 = vrot.slane %v468, 7
      %v471 = vshll.u32 %v335, 16
      %v473 = vor.u32 %v470, %v471
      %v474 = vsel %vm356, %v466, %v473
      %v475 = vrot.slane %v470, 4
      %v477 = vshrl.u32 %v336, 16
      %v479 = vrot.slane %v477, 7
      %v480 = vshll.u32 %v336, 16
      %v482 = vor.u32 %v479, %v480
      %v483 = vrot.slane %v479, 4
      %v485 = vshrl.u32 %v337, 16
      %v487 = vrot.slane %v485, 7
      %v488 = vshll.u32 %v337, 16
      %v490 = vor.u32 %v487, %v488
      %v491 = vsel %vm356, %v483, %v490
      %v492 = vrot.slane %v487, 4
      %v494 = vshrl.u32 %v338, 16
      %v496 = vrot.slane %v494, 7
      %v497 = vshll.u32 %v338, 16
      %v499 = vor.u32 %v496, %v497
      %v500 = vrot.slane %v496, 4
      %v502 = vshrl.u32 %v339, 16
      %v504 = vrot.slane %v502, 7
      %v505 = vshll.u32 %v339, 16
      %v507 = vor.u32 %v504, %v505
      %v508 = vsel %vm356, %v500, %v507
      %v509 = vrot.slane %v504, 4
      %v511 = vshrl.u32 %v340, 16
      %v513 = vrot.slane %v511, 7
      %v514 = vshll.u32 %v340, 16
      %v516 = vor.u32 %v513, %v514
      %v517 = vrot.slane %v513, 4
      %v519 = vshrl.u32 %v341, 16
      %v521 = vrot.slane %v519, 7
      %v522 = vshll.u32 %v341, 16
      %v524 = vor.u32 %v521, %v522
      %v525 = vsel %vm356, %v517, %v524
      %v526 = vrot.slane %v521, 4
      %v528 = vshrl.u32 %v342, 16
      %v530 = vrot.slane %v528, 7
      %v531 = vshll.u32 %v342, 16
      %v533 = vor.u32 %v530, %v531
      %v534 = vrot.slane %v530, 4
      %v536 = vshrl.u32 %v343, 16
      %v538 = vrot.slane %v536, 7
      %v539 = vshll.u32 %v343, 16
      %v541 = vor.u32 %v538, %v539
      %v542 = vsel %vm356, %v534, %v541
      %v543 = vrot.slane %v538, 4
      %v545 = vshrl.u32 %v344, 16
      %v547 = vrot.slane %v545, 7
      %v548 = vshll.u32 %v344, 16
      %v550 = vor.u32 %v547, %v548
      %v551 = vrot.slane %v547, 4
      %v553 = vshrl.u32 %v345, 16
      %v555 = vrot.slane %v553, 7
      %v556 = vshll.u32 %v345, 16
      %v558 = vor.u32 %v555, %v556
      %v559 = vsel %vm356, %v551, %v558
      %v560 = vrot.slane %v555, 4
      %v562 = vshrl.u32 %v346, 16
      %v564 = vrot.slane %v562, 7
      %v565 = vshll.u32 %v346, 16
      %v567 = vor.u32 %v564, %v565
      %v568 = vrot.slane %v564, 4
      %v570 = vshrl.u32 %v347, 16
      %v572 = vrot.slane %v570, 7
      %v573 = vshll.u32 %v347, 16
      %v575 = vor.u32 %v572, %v573
      %v576 = vsel %vm356, %v568, %v575
      %v577 = vrot.slane %v572, 4
      %v579 = vshrl.u32 %v348, 16
      %v581 = vrot.slane %v579, 7
      %v582 = vshll.u32 %v348, 16
      %v584 = vor.u32 %v581, %v582
      %v585 = vrot.slane %v581, 4
      %v587 = vshrl.u32 %v349, 16
      %v589 = vrot.slane %v587, 7
      %v590 = vshll.u32 %v349, 16
      %v592 = vor.u32 %v589, %v590
      %v593 = vsel %vm356, %v585, %v592
      %v594 = vrot.slane %v589, 4
      %v596 = vshrl.u32 %v350, 16
      %v598 = vrot.slane %v596, 7
      %v599 = vshll.u32 %v350, 16
      %v601 = vor.u32 %v598, %v599
      %v602 = vrot.slane %v598, 4
      %v604 = vshrl.u32 %v351, 16
      %v606 = vrot.slane %v604, 7
      %v607 = vshll.u32 %v351, 16
      %v609 = vor.u32 %v606, %v607
      %v610 = vsel %vm356, %v602, %v609
      %v611 = vrot.slane %v606, 4
      %v613 = vshrl.u32 %v352, 16
      %v615 = vrot.slane %v613, 7
      %v616 = vshll.u32 %v352, 16
      %v618 = vor.u32 %v615, %v616
      %v619 = vrot.slane %v615, 4
      %v621 = vshrl.u32 %v353, 16
      %v623 = vrot.slane %v621, 7
      %v624 = vshll.u32 %v353, 16
      %v626 = vor.u32 %v623, %v624
      %v627 = vsel %vm356, %v619, %v626
      %v628 = vrot.slane %v623, 4
      %s677 = scalar_lea.vmem [#allocation2], 12
      %vm678 = vcmask 1043456
      %vm679 = vsmask.f32 7938
      %vm680 = vmand %vm678, %vm679
      %v681 = vld [vmem:[%s677] sm:$0xf]
      %v682 = vsel %vm680, %v363, %v681
      %683 = vst [vmem:[%s677] sm:$0xf] %v682
      %684 = vst [vmem:[%s677 + $0x4] sm:$0xf] %v372
      %vm685 = vcmask 1040384
      %vm686 = vmand %vm685, %vm354
      %v687 = vld [vmem:[%s677 + $0x8] sm:$0x1]
      %v688 = vsel %vm686, %v373, %v687
      %689 = vst [vmem:[%s677 + $0x8] sm:$0x1] %v688
      %v690 = vld [vmem:[%s677 + $0xc] sm:$0xf]
      %v691 = vsel %vm680, %v380, %v690
      %692 = vst [vmem:[%s677 + $0xc] sm:$0xf] %v691
      %693 = vst [vmem:[%s677 + $0x10] sm:$0xf] %v389
      %v694 = vld [vmem:[%s677 + $0x14] sm:$0x1]
      %v695 = vsel %vm686, %v390, %v694
      %696 = vst [vmem:[%s677 + $0x14] sm:$0x1] %v695
      %v697 = vld [vmem:[%s677 + $0x18] sm:$0xf]
      %v698 = vsel %vm680, %v397, %v697
      %699 = vst [vmem:[%s677 + $0x18] sm:$0xf] %v698
      %700 = vst [vmem:[%s677 + $0x1c] sm:$0xf] %v406
      %v701 = vld [vmem:[%s677 + $0x20] sm:$0x1]
      %v702 = vsel %vm686, %v407, %v701
      %703 = vst [vmem:[%s677 + $0x20] sm:$0x1] %v702
      %v704 = vld [vmem:[%s677 + $0x24] sm:$0xf]
      %v705 = vsel %vm680, %v414, %v704
      %706 = vst [vmem:[%s677 + $0x24] sm:$0xf] %v705
      %707 = vst [vmem:[%s677 + $0x28] sm:$0xf] %v423
      %v708 = vld [vmem:[%s677 + $0x2c] sm:$0x1]
      %v709 = vsel %vm686, %v424, %v708
      %710 = vst [vmem:[%s677 + $0x2c] sm:$0x1] %v709
      %v711 = vld [vmem:[%s677 + $0x30] sm:$0xf]
      %v712 = vsel %vm680, %v431, %v711
      %713 = vst [vmem:[%s677 + $0x30] sm:$0xf] %v712
      %714 = vst [vmem:[%s677 + $0x34] sm:$0xf] %v440
      %v715 = vld [vmem:[%s677 + $0x38] sm:$0x1]
      %v716 = vsel %vm686, %v441, %v715
      %717 = vst [vmem:[%s677 + $0x38] sm:$0x1] %v716
      %v718 = vld [vmem:[%s677 + $0x3c] sm:$0xf]
      %v719 = vsel %vm680, %v448, %v718
      %720 = vst [vmem:[%s677 + $0x3c] sm:$0xf] %v719
      %721 = vst [vmem:[%s677 + $0x40] sm:$0xf] %v457
      %v722 = vld [vmem:[%s677 + $0x44] sm:$0x1]
      %v723 = vsel %vm686, %v458, %v722
      %724 = vst [vmem:[%s677 + $0x44] sm:$0x1] %v723
      %v725 = vld [vmem:[%s677 + $0x48] sm:$0xf]
      %v726 = vsel %vm680, %v465, %v725
      %727 = vst [vmem:[%s677 + $0x48] sm:$0xf] %v726
      %728 = vst [vmem:[%s677 + $0x4c] sm:$0xf] %v474
      %v729 = vld [vmem:[%s677 + $0x50] sm:$0x1]
      %v730 = vsel %vm686, %v475, %v729
      %731 = vst [vmem:[%s677 + $0x50] sm:$0x1] %v730
      %v732 = vld [vmem:[%s677 + $0x54] sm:$0xf]
      %v733 = vsel %vm680, %v482, %v732
      %734 = vst [vmem:[%s677 + $0x54] sm:$0xf] %v733
      %735 = vst [vmem:[%s677 + $0x58] sm:$0xf] %v491
      %v736 = vld [vmem:[%s677 + $0x5c] sm:$0x1]
      %v737 = vsel %vm686, %v492, %v736
      %738 = vst [vmem:[%s677 + $0x5c] sm:$0x1] %v737
      %v739 = vld [vmem:[%s677 + $0x60] sm:$0xf]
      %v740 = vsel %vm680, %v499, %v739
      %741 = vst [vmem:[%s677 + $0x60] sm:$0xf] %v740
      %742 = vst [vmem:[%s677 + $0x64] sm:$0xf] %v508
      %v743 = vld [vmem:[%s677 + $0x68] sm:$0x1]
      %v744 = vsel %vm686, %v509, %v743
      %745 = vst [vmem:[%s677 + $0x68] sm:$0x1] %v744
      %v746 = vld [vmem:[%s677 + $0x6c] sm:$0xf]
      %v747 = vsel %vm680, %v516, %v746
      %748 = vst [vmem:[%s677 + $0x6c] sm:$0xf] %v747
      %749 = vst [vmem:[%s677 + $0x70] sm:$0xf] %v525
      %v750 = vld [vmem:[%s677 + $0x74] sm:$0x1]
      %v751 = vsel %vm686, %v526, %v750
      %752 = vst [vmem:[%s677 + $0x74] sm:$0x1] %v751
      %v753 = vld [vmem:[%s677 + $0x78] sm:$0xf]
      %v754 = vsel %vm680, %v533, %v753
      %755 = vst [vmem:[%s677 + $0x78] sm:$0xf] %v754
      %756 = vst [vmem:[%s677 + $0x7c] sm:$0xf] %v542
      %v757 = vld [vmem:[%s677 + $0x80] sm:$0x1]
      %v758 = vsel %vm686, %v543, %v757
      %759 = vst [vmem:[%s677 + $0x80] sm:$0x1] %v758
      %v760 = vld [vmem:[%s677 + $0x84] sm:$0xf]
      %v761 = vsel %vm680, %v550, %v760
      %762 = vst [vmem:[%s677 + $0x84] sm:$0xf] %v761
      %763 = vst [vmem:[%s677 + $0x88] sm:$0xf] %v559
      %v764 = vld [vmem:[%s677 + $0x8c] sm:$0x1]
      %v765 = vsel %vm686, %v560, %v764
      %766 = vst [vmem:[%s677 + $0x8c] sm:$0x1] %v765
      %v767 = vld [vmem:[%s677 + $0x90] sm:$0xf]
      %v768 = vsel %vm680, %v567, %v767
      %769 = vst [vmem:[%s677 + $0x90] sm:$0xf] %v768
      %770 = vst [vmem:[%s677 + $0x94] sm:$0xf] %v576
      %v771 = vld [vmem:[%s677 + $0x98] sm:$0x1]
      %v772 = vsel %vm686, %v577, %v771
      %773 = vst [vmem:[%s677 + $0x98] sm:$0x1] %v772
      %v774 = vld [vmem:[%s677 + $0x9c] sm:$0xf]
      %v775 = vsel %vm680, %v584, %v774
      %776 = vst [vmem:[%s677 + $0x9c] sm:$0xf] %v775
      %777 = vst [vmem:[%s677 + $0xa0] sm:$0xf] %v593
      %v778 = vld [vmem:[%s677 + $0xa4] sm:$0x1]
      %v779 = vsel %vm686, %v594, %v778
      %780 = vst [vmem:[%s677 + $0xa4] sm:$0x1] %v779
      %v781 = vld [vmem:[%s677 + $0xa8] sm:$0xf]
      %v782 = vsel %vm680, %v601, %v781
      %783 = vst [vmem:[%s677 + $0xa8] sm:$0xf] %v782
      %784 = vst [vmem:[%s677 + $0xac] sm:$0xf] %v610
      %v785 = vld [vmem:[%s677 + $0xb0] sm:$0x1]
      %v786 = vsel %vm686, %v611, %v785
      %787 = vst [vmem:[%s677 + $0xb0] sm:$0x1] %v786
      %v788 = vld [vmem:[%s677 + $0xb4] sm:$0xf]
      %v789 = vsel %vm680, %v618, %v788
      %790 = vst [vmem:[%s677 + $0xb4] sm:$0xf] %v789
      %791 = vst [vmem:[%s677 + $0xb8] sm:$0xf] %v627
      %v792 = vld [vmem:[%s677 + $0xbc] sm:$0x1]
      %v793 = vsel %vm686, %v628, %v792
      %794 = vst [vmem:[%s677 + $0xbc] sm:$0x1] %v793
      %v795 = vld [vmem:[%s2] sm:$0xf]
      %v796 = vld [vmem:[%s2 + $0x4] sm:$0xf]
      %v797 = vld [vmem:[%s2 + $0x8] sm:$0xf]
      %v798 = vld [vmem:[%s2 + $0xc] sm:$0xf]
      %v799 = vld [vmem:[%s2 + $0x10] sm:$0xf]
      %v800 = vld [vmem:[%s2 + $0x14] sm:$0xf]
      %v801 = vld [vmem:[%s2 + $0x18] sm:$0xf]
      %v802 = vld [vmem:[%s2 + $0x1c] sm:$0xf]
      %v803 = vld [vmem:[%s2 + $0x20] sm:$0xf]
      %v804 = vld [vmem:[%s2 + $0x24] sm:$0xf]
      %v805 = vld [vmem:[%s2 + $0x28] sm:$0xf]
      %v806 = vld [vmem:[%s2 + $0x2c] sm:$0xf]
      %v807 = vld [vmem:[%s2 + $0x30] sm:$0xf]
      %v808 = vld [vmem:[%s2 + $0x34] sm:$0xf]
      %v809 = vld [vmem:[%s2 + $0x38] sm:$0xf]
      %v810 = vld [vmem:[%s2 + $0x3c] sm:$0xf]
      %v811 = vld [vmem:[%s3] sm:$0x1]
      %v813 = vlaneseq
      %v814 = vshrl.u32 %v813, 7
      %v815 = vsub.s32 0, %v814
      %v816 = vrot.slane %v811, %v815
      %v850 = vunpack.c.l.b16 %v322
      %v851 = vunpack.c.l.b16 %v323
      %v852 = vunpack.c.l.b16 %v324
      %v853 = vunpack.c.l.b16 %v325
      %v854 = vunpack.c.l.b16 %v326
      %v855 = vunpack.c.l.b16 %v327
      %v856 = vunpack.c.l.b16 %v328
      %v857 = vunpack.c.l.b16 %v329
      %v858 = vunpack.c.l.b16 %v330
      %v859 = vunpack.c.l.b16 %v331
      %v860 = vunpack.c.l.b16 %v332
      %v861 = vunpack.c.l.b16 %v333
      %v862 = vunpack.c.l.b16 %v334
      %v863 = vunpack.c.l.b16 %v335
      %v864 = vunpack.c.l.b16 %v336
      %v865 = vunpack.c.l.b16 %v337
      %v866 = vunpack.c.l.b16 %v338
      %v867 = vunpack.c.l.b16 %v339
      %v868 = vunpack.c.l.b16 %v340
      %v869 = vunpack.c.l.b16 %v341
      %v870 = vunpack.c.l.b16 %v342
      %v871 = vunpack.c.l.b16 %v343
      %v872 = vunpack.c.l.b16 %v344
      %v873 = vunpack.c.l.b16 %v345
      %v874 = vunpack.c.l.b16 %v346
      %v875 = vunpack.c.l.b16 %v347
      %v876 = vunpack.c.l.b16 %v348
      %v877 = vunpack.c.l.b16 %v349
      %v878 = vunpack.c.l.b16 %v350
      %v879 = vunpack.c.l.b16 %v351
      %v880 = vunpack.c.l.b16 %v352
      %v881 = vunpack.c.l.b16 %v353
      %v882 = vpack.c.b16 %v851, %v850
      %v883 = vpack.c.b16 %v853, %v852
      %v884 = vpack.c.b16 %v855, %v854
      %v885 = vpack.c.b16 %v857, %v856
      %v886 = vpack.c.b16 %v859, %v858
      %v887 = vpack.c.b16 %v861, %v860
      %v888 = vpack.c.b16 %v863, %v862
      %v889 = vpack.c.b16 %v865, %v864
      %v890 = vpack.c.b16 %v867, %v866
      %v891 = vpack.c.b16 %v869, %v868
      %v892 = vpack.c.b16 %v871, %v870
      %v893 = vpack.c.b16 %v873, %v872
      %v894 = vpack.c.b16 %v875, %v874
      %v895 = vpack.c.b16 %v877, %v876
      %v896 = vpack.c.b16 %v879, %v878
      %v897 = vpack.c.b16 %v881, %v880
      %v930 = vunpack.c.l.b16 %v795
      %v931 = vunpack.c.l.b16 %v796
      %v932 = vunpack.c.l.b16 %v797
      %v933 = vunpack.c.l.b16 %v798
      %v934 = vunpack.c.l.b16 %v799
      %v935 = vunpack.c.l.b16 %v800
      %v936 = vunpack.c.l.b16 %v801
      %v937 = vunpack.c.l.b16 %v802
      %v938 = vunpack.c.l.b16 %v803
      %v939 = vunpack.c.l.b16 %v804
      %v940 = vunpack.c.l.b16 %v805
      %v941 = vunpack.c.l.b16 %v806
      %v942 = vunpack.c.l.b16 %v807
      %v943 = vunpack.c.l.b16 %v808
      %v944 = vunpack.c.l.b16 %v809
      %v945 = vunpack.c.l.b16 %v810
      %v946 = vpack.c.b16 %v931, %v930
      %v947 = vpack.c.b16 %v933, %v932
      %v948 = vpack.c.b16 %v935, %v934
      %v949 = vpack.c.b16 %v937, %v936
      %v950 = vpack.c.b16 %v939, %v938
      %v951 = vpack.c.b16 %v941, %v940
      %v952 = vpack.c.b16 %v943, %v942
      %v953 = vpack.c.b16 %v945, %v944
      %962 = vmatprep.subr.bf16.mxu0 0
      %963 = vmatpush1.bf16.msra.mxu0 %v953
      %964 = vmatprep.subr.bf16.mxu0 0
      %965 = vmatpush1.bf16.msra.mxu0 %v952
      %966 = vmatprep.subr.bf16.mxu0 0
      %967 = vmatpush1.bf16.msra.mxu0 %v951
      %968 = vmatprep.subr.bf16.mxu0 0
      %969 = vmatpush1.bf16.msra.mxu0 %v950
      %970 = vmatprep.subr.bf16.mxu0 0
      %971 = vmatpush1.bf16.msra.mxu0 %v949
      %972 = vmatprep.subr.bf16.mxu0 0
      %973 = vmatpush1.bf16.msra.mxu0 %v948
      %974 = vmatprep.subr.bf16.mxu0 0
      %975 = vmatpush1.bf16.msra.mxu0 %v947
      %976 = vmatprep.subr.bf16.mxu0 0
      %977 = vmatpush1.bf16.msra.mxu0 %v946
      %978 = vmatprep.subr.bf16.mxu0 0
      %979 = vmatpush2.bf16.msra.mxu0 0
      %980 = vmatprep.subr.bf16.mxu0 0
      %981 = vmatpush2.bf16.msra.mxu0 0
      %982 = vmatprep.subr.bf16.mxu0 0
      %983 = vmatpush2.bf16.msra.mxu0 0
      %984 = vmatprep.subr.bf16.mxu0 0
      %985 = vmatpush2.bf16.msra.mxu0 0
      %986 = vmatprep.subr.bf16.mxu0 0
      %987 = vmatpush2.bf16.msra.mxu0 0
      %988 = vmatprep.subr.bf16.mxu0 0
      %989 = vmatpush2.bf16.msra.mxu0 0
      %990 = vmatprep.subr.bf16.mxu0 0
      %991 = vmatpush2.bf16.msra.mxu0 0
      %992 = vmatprep.subr.bf16.mxu0 0
      %993 = vmatpush2.bf16.msra.mxu0 0
      %994 = vmatprep.mubr.bf16.mxu0 0
      %995 = vmatmul.mubr.bf16.gmra.mxu0 %v882
      %v996 = vpop.f32.mrf.mxu0
      %v997 = vadd.f32 %v816, %v996
      %v998 = vpop.f32.mrf.mxu0
      %v999 = vpop.f32.mrf.mxu0
      %v1000 = vadd.f32 %v816, %v999
      %v1001 = vpop.f32.mrf.mxu0
      %1002 = vmatprep.mubr.bf16.mxu0 0
      %1003 = vmatmul.mubr.bf16.gmra.mxu0 %v883
      %v1004 = vpop.f32.mrf.mxu0
      %v1005 = vadd.f32 %v816, %v1004
      %v1006 = vpop.f32.mrf.mxu0
      %v1007 = vpop.f32.mrf.mxu0
      %v1008 = vadd.f32 %v816, %v1007
      %v1009 = vpop.f32.mrf.mxu0
      %1010 = vmatprep.mubr.bf16.mxu0 0
      %1011 = vmatmul.mubr.bf16.gmra.mxu0 %v884
      %v1012 = vpop.f32.mrf.mxu0
      %v1013 = vadd.f32 %v816, %v1012
      %v1014 = vpop.f32.mrf.mxu0
      %v1015 = vpop.f32.mrf.mxu0
      %v1016 = vadd.f32 %v816, %v1015
      %v1017 = vpop.f32.mrf.mxu0
      %1018 = vmatprep.mubr.bf16.mxu0 0
      %1019 = vmatmul.mubr.bf16.gmra.mxu0 %v885
      %v1020 = vpop.f32.mrf.mxu0
      %v1021 = vadd.f32 %v816, %v1020
      %v1022 = vpop.f32.mrf.mxu0
      %v1023 = vpop.f32.mrf.mxu0
      %v1024 = vadd.f32 %v816, %v1023
      %v1025 = vpop.f32.mrf.mxu0
      %1026 = vmatprep.mubr.bf16.mxu0 0
      %1027 = vmatmul.mubr.bf16.gmra.mxu0 %v886
      %v1028 = vpop.f32.mrf.mxu0
      %v1029 = vadd.f32 %v816, %v1028
      %v1030 = vpop.f32.mrf.mxu0
      %v1031 = vpop.f32.mrf.mxu0
      %v1032 = vadd.f32 %v816, %v1031
      %v1033 = vpop.f32.mrf.mxu0
      %1034 = vmatprep.mubr.bf16.mxu0 0
      %1035 = vmatmul.mubr.bf16.gmra.mxu0 %v887
      %v1036 = vpop.f32.mrf.mxu0
      %v1037 = vadd.f32 %v816, %v1036
      %v1038 = vpop.f32.mrf.mxu0
      %v1039 = vpop.f32.mrf.mxu0
      %v1040 = vadd.f32 %v816, %v1039
      %v1041 = vpop.f32.mrf.mxu0
      %1042 = vmatprep.mubr.bf16.mxu0 0
      %1043 = vmatmul.mubr.bf16.gmra.mxu0 %v888
      %v1044 = vpop.f32.mrf.mxu0
      %v1045 = vadd.f32 %v816, %v1044
      %v1046 = vpop.f32.mrf.mxu0
      %v1047 = vpop.f32.mrf.mxu0
      %v1048 = vadd.f32 %v816, %v1047
      %v1049 = vpop.f32.mrf.mxu0
      %1050 = vmatprep.mubr.bf16.mxu0 0
      %1051 = vmatmul.mubr.bf16.gmra.mxu0 %v889
      %v1052 = vpop.f32.mrf.mxu0
      %v1053 = vadd.f32 %v816, %v1052
      %v1054 = vpop.f32.mrf.mxu0
      %v1055 = vpop.f32.mrf.mxu0
      %v1056 = vadd.f32 %v816, %v1055
      %v1057 = vpop.f32.mrf.mxu0
      %1058 = vmatprep.mubr.bf16.mxu0 0
      %1059 = vmatmul.mubr.bf16.gmra.mxu0 %v890
      %v1060 = vpop.f32.mrf.mxu0
      %v1061 = vadd.f32 %v816, %v1060
      %v1062 = vpop.f32.mrf.mxu0
      %v1063 = vpop.f32.mrf.mxu0
      %v1064 = vadd.f32 %v816, %v1063
      %v1065 = vpop.f32.mrf.mxu0
      %1066 = vmatprep.mubr.bf16.mxu0 0
      %1067 = vmatmul.mubr.bf16.gmra.mxu0 %v891
      %v1068 = vpop.f32.mrf.mxu0
      %v1069 = vadd.f32 %v816, %v1068
      %v1070 = vpop.f32.mrf.mxu0
      %v1071 = vpop.f32.mrf.mxu0
      %v1072 = vadd.f32 %v816, %v1071
      %v1073 = vpop.f32.mrf.mxu0
      %1074 = vmatprep.mubr.bf16.mxu0 0
      %1075 = vmatmul.mubr.bf16.gmra.mxu0 %v892
      %v1076 = vpop.f32.mrf.mxu0
      %v1077 = vadd.f32 %v816, %v1076
      %v1078 = vpop.f32.mrf.mxu0
      %v1079 = vpop.f32.mrf.mxu0
      %v1080 = vadd.f32 %v816, %v1079
      %v1081 = vpop.f32.mrf.mxu0
      %1082 = vmatprep.mubr.bf16.mxu0 0
      %1083 = vmatmul.mubr.bf16.gmra.mxu0 %v893
      %v1084 = vpop.f32.mrf.mxu0
      %v1085 = vadd.f32 %v816, %v1084
      %v1086 = vpop.f32.mrf.mxu0
      %v1087 = vpop.f32.mrf.mxu0
      %v1088 = vadd.f32 %v816, %v1087
      %v1089 = vpop.f32.mrf.mxu0
      %1090 = vmatprep.mubr.bf16.mxu0 0
      %1091 = vmatmul.mubr.bf16.gmra.mxu0 %v894
      %v1092 = vpop.f32.mrf.mxu0
      %v1093 = vadd.f32 %v816, %v1092
      %v1094 = vpop.f32.mrf.mxu0
      %v1095 = vpop.f32.mrf.mxu0
      %v1096 = vadd.f32 %v816, %v1095
      %v1097 = vpop.f32.mrf.mxu0
      %1098 = vmatprep.mubr.bf16.mxu0 0
      %1099 = vmatmul.mubr.bf16.gmra.mxu0 %v895
      %v1100 = vpop.f32.mrf.mxu0
      %v1101 = vadd.f32 %v816, %v1100
      %v1102 = vpop.f32.mrf.mxu0
      %v1103 = vpop.f32.mrf.mxu0
      %v1104 = vadd.f32 %v816, %v1103
      %v1105 = vpop.f32.mrf.mxu0
      %1106 = vmatprep.mubr.bf16.mxu0 0
      %1107 = vmatmul.mubr.bf16.gmra.mxu0 %v896
      %v1108 = vpop.f32.mrf.mxu0
      %v1109 = vadd.f32 %v816, %v1108
      %v1110 = vpop.f32.mrf.mxu0
      %v1111 = vpop.f32.mrf.mxu0
      %v1112 = vadd.f32 %v816, %v1111
      %v1113 = vpop.f32.mrf.mxu0
      %1114 = vmatprep.mubr.bf16.mxu0 0
      %1115 = vmatmul.mubr.bf16.gmra.mxu0 %v897
      %v1116 = vpop.f32.mrf.mxu0
      %v1117 = vadd.f32 %v816, %v1116
      %v1118 = vpop.f32.mrf.mxu0
      %v1119 = vpop.f32.mrf.mxu0
      %v1120 = vadd.f32 %v816, %v1119
      %v1121 = vpop.f32.mrf.mxu0
      %1122 = vdwg.mxu0
      %v1123 = vpack.c.bf16 %v1000, %v997
      %v1124 = vpack.c.bf16 %v1008, %v1005
      %v1125 = vpack.c.bf16 %v1016, %v1013
      %v1126 = vpack.c.bf16 %v1024, %v1021
      %v1127 = vpack.c.bf16 %v1032, %v1029
      %v1128 = vpack.c.bf16 %v1040, %v1037
      %v1129 = vpack.c.bf16 %v1048, %v1045
      %v1130 = vpack.c.bf16 %v1056, %v1053
      %v1131 = vpack.c.bf16 %v1064, %v1061
      %v1132 = vpack.c.bf16 %v1072, %v1069
      %v1133 = vpack.c.bf16 %v1080, %v1077
      %v1134 = vpack.c.bf16 %v1088, %v1085
      %v1135 = vpack.c.bf16 %v1096, %v1093
      %v1136 = vpack.c.bf16 %v1104, %v1101
      %v1137 = vpack.c.bf16 %v1112, %v1109
      %v1138 = vpack.c.bf16 %v1120, %v1117
      %v1155 = vunpack.c.l.b16 %v1123
      %v1156 = vunpack.c.h.b16 %v1123
      %v1157 = vunpack.c.l.b16 %v1124
      %v1158 = vunpack.c.h.b16 %v1124
      %v1159 = vunpack.c.l.b16 %v1125
      %v1160 = vunpack.c.h.b16 %v1125
      %v1161 = vunpack.c.l.b16 %v1126
      %v1162 = vunpack.c.h.b16 %v1126
      %v1163 = vunpack.c.l.b16 %v1127
      %v1164 = vunpack.c.h.b16 %v1127
      %v1165 = vunpack.c.l.b16 %v1128
      %v1166 = vunpack.c.h.b16 %v1128
      %v1167 = vunpack.c.l.b16 %v1129
      %v1168 = vunpack.c.h.b16 %v1129
      %v1169 = vunpack.c.l.b16 %v1130
      %v1170 = vunpack.c.h.b16 %v1130
      %v1171 = vunpack.c.l.b16 %v1131
      %v1172 = vunpack.c.h.b16 %v1131
      %v1173 = vunpack.c.l.b16 %v1132
      %v1174 = vunpack.c.h.b16 %v1132
      %v1175 = vunpack.c.l.b16 %v1133
      %v1176 = vunpack.c.h.b16 %v1133
      %v1177 = vunpack.c.l.b16 %v1134
      %v1178 = vunpack.c.h.b16 %v1134
      %v1179 = vunpack.c.l.b16 %v1135
      %v1180 = vunpack.c.h.b16 %v1135
      %v1181 = vunpack.c.l.b16 %v1136
      %v1182 = vunpack.c.h.b16 %v1136
      %v1183 = vunpack.c.l.b16 %v1137
      %v1184 = vunpack.c.h.b16 %v1137
      %v1185 = vunpack.c.l.b16 %v1138
      %v1186 = vunpack.c.h.b16 %v1138
      %v1187 = vpack.c.b16 %v1155, %v1155
      %v1188 = vpack.c.b16 %v1156, %v1156
      %v1189 = vpack.c.b16 %v1157, %v1157
      %v1190 = vpack.c.b16 %v1158, %v1158
      %v1191 = vpack.c.b16 %v1159, %v1159
      %v1192 = vpack.c.b16 %v1160, %v1160
      %v1193 = vpack.c.b16 %v1161, %v1161
      %v1194 = vpack.c.b16 %v1162, %v1162
      %v1195 = vpack.c.b16 %v1163, %v1163
      %v1196 = vpack.c.b16 %v1164, %v1164
      %v1197 = vpack.c.b16 %v1165, %v1165
      %v1198 = vpack.c.b16 %v1166, %v1166
      %v1199 = vpack.c.b16 %v1167, %v1167
      %v1200 = vpack.c.b16 %v1168, %v1168
      %v1201 = vpack.c.b16 %v1169, %v1169
      %v1202 = vpack.c.b16 %v1170, %v1170
      %v1203 = vpack.c.b16 %v1171, %v1171
      %v1204 = vpack.c.b16 %v1172, %v1172
      %v1205 = vpack.c.b16 %v1173, %v1173
      %v1206 = vpack.c.b16 %v1174, %v1174
      %v1207 = vpack.c.b16 %v1175, %v1175
      %v1208 = vpack.c.b16 %v1176, %v1176
      %v1209 = vpack.c.b16 %v1177, %v1177
      %v1210 = vpack.c.b16 %v1178, %v1178
      %v1211 = vpack.c.b16 %v1179, %v1179
      %v1212 = vpack.c.b16 %v1180, %v1180
      %v1213 = vpack.c.b16 %v1181, %v1181
      %v1214 = vpack.c.b16 %v1182, %v1182
      %v1215 = vpack.c.b16 %v1183, %v1183
      %v1216 = vpack.c.b16 %v1184, %v1184
      %v1217 = vpack.c.b16 %v1185, %v1185
      %v1218 = vpack.c.b16 %v1186, %v1186
      %1251 = vst [vmem:[%s261] sm:$0xf] %v1187
      %1252 = vst [vmem:[%s261 + $0x4] sm:$0xf] %v1188
      %1253 = vst [vmem:[%s261 + $0x8] sm:$0xf] %v1189
      %1254 = vst [vmem:[%s261 + $0xc] sm:$0xf] %v1190
      %1255 = vst [vmem:[%s261 + $0x10] sm:$0xf] %v1191
      %1256 = vst [vmem:[%s261 + $0x14] sm:$0xf] %v1192
      %1257 = vst [vmem:[%s261 + $0x18] sm:$0xf] %v1193
      %1258 = vst [vmem:[%s261 + $0x1c] sm:$0xf] %v1194
      %1259 = vst [vmem:[%s261 + $0x20] sm:$0xf] %v1195
      %1260 = vst [vmem:[%s261 + $0x24] sm:$0xf] %v1196
      %1261 = vst [vmem:[%s261 + $0x28] sm:$0xf] %v1197
      %1262 = vst [vmem:[%s261 + $0x2c] sm:$0xf] %v1198
      %1263 = vst [vmem:[%s261 + $0x30] sm:$0xf] %v1199
      %1264 = vst [vmem:[%s261 + $0x34] sm:$0xf] %v1200
      %1265 = vst [vmem:[%s261 + $0x38] sm:$0xf] %v1201
      %1266 = vst [vmem:[%s261 + $0x3c] sm:$0xf] %v1202
      %1267 = vst [vmem:[%s261 + $0x40] sm:$0xf] %v1203
      %1268 = vst [vmem:[%s261 + $0x44] sm:$0xf] %v1204
      %1269 = vst [vmem:[%s261 + $0x48] sm:$0xf] %v1205
      %1270 = vst [vmem:[%s261 + $0x4c] sm:$0xf] %v1206
      %1271 = vst [vmem:[%s261 + $0x50] sm:$0xf] %v1207
      %1272 = vst [vmem:[%s261 + $0x54] sm:$0xf] %v1208
      %1273 = vst [vmem:[%s261 + $0x58] sm:$0xf] %v1209
      %1274 = vst [vmem:[%s261 + $0x5c] sm:$0xf] %v1210
      %1275 = vst [vmem:[%s261 + $0x60] sm:$0xf] %v1211
      %1276 = vst [vmem:[%s261 + $0x64] sm:$0xf] %v1212
      %1277 = vst [vmem:[%s261 + $0x68] sm:$0xf] %v1213
      %1278 = vst [vmem:[%s261 + $0x6c] sm:$0xf] %v1214
      %1279 = vst [vmem:[%s261 + $0x70] sm:$0xf] %v1215
      %1280 = vst [vmem:[%s261 + $0x74] sm:$0xf] %v1216
      %1281 = vst [vmem:[%s261 + $0x78] sm:$0xf] %v1217
      %1282 = vst [vmem:[%s261 + $0x7c] sm:$0xf] %v1218
      %v1283 = vld [vmem:[#allocation2] sm:$0xf]
      %v1284 = vld [vmem:[#allocation2 + $0x4] sm:$0xf]
      %v1285 = vld [vmem:[#allocation2 + $0xc] sm:$0xf]
      %v1286 = vld [vmem:[#allocation2 + $0x10] sm:$0xf]
      %v1287 = vld [vmem:[#allocation2 + $0x18] sm:$0xf]
      %v1288 = vld [vmem:[#allocation2 + $0x1c] sm:$0xf]
      %v1289 = vld [vmem:[#allocation2 + $0x24] sm:$0xf]
      %v1290 = vld [vmem:[#allocation2 + $0x28] sm:$0xf]
      %v1291 = vld [vmem:[#allocation2 + $0x30] sm:$0xf]
      %v1292 = vld [vmem:[#allocation2 + $0x34] sm:$0xf]
      %v1293 = vld [vmem:[#allocation2 + $0x3c] sm:$0xf]
      %v1294 = vld [vmem:[#allocation2 + $0x40] sm:$0xf]
      %v1295 = vld [vmem:[#allocation2 + $0x48] sm:$0xf]
      %v1296 = vld [vmem:[#allocation2 + $0x4c] sm:$0xf]
      %v1297 = vld [vmem:[#allocation2 + $0x54] sm:$0xf]
      %v1298 = vld [vmem:[#allocation2 + $0x58] sm:$0xf]
      %v1299 = vld [vmem:[#allocation2 + $0x60] sm:$0xf]
      %v1300 = vld [vmem:[#allocation2 + $0x64] sm:$0xf]
      %v1301 = vld [vmem:[#allocation2 + $0x6c] sm:$0xf]
      %v1302 = vld [vmem:[#allocation2 + $0x70] sm:$0xf]
      %v1303 = vld [vmem:[#allocation2 + $0x78] sm:$0xf]
      %v1304 = vld [vmem:[#allocation2 + $0x7c] sm:$0xf]
      %v1305 = vld [vmem:[#allocation2 + $0x84] sm:$0xf]
      %v1306 = vld [vmem:[#allocation2 + $0x88] sm:$0xf]
      %v1307 = vld [vmem:[#allocation2 + $0x90] sm:$0xf]
      %v1308 = vld [vmem:[#allocation2 + $0x94] sm:$0xf]
      %v1309 = vld [vmem:[#allocation2 + $0x9c] sm:$0xf]
      %v1310 = vld [vmem:[#allocation2 + $0xa0] sm:$0xf]
      %v1311 = vld [vmem:[#allocation2 + $0xa8] sm:$0xf]
      %v1312 = vld [vmem:[#allocation2 + $0xac] sm:$0xf]
      %v1313 = vld [vmem:[#allocation2 + $0xb4] sm:$0xf]
      %v1314 = vld [vmem:[#allocation2 + $0xb8] sm:$0xf]
      %v1315 = vld [vmem:[#allocation2 + $0x8] sm:$0x1]
      %v1316 = vld [vmem:[#allocation2 + $0x14] sm:$0x1]
      %v1317 = vld [vmem:[#allocation2 + $0x20] sm:$0x1]
      %v1318 = vld [vmem:[#allocation2 + $0x2c] sm:$0x1]
      %v1319 = vld [vmem:[#allocation2 + $0x38] sm:$0x1]
      %v1320 = vld [vmem:[#allocation2 + $0x44] sm:$0x1]
      %v1321 = vld [vmem:[#allocation2 + $0x50] sm:$0x1]
      %v1322 = vld [vmem:[#allocation2 + $0x5c] sm:$0x1]
      %v1323 = vld [vmem:[#allocation2 + $0x68] sm:$0x1]
      %v1324 = vld [vmem:[#allocation2 + $0x74] sm:$0x1]
      %v1325 = vld [vmem:[#allocation2 + $0x80] sm:$0x1]
      %v1326 = vld [vmem:[#allocation2 + $0x8c] sm:$0x1]
      %v1327 = vld [vmem:[#allocation2 + $0x98] sm:$0x1]
      %v1328 = vld [vmem:[#allocation2 + $0xa4] sm:$0x1]
      %v1329 = vld [vmem:[#allocation2 + $0xb0] sm:$0x1]
      %v1330 = vld [vmem:[#allocation2 + $0xbc] sm:$0x1]
      %v1331 = vld [vmem:[#allocation2] sm:$0xe]
      %v1332 = vld [vmem:[#allocation2 + $0xc] sm:$0xe]
      %v1333 = vld [vmem:[#allocation2 + $0x18] sm:$0xe]
      %v1334 = vld [vmem:[#allocation2 + $0x24] sm:$0xe]
      %v1335 = vld [vmem:[#allocation2 + $0x30] sm:$0xe]
      %v1336 = vld [vmem:[#allocation2 + $0x3c] sm:$0xe]
      %v1337 = vld [vmem:[#allocation2 + $0x48] sm:$0xe]
      %v1338 = vld [vmem:[#allocation2 + $0x54] sm:$0xe]
      %v1339 = vld [vmem:[#allocation2 + $0x60] sm:$0xe]
      %v1340 = vld [vmem:[#allocation2 + $0x6c] sm:$0xe]
      %v1341 = vld [vmem:[#allocation2 + $0x78] sm:$0xe]
      %v1342 = vld [vmem:[#allocation2 + $0x84] sm:$0xe]
      %v1343 = vld [vmem:[#allocation2 + $0x90] sm:$0xe]
      %v1344 = vld [vmem:[#allocation2 + $0x9c] sm:$0xe]
      %v1345 = vld [vmem:[#allocation2 + $0xa8] sm:$0xe]
      %v1346 = vld [vmem:[#allocation2 + $0xb4] sm:$0xe]
      %v1379 = vunpack.c.l.b16 %v1283
      %v1380 = vunpack.c.l.b16 %v1284
      %v1381 = vunpack.c.l.b16 %v1285
      %v1382 = vunpack.c.l.b16 %v1286
      %v1383 = vunpack.c.l.b16 %v1287
      %v1384 = vunpack.c.l.b16 %v1288
      %v1385 = vunpack.c.l.b16 %v1289
      %v1386 = vunpack.c.l.b16 %v1290
      %v1387 = vunpack.c.l.b16 %v1291
      %v1388 = vunpack.c.l.b16 %v1292
      %v1389 = vunpack.c.l.b16 %v1293
      %v1390 = vunpack.c.l.b16 %v1294
      %v1391 = vunpack.c.l.b16 %v1295
      %v1392 = vunpack.c.l.b16 %v1296
      %v1393 = vunpack.c.l.b16 %v1297
      %v1394 = vunpack.c.l.b16 %v1298
      %v1395 = vunpack.c.l.b16 %v1299
      %v1396 = vunpack.c.l.b16 %v1300
      %v1397 = vunpack.c.l.b16 %v1301
      %v1398 = vunpack.c.l.b16 %v1302
      %v1399 = vunpack.c.l.b16 %v1303
      %v1400 = vunpack.c.l.b16 %v1304
      %v1401 = vunpack.c.l.b16 %v1305
      %v1402 = vunpack.c.l.b16 %v1306
      %v1403 = vunpack.c.l.b16 %v1307
      %v1404 = vunpack.c.l.b16 %v1308
      %v1405 = vunpack.c.l.b16 %v1309
      %v1406 = vunpack.c.l.b16 %v1310
      %v1407 = vunpack.c.l.b16 %v1311
      %v1408 = vunpack.c.l.b16 %v1312
      %v1409 = vunpack.c.l.b16 %v1313
      %v1410 = vunpack.c.l.b16 %v1314
      %v1411 = vpack.c.b16 %v1380, %v1379
      %v1412 = vpack.c.b16 %v1382, %v1381
      %v1413 = vpack.c.b16 %v1384, %v1383
      %v1414 = vpack.c.b16 %v1386, %v1385
      %v1415 = vpack.c.b16 %v1388, %v1387
      %v1416 = vpack.c.b16 %v1390, %v1389
      %v1417 = vpack.c.b16 %v1392, %v1391
      %v1418 = vpack.c.b16 %v1394, %v1393
      %v1419 = vpack.c.b16 %v1396, %v1395
      %v1420 = vpack.c.b16 %v1398, %v1397
      %v1421 = vpack.c.b16 %v1400, %v1399
      %v1422 = vpack.c.b16 %v1402, %v1401
      %v1423 = vpack.c.b16 %v1404, %v1403
      %v1424 = vpack.c.b16 %v1406, %v1405
      %v1425 = vpack.c.b16 %v1408, %v1407
      %v1426 = vpack.c.b16 %v1410, %v1409
      %v1459 = vunpack.c.l.b16 %v1315
      %v1460 = vunpack.c.l.b16 %v1316
      %v1461 = vunpack.c.l.b16 %v1317
      %v1462 = vunpack.c.l.b16 %v1318
      %v1463 = vunpack.c.l.b16 %v1319
      %v1464 = vunpack.c.l.b16 %v1320
      %v1465 = vunpack.c.l.b16 %v1321
      %v1466 = vunpack.c.l.b16 %v1322
      %v1467 = vunpack.c.l.b16 %v1323
      %v1468 = vunpack.c.l.b16 %v1324
      %v1469 = vunpack.c.l.b16 %v1325
      %v1470 = vunpack.c.l.b16 %v1326
      %v1471 = vunpack.c.l.b16 %v1327
      %v1472 = vunpack.c.l.b16 %v1328
      %v1473 = vunpack.c.l.b16 %v1329
      %v1474 = vunpack.c.l.b16 %v1330
      %v1475 = vpack.c.b16 %v1459, %v1459
      %v1476 = vpack.c.b16 %v1460, %v1460
      %v1477 = vpack.c.b16 %v1461, %v1461
      %v1478 = vpack.c.b16 %v1462, %v1462
      %v1479 = vpack.c.b16 %v1463, %v1463
      %v1480 = vpack.c.b16 %v1464, %v1464
      %v1481 = vpack.c.b16 %v1465, %v1465
      %v1482 = vpack.c.b16 %v1466, %v1466
      %v1483 = vpack.c.b16 %v1467, %v1467
      %v1484 = vpack.c.b16 %v1468, %v1468
      %v1485 = vpack.c.b16 %v1469, %v1469
      %v1486 = vpack.c.b16 %v1470, %v1470
      %v1487 = vpack.c.b16 %v1471, %v1471
      %v1488 = vpack.c.b16 %v1472, %v1472
      %v1489 = vpack.c.b16 %v1473, %v1473
      %v1490 = vpack.c.b16 %v1474, %v1474
      %vm1491 = vsmask.f32 7424
      %v1493 = vshrl.u32 %v1411, 16
      %v1495 = vshll.u32 %v1411, 16
      %v1497 = vrot.slane %v1495, 1
      %v1498 = vor.u32 %v1493, %v1497
      %v1500 = vshll.u32 %v1475, 16
      %v1502 = vrot.slane %v1500, 1
      %v1503 = vsel %vm1491, %v1498, %v1502
      %v1505 = vshrl.u32 %v1412, 16
      %v1507 = vshll.u32 %v1412, 16
      %v1509 = vrot.slane %v1507, 1
      %v1510 = vor.u32 %v1505, %v1509
      %v1512 = vshll.u32 %v1476, 16
      %v1514 = vrot.slane %v1512, 1
      %v1515 = vsel %vm1491, %v1510, %v1514
      %v1517 = vshrl.u32 %v1413, 16
      %v1519 = vshll.u32 %v1413, 16
      %v1521 = vrot.slane %v1519, 1
      %v1522 = vor.u32 %v1517, %v1521
      %v1524 = vshll.u32 %v1477, 16
      %v1526 = vrot.slane %v1524, 1
      %v1527 = vsel %vm1491, %v1522, %v1526
      %v1529 = vshrl.u32 %v1414, 16
      %v1531 = vshll.u32 %v1414, 16
      %v1533 = vrot.slane %v1531, 1
      %v1534 = vor.u32 %v1529, %v1533
      %v1536 = vshll.u32 %v1478, 16
      %v1538 = vrot.slane %v1536, 1
      %v1539 = vsel %vm1491, %v1534, %v1538
      %v1541 = vshrl.u32 %v1415, 16
      %v1543 = vshll.u32 %v1415, 16
      %v1545 = vrot.slane %v1543, 1
      %v1546 = vor.u32 %v1541, %v1545
      %v1548 = vshll.u32 %v1479, 16
      %v1550 = vrot.slane %v1548, 1
      %v1551 = vsel %vm1491, %v1546, %v1550
      %v1553 = vshrl.u32 %v1416, 16
      %v1555 = vshll.u32 %v1416, 16
      %v1557 = vrot.slane %v1555, 1
      %v1558 = vor.u32 %v1553, %v1557
      %v1560 = vshll.u32 %v1480, 16
      %v1562 = vrot.slane %v1560, 1
      %v1563 = vsel %vm1491, %v1558, %v1562
      %v1565 = vshrl.u32 %v1417, 16
      %v1567 = vshll.u32 %v1417, 16
      %v1569 = vrot.slane %v1567, 1
      %v1570 = vor.u32 %v1565, %v1569
      %v1572 = vshll.u32 %v1481, 16
      %v1574 = vrot.slane %v1572, 1
      %v1575 = vsel %vm1491, %v1570, %v1574
      %v1577 = vshrl.u32 %v1418, 16
      %v1579 = vshll.u32 %v1418, 16
      %v1581 = vrot.slane %v1579, 1
      %v1582 = vor.u32 %v1577, %v1581
      %v1584 = vshll.u32 %v1482, 16
      %v1586 = vrot.slane %v1584, 1
      %v1587 = vsel %vm1491, %v1582, %v1586
      %v1589 = vshrl.u32 %v1419, 16
      %v1591 = vshll.u32 %v1419, 16
      %v1593 = vrot.slane %v1591, 1
      %v1594 = vor.u32 %v1589, %v1593
      %v1596 = vshll.u32 %v1483, 16
      %v1598 = vrot.slane %v1596, 1
      %v1599 = vsel %vm1491, %v1594, %v1598
      %v1601 = vshrl.u32 %v1420, 16
      %v1603 = vshll.u32 %v1420, 16
      %v1605 = vrot.slane %v1603, 1
      %v1606 = vor.u32 %v1601, %v1605
      %v1608 = vshll.u32 %v1484, 16
      %v1610 = vrot.slane %v1608, 1
      %v1611 = vsel %vm1491, %v1606, %v1610
      %v1613 = vshrl.u32 %v1421, 16
      %v1615 = vshll.u32 %v1421, 16
      %v1617 = vrot.slane %v1615, 1
      %v1618 = vor.u32 %v1613, %v1617
      %v1620 = vshll.u32 %v1485, 16
      %v1622 = vrot.slane %v1620, 1
      %v1623 = vsel %vm1491, %v1618, %v1622
      %v1625 = vshrl.u32 %v1422, 16
      %v1627 = vshll.u32 %v1422, 16
      %v1629 = vrot.slane %v1627, 1
      %v1630 = vor.u32 %v1625, %v1629
      %v1632 = vshll.u32 %v1486, 16
      %v1634 = vrot.slane %v1632, 1
      %v1635 = vsel %vm1491, %v1630, %v1634
      %v1637 = vshrl.u32 %v1423, 16
      %v1639 = vshll.u32 %v1423, 16
      %v1641 = vrot.slane %v1639, 1
      %v1642 = vor.u32 %v1637, %v1641
      %v1644 = vshll.u32 %v1487, 16
      %v1646 = vrot.slane %v1644, 1
      %v1647 = vsel %vm1491, %v1642, %v1646
      %v1649 = vshrl.u32 %v1424, 16
      %v1651 = vshll.u32 %v1424, 16
      %v1653 = vrot.slane %v1651, 1
      %v1654 = vor.u32 %v1649, %v1653
      %v1656 = vshll.u32 %v1488, 16
      %v1658 = vrot.slane %v1656, 1
      %v1659 = vsel %vm1491, %v1654, %v1658
      %v1661 = vshrl.u32 %v1425, 16
      %v1663 = vshll.u32 %v1425, 16
      %v1665 = vrot.slane %v1663, 1
      %v1666 = vor.u32 %v1661, %v1665
      %v1668 = vshll.u32 %v1489, 16
      %v1670 = vrot.slane %v1668, 1
      %v1671 = vsel %vm1491, %v1666, %v1670
      %v1673 = vshrl.u32 %v1426, 16
      %v1675 = vshll.u32 %v1426, 16
      %v1677 = vrot.slane %v1675, 1
      %v1678 = vor.u32 %v1673, %v1677
      %v1680 = vshll.u32 %v1490, 16
      %v1682 = vrot.slane %v1680, 1
      %v1683 = vsel %vm1491, %v1678, %v1682
      %v1716 = vunpack.c.l.b16 %v1331
      %v1717 = vunpack.c.l.b16 %v1332
      %v1718 = vunpack.c.l.b16 %v1333
      %v1719 = vunpack.c.l.b16 %v1334
      %v1720 = vunpack.c.l.b16 %v1335
      %v1721 = vunpack.c.l.b16 %v1336
      %v1722 = vunpack.c.l.b16 %v1337
      %v1723 = vunpack.c.l.b16 %v1338
      %v1724 = vunpack.c.l.b16 %v1339
      %v1725 = vunpack.c.l.b16 %v1340
      %v1726 = vunpack.c.l.b16 %v1341
      %v1727 = vunpack.c.l.b16 %v1342
      %v1728 = vunpack.c.l.b16 %v1343
      %v1729 = vunpack.c.l.b16 %v1344
      %v1730 = vunpack.c.l.b16 %v1345
      %v1731 = vunpack.c.l.b16 %v1346
      %v1732 = vpack.c.b16 %v1380, %v1716
      %v1733 = vpack.c.b16 %v1382, %v1717
      %v1734 = vpack.c.b16 %v1384, %v1718
      %v1735 = vpack.c.b16 %v1386, %v1719
      %v1736 = vpack.c.b16 %v1388, %v1720
      %v1737 = vpack.c.b16 %v1390, %v1721
      %v1738 = vpack.c.b16 %v1392, %v1722
      %v1739 = vpack.c.b16 %v1394, %v1723
      %v1740 = vpack.c.b16 %v1396, %v1724
      %v1741 = vpack.c.b16 %v1398, %v1725
      %v1742 = vpack.c.b16 %v1400, %v1726
      %v1743 = vpack.c.b16 %v1402, %v1727
      %v1744 = vpack.c.b16 %v1404, %v1728
      %v1745 = vpack.c.b16 %v1406, %v1729
      %v1746 = vpack.c.b16 %v1408, %v1730
      %v1747 = vpack.c.b16 %v1410, %v1731
      %vm1748 = vcmask 1046528
      %v1749 = vrot.slane %v1732, 1
      %v1750 = vrot.slane %v1475, 1
      %v1751 = vsel %vm1748, %v1749, %v1750
      %v1752 = vrot.slane %v1733, 1
      %v1753 = vrot.slane %v1476, 1
      %v1754 = vsel %vm1748, %v1752, %v1753
      %v1755 = vrot.slane %v1734, 1
      %v1756 = vrot.slane %v1477, 1
      %v1757 = vsel %vm1748, %v1755, %v1756
      %v1758 = vrot.slane %v1735, 1
      %v1759 = vrot.slane %v1478, 1
      %v1760 = vsel %vm1748, %v1758, %v1759
      %v1761 = vrot.slane %v1736, 1
      %v1762 = vrot.slane %v1479, 1
      %v1763 = vsel %vm1748, %v1761, %v1762
      %v1764 = vrot.slane %v1737, 1
      %v1765 = vrot.slane %v1480, 1
      %v1766 = vsel %vm1748, %v1764, %v1765
      %v1767 = vrot.slane %v1738, 1
      %v1768 = vrot.slane %v1481, 1
      %v1769 = vsel %vm1748, %v1767, %v1768
      %v1770 = vrot.slane %v1739, 1
      %v1771 = vrot.slane %v1482, 1
      %v1772 = vsel %vm1748, %v1770, %v1771
      %v1773 = vrot.slane %v1740, 1
      %v1774 = vrot.slane %v1483, 1
      %v1775 = vsel %vm1748, %v1773, %v1774
      %v1776 = vrot.slane %v1741, 1
      %v1777 = vrot.slane %v1484, 1
      %v1778 = vsel %vm1748, %v1776, %v1777
      %v1779 = vrot.slane %v1742, 1
      %v1780 = vrot.slane %v1485, 1
      %v1781 = vsel %vm1748, %v1779, %v1780
      %v1782 = vrot.slane %v1743, 1
      %v1783 = vrot.slane %v1486, 1
      %v1784 = vsel %vm1748, %v1782, %v1783
      %v1785 = vrot.slane %v1744, 1
      %v1786 = vrot.slane %v1487, 1
      %v1787 = vsel %vm1748, %v1785, %v1786
      %v1788 = vrot.slane %v1745, 1
      %v1789 = vrot.slane %v1488, 1
      %v1790 = vsel %vm1748, %v1788, %v1789
      %v1791 = vrot.slane %v1746, 1
      %v1792 = vrot.slane %v1489, 1
      %v1793 = vsel %vm1748, %v1791, %v1792
      %v1794 = vrot.slane %v1747, 1
      %v1795 = vrot.slane %v1490, 1
      %v1796 = vsel %vm1748, %v1794, %v1795
      %v1813 = vld [vmem:[%s1] sm:$0xf]
      %v1814 = vld [vmem:[%s1 + $0x4] sm:$0xf]
      %v1815 = vld [vmem:[%s1 + $0x8] sm:$0xf]
      %v1816 = vld [vmem:[%s1 + $0xc] sm:$0xf]
      %v1817 = vld [vmem:[%s1 + $0x10] sm:$0xf]
      %v1818 = vld [vmem:[%s1 + $0x14] sm:$0xf]
      %v1819 = vld [vmem:[%s1 + $0x18] sm:$0xf]
      %v1820 = vld [vmem:[%s1 + $0x1c] sm:$0xf]
      %v1821 = vld [vmem:[%s1 + $0x20] sm:$0xf]
      %v1822 = vld [vmem:[%s1 + $0x24] sm:$0xf]
      %v1823 = vld [vmem:[%s1 + $0x28] sm:$0xf]
      %v1824 = vld [vmem:[%s1 + $0x2c] sm:$0xf]
      %v1825 = vld [vmem:[%s1 + $0x30] sm:$0xf]
      %v1826 = vld [vmem:[%s1 + $0x34] sm:$0xf]
      %v1827 = vld [vmem:[%s1 + $0x38] sm:$0xf]
      %v1828 = vld [vmem:[%s1 + $0x3c] sm:$0xf]
      %v1829 = vld [vmem:[%s1 + $0x40] sm:$0xf]
      %v1830 = vld [vmem:[%s1 + $0x44] sm:$0xf]
      %v1831 = vld [vmem:[%s1 + $0x48] sm:$0xf]
      %v1832 = vld [vmem:[%s1 + $0x4c] sm:$0xf]
      %v1833 = vld [vmem:[%s1 + $0x50] sm:$0xf]
      %v1834 = vld [vmem:[%s1 + $0x54] sm:$0xf]
      %v1835 = vld [vmem:[%s1 + $0x58] sm:$0xf]
      %v1836 = vld [vmem:[%s1 + $0x5c] sm:$0xf]
      %v1837 = vld [vmem:[%s1 + $0x60] sm:$0xf]
      %v1838 = vld [vmem:[%s1 + $0x64] sm:$0xf]
      %v1839 = vld [vmem:[%s1 + $0x68] sm:$0xf]
      %v1840 = vld [vmem:[%s1 + $0x6c] sm:$0xf]
      %v1841 = vld [vmem:[%s1 + $0x70] sm:$0xf]
      %v1842 = vld [vmem:[%s1 + $0x74] sm:$0xf]
      %v1843 = vld [vmem:[%s1 + $0x78] sm:$0xf]
      %v1844 = vld [vmem:[%s1 + $0x7c] sm:$0xf]
      %v1845 = vld [vmem:[%s1 + $0x80] sm:$0xf]
      %v1846 = vld [vmem:[%s1 + $0x84] sm:$0xf]
      %v1847 = vld [vmem:[%s1 + $0x88] sm:$0xf]
      %v1848 = vld [vmem:[%s1 + $0x8c] sm:$0xf]
      %v1849 = vld [vmem:[%s1 + $0x90] sm:$0xf]
      %v1850 = vld [vmem:[%s1 + $0x94] sm:$0xf]
      %v1851 = vld [vmem:[%s1 + $0x98] sm:$0xf]
      %v1852 = vld [vmem:[%s1 + $0x9c] sm:$0xf]
      %v1853 = vld [vmem:[%s1 + $0xa0] sm:$0xf]
      %v1854 = vld [vmem:[%s1 + $0xa4] sm:$0xf]
      %v1855 = vld [vmem:[%s1 + $0xa8] sm:$0xf]
      %v1856 = vld [vmem:[%s1 + $0xac] sm:$0xf]
      %v1857 = vld [vmem:[%s1 + $0xb0] sm:$0xf]
      %v1858 = vld [vmem:[%s1 + $0xb4] sm:$0xf]
      %v1859 = vld [vmem:[%s1 + $0xb8] sm:$0xf]
      %v1860 = vld [vmem:[%s1 + $0xbc] sm:$0xf]
      %v1909 = vunpack.c.l.b16 %v1813
      %v1910 = vunpack.c.l.b16 %v1814
      %v1911 = vunpack.c.l.b16 %v1815
      %v1912 = vunpack.c.l.b16 %v1816
      %v1913 = vunpack.c.l.b16 %v1817
      %v1914 = vunpack.c.l.b16 %v1818
      %v1915 = vunpack.c.l.b16 %v1819
      %v1916 = vunpack.c.l.b16 %v1820
      %v1917 = vunpack.c.l.b16 %v1821
      %v1918 = vunpack.c.l.b16 %v1822
      %v1919 = vunpack.c.l.b16 %v1823
      %v1920 = vunpack.c.l.b16 %v1824
      %v1921 = vunpack.c.l.b16 %v1825
      %v1922 = vunpack.c.l.b16 %v1826
      %v1923 = vunpack.c.l.b16 %v1827
      %v1924 = vunpack.c.l.b16 %v1828
      %v1925 = vunpack.c.l.b16 %v1829
      %v1926 = vunpack.c.l.b16 %v1830
      %v1927 = vunpack.c.l.b16 %v1831
      %v1928 = vunpack.c.l.b16 %v1832
      %v1929 = vunpack.c.l.b16 %v1833
      %v1930 = vunpack.c.l.b16 %v1834
      %v1931 = vunpack.c.l.b16 %v1835
      %v1932 = vunpack.c.l.b16 %v1836
      %v1933 = vunpack.c.l.b16 %v1837
      %v1934 = vunpack.c.l.b16 %v1838
      %v1935 = vunpack.c.l.b16 %v1839
      %v1936 = vunpack.c.l.b16 %v1840
      %v1937 = vunpack.c.l.b16 %v1841
      %v1938 = vunpack.c.l.b16 %v1842
      %v1939 = vunpack.c.l.b16 %v1843
      %v1940 = vunpack.c.l.b16 %v1844
      %v1941 = vunpack.c.l.b16 %v1845
      %v1942 = vunpack.c.l.b16 %v1846
      %v1943 = vunpack.c.l.b16 %v1847
      %v1944 = vunpack.c.l.b16 %v1848
      %v1945 = vunpack.c.l.b16 %v1849
      %v1946 = vunpack.c.l.b16 %v1850
      %v1947 = vunpack.c.l.b16 %v1851
      %v1948 = vunpack.c.l.b16 %v1852
      %v1949 = vunpack.c.l.b16 %v1853
      %v1950 = vunpack.c.l.b16 %v1854
      %v1951 = vunpack.c.l.b16 %v1855
      %v1952 = vunpack.c.l.b16 %v1856
      %v1953 = vunpack.c.l.b16 %v1857
      %v1954 = vunpack.c.l.b16 %v1858
      %v1955 = vunpack.c.l.b16 %v1859
      %v1956 = vunpack.c.l.b16 %v1860
      %v1957 = vpack.c.b16 %v1910, %v1909
      %v1958 = vpack.c.b16 %v1912, %v1911
      %v1959 = vpack.c.b16 %v1914, %v1913
      %v1960 = vpack.c.b16 %v1916, %v1915
      %v1961 = vpack.c.b16 %v1918, %v1917
      %v1962 = vpack.c.b16 %v1920, %v1919
      %v1963 = vpack.c.b16 %v1922, %v1921
      %v1964 = vpack.c.b16 %v1924, %v1923
      %v1965 = vpack.c.b16 %v1926, %v1925
      %v1966 = vpack.c.b16 %v1928, %v1927
      %v1967 = vpack.c.b16 %v1930, %v1929
      %v1968 = vpack.c.b16 %v1932, %v1931
      %v1969 = vpack.c.b16 %v1934, %v1933
      %v1970 = vpack.c.b16 %v1936, %v1935
      %v1971 = vpack.c.b16 %v1938, %v1937
      %v1972 = vpack.c.b16 %v1940, %v1939
      %v1973 = vpack.c.b16 %v1942, %v1941
      %v1974 = vpack.c.b16 %v1944, %v1943
      %v1975 = vpack.c.b16 %v1946, %v1945
      %v1976 = vpack.c.b16 %v1948, %v1947
      %v1977 = vpack.c.b16 %v1950, %v1949
      %v1978 = vpack.c.b16 %v1952, %v1951
      %v1979 = vpack.c.b16 %v1954, %v1953
      %v1980 = vpack.c.b16 %v1956, %v1955
      %2005 = vmatprep.subr.bf16.mxu0 0
      %2006 = vmatpush1.bf16.msra.mxu0 %v1964
      %2007 = vmatprep.subr.bf16.mxu0 0
      %2008 = vmatpush1.bf16.msra.mxu0 %v1963
      %2009 = vmatprep.subr.bf16.mxu0 0
      %2010 = vmatpush1.bf16.msra.mxu0 %v1962
      %2011 = vmatprep.subr.bf16.mxu0 0
      %2012 = vmatpush1.bf16.msra.mxu0 %v1961
      %2013 = vmatprep.subr.bf16.mxu0 0
      %2014 = vmatpush1.bf16.msra.mxu0 %v1960
      %2015 = vmatprep.subr.bf16.mxu0 0
      %2016 = vmatpush1.bf16.msra.mxu0 %v1959
      %2017 = vmatprep.subr.bf16.mxu0 0
      %2018 = vmatpush1.bf16.msra.mxu0 %v1958
      %2019 = vmatprep.subr.bf16.mxu0 0
      %2020 = vmatpush1.bf16.msra.mxu0 %v1957
      %2021 = vmatprep.subr.bf16.mxu0 0
      %2022 = vmatpush2.bf16.msra.mxu0 %v1972
      %2023 = vmatprep.subr.bf16.mxu0 0
      %2024 = vmatpush2.bf16.msra.mxu0 %v1971
      %2025 = vmatprep.subr.bf16.mxu0 0
      %2026 = vmatpush2.bf16.msra.mxu0 %v1970
      %2027 = vmatprep.subr.bf16.mxu0 0
      %2028 = vmatpush2.bf16.msra.mxu0 %v1969
      %2029 = vmatprep.subr.bf16.mxu0 0
      %2030 = vmatpush2.bf16.msra.mxu0 %v1968
      %2031 = vmatprep.subr.bf16.mxu0 0
      %2032 = vmatpush2.bf16.msra.mxu0 %v1967
      %2033 = vmatprep.subr.bf16.mxu0 0
      %2034 = vmatpush2.bf16.msra.mxu0 %v1966
      %2035 = vmatprep.subr.bf16.mxu0 0
      %2036 = vmatpush2.bf16.msra.mxu0 %v1965
      %2037 = vmatprep.mubr.bf16.mxu0 %v1503
      %2038 = vmatmul.mubr.bf16.gmra.mxu0 %v1411
      %v2039 = vpop.f32.mrf.mxu0
      %v2040 = vadd.f32 0.0, %v2039
      %v2041 = vpop.f32.mrf.mxu0
      %v2042 = vpop.f32.mrf.mxu0
      %v2043 = vadd.f32 0.0, %v2042
      %v2044 = vpop.f32.mrf.mxu0
      %2045 = vmatprep.mubr.bf16.mxu0 %v1515
      %2046 = vmatmul.mubr.bf16.gmra.mxu0 %v1412
      %v2047 = vpop.f32.mrf.mxu0
      %v2048 = vadd.f32 0.0, %v2047
      %v2049 = vpop.f32.mrf.mxu0
      %v2050 = vpop.f32.mrf.mxu0
      %v2051 = vadd.f32 0.0, %v2050
      %v2052 = vpop.f32.mrf.mxu0
      %2053 = vmatprep.mubr.bf16.mxu0 %v1527
      %2054 = vmatmul.mubr.bf16.gmra.mxu0 %v1413
      %v2055 = vpop.f32.mrf.mxu0
      %v2056 = vadd.f32 0.0, %v2055
      %v2057 = vpop.f32.mrf.mxu0
      %v2058 = vpop.f32.mrf.mxu0
      %v2059 = vadd.f32 0.0, %v2058
      %v2060 = vpop.f32.mrf.mxu0
      %2061 = vmatprep.mubr.bf16.mxu0 %v1539
      %2062 = vmatmul.mubr.bf16.gmra.mxu0 %v1414
      %v2063 = vpop.f32.mrf.mxu0
      %v2064 = vadd.f32 0.0, %v2063
      %v2065 = vpop.f32.mrf.mxu0
      %v2066 = vpop.f32.mrf.mxu0
      %v2067 = vadd.f32 0.0, %v2066
      %v2068 = vpop.f32.mrf.mxu0
      %2069 = vmatprep.mubr.bf16.mxu0 %v1551
      %2070 = vmatmul.mubr.bf16.gmra.mxu0 %v1415
      %v2071 = vpop.f32.mrf.mxu0
      %v2072 = vadd.f32 0.0, %v2071
      %v2073 = vpop.f32.mrf.mxu0
      %v2074 = vpop.f32.mrf.mxu0
      %v2075 = vadd.f32 0.0, %v2074
      %v2076 = vpop.f32.mrf.mxu0
      %2077 = vmatprep.mubr.bf16.mxu0 %v1563
      %2078 = vmatmul.mubr.bf16.gmra.mxu0 %v1416
      %v2079 = vpop.f32.mrf.mxu0
      %v2080 = vadd.f32 0.0, %v2079
      %v2081 = vpop.f32.mrf.mxu0
      %v2082 = vpop.f32.mrf.mxu0
      %v2083 = vadd.f32 0.0, %v2082
      %v2084 = vpop.f32.mrf.mxu0
      %2085 = vmatprep.mubr.bf16.mxu0 %v1575
      %2086 = vmatmul.mubr.bf16.gmra.mxu0 %v1417
      %v2087 = vpop.f32.mrf.mxu0
      %v2088 = vadd.f32 0.0, %v2087
      %v2089 = vpop.f32.mrf.mxu0
      %v2090 = vpop.f32.mrf.mxu0
      %v2091 = vadd.f32 0.0, %v2090
      %v2092 = vpop.f32.mrf.mxu0
      %2093 = vmatprep.mubr.bf16.mxu0 %v1587
      %2094 = vmatmul.mubr.bf16.gmra.mxu0 %v1418
      %v2095 = vpop.f32.mrf.mxu0
      %v2096 = vadd.f32 0.0, %v2095
      %v2097 = vpop.f32.mrf.mxu0
      %v2098 = vpop.f32.mrf.mxu0
      %v2099 = vadd.f32 0.0, %v2098
      %v2100 = vpop.f32.mrf.mxu0
      %2101 = vmatprep.mubr.bf16.mxu0 %v1599
      %2102 = vmatmul.mubr.bf16.gmra.mxu0 %v1419
      %v2103 = vpop.f32.mrf.mxu0
      %v2104 = vadd.f32 0.0, %v2103
      %v2105 = vpop.f32.mrf.mxu0
      %v2106 = vpop.f32.mrf.mxu0
      %v2107 = vadd.f32 0.0, %v2106
      %v2108 = vpop.f32.mrf.mxu0
      %2109 = vmatprep.mubr.bf16.mxu0 %v1611
      %2110 = vmatmul.mubr.bf16.gmra.mxu0 %v1420
      %v2111 = vpop.f32.mrf.mxu0
      %v2112 = vadd.f32 0.0, %v2111
      %v2113 = vpop.f32.mrf.mxu0
      %v2114 = vpop.f32.mrf.mxu0
      %v2115 = vadd.f32 0.0, %v2114
      %v2116 = vpop.f32.mrf.mxu0
      %2117 = vmatprep.mubr.bf16.mxu0 %v1623
      %2118 = vmatmul.mubr.bf16.gmra.mxu0 %v1421
      %v2119 = vpop.f32.mrf.mxu0
      %v2120 = vadd.f32 0.0, %v2119
      %v2121 = vpop.f32.mrf.mxu0
      %v2122 = vpop.f32.mrf.mxu0
      %v2123 = vadd.f32 0.0, %v2122
      %v2124 = vpop.f32.mrf.mxu0
      %2125 = vmatprep.mubr.bf16.mxu0 %v1635
      %2126 = vmatmul.mubr.bf16.gmra.mxu0 %v1422
      %v2127 = vpop.f32.mrf.mxu0
      %v2128 = vadd.f32 0.0, %v2127
      %v2129 = vpop.f32.mrf.mxu0
      %v2130 = vpop.f32.mrf.mxu0
      %v2131 = vadd.f32 0.0, %v2130
      %v2132 = vpop.f32.mrf.mxu0
      %2133 = vmatprep.mubr.bf16.mxu0 %v1647
      %2134 = vmatmul.mubr.bf16.gmra.mxu0 %v1423
      %v2135 = vpop.f32.mrf.mxu0
      %v2136 = vadd.f32 0.0, %v2135
      %v2137 = vpop.f32.mrf.mxu0
      %v2138 = vpop.f32.mrf.mxu0
      %v2139 = vadd.f32 0.0, %v2138
      %v2140 = vpop.f32.mrf.mxu0
      %2141 = vmatprep.mubr.bf16.mxu0 %v1659
      %2142 = vmatmul.mubr.bf16.gmra.mxu0 %v1424
      %v2143 = vpop.f32.mrf.mxu0
      %v2144 = vadd.f32 0.0, %v2143
      %v2145 = vpop.f32.mrf.mxu0
      %v2146 = vpop.f32.mrf.mxu0
      %v2147 = vadd.f32 0.0, %v2146
      %v2148 = vpop.f32.mrf.mxu0
      %2149 = vmatprep.mubr.bf16.mxu0 %v1671
      %2150 = vmatmul.mubr.bf16.gmra.mxu0 %v1425
      %v2151 = vpop.f32.mrf.mxu0
      %v2152 = vadd.f32 0.0, %v2151
      %v2153 = vpop.f32.mrf.mxu0
      %v2154 = vpop.f32.mrf.mxu0
      %v2155 = vadd.f32 0.0, %v2154
      %v2156 = vpop.f32.mrf.mxu0
      %2157 = vmatprep.mubr.bf16.mxu0 %v1683
      %2158 = vmatmul.mubr.bf16.gmra.mxu0 %v1426
      %v2159 = vpop.f32.mrf.mxu0
      %v2160 = vadd.f32 0.0, %v2159
      %v2161 = vpop.f32.mrf.mxu0
      %v2162 = vpop.f32.mrf.mxu0
      %v2163 = vadd.f32 0.0, %v2162
      %v2164 = vpop.f32.mrf.mxu0
      %2165 = vdwg.mxu0
      %2166 = vmatprep.subr.bf16.mxu0 0
      %2167 = vmatpush1.bf16.msra.mxu0 %v1980
      %2168 = vmatprep.subr.bf16.mxu0 0
      %2169 = vmatpush1.bf16.msra.mxu0 %v1979
      %2170 = vmatprep.subr.bf16.mxu0 0
      %2171 = vmatpush1.bf16.msra.mxu0 %v1978
      %2172 = vmatprep.subr.bf16.mxu0 0
      %2173 = vmatpush1.bf16.msra.mxu0 %v1977
      %2174 = vmatprep.subr.bf16.mxu0 0
      %2175 = vmatpush1.bf16.msra.mxu0 %v1976
      %2176 = vmatprep.subr.bf16.mxu0 0
      %2177 = vmatpush1.bf16.msra.mxu0 %v1975
      %2178 = vmatprep.subr.bf16.mxu0 0
      %2179 = vmatpush1.bf16.msra.mxu0 %v1974
      %2180 = vmatprep.subr.bf16.mxu0 0
      %2181 = vmatpush1.bf16.msra.mxu0 %v1973
      %2182 = vmatprep.subr.bf16.mxu0 0
      %2183 = vmatpush2.bf16.msra.mxu0 0
      %2184 = vmatprep.subr.bf16.mxu0 0
      %2185 = vmatpush2.bf16.msra.mxu0 0
      %2186 = vmatprep.subr.bf16.mxu0 0
      %2187 = vmatpush2.bf16.msra.mxu0 0
      %2188 = vmatprep.subr.bf16.mxu0 0
      %2189 = vmatpush2.bf16.msra.mxu0 0
      %2190 = vmatprep.subr.bf16.mxu0 0
      %2191 = vmatpush2.bf16.msra.mxu0 0
      %2192 = vmatprep.subr.bf16.mxu0 0
      %2193 = vmatpush2.bf16.msra.mxu0 0
      %2194 = vmatprep.subr.bf16.mxu0 0
      %2195 = vmatpush2.bf16.msra.mxu0 0
      %2196 = vmatprep.subr.bf16.mxu0 0
      %2197 = vmatpush2.bf16.msra.mxu0 0
      %2198 = vmatprep.mubr.bf16.mxu0 0
      %2199 = vmatmul.mubr.bf16.gmra.mxu0 %v1751
      %v2200 = vpop.f32.mrf.mxu0
      %v2201 = vadd.f32 %v2040, %v2200
      %v2202 = vpop.f32.mrf.mxu0
      %v2203 = vpop.f32.mrf.mxu0
      %v2204 = vadd.f32 %v2043, %v2203
      %v2205 = vpop.f32.mrf.mxu0
      %2206 = vmatprep.mubr.bf16.mxu0 0
      %2207 = vmatmul.mubr.bf16.gmra.mxu0 %v1754
      %v2208 = vpop.f32.mrf.mxu0
      %v2209 = vadd.f32 %v2048, %v2208
      %v2210 = vpop.f32.mrf.mxu0
      %v2211 = vpop.f32.mrf.mxu0
      %v2212 = vadd.f32 %v2051, %v2211
      %v2213 = vpop.f32.mrf.mxu0
      %2214 = vmatprep.mubr.bf16.mxu0 0
      %2215 = vmatmul.mubr.bf16.gmra.mxu0 %v1757
      %v2216 = vpop.f32.mrf.mxu0
      %v2217 = vadd.f32 %v2056, %v2216
      %v2218 = vpop.f32.mrf.mxu0
      %v2219 = vpop.f32.mrf.mxu0
      %v2220 = vadd.f32 %v2059, %v2219
      %v2221 = vpop.f32.mrf.mxu0
      %2222 = vmatprep.mubr.bf16.mxu0 0
      %2223 = vmatmul.mubr.bf16.gmra.mxu0 %v1760
      %v2224 = vpop.f32.mrf.mxu0
      %v2225 = vadd.f32 %v2064, %v2224
      %v2226 = vpop.f32.mrf.mxu0
      %v2227 = vpop.f32.mrf.mxu0
      %v2228 = vadd.f32 %v2067, %v2227
      %v2229 = vpop.f32.mrf.mxu0
      %2230 = vmatprep.mubr.bf16.mxu0 0
      %2231 = vmatmul.mubr.bf16.gmra.mxu0 %v1763
      %v2232 = vpop.f32.mrf.mxu0
      %v2233 = vadd.f32 %v2072, %v2232
      %v2234 = vpop.f32.mrf.mxu0
      %v2235 = vpop.f32.mrf.mxu0
      %v2236 = vadd.f32 %v2075, %v2235
      %v2237 = vpop.f32.mrf.mxu0
      %2238 = vmatprep.mubr.bf16.mxu0 0
      %2239 = vmatmul.mubr.bf16.gmra.mxu0 %v1766
      %v2240 = vpop.f32.mrf.mxu0
      %v2241 = vadd.f32 %v2080, %v2240
      %v2242 = vpop.f32.mrf.mxu0
      %v2243 = vpop.f32.mrf.mxu0
      %v2244 = vadd.f32 %v2083, %v2243
      %v2245 = vpop.f32.mrf.mxu0
      %2246 = vmatprep.mubr.bf16.mxu0 0
      %2247 = vmatmul.mubr.bf16.gmra.mxu0 %v1769
      %v2248 = vpop.f32.mrf.mxu0
      %v2249 = vadd.f32 %v2088, %v2248
      %v2250 = vpop.f32.mrf.mxu0
      %v2251 = vpop.f32.mrf.mxu0
      %v2252 = vadd.f32 %v2091, %v2251
      %v2253 = vpop.f32.mrf.mxu0
      %2254 = vmatprep.mubr.bf16.mxu0 0
      %2255 = vmatmul.mubr.bf16.gmra.mxu0 %v1772
      %v2256 = vpop.f32.mrf.mxu0
      %v2257 = vadd.f32 %v2096, %v2256
      %v2258 = vpop.f32.mrf.mxu0
      %v2259 = vpop.f32.mrf.mxu0
      %v2260 = vadd.f32 %v2099, %v2259
      %v2261 = vpop.f32.mrf.mxu0
      %2262 = vmatprep.mubr.bf16.mxu0 0
      %2263 = vmatmul.mubr.bf16.gmra.mxu0 %v1775
      %v2264 = vpop.f32.mrf.mxu0
      %v2265 = vadd.f32 %v2104, %v2264
      %v2266 = vpop.f32.mrf.mxu0
      %v2267 = vpop.f32.mrf.mxu0
      %v2268 = vadd.f32 %v2107, %v2267
      %v2269 = vpop.f32.mrf.mxu0
      %2270 = vmatprep.mubr.bf16.mxu0 0
      %2271 = vmatmul.mubr.bf16.gmra.mxu0 %v1778
      %v2272 = vpop.f32.mrf.mxu0
      %v2273 = vadd.f32 %v2112, %v2272
      %v2274 = vpop.f32.mrf.mxu0
      %v2275 = vpop.f32.mrf.mxu0
      %v2276 = vadd.f32 %v2115, %v2275
      %v2277 = vpop.f32.mrf.mxu0
      %2278 = vmatprep.mubr.bf16.mxu0 0
      %2279 = vmatmul.mubr.bf16.gmra.mxu0 %v1781
      %v2280 = vpop.f32.mrf.mxu0
      %v2281 = vadd.f32 %v2120, %v2280
      %v2282 = vpop.f32.mrf.mxu0
      %v2283 = vpop.f32.mrf.mxu0
      %v2284 = vadd.f32 %v2123, %v2283
      %v2285 = vpop.f32.mrf.mxu0
      %2286 = vmatprep.mubr.bf16.mxu0 0
      %2287 = vmatmul.mubr.bf16.gmra.mxu0 %v1784
      %v2288 = vpop.f32.mrf.mxu0
      %v2289 = vadd.f32 %v2128, %v2288
      %v2290 = vpop.f32.mrf.mxu0
      %v2291 = vpop.f32.mrf.mxu0
      %v2292 = vadd.f32 %v2131, %v2291
      %v2293 = vpop.f32.mrf.mxu0
      %2294 = vmatprep.mubr.bf16.mxu0 0
      %2295 = vmatmul.mubr.bf16.gmra.mxu0 %v1787
      %v2296 = vpop.f32.mrf.mxu0
      %v2297 = vadd.f32 %v2136, %v2296
      %v2298 = vpop.f32.mrf.mxu0
      %v2299 = vpop.f32.mrf.mxu0
      %v2300 = vadd.f32 %v2139, %v2299
      %v2301 = vpop.f32.mrf.mxu0
      %2302 = vmatprep.mubr.bf16.mxu0 0
      %2303 = vmatmul.mubr.bf16.gmra.mxu0 %v1790
      %v2304 = vpop.f32.mrf.mxu0
      %v2305 = vadd.f32 %v2144, %v2304
      %v2306 = vpop.f32.mrf.mxu0
      %v2307 = vpop.f32.mrf.mxu0
      %v2308 = vadd.f32 %v2147, %v2307
      %v2309 = vpop.f32.mrf.mxu0
      %2310 = vmatprep.mubr.bf16.mxu0 0
      %2311 = vmatmul.mubr.bf16.gmra.mxu0 %v1793
      %v2312 = vpop.f32.mrf.mxu0
      %v2313 = vadd.f32 %v2152, %v2312
      %v2314 = vpop.f32.mrf.mxu0
      %v2315 = vpop.f32.mrf.mxu0
      %v2316 = vadd.f32 %v2155, %v2315
      %v2317 = vpop.f32.mrf.mxu0
      %2318 = vmatprep.mubr.bf16.mxu0 0
      %2319 = vmatmul.mubr.bf16.gmra.mxu0 %v1796
      %v2320 = vpop.f32.mrf.mxu0
      %v2321 = vadd.f32 %v2160, %v2320
      %v2322 = vpop.f32.mrf.mxu0
      %v2323 = vpop.f32.mrf.mxu0
      %v2324 = vadd.f32 %v2163, %v2323
      %v2325 = vpop.f32.mrf.mxu0
      %2326 = vdwg.mxu0
      %2327 = vst [vmem:[#allocation3] sm:$0xff] %v2201
      %2328 = vst [vmem:[#allocation3 + $0x8] sm:$0xff] %v2204
      %2329 = vst [vmem:[#allocation3 + $0x10] sm:$0xff] %v2209
      %2330 = vst [vmem:[#allocation3 + $0x18] sm:$0xff] %v2212
      %2331 = vst [vmem:[#allocation3 + $0x20] sm:$0xff] %v2217
      %2332 = vst [vmem:[#allocation3 + $0x28] sm:$0xff] %v2220
      %2333 = vst [vmem:[#allocation3 + $0x30] sm:$0xff] %v2225
      %2334 = vst [vmem:[#allocation3 + $0x38] sm:$0xff] %v2228
      %2335 = vst [vmem:[#allocation3 + $0x40] sm:$0xff] %v2233
      %2336 = vst [vmem:[#allocation3 + $0x48] sm:$0xff] %v2236
      %2337 = vst [vmem:[#allocation3 + $0x50] sm:$0xff] %v2241
      %2338 = vst [vmem:[#allocation3 + $0x58] sm:$0xff] %v2244
      %2339 = vst [vmem:[#allocation3 + $0x60] sm:$0xff] %v2249
      %2340 = vst [vmem:[#allocation3 + $0x68] sm:$0xff] %v2252
      %2341 = vst [vmem:[#allocation3 + $0x70] sm:$0xff] %v2257
      %2342 = vst [vmem:[#allocation3 + $0x78] sm:$0xff] %v2260
      %2343 = vst [vmem:[#allocation3 + $0x80] sm:$0xff] %v2265
      %2344 = vst [vmem:[#allocation3 + $0x88] sm:$0xff] %v2268
      %2345 = vst [vmem:[#allocation3 + $0x90] sm:$0xff] %v2273
      %2346 = vst [vmem:[#allocation3 + $0x98] sm:$0xff] %v2276
      %2347 = vst [vmem:[#allocation3 + $0xa0] sm:$0xff] %v2281
      %2348 = vst [vmem:[#allocation3 + $0xa8] sm:$0xff] %v2284
      %2349 = vst [vmem:[#allocation3 + $0xb0] sm:$0xff] %v2289
      %2350 = vst [vmem:[#allocation3 + $0xb8] sm:$0xff] %v2292
      %2351 = vst [vmem:[#allocation3 + $0xc0] sm:$0xff] %v2297
      %2352 = vst [vmem:[#allocation3 + $0xc8] sm:$0xff] %v2300
      %2353 = vst [vmem:[#allocation3 + $0xd0] sm:$0xff] %v2305
      %2354 = vst [vmem:[#allocation3 + $0xd8] sm:$0xff] %v2308
      %2355 = vst [vmem:[#allocation3 + $0xe0] sm:$0xff] %v2313
      %2356 = vst [vmem:[#allocation3 + $0xe8] sm:$0xff] %v2316
      %2357 = vst [vmem:[#allocation3 + $0xf0] sm:$0xff] %v2321
      %2358 = vst [vmem:[#allocation3 + $0xf8] sm:$0xff] %v2324
      %v2359 = vld [vmem:[%s677] sm:$0xf]
      %v2360 = vld [vmem:[%s677 + $0x4] sm:$0xf]
      %v2361 = vld [vmem:[%s677 + $0xc] sm:$0xf]
      %v2362 = vld [vmem:[%s677 + $0x10] sm:$0xf]
      %v2363 = vld [vmem:[%s677 + $0x18] sm:$0xf]
      %v2364 = vld [vmem:[%s677 + $0x1c] sm:$0xf]
      %v2365 = vld [vmem:[%s677 + $0x24] sm:$0xf]
      %v2366 = vld [vmem:[%s677 + $0x28] sm:$0xf]
      %v2367 = vld [vmem:[%s677 + $0x30] sm:$0xf]
      %v2368 = vld [vmem:[%s677 + $0x34] sm:$0xf]
      %v2369 = vld [vmem:[%s677 + $0x3c] sm:$0xf]
      %v2370 = vld [vmem:[%s677 + $0x40] sm:$0xf]
      %v2371 = vld [vmem:[%s677 + $0x48] sm:$0xf]
      %v2372 = vld [vmem:[%s677 + $0x4c] sm:$0xf]
      %v2373 = vld [vmem:[%s677 + $0x54] sm:$0xf]
      %v2374 = vld [vmem:[%s677 + $0x58] sm:$0xf]
      %v2375 = vld [vmem:[%s677 + $0x60] sm:$0xf]
      %v2376 = vld [vmem:[%s677 + $0x64] sm:$0xf]
      %v2377 = vld [vmem:[%s677 + $0x6c] sm:$0xf]
      %v2378 = vld [vmem:[%s677 + $0x70] sm:$0xf]
      %v2379 = vld [vmem:[%s677 + $0x78] sm:$0xf]
      %v2380 = vld [vmem:[%s677 + $0x7c] sm:$0xf]
      %v2381 = vld [vmem:[%s677 + $0x84] sm:$0xf]
      %v2382 = vld [vmem:[%s677 + $0x88] sm:$0xf]
      %v2383 = vld [vmem:[%s677 + $0x90] sm:$0xf]
      %v2384 = vld [vmem:[%s677 + $0x94] sm:$0xf]
      %v2385 = vld [vmem:[%s677 + $0x9c] sm:$0xf]
      %v2386 = vld [vmem:[%s677 + $0xa0] sm:$0xf]
      %v2387 = vld [vmem:[%s677 + $0xa8] sm:$0xf]
      %v2388 = vld [vmem:[%s677 + $0xac] sm:$0xf]
      %v2389 = vld [vmem:[%s677 + $0xb4] sm:$0xf]
      %v2390 = vld [vmem:[%s677 + $0xb8] sm:$0xf]
      %v2391 = vld [vmem:[%s677 + $0x8] sm:$0x1]
      %v2392 = vld [vmem:[%s677 + $0x14] sm:$0x1]
      %v2393 = vld [vmem:[%s677 + $0x20] sm:$0x1]
      %v2394 = vld [vmem:[%s677 + $0x2c] sm:$0x1]
      %v2395 = vld [vmem:[%s677 + $0x38] sm:$0x1]
      %v2396 = vld [vmem:[%s677 + $0x44] sm:$0x1]
      %v2397 = vld [vmem:[%s677 + $0x50] sm:$0x1]
      %v2398 = vld [vmem:[%s677 + $0x5c] sm:$0x1]
      %v2399 = vld [vmem:[%s677 + $0x68] sm:$0x1]
      %v2400 = vld [vmem:[%s677 + $0x74] sm:$0x1]
      %v2401 = vld [vmem:[%s677 + $0x80] sm:$0x1]
      %v2402 = vld [vmem:[%s677 + $0x8c] sm:$0x1]
      %v2403 = vld [vmem:[%s677 + $0x98] sm:$0x1]
      %v2404 = vld [vmem:[%s677 + $0xa4] sm:$0x1]
      %v2405 = vld [vmem:[%s677 + $0xb0] sm:$0x1]
      %v2406 = vld [vmem:[%s677 + $0xbc] sm:$0x1]
      %v2407 = vld [vmem:[%s677] sm:$0xe]
      %v2408 = vld [vmem:[%s677 + $0xc] sm:$0xe]
      %v2409 = vld [vmem:[%s677 + $0x18] sm:$0xe]
      %v2410 = vld [vmem:[%s677 + $0x24] sm:$0xe]
      %v2411 = vld [vmem:[%s677 + $0x30] sm:$0xe]
      %v2412 = vld [vmem:[%s677 + $0x3c] sm:$0xe]
      %v2413 = vld [vmem:[%s677 + $0x48] sm:$0xe]
      %v2414 = vld [vmem:[%s677 + $0x54] sm:$0xe]
      %v2415 = vld [vmem:[%s677 + $0x60] sm:$0xe]
      %v2416 = vld [vmem:[%s677 + $0x6c] sm:$0xe]
      %v2417 = vld [vmem:[%s677 + $0x78] sm:$0xe]
      %v2418 = vld [vmem:[%s677 + $0x84] sm:$0xe]
      %v2419 = vld [vmem:[%s677 + $0x90] sm:$0xe]
      %v2420 = vld [vmem:[%s677 + $0x9c] sm:$0xe]
      %v2421 = vld [vmem:[%s677 + $0xa8] sm:$0xe]
      %v2422 = vld [vmem:[%s677 + $0xb4] sm:$0xe]
      %v2455 = vunpack.c.l.b16 %v2359
      %v2456 = vunpack.c.l.b16 %v2360
      %v2457 = vunpack.c.l.b16 %v2361
      %v2458 = vunpack.c.l.b16 %v2362
      %v2459 = vunpack.c.l.b16 %v2363
      %v2460 = vunpack.c.l.b16 %v2364
      %v2461 = vunpack.c.l.b16 %v2365
      %v2462 = vunpack.c.l.b16 %v2366
      %v2463 = vunpack.c.l.b16 %v2367
      %v2464 = vunpack.c.l.b16 %v2368
      %v2465 = vunpack.c.l.b16 %v2369
      %v2466 = vunpack.c.l.b16 %v2370
      %v2467 = vunpack.c.l.b16 %v2371
      %v2468 = vunpack.c.l.b16 %v2372
      %v2469 = vunpack.c.l.b16 %v2373
      %v2470 = vunpack.c.l.b16 %v2374
      %v2471 = vunpack.c.l.b16 %v2375
      %v2472 = vunpack.c.l.b16 %v2376
      %v2473 = vunpack.c.l.b16 %v2377
      %v2474 = vunpack.c.l.b16 %v2378
      %v2475 = vunpack.c.l.b16 %v2379
      %v2476 = vunpack.c.l.b16 %v2380
      %v2477 = vunpack.c.l.b16 %v2381
      %v2478 = vunpack.c.l.b16 %v2382
      %v2479 = vunpack.c.l.b16 %v2383
      %v2480 = vunpack.c.l.b16 %v2384
      %v2481 = vunpack.c.l.b16 %v2385
      %v2482 = vunpack.c.l.b16 %v2386
      %v2483 = vunpack.c.l.b16 %v2387
      %v2484 = vunpack.c.l.b16 %v2388
      %v2485 = vunpack.c.l.b16 %v2389
      %v2486 = vunpack.c.l.b16 %v2390
      %v2487 = vpack.c.b16 %v2456, %v2455
      %v2488 = vpack.c.b16 %v2458, %v2457
      %v2489 = vpack.c.b16 %v2460, %v2459
      %v2490 = vpack.c.b16 %v2462, %v2461
      %v2491 = vpack.c.b16 %v2464, %v2463
      %v2492 = vpack.c.b16 %v2466, %v2465
      %v2493 = vpack.c.b16 %v2468, %v2467
      %v2494 = vpack.c.b16 %v2470, %v2469
      %v2495 = vpack.c.b16 %v2472, %v2471
      %v2496 = vpack.c.b16 %v2474, %v2473
      %v2497 = vpack.c.b16 %v2476, %v2475
      %v2498 = vpack.c.b16 %v2478, %v2477
      %v2499 = vpack.c.b16 %v2480, %v2479
      %v2500 = vpack.c.b16 %v2482, %v2481
      %v2501 = vpack.c.b16 %v2484, %v2483
      %v2502 = vpack.c.b16 %v2486, %v2485
      %v2535 = vunpack.c.l.b16 %v2391
      %v2536 = vunpack.c.l.b16 %v2392
      %v2537 = vunpack.c.l.b16 %v2393
      %v2538 = vunpack.c.l.b16 %v2394
      %v2539 = vunpack.c.l.b16 %v2395
      %v2540 = vunpack.c.l.b16 %v2396
      %v2541 = vunpack.c.l.b16 %v2397
      %v2542 = vunpack.c.l.b16 %v2398
      %v2543 = vunpack.c.l.b16 %v2399
      %v2544 = vunpack.c.l.b16 %v2400
      %v2545 = vunpack.c.l.b16 %v2401
      %v2546 = vunpack.c.l.b16 %v2402
      %v2547 = vunpack.c.l.b16 %v2403
      %v2548 = vunpack.c.l.b16 %v2404
      %v2549 = vunpack.c.l.b16 %v2405
      %v2550 = vunpack.c.l.b16 %v2406
      %v2551 = vpack.c.b16 %v2535, %v2535
      %v2552 = vpack.c.b16 %v2536, %v2536
      %v2553 = vpack.c.b16 %v2537, %v2537
      %v2554 = vpack.c.b16 %v2538, %v2538
      %v2555 = vpack.c.b16 %v2539, %v2539
      %v2556 = vpack.c.b16 %v2540, %v2540
      %v2557 = vpack.c.b16 %v2541, %v2541
      %v2558 = vpack.c.b16 %v2542, %v2542
      %v2559 = vpack.c.b16 %v2543, %v2543
      %v2560 = vpack.c.b16 %v2544, %v2544
      %v2561 = vpack.c.b16 %v2545, %v2545
      %v2562 = vpack.c.b16 %v2546, %v2546
      %v2563 = vpack.c.b16 %v2547, %v2547
      %v2564 = vpack.c.b16 %v2548, %v2548
      %v2565 = vpack.c.b16 %v2549, %v2549
      %v2566 = vpack.c.b16 %v2550, %v2550
      %v2568 = vshrl.u32 %v2487, 16
      %v2570 = vshll.u32 %v2487, 16
      %v2572 = vrot.slane %v2570, 1
      %v2573 = vor.u32 %v2568, %v2572
      %v2575 = vshll.u32 %v2551, 16
      %v2577 = vrot.slane %v2575, 1
      %v2578 = vsel %vm1491, %v2573, %v2577
      %v2580 = vshrl.u32 %v2488, 16
      %v2582 = vshll.u32 %v2488, 16
      %v2584 = vrot.slane %v2582, 1
      %v2585 = vor.u32 %v2580, %v2584
      %v2587 = vshll.u32 %v2552, 16
      %v2589 = vrot.slane %v2587, 1
      %v2590 = vsel %vm1491, %v2585, %v2589
      %v2592 = vshrl.u32 %v2489, 16
      %v2594 = vshll.u32 %v2489, 16
      %v2596 = vrot.slane %v2594, 1
      %v2597 = vor.u32 %v2592, %v2596
      %v2599 = vshll.u32 %v2553, 16
      %v2601 = vrot.slane %v2599, 1
      %v2602 = vsel %vm1491, %v2597, %v2601
      %v2604 = vshrl.u32 %v2490, 16
      %v2606 = vshll.u32 %v2490, 16
      %v2608 = vrot.slane %v2606, 1
      %v2609 = vor.u32 %v2604, %v2608
      %v2611 = vshll.u32 %v2554, 16
      %v2613 = vrot.slane %v2611, 1
      %v2614 = vsel %vm1491, %v2609, %v2613
      %v2616 = vshrl.u32 %v2491, 16
      %v2618 = vshll.u32 %v2491, 16
      %v2620 = vrot.slane %v2618, 1
      %v2621 = vor.u32 %v2616, %v2620
      %v2623 = vshll.u32 %v2555, 16
      %v2625 = vrot.slane %v2623, 1
      %v2626 = vsel %vm1491, %v2621, %v2625
      %v2628 = vshrl.u32 %v2492, 16
      %v2630 = vshll.u32 %v2492, 16
      %v2632 = vrot.slane %v2630, 1
      %v2633 = vor.u32 %v2628, %v2632
      %v2635 = vshll.u32 %v2556, 16
      %v2637 = vrot.slane %v2635, 1
      %v2638 = vsel %vm1491, %v2633, %v2637
      %v2640 = vshrl.u32 %v2493, 16
      %v2642 = vshll.u32 %v2493, 16
      %v2644 = vrot.slane %v2642, 1
      %v2645 = vor.u32 %v2640, %v2644
      %v2647 = vshll.u32 %v2557, 16
      %v2649 = vrot.slane %v2647, 1
      %v2650 = vsel %vm1491, %v2645, %v2649
      %v2652 = vshrl.u32 %v2494, 16
      %v2654 = vshll.u32 %v2494, 16
      %v2656 = vrot.slane %v2654, 1
      %v2657 = vor.u32 %v2652, %v2656
      %v2659 = vshll.u32 %v2558, 16
      %v2661 = vrot.slane %v2659, 1
      %v2662 = vsel %vm1491, %v2657, %v2661
      %v2664 = vshrl.u32 %v2495, 16
      %v2666 = vshll.u32 %v2495, 16
      %v2668 = vrot.slane %v2666, 1
      %v2669 = vor.u32 %v2664, %v2668
      %v2671 = vshll.u32 %v2559, 16
      %v2673 = vrot.slane %v2671, 1
      %v2674 = vsel %vm1491, %v2669, %v2673
      %v2676 = vshrl.u32 %v2496, 16
      %v2678 = vshll.u32 %v2496, 16
      %v2680 = vrot.slane %v2678, 1
      %v2681 = vor.u32 %v2676, %v2680
      %v2683 = vshll.u32 %v2560, 16
      %v2685 = vrot.slane %v2683, 1
      %v2686 = vsel %vm1491, %v2681, %v2685
      %v2688 = vshrl.u32 %v2497, 16
      %v2690 = vshll.u32 %v2497, 16
      %v2692 = vrot.slane %v2690, 1
      %v2693 = vor.u32 %v2688, %v2692
      %v2695 = vshll.u32 %v2561, 16
      %v2697 = vrot.slane %v2695, 1
      %v2698 = vsel %vm1491, %v2693, %v2697
      %v2700 = vshrl.u32 %v2498, 16
      %v2702 = vshll.u32 %v2498, 16
      %v2704 = vrot.slane %v2702, 1
      %v2705 = vor.u32 %v2700, %v2704
      %v2707 = vshll.u32 %v2562, 16
      %v2709 = vrot.slane %v2707, 1
      %v2710 = vsel %vm1491, %v2705, %v2709
      %v2712 = vshrl.u32 %v2499, 16
      %v2714 = vshll.u32 %v2499, 16
      %v2716 = vrot.slane %v2714, 1
      %v2717 = vor.u32 %v2712, %v2716
      %v2719 = vshll.u32 %v2563, 16
      %v2721 = vrot.slane %v2719, 1
      %v2722 = vsel %vm1491, %v2717, %v2721
      %v2724 = vshrl.u32 %v2500, 16
      %v2726 = vshll.u32 %v2500, 16
      %v2728 = vrot.slane %v2726, 1
      %v2729 = vor.u32 %v2724, %v2728
      %v2731 = vshll.u32 %v2564, 16
      %v2733 = vrot.slane %v2731, 1
      %v2734 = vsel %vm1491, %v2729, %v2733
      %v2736 = vshrl.u32 %v2501, 16
      %v2738 = vshll.u32 %v2501, 16
      %v2740 = vrot.slane %v2738, 1
      %v2741 = vor.u32 %v2736, %v2740
      %v2743 = vshll.u32 %v2565, 16
      %v2745 = vrot.slane %v2743, 1
      %v2746 = vsel %vm1491, %v2741, %v2745
      %v2748 = vshrl.u32 %v2502, 16
      %v2750 = vshll.u32 %v2502, 16
      %v2752 = vrot.slane %v2750, 1
      %v2753 = vor.u32 %v2748, %v2752
      %v2755 = vshll.u32 %v2566, 16
      %v2757 = vrot.slane %v2755, 1
      %v2758 = vsel %vm1491, %v2753, %v2757
      %v2791 = vunpack.c.l.b16 %v2407
      %v2792 = vunpack.c.l.b16 %v2408
      %v2793 = vunpack.c.l.b16 %v2409
      %v2794 = vunpack.c.l.b16 %v2410
      %v2795 = vunpack.c.l.b16 %v2411
      %v2796 = vunpack.c.l.b16 %v2412
      %v2797 = vunpack.c.l.b16 %v2413
      %v2798 = vunpack.c.l.b16 %v2414
      %v2799 = vunpack.c.l.b16 %v2415
      %v2800 = vunpack.c.l.b16 %v2416
      %v2801 = vunpack.c.l.b16 %v2417
      %v2802 = vunpack.c.l.b16 %v2418
      %v2803 = vunpack.c.l.b16 %v2419
      %v2804 = vunpack.c.l.b16 %v2420
      %v2805 = vunpack.c.l.b16 %v2421
      %v2806 = vunpack.c.l.b16 %v2422
      %v2807 = vpack.c.b16 %v2456, %v2791
      %v2808 = vpack.c.b16 %v2458, %v2792
      %v2809 = vpack.c.b16 %v2460, %v2793
      %v2810 = vpack.c.b16 %v2462, %v2794
      %v2811 = vpack.c.b16 %v2464, %v2795
      %v2812 = vpack.c.b16 %v2466, %v2796
      %v2813 = vpack.c.b16 %v2468, %v2797
      %v2814 = vpack.c.b16 %v2470, %v2798
      %v2815 = vpack.c.b16 %v2472, %v2799
      %v2816 = vpack.c.b16 %v2474, %v2800
      %v2817 = vpack.c.b16 %v2476, %v2801
      %v2818 = vpack.c.b16 %v2478, %v2802
      %v2819 = vpack.c.b16 %v2480, %v2803
      %v2820 = vpack.c.b16 %v2482, %v2804
      %v2821 = vpack.c.b16 %v2484, %v2805
      %v2822 = vpack.c.b16 %v2486, %v2806
      %v2823 = vrot.slane %v2807, 1
      %v2824 = vrot.slane %v2551, 1
      %v2825 = vsel %vm1748, %v2823, %v2824
      %v2826 = vrot.slane %v2808, 1
      %v2827 = vrot.slane %v2552, 1
      %v2828 = vsel %vm1748, %v2826, %v2827
      %v2829 = vrot.slane %v2809, 1
      %v2830 = vrot.slane %v2553, 1
      %v2831 = vsel %vm1748, %v2829, %v2830
      %v2832 = vrot.slane %v2810, 1
      %v2833 = vrot.slane %v2554, 1
      %v2834 = vsel %vm1748, %v2832, %v2833
      %v2835 = vrot.slane %v2811, 1
      %v2836 = vrot.slane %v2555, 1
      %v2837 = vsel %vm1748, %v2835, %v2836
      %v2838 = vrot.slane %v2812, 1
      %v2839 = vrot.slane %v2556, 1
      %v2840 = vsel %vm1748, %v2838, %v2839
      %v2841 = vrot.slane %v2813, 1
      %v2842 = vrot.slane %v2557, 1
      %v2843 = vsel %vm1748, %v2841, %v2842
      %v2844 = vrot.slane %v2814, 1
      %v2845 = vrot.slane %v2558, 1
      %v2846 = vsel %vm1748, %v2844, %v2845
      %v2847 = vrot.slane %v2815, 1
      %v2848 = vrot.slane %v2559, 1
      %v2849 = vsel %vm1748, %v2847, %v2848
      %v2850 = vrot.slane %v2816, 1
      %v2851 = vrot.slane %v2560, 1
      %v2852 = vsel %vm1748, %v2850, %v2851
      %v2853 = vrot.slane %v2817, 1
      %v2854 = vrot.slane %v2561, 1
      %v2855 = vsel %vm1748, %v2853, %v2854
      %v2856 = vrot.slane %v2818, 1
      %v2857 = vrot.slane %v2562, 1
      %v2858 = vsel %vm1748, %v2856, %v2857
      %v2859 = vrot.slane %v2819, 1
      %v2860 = vrot.slane %v2563, 1
      %v2861 = vsel %vm1748, %v2859, %v2860
      %v2862 = vrot.slane %v2820, 1
      %v2863 = vrot.slane %v2564, 1
      %v2864 = vsel %vm1748, %v2862, %v2863
      %v2865 = vrot.slane %v2821, 1
      %v2866 = vrot.slane %v2565, 1
      %v2867 = vsel %vm1748, %v2865, %v2866
      %v2868 = vrot.slane %v2822, 1
      %v2869 = vrot.slane %v2566, 1
      %v2870 = vsel %vm1748, %v2868, %v2869
      %s2887 = scalar_lea.vmem %s1, 192
      %v2888 = vld [vmem:[%s2887] sm:$0xf]
      %v2889 = vld [vmem:[%s2887 + $0x4] sm:$0xf]
      %v2890 = vld [vmem:[%s2887 + $0x8] sm:$0xf]
      %v2891 = vld [vmem:[%s2887 + $0xc] sm:$0xf]
      %v2892 = vld [vmem:[%s2887 + $0x10] sm:$0xf]
      %v2893 = vld [vmem:[%s2887 + $0x14] sm:$0xf]
      %v2894 = vld [vmem:[%s2887 + $0x18] sm:$0xf]
      %v2895 = vld [vmem:[%s2887 + $0x1c] sm:$0xf]
      %v2896 = vld [vmem:[%s2887 + $0x20] sm:$0xf]
      %v2897 = vld [vmem:[%s2887 + $0x24] sm:$0xf]
      %v2898 = vld [vmem:[%s2887 + $0x28] sm:$0xf]
      %v2899 = vld [vmem:[%s2887 + $0x2c] sm:$0xf]
      %v2900 = vld [vmem:[%s2887 + $0x30] sm:$0xf]
      %v2901 = vld [vmem:[%s2887 + $0x34] sm:$0xf]
      %v2902 = vld [vmem:[%s2887 + $0x38] sm:$0xf]
      %v2903 = vld [vmem:[%s2887 + $0x3c] sm:$0xf]
      %v2904 = vld [vmem:[%s2887 + $0x40] sm:$0xf]
      %v2905 = vld [vmem:[%s2887 + $0x44] sm:$0xf]
      %v2906 = vld [vmem:[%s2887 + $0x48] sm:$0xf]
      %v2907 = vld [vmem:[%s2887 + $0x4c] sm:$0xf]
      %v2908 = vld [vmem:[%s2887 + $0x50] sm:$0xf]
      %v2909 = vld [vmem:[%s2887 + $0x54] sm:$0xf]
      %v2910 = vld [vmem:[%s2887 + $0x58] sm:$0xf]
      %v2911 = vld [vmem:[%s2887 + $0x5c] sm:$0xf]
      %v2912 = vld [vmem:[%s2887 + $0x60] sm:$0xf]
      %v2913 = vld [vmem:[%s2887 + $0x64] sm:$0xf]
      %v2914 = vld [vmem:[%s2887 + $0x68] sm:$0xf]
      %v2915 = vld [vmem:[%s2887 + $0x6c] sm:$0xf]
      %v2916 = vld [vmem:[%s2887 + $0x70] sm:$0xf]
      %v2917 = vld [vmem:[%s2887 + $0x74] sm:$0xf]
      %v2918 = vld [vmem:[%s2887 + $0x78] sm:$0xf]
      %v2919 = vld [vmem:[%s2887 + $0x7c] sm:$0xf]
      %v2920 = vld [vmem:[%s2887 + $0x80] sm:$0xf]
      %v2921 = vld [vmem:[%s2887 + $0x84] sm:$0xf]
      %v2922 = vld [vmem:[%s2887 + $0x88] sm:$0xf]
      %v2923 = vld [vmem:[%s2887 + $0x8c] sm:$0xf]
      %v2924 = vld [vmem:[%s2887 + $0x90] sm:$0xf]
      %v2925 = vld [vmem:[%s2887 + $0x94] sm:$0xf]
      %v2926 = vld [vmem:[%s2887 + $0x98] sm:$0xf]
      %v2927 = vld [vmem:[%s2887 + $0x9c] sm:$0xf]
      %v2928 = vld [vmem:[%s2887 + $0xa0] sm:$0xf]
      %v2929 = vld [vmem:[%s2887 + $0xa4] sm:$0xf]
      %v2930 = vld [vmem:[%s2887 + $0xa8] sm:$0xf]
      %v2931 = vld [vmem:[%s2887 + $0xac] sm:$0xf]
      %v2932 = vld [vmem:[%s2887 + $0xb0] sm:$0xf]
      %v2933 = vld [vmem:[%s2887 + $0xb4] sm:$0xf]
      %v2934 = vld [vmem:[%s2887 + $0xb8] sm:$0xf]
      %v2935 = vld [vmem:[%s2887 + $0xbc] sm:$0xf]
      %v2984 = vunpack.c.l.b16 %v2888
      %v2985 = vunpack.c.l.b16 %v2889
      %v2986 = vunpack.c.l.b16 %v2890
      %v2987 = vunpack.c.l.b16 %v2891
      %v2988 = vunpack.c.l.b16 %v2892
      %v2989 = vunpack.c.l.b16 %v2893
      %v2990 = vunpack.c.l.b16 %v2894
      %v2991 = vunpack.c.l.b16 %v2895
      %v2992 = vunpack.c.l.b16 %v2896
      %v2993 = vunpack.c.l.b16 %v2897
      %v2994 = vunpack.c.l.b16 %v2898
      %v2995 = vunpack.c.l.b16 %v2899
      %v2996 = vunpack.c.l.b16 %v2900
      %v2997 = vunpack.c.l.b16 %v2901
      %v2998 = vunpack.c.l.b16 %v2902
      %v2999 = vunpack.c.l.b16 %v2903
      %v3000 = vunpack.c.l.b16 %v2904
      %v3001 = vunpack.c.l.b16 %v2905
      %v3002 = vunpack.c.l.b16 %v2906
      %v3003 = vunpack.c.l.b16 %v2907
      %v3004 = vunpack.c.l.b16 %v2908
      %v3005 = vunpack.c.l.b16 %v2909
      %v3006 = vunpack.c.l.b16 %v2910
      %v3007 = vunpack.c.l.b16 %v2911
      %v3008 = vunpack.c.l.b16 %v2912
      %v3009 = vunpack.c.l.b16 %v2913
      %v3010 = vunpack.c.l.b16 %v2914
      %v3011 = vunpack.c.l.b16 %v2915
      %v3012 = vunpack.c.l.b16 %v2916
      %v3013 = vunpack.c.l.b16 %v2917
      %v3014 = vunpack.c.l.b16 %v2918
      %v3015 = vunpack.c.l.b16 %v2919
      %v3016 = vunpack.c.l.b16 %v2920
      %v3017 = vunpack.c.l.b16 %v2921
      %v3018 = vunpack.c.l.b16 %v2922
      %v3019 = vunpack.c.l.b16 %v2923
      %v3020 = vunpack.c.l.b16 %v2924
      %v3021 = vunpack.c.l.b16 %v2925
      %v3022 = vunpack.c.l.b16 %v2926
      %v3023 = vunpack.c.l.b16 %v2927
      %v3024 = vunpack.c.l.b16 %v2928
      %v3025 = vunpack.c.l.b16 %v2929
      %v3026 = vunpack.c.l.b16 %v2930
      %v3027 = vunpack.c.l.b16 %v2931
      %v3028 = vunpack.c.l.b16 %v2932
      %v3029 = vunpack.c.l.b16 %v2933
      %v3030 = vunpack.c.l.b16 %v2934
      %v3031 = vunpack.c.l.b16 %v2935
      %v3032 = vpack.c.b16 %v2985, %v2984
      %v3033 = vpack.c.b16 %v2987, %v2986
      %v3034 = vpack.c.b16 %v2989, %v2988
      %v3035 = vpack.c.b16 %v2991, %v2990
      %v3036 = vpack.c.b16 %v2993, %v2992
      %v3037 = vpack.c.b16 %v2995, %v2994
      %v3038 = vpack.c.b16 %v2997, %v2996
      %v3039 = vpack.c.b16 %v2999, %v2998
      %v3040 = vpack.c.b16 %v3001, %v3000
      %v3041 = vpack.c.b16 %v3003, %v3002
      %v3042 = vpack.c.b16 %v3005, %v3004
      %v3043 = vpack.c.b16 %v3007, %v3006
      %v3044 = vpack.c.b16 %v3009, %v3008
      %v3045 = vpack.c.b16 %v3011, %v3010
      %v3046 = vpack.c.b16 %v3013, %v3012
      %v3047 = vpack.c.b16 %v3015, %v3014
      %v3048 = vpack.c.b16 %v3017, %v3016
      %v3049 = vpack.c.b16 %v3019, %v3018
      %v3050 = vpack.c.b16 %v3021, %v3020
      %v3051 = vpack.c.b16 %v3023, %v3022
      %v3052 = vpack.c.b16 %v3025, %v3024
      %v3053 = vpack.c.b16 %v3027, %v3026
      %v3054 = vpack.c.b16 %v3029, %v3028
      %v3055 = vpack.c.b16 %v3031, %v3030
      %3080 = vmatprep.subr.bf16.mxu0 0
      %3081 = vmatpush1.bf16.msra.mxu0 %v3039
      %3082 = vmatprep.subr.bf16.mxu0 0
      %3083 = vmatpush1.bf16.msra.mxu0 %v3038
      %3084 = vmatprep.subr.bf16.mxu0 0
      %3085 = vmatpush1.bf16.msra.mxu0 %v3037
      %3086 = vmatprep.subr.bf16.mxu0 0
      %3087 = vmatpush1.bf16.msra.mxu0 %v3036
      %3088 = vmatprep.subr.bf16.mxu0 0
      %3089 = vmatpush1.bf16.msra.mxu0 %v3035
      %3090 = vmatprep.subr.bf16.mxu0 0
      %3091 = vmatpush1.bf16.msra.mxu0 %v3034
      %3092 = vmatprep.subr.bf16.mxu0 0
      %3093 = vmatpush1.bf16.msra.mxu0 %v3033
      %3094 = vmatprep.subr.bf16.mxu0 0
      %3095 = vmatpush1.bf16.msra.mxu0 %v3032
      %3096 = vmatprep.subr.bf16.mxu0 0
      %3097 = vmatpush2.bf16.msra.mxu0 %v3047
      %3098 = vmatprep.subr.bf16.mxu0 0
      %3099 = vmatpush2.bf16.msra.mxu0 %v3046
      %3100 = vmatprep.subr.bf16.mxu0 0
      %3101 = vmatpush2.bf16.msra.mxu0 %v3045
      %3102 = vmatprep.subr.bf16.mxu0 0
      %3103 = vmatpush2.bf16.msra.mxu0 %v3044
      %3104 = vmatprep.subr.bf16.mxu0 0
      %3105 = vmatpush2.bf16.msra.mxu0 %v3043
      %3106 = vmatprep.subr.bf16.mxu0 0
      %3107 = vmatpush2.bf16.msra.mxu0 %v3042
      %3108 = vmatprep.subr.bf16.mxu0 0
      %3109 = vmatpush2.bf16.msra.mxu0 %v3041
      %3110 = vmatprep.subr.bf16.mxu0 0
      %3111 = vmatpush2.bf16.msra.mxu0 %v3040
      %3112 = vmatprep.mubr.bf16.mxu0 %v2578
      %3113 = vmatmul.mubr.bf16.gmra.mxu0 %v2487
      %v3114 = vpop.f32.mrf.mxu0
      %v3115 = vadd.f32 0.0, %v3114
      %v3116 = vpop.f32.mrf.mxu0
      %v3117 = vpop.f32.mrf.mxu0
      %v3118 = vadd.f32 0.0, %v3117
      %v3119 = vpop.f32.mrf.mxu0
      %3120 = vmatprep.mubr.bf16.mxu0 %v2590
      %3121 = vmatmul.mubr.bf16.gmra.mxu0 %v2488
      %v3122 = vpop.f32.mrf.mxu0
      %v3123 = vadd.f32 0.0, %v3122
      %v3124 = vpop.f32.mrf.mxu0
      %v3125 = vpop.f32.mrf.mxu0
      %v3126 = vadd.f32 0.0, %v3125
      %v3127 = vpop.f32.mrf.mxu0
      %3128 = vmatprep.mubr.bf16.mxu0 %v2602
      %3129 = vmatmul.mubr.bf16.gmra.mxu0 %v2489
      %v3130 = vpop.f32.mrf.mxu0
      %v3131 = vadd.f32 0.0, %v3130
      %v3132 = vpop.f32.mrf.mxu0
      %v3133 = vpop.f32.mrf.mxu0
      %v3134 = vadd.f32 0.0, %v3133
      %v3135 = vpop.f32.mrf.mxu0
      %3136 = vmatprep.mubr.bf16.mxu0 %v2614
      %3137 = vmatmul.mubr.bf16.gmra.mxu0 %v2490
      %v3138 = vpop.f32.mrf.mxu0
      %v3139 = vadd.f32 0.0, %v3138
      %v3140 = vpop.f32.mrf.mxu0
      %v3141 = vpop.f32.mrf.mxu0
      %v3142 = vadd.f32 0.0, %v3141
      %v3143 = vpop.f32.mrf.mxu0
      %3144 = vmatprep.mubr.bf16.mxu0 %v2626
      %3145 = vmatmul.mubr.bf16.gmra.mxu0 %v2491
      %v3146 = vpop.f32.mrf.mxu0
      %v3147 = vadd.f32 0.0, %v3146
      %v3148 = vpop.f32.mrf.mxu0
      %v3149 = vpop.f32.mrf.mxu0
      %v3150 = vadd.f32 0.0, %v3149
      %v3151 = vpop.f32.mrf.mxu0
      %3152 = vmatprep.mubr.bf16.mxu0 %v2638
      %3153 = vmatmul.mubr.bf16.gmra.mxu0 %v2492
      %v3154 = vpop.f32.mrf.mxu0
      %v3155 = vadd.f32 0.0, %v3154
      %v3156 = vpop.f32.mrf.mxu0
      %v3157 = vpop.f32.mrf.mxu0
      %v3158 = vadd.f32 0.0, %v3157
      %v3159 = vpop.f32.mrf.mxu0
      %3160 = vmatprep.mubr.bf16.mxu0 %v2650
      %3161 = vmatmul.mubr.bf16.gmra.mxu0 %v2493
      %v3162 = vpop.f32.mrf.mxu0
      %v3163 = vadd.f32 0.0, %v3162
      %v3164 = vpop.f32.mrf.mxu0
      %v3165 = vpop.f32.mrf.mxu0
      %v3166 = vadd.f32 0.0, %v3165
      %v3167 = vpop.f32.mrf.mxu0
      %3168 = vmatprep.mubr.bf16.mxu0 %v2662
      %3169 = vmatmul.mubr.bf16.gmra.mxu0 %v2494
      %v3170 = vpop.f32.mrf.mxu0
      %v3171 = vadd.f32 0.0, %v3170
      %v3172 = vpop.f32.mrf.mxu0
      %v3173 = vpop.f32.mrf.mxu0
      %v3174 = vadd.f32 0.0, %v3173
      %v3175 = vpop.f32.mrf.mxu0
      %3176 = vmatprep.mubr.bf16.mxu0 %v2674
      %3177 = vmatmul.mubr.bf16.gmra.mxu0 %v2495
      %v3178 = vpop.f32.mrf.mxu0
      %v3179 = vadd.f32 0.0, %v3178
      %v3180 = vpop.f32.mrf.mxu0
      %v3181 = vpop.f32.mrf.mxu0
      %v3182 = vadd.f32 0.0, %v3181
      %v3183 = vpop.f32.mrf.mxu0
      %3184 = vmatprep.mubr.bf16.mxu0 %v2686
      %3185 = vmatmul.mubr.bf16.gmra.mxu0 %v2496
      %v3186 = vpop.f32.mrf.mxu0
      %v3187 = vadd.f32 0.0, %v3186
      %v3188 = vpop.f32.mrf.mxu0
      %v3189 = vpop.f32.mrf.mxu0
      %v3190 = vadd.f32 0.0, %v3189
      %v3191 = vpop.f32.mrf.mxu0
      %3192 = vmatprep.mubr.bf16.mxu0 %v2698
      %3193 = vmatmul.mubr.bf16.gmra.mxu0 %v2497
      %v3194 = vpop.f32.mrf.mxu0
      %v3195 = vadd.f32 0.0, %v3194
      %v3196 = vpop.f32.mrf.mxu0
      %v3197 = vpop.f32.mrf.mxu0
      %v3198 = vadd.f32 0.0, %v3197
      %v3199 = vpop.f32.mrf.mxu0
      %3200 = vmatprep.mubr.bf16.mxu0 %v2710
      %3201 = vmatmul.mubr.bf16.gmra.mxu0 %v2498
      %v3202 = vpop.f32.mrf.mxu0
      %v3203 = vadd.f32 0.0, %v3202
      %v3204 = vpop.f32.mrf.mxu0
      %v3205 = vpop.f32.mrf.mxu0
      %v3206 = vadd.f32 0.0, %v3205
      %v3207 = vpop.f32.mrf.mxu0
      %3208 = vmatprep.mubr.bf16.mxu0 %v2722
      %3209 = vmatmul.mubr.bf16.gmra.mxu0 %v2499
      %v3210 = vpop.f32.mrf.mxu0
      %v3211 = vadd.f32 0.0, %v3210
      %v3212 = vpop.f32.mrf.mxu0
      %v3213 = vpop.f32.mrf.mxu0
      %v3214 = vadd.f32 0.0, %v3213
      %v3215 = vpop.f32.mrf.mxu0
      %3216 = vmatprep.mubr.bf16.mxu0 %v2734
      %3217 = vmatmul.mubr.bf16.gmra.mxu0 %v2500
      %v3218 = vpop.f32.mrf.mxu0
      %v3219 = vadd.f32 0.0, %v3218
      %v3220 = vpop.f32.mrf.mxu0
      %v3221 = vpop.f32.mrf.mxu0
      %v3222 = vadd.f32 0.0, %v3221
      %v3223 = vpop.f32.mrf.mxu0
      %3224 = vmatprep.mubr.bf16.mxu0 %v2746
      %3225 = vmatmul.mubr.bf16.gmra.mxu0 %v2501
      %v3226 = vpop.f32.mrf.mxu0
      %v3227 = vadd.f32 0.0, %v3226
      %v3228 = vpop.f32.mrf.mxu0
      %v3229 = vpop.f32.mrf.mxu0
      %v3230 = vadd.f32 0.0, %v3229
      %v3231 = vpop.f32.mrf.mxu0
      %3232 = vmatprep.mubr.bf16.mxu0 %v2758
      %3233 = vmatmul.mubr.bf16.gmra.mxu0 %v2502
      %v3234 = vpop.f32.mrf.mxu0
      %v3235 = vadd.f32 0.0, %v3234
      %v3236 = vpop.f32.mrf.mxu0
      %v3237 = vpop.f32.mrf.mxu0
      %v3238 = vadd.f32 0.0, %v3237
      %v3239 = vpop.f32.mrf.mxu0
      %3240 = vdwg.mxu0
      %3241 = vmatprep.subr.bf16.mxu0 0
      %3242 = vmatpush1.bf16.msra.mxu0 %v3055
      %3243 = vmatprep.subr.bf16.mxu0 0
      %3244 = vmatpush1.bf16.msra.mxu0 %v3054
      %3245 = vmatprep.subr.bf16.mxu0 0
      %3246 = vmatpush1.bf16.msra.mxu0 %v3053
      %3247 = vmatprep.subr.bf16.mxu0 0
      %3248 = vmatpush1.bf16.msra.mxu0 %v3052
      %3249 = vmatprep.subr.bf16.mxu0 0
      %3250 = vmatpush1.bf16.msra.mxu0 %v3051
      %3251 = vmatprep.subr.bf16.mxu0 0
      %3252 = vmatpush1.bf16.msra.mxu0 %v3050
      %3253 = vmatprep.subr.bf16.mxu0 0
      %3254 = vmatpush1.bf16.msra.mxu0 %v3049
      %3255 = vmatprep.subr.bf16.mxu0 0
      %3256 = vmatpush1.bf16.msra.mxu0 %v3048
      %3257 = vmatprep.subr.bf16.mxu0 0
      %3258 = vmatpush2.bf16.msra.mxu0 0
      %3259 = vmatprep.subr.bf16.mxu0 0
      %3260 = vmatpush2.bf16.msra.mxu0 0
      %3261 = vmatprep.subr.bf16.mxu0 0
      %3262 = vmatpush2.bf16.msra.mxu0 0
      %3263 = vmatprep.subr.bf16.mxu0 0
      %3264 = vmatpush2.bf16.msra.mxu0 0
      %3265 = vmatprep.subr.bf16.mxu0 0
      %3266 = vmatpush2.bf16.msra.mxu0 0
      %3267 = vmatprep.subr.bf16.mxu0 0
      %3268 = vmatpush2.bf16.msra.mxu0 0
      %3269 = vmatprep.subr.bf16.mxu0 0
      %3270 = vmatpush2.bf16.msra.mxu0 0
      %3271 = vmatprep.subr.bf16.mxu0 0
      %3272 = vmatpush2.bf16.msra.mxu0 0
      %3273 = vmatprep.mubr.bf16.mxu0 0
      %3274 = vmatmul.mubr.bf16.gmra.mxu0 %v2825
      %v3275 = vpop.f32.mrf.mxu0
      %v3276 = vadd.f32 %v3115, %v3275
      %v3277 = vpop.f32.mrf.mxu0
      %v3278 = vpop.f32.mrf.mxu0
      %v3279 = vadd.f32 %v3118, %v3278
      %v3280 = vpop.f32.mrf.mxu0
      %3281 = vmatprep.mubr.bf16.mxu0 0
      %3282 = vmatmul.mubr.bf16.gmra.mxu0 %v2828
      %v3283 = vpop.f32.mrf.mxu0
      %v3284 = vadd.f32 %v3123, %v3283
      %v3285 = vpop.f32.mrf.mxu0
      %v3286 = vpop.f32.mrf.mxu0
      %v3287 = vadd.f32 %v3126, %v3286
      %v3288 = vpop.f32.mrf.mxu0
      %3289 = vmatprep.mubr.bf16.mxu0 0
      %3290 = vmatmul.mubr.bf16.gmra.mxu0 %v2831
      %v3291 = vpop.f32.mrf.mxu0
      %v3292 = vadd.f32 %v3131, %v3291
      %v3293 = vpop.f32.mrf.mxu0
      %v3294 = vpop.f32.mrf.mxu0
      %v3295 = vadd.f32 %v3134, %v3294
      %v3296 = vpop.f32.mrf.mxu0
      %3297 = vmatprep.mubr.bf16.mxu0 0
      %3298 = vmatmul.mubr.bf16.gmra.mxu0 %v2834
      %v3299 = vpop.f32.mrf.mxu0
      %v3300 = vadd.f32 %v3139, %v3299
      %v3301 = vpop.f32.mrf.mxu0
      %v3302 = vpop.f32.mrf.mxu0
      %v3303 = vadd.f32 %v3142, %v3302
      %v3304 = vpop.f32.mrf.mxu0
      %3305 = vmatprep.mubr.bf16.mxu0 0
      %3306 = vmatmul.mubr.bf16.gmra.mxu0 %v2837
      %v3307 = vpop.f32.mrf.mxu0
      %v3308 = vadd.f32 %v3147, %v3307
      %v3309 = vpop.f32.mrf.mxu0
      %v3310 = vpop.f32.mrf.mxu0
      %v3311 = vadd.f32 %v3150, %v3310
      %v3312 = vpop.f32.mrf.mxu0
      %3313 = vmatprep.mubr.bf16.mxu0 0
      %3314 = vmatmul.mubr.bf16.gmra.mxu0 %v2840
      %v3315 = vpop.f32.mrf.mxu0
      %v3316 = vadd.f32 %v3155, %v3315
      %v3317 = vpop.f32.mrf.mxu0
      %v3318 = vpop.f32.mrf.mxu0
      %v3319 = vadd.f32 %v3158, %v3318
      %v3320 = vpop.f32.mrf.mxu0
      %3321 = vmatprep.mubr.bf16.mxu0 0
      %3322 = vmatmul.mubr.bf16.gmra.mxu0 %v2843
      %v3323 = vpop.f32.mrf.mxu0
      %v3324 = vadd.f32 %v3163, %v3323
      %v3325 = vpop.f32.mrf.mxu0
      %v3326 = vpop.f32.mrf.mxu0
      %v3327 = vadd.f32 %v3166, %v3326
      %v3328 = vpop.f32.mrf.mxu0
      %3329 = vmatprep.mubr.bf16.mxu0 0
      %3330 = vmatmul.mubr.bf16.gmra.mxu0 %v2846
      %v3331 = vpop.f32.mrf.mxu0
      %v3332 = vadd.f32 %v3171, %v3331
      %v3333 = vpop.f32.mrf.mxu0
      %v3334 = vpop.f32.mrf.mxu0
      %v3335 = vadd.f32 %v3174, %v3334
      %v3336 = vpop.f32.mrf.mxu0
      %3337 = vmatprep.mubr.bf16.mxu0 0
      %3338 = vmatmul.mubr.bf16.gmra.mxu0 %v2849
      %v3339 = vpop.f32.mrf.mxu0
      %v3340 = vadd.f32 %v3179, %v3339
      %v3341 = vpop.f32.mrf.mxu0
      %v3342 = vpop.f32.mrf.mxu0
      %v3343 = vadd.f32 %v3182, %v3342
      %v3344 = vpop.f32.mrf.mxu0
      %3345 = vmatprep.mubr.bf16.mxu0 0
      %3346 = vmatmul.mubr.bf16.gmra.mxu0 %v2852
      %v3347 = vpop.f32.mrf.mxu0
      %v3348 = vadd.f32 %v3187, %v3347
      %v3349 = vpop.f32.mrf.mxu0
      %v3350 = vpop.f32.mrf.mxu0
      %v3351 = vadd.f32 %v3190, %v3350
      %v3352 = vpop.f32.mrf.mxu0
      %3353 = vmatprep.mubr.bf16.mxu0 0
      %3354 = vmatmul.mubr.bf16.gmra.mxu0 %v2855
      %v3355 = vpop.f32.mrf.mxu0
      %v3356 = vadd.f32 %v3195, %v3355
      %v3357 = vpop.f32.mrf.mxu0
      %v3358 = vpop.f32.mrf.mxu0
      %v3359 = vadd.f32 %v3198, %v3358
      %v3360 = vpop.f32.mrf.mxu0
      %3361 = vmatprep.mubr.bf16.mxu0 0
      %3362 = vmatmul.mubr.bf16.gmra.mxu0 %v2858
      %v3363 = vpop.f32.mrf.mxu0
      %v3364 = vadd.f32 %v3203, %v3363
      %v3365 = vpop.f32.mrf.mxu0
      %v3366 = vpop.f32.mrf.mxu0
      %v3367 = vadd.f32 %v3206, %v3366
      %v3368 = vpop.f32.mrf.mxu0
      %3369 = vmatprep.mubr.bf16.mxu0 0
      %3370 = vmatmul.mubr.bf16.gmra.mxu0 %v2861
      %v3371 = vpop.f32.mrf.mxu0
      %v3372 = vadd.f32 %v3211, %v3371
      %v3373 = vpop.f32.mrf.mxu0
      %v3374 = vpop.f32.mrf.mxu0
      %v3375 = vadd.f32 %v3214, %v3374
      %v3376 = vpop.f32.mrf.mxu0
      %3377 = vmatprep.mubr.bf16.mxu0 0
      %3378 = vmatmul.mubr.bf16.gmra.mxu0 %v2864
      %v3379 = vpop.f32.mrf.mxu0
      %v3380 = vadd.f32 %v3219, %v3379
      %v3381 = vpop.f32.mrf.mxu0
      %v3382 = vpop.f32.mrf.mxu0
      %v3383 = vadd.f32 %v3222, %v3382
      %v3384 = vpop.f32.mrf.mxu0
      %3385 = vmatprep.mubr.bf16.mxu0 0
      %3386 = vmatmul.mubr.bf16.gmra.mxu0 %v2867
      %v3387 = vpop.f32.mrf.mxu0
      %v3388 = vadd.f32 %v3227, %v3387
      %v3389 = vpop.f32.mrf.mxu0
      %v3390 = vpop.f32.mrf.mxu0
      %v3391 = vadd.f32 %v3230, %v3390
      %v3392 = vpop.f32.mrf.mxu0
      %3393 = vmatprep.mubr.bf16.mxu0 0
      %3394 = vmatmul.mubr.bf16.gmra.mxu0 %v2870
      %v3395 = vpop.f32.mrf.mxu0
      %v3396 = vadd.f32 %v3235, %v3395
      %v3397 = vpop.f32.mrf.mxu0
      %v3398 = vpop.f32.mrf.mxu0
      %v3399 = vadd.f32 %v3238, %v3398
      %v3400 = vpop.f32.mrf.mxu0
      %3401 = vdwg.mxu0
      %v3402 = vld [vmem:[#allocation3] sm:$0xff]
      %v3403 = vld [vmem:[#allocation3 + $0x8] sm:$0xff]
      %v3404 = vld [vmem:[#allocation3 + $0x10] sm:$0xff]
      %v3405 = vld [vmem:[#allocation3 + $0x18] sm:$0xff]
      %v3406 = vld [vmem:[#allocation3 + $0x20] sm:$0xff]
      %v3407 = vld [vmem:[#allocation3 + $0x28] sm:$0xff]
      %v3408 = vld [vmem:[#allocation3 + $0x30] sm:$0xff]
      %v3409 = vld [vmem:[#allocation3 + $0x38] sm:$0xff]
      %v3410 = vld [vmem:[#allocation3 + $0x40] sm:$0xff]
      %v3411 = vld [vmem:[#allocation3 + $0x48] sm:$0xff]
      %v3412 = vld [vmem:[#allocation3 + $0x50] sm:$0xff]
      %v3413 = vld [vmem:[#allocation3 + $0x58] sm:$0xff]
      %v3414 = vld [vmem:[#allocation3 + $0x60] sm:$0xff]
      %v3415 = vld [vmem:[#allocation3 + $0x68] sm:$0xff]
      %v3416 = vld [vmem:[#allocation3 + $0x70] sm:$0xff]
      %v3417 = vld [vmem:[#allocation3 + $0x78] sm:$0xff]
      %v3418 = vld [vmem:[#allocation3 + $0x80] sm:$0xff]
      %v3419 = vld [vmem:[#allocation3 + $0x88] sm:$0xff]
      %v3420 = vld [vmem:[#allocation3 + $0x90] sm:$0xff]
      %v3421 = vld [vmem:[#allocation3 + $0x98] sm:$0xff]
      %v3422 = vld [vmem:[#allocation3 + $0xa0] sm:$0xff]
      %v3423 = vld [vmem:[#allocation3 + $0xa8] sm:$0xff]
      %v3424 = vld [vmem:[#allocation3 + $0xb0] sm:$0xff]
      %v3425 = vld [vmem:[#allocation3 + $0xb8] sm:$0xff]
      %v3426 = vld [vmem:[#allocation3 + $0xc0] sm:$0xff]
      %v3427 = vld [vmem:[#allocation3 + $0xc8] sm:$0xff]
      %v3428 = vld [vmem:[#allocation3 + $0xd0] sm:$0xff]
      %v3429 = vld [vmem:[#allocation3 + $0xd8] sm:$0xff]
      %v3430 = vld [vmem:[#allocation3 + $0xe0] sm:$0xff]
      %v3431 = vld [vmem:[#allocation3 + $0xe8] sm:$0xff]
      %v3432 = vld [vmem:[#allocation3 + $0xf0] sm:$0xff]
      %v3433 = vld [vmem:[#allocation3 + $0xf8] sm:$0xff]
      %v3434 = vadd.f32 %v3402, %v3276
      %v3435 = vadd.f32 %v3403, %v3279
      %v3436 = vadd.f32 %v3404, %v3284
      %v3437 = vadd.f32 %v3405, %v3287
      %v3438 = vadd.f32 %v3406, %v3292
      %v3439 = vadd.f32 %v3407, %v3295
      %v3440 = vadd.f32 %v3408, %v3300
      %v3441 = vadd.f32 %v3409, %v3303
      %v3442 = vadd.f32 %v3410, %v3308
      %v3443 = vadd.f32 %v3411, %v3311
      %v3444 = vadd.f32 %v3412, %v3316
      %v3445 = vadd.f32 %v3413, %v3319
      %v3446 = vadd.f32 %v3414, %v3324
      %v3447 = vadd.f32 %v3415, %v3327
      %v3448 = vadd.f32 %v3416, %v3332
      %v3449 = vadd.f32 %v3417, %v3335
      %v3450 = vadd.f32 %v3418, %v3340
      %v3451 = vadd.f32 %v3419, %v3343
      %v3452 = vadd.f32 %v3420, %v3348
      %v3453 = vadd.f32 %v3421, %v3351
      %v3454 = vadd.f32 %v3422, %v3356
      %v3455 = vadd.f32 %v3423, %v3359
      %v3456 = vadd.f32 %v3424, %v3364
      %v3457 = vadd.f32 %v3425, %v3367
      %v3458 = vadd.f32 %v3426, %v3372
      %v3459 = vadd.f32 %v3427, %v3375
      %v3460 = vadd.f32 %v3428, %v3380
      %v3461 = vadd.f32 %v3429, %v3383
      %v3462 = vadd.f32 %v3430, %v3388
      %v3463 = vadd.f32 %v3431, %v3391
      %v3464 = vadd.f32 %v3432, %v3396
      %v3465 = vadd.f32 %v3433, %v3399
      %3466 = vst [vmem:[#allocation3] sm:$0xff] %v3434
      %3467 = vst [vmem:[#allocation3 + $0x8] sm:$0xff] %v3435
      %3468 = vst [vmem:[#allocation3 + $0x10] sm:$0xff] %v3436
      %3469 = vst [vmem:[#allocation3 + $0x18] sm:$0xff] %v3437
      %3470 = vst [vmem:[#allocation3 + $0x20] sm:$0xff] %v3438
      %3471 = vst [vmem:[#allocation3 + $0x28] sm:$0xff] %v3439
      %3472 = vst [vmem:[#allocation3 + $0x30] sm:$0xff] %v3440
      %3473 = vst [vmem:[#allocation3 + $0x38] sm:$0xff] %v3441
      %3474 = vst [vmem:[#allocation3 + $0x40] sm:$0xff] %v3442
      %3475 = vst [vmem:[#allocation3 + $0x48] sm:$0xff] %v3443
      %3476 = vst [vmem:[#allocation3 + $0x50] sm:$0xff] %v3444
      %3477 = vst [vmem:[#allocation3 + $0x58] sm:$0xff] %v3445
      %3478 = vst [vmem:[#allocation3 + $0x60] sm:$0xff] %v3446
      %3479 = vst [vmem:[#allocation3 + $0x68] sm:$0xff] %v3447
      %3480 = vst [vmem:[#allocation3 + $0x70] sm:$0xff] %v3448
      %3481 = vst [vmem:[#allocation3 + $0x78] sm:$0xff] %v3449
      %3482 = vst [vmem:[#allocation3 + $0x80] sm:$0xff] %v3450
      %3483 = vst [vmem:[#allocation3 + $0x88] sm:$0xff] %v3451
      %3484 = vst [vmem:[#allocation3 + $0x90] sm:$0xff] %v3452
      %3485 = vst [vmem:[#allocation3 + $0x98] sm:$0xff] %v3453
      %3486 = vst [vmem:[#allocation3 + $0xa0] sm:$0xff] %v3454
      %3487 = vst [vmem:[#allocation3 + $0xa8] sm:$0xff] %v3455
      %3488 = vst [vmem:[#allocation3 + $0xb0] sm:$0xff] %v3456
      %3489 = vst [vmem:[#allocation3 + $0xb8] sm:$0xff] %v3457
      %3490 = vst [vmem:[#allocation3 + $0xc0] sm:$0xff] %v3458
      %3491 = vst [vmem:[#allocation3 + $0xc8] sm:$0xff] %v3459
      %3492 = vst [vmem:[#allocation3 + $0xd0] sm:$0xff] %v3460
      %3493 = vst [vmem:[#allocation3 + $0xd8] sm:$0xff] %v3461
      %3494 = vst [vmem:[#allocation3 + $0xe0] sm:$0xff] %v3462
      %3495 = vst [vmem:[#allocation3 + $0xe8] sm:$0xff] %v3463
      %3496 = vst [vmem:[#allocation3 + $0xf0] sm:$0xff] %v3464
      %3497 = vst [vmem:[#allocation3 + $0xf8] sm:$0xff] %v3465
      %s3498 = scalar_lea.vmem [#allocation2], 24
      %v3499 = vld [vmem:[%s3498] sm:$0xf]
      %v3500 = vld [vmem:[%s3498 + $0x4] sm:$0xf]
      %v3501 = vld [vmem:[%s3498 + $0xc] sm:$0xf]
      %v3502 = vld [vmem:[%s3498 + $0x10] sm:$0xf]
      %v3503 = vld [vmem:[%s3498 + $0x18] sm:$0xf]
      %v3504 = vld [vmem:[%s3498 + $0x1c] sm:$0xf]
      %v3505 = vld [vmem:[%s3498 + $0x24] sm:$0xf]
      %v3506 = vld [vmem:[%s3498 + $0x28] sm:$0xf]
      %v3507 = vld [vmem:[%s3498 + $0x30] sm:$0xf]
      %v3508 = vld [vmem:[%s3498 + $0x34] sm:$0xf]
      %v3509 = vld [vmem:[%s3498 + $0x3c] sm:$0xf]
      %v3510 = vld [vmem:[%s3498 + $0x40] sm:$0xf]
      %v3511 = vld [vmem:[%s3498 + $0x48] sm:$0xf]
      %v3512 = vld [vmem:[%s3498 + $0x4c] sm:$0xf]
      %v3513 = vld [vmem:[%s3498 + $0x54] sm:$0xf]
      %v3514 = vld [vmem:[%s3498 + $0x58] sm:$0xf]
      %v3515 = vld [vmem:[%s3498 + $0x60] sm:$0xf]
      %v3516 = vld [vmem:[%s3498 + $0x64] sm:$0xf]
      %v3517 = vld [vmem:[%s3498 + $0x6c] sm:$0xf]
      %v3518 = vld [vmem:[%s3498 + $0x70] sm:$0xf]
      %v3519 = vld [vmem:[%s3498 + $0x78] sm:$0xf]
      %v3520 = vld [vmem:[%s3498 + $0x7c] sm:$0xf]
      %v3521 = vld [vmem:[%s3498 + $0x84] sm:$0xf]
      %v3522 = vld [vmem:[%s3498 + $0x88] sm:$0xf]
      %v3523 = vld [vmem:[%s3498 + $0x90] sm:$0xf]
      %v3524 = vld [vmem:[%s3498 + $0x94] sm:$0xf]
      %v3525 = vld [vmem:[%s3498 + $0x9c] sm:$0xf]
      %v3526 = vld [vmem:[%s3498 + $0xa0] sm:$0xf]
      %v3527 = vld [vmem:[%s3498 + $0xa8] sm:$0xf]
      %v3528 = vld [vmem:[%s3498 + $0xac] sm:$0xf]
      %v3529 = vld [vmem:[%s3498 + $0xb4] sm:$0xf]
      %v3530 = vld [vmem:[%s3498 + $0xb8] sm:$0xf]
      %v3531 = vld [vmem:[%s3498 + $0x8] sm:$0x1]
      %v3532 = vld [vmem:[%s3498 + $0x14] sm:$0x1]
      %v3533 = vld [vmem:[%s3498 + $0x20] sm:$0x1]
      %v3534 = vld [vmem:[%s3498 + $0x2c] sm:$0x1]
      %v3535 = vld [vmem:[%s3498 + $0x38] sm:$0x1]
      %v3536 = vld [vmem:[%s3498 + $0x44] sm:$0x1]
      %v3537 = vld [vmem:[%s3498 + $0x50] sm:$0x1]
      %v3538 = vld [vmem:[%s3498 + $0x5c] sm:$0x1]
      %v3539 = vld [vmem:[%s3498 + $0x68] sm:$0x1]
      %v3540 = vld [vmem:[%s3498 + $0x74] sm:$0x1]
      %v3541 = vld [vmem:[%s3498 + $0x80] sm:$0x1]
      %v3542 = vld [vmem:[%s3498 + $0x8c] sm:$0x1]
      %v3543 = vld [vmem:[%s3498 + $0x98] sm:$0x1]
      %v3544 = vld [vmem:[%s3498 + $0xa4] sm:$0x1]
      %v3545 = vld [vmem:[%s3498 + $0xb0] sm:$0x1]
      %v3546 = vld [vmem:[%s3498 + $0xbc] sm:$0x1]
      %v3547 = vld [vmem:[%s3498] sm:$0xe]
      %v3548 = vld [vmem:[%s3498 + $0xc] sm:$0xe]
      %v3549 = vld [vmem:[%s3498 + $0x18] sm:$0xe]
      %v3550 = vld [vmem:[%s3498 + $0x24] sm:$0xe]
      %v3551 = vld [vmem:[%s3498 + $0x30] sm:$0xe]
      %v3552 = vld [vmem:[%s3498 + $0x3c] sm:$0xe]
      %v3553 = vld [vmem:[%s3498 + $0x48] sm:$0xe]
      %v3554 = vld [vmem:[%s3498 + $0x54] sm:$0xe]
      %v3555 = vld [vmem:[%s3498 + $0x60] sm:$0xe]
      %v3556 = vld [vmem:[%s3498 + $0x6c] sm:$0xe]
      %v3557 = vld [vmem:[%s3498 + $0x78] sm:$0xe]
      %v3558 = vld [vmem:[%s3498 + $0x84] sm:$0xe]
      %v3559 = vld [vmem:[%s3498 + $0x90] sm:$0xe]
      %v3560 = vld [vmem:[%s3498 + $0x9c] sm:$0xe]
      %v3561 = vld [vmem:[%s3498 + $0xa8] sm:$0xe]
      %v3562 = vld [vmem:[%s3498 + $0xb4] sm:$0xe]
      %v3595 = vunpack.c.l.b16 %v3499
      %v3596 = vunpack.c.l.b16 %v3500
      %v3597 = vunpack.c.l.b16 %v3501
      %v3598 = vunpack.c.l.b16 %v3502
      %v3599 = vunpack.c.l.b16 %v3503
      %v3600 = vunpack.c.l.b16 %v3504
      %v3601 = vunpack.c.l.b16 %v3505
      %v3602 = vunpack.c.l.b16 %v3506
      %v3603 = vunpack.c.l.b16 %v3507
      %v3604 = vunpack.c.l.b16 %v3508
      %v3605 = vunpack.c.l.b16 %v3509
      %v3606 = vunpack.c.l.b16 %v3510
      %v3607 = vunpack.c.l.b16 %v3511
      %v3608 = vunpack.c.l.b16 %v3512
      %v3609 = vunpack.c.l.b16 %v3513
      %v3610 = vunpack.c.l.b16 %v3514
      %v3611 = vunpack.c.l.b16 %v3515
      %v3612 = vunpack.c.l.b16 %v3516
      %v3613 = vunpack.c.l.b16 %v3517
      %v3614 = vunpack.c.l.b16 %v3518
      %v3615 = vunpack.c.l.b16 %v3519
      %v3616 = vunpack.c.l.b16 %v3520
      %v3617 = vunpack.c.l.b16 %v3521
      %v3618 = vunpack.c.l.b16 %v3522
      %v3619 = vunpack.c.l.b16 %v3523
      %v3620 = vunpack.c.l.b16 %v3524
      %v3621 = vunpack.c.l.b16 %v3525
      %v3622 = vunpack.c.l.b16 %v3526
      %v3623 = vunpack.c.l.b16 %v3527
      %v3624 = vunpack.c.l.b16 %v3528
      %v3625 = vunpack.c.l.b16 %v3529
      %v3626 = vunpack.c.l.b16 %v3530
      %v3627 = vpack.c.b16 %v3596, %v3595
      %v3628 = vpack.c.b16 %v3598, %v3597
      %v3629 = vpack.c.b16 %v3600, %v3599
      %v3630 = vpack.c.b16 %v3602, %v3601
      %v3631 = vpack.c.b16 %v3604, %v3603
      %v3632 = vpack.c.b16 %v3606, %v3605
      %v3633 = vpack.c.b16 %v3608, %v3607
      %v3634 = vpack.c.b16 %v3610, %v3609
      %v3635 = vpack.c.b16 %v3612, %v3611
      %v3636 = vpack.c.b16 %v3614, %v3613
      %v3637 = vpack.c.b16 %v3616, %v3615
      %v3638 = vpack.c.b16 %v3618, %v3617
      %v3639 = vpack.c.b16 %v3620, %v3619
      %v3640 = vpack.c.b16 %v3622, %v3621
      %v3641 = vpack.c.b16 %v3624, %v3623
      %v3642 = vpack.c.b16 %v3626, %v3625
      %v3675 = vunpack.c.l.b16 %v3531
      %v3676 = vunpack.c.l.b16 %v3532
      %v3677 = vunpack.c.l.b16 %v3533
      %v3678 = vunpack.c.l.b16 %v3534
      %v3679 = vunpack.c.l.b16 %v3535
      %v3680 = vunpack.c.l.b16 %v3536
      %v3681 = vunpack.c.l.b16 %v3537
      %v3682 = vunpack.c.l.b16 %v3538
      %v3683 = vunpack.c.l.b16 %v3539
      %v3684 = vunpack.c.l.b16 %v3540
      %v3685 = vunpack.c.l.b16 %v3541
      %v3686 = vunpack.c.l.b16 %v3542
      %v3687 = vunpack.c.l.b16 %v3543
      %v3688 = vunpack.c.l.b16 %v3544
      %v3689 = vunpack.c.l.b16 %v3545
      %v3690 = vunpack.c.l.b16 %v3546
      %v3691 = vpack.c.b16 %v3675, %v3675
      %v3692 = vpack.c.b16 %v3676, %v3676
      %v3693 = vpack.c.b16 %v3677, %v3677
      %v3694 = vpack.c.b16 %v3678, %v3678
      %v3695 = vpack.c.b16 %v3679, %v3679
      %v3696 = vpack.c.b16 %v3680, %v3680
      %v3697 = vpack.c.b16 %v3681, %v3681
      %v3698 = vpack.c.b16 %v3682, %v3682
      %v3699 = vpack.c.b16 %v3683, %v3683
      %v3700 = vpack.c.b16 %v3684, %v3684
      %v3701 = vpack.c.b16 %v3685, %v3685
      %v3702 = vpack.c.b16 %v3686, %v3686
      %v3703 = vpack.c.b16 %v3687, %v3687
      %v3704 = vpack.c.b16 %v3688, %v3688
      %v3705 = vpack.c.b16 %v3689, %v3689
      %v3706 = vpack.c.b16 %v3690, %v3690
      %v3708 = vshrl.u32 %v3627, 16
      %v3710 = vshll.u32 %v3627, 16
      %v3712 = vrot.slane %v3710, 1
      %v3713 = vor.u32 %v3708, %v3712
      %v3715 = vshll.u32 %v3691, 16
      %v3717 = vrot.slane %v3715, 1
      %v3718 = vsel %vm1491, %v3713, %v3717
      %v3720 = vshrl.u32 %v3628, 16
      %v3722 = vshll.u32 %v3628, 16
      %v3724 = vrot.slane %v3722, 1
      %v3725 = vor.u32 %v3720, %v3724
      %v3727 = vshll.u32 %v3692, 16
      %v3729 = vrot.slane %v3727, 1
      %v3730 = vsel %vm1491, %v3725, %v3729
      %v3732 = vshrl.u32 %v3629, 16
      %v3734 = vshll.u32 %v3629, 16
      %v3736 = vrot.slane %v3734, 1
      %v3737 = vor.u32 %v3732, %v3736
      %v3739 = vshll.u32 %v3693, 16
      %v3741 = vrot.slane %v3739, 1
      %v3742 = vsel %vm1491, %v3737, %v3741
      %v3744 = vshrl.u32 %v3630, 16
      %v3746 = vshll.u32 %v3630, 16
      %v3748 = vrot.slane %v3746, 1
      %v3749 = vor.u32 %v3744, %v3748
      %v3751 = vshll.u32 %v3694, 16
      %v3753 = vrot.slane %v3751, 1
      %v3754 = vsel %vm1491, %v3749, %v3753
      %v3756 = vshrl.u32 %v3631, 16
      %v3758 = vshll.u32 %v3631, 16
      %v3760 = vrot.slane %v3758, 1
      %v3761 = vor.u32 %v3756, %v3760
      %v3763 = vshll.u32 %v3695, 16
      %v3765 = vrot.slane %v3763, 1
      %v3766 = vsel %vm1491, %v3761, %v3765
      %v3768 = vshrl.u32 %v3632, 16
      %v3770 = vshll.u32 %v3632, 16
      %v3772 = vrot.slane %v3770, 1
      %v3773 = vor.u32 %v3768, %v3772
      %v3775 = vshll.u32 %v3696, 16
      %v3777 = vrot.slane %v3775, 1
      %v3778 = vsel %vm1491, %v3773, %v3777
      %v3780 = vshrl.u32 %v3633, 16
      %v3782 = vshll.u32 %v3633, 16
      %v3784 = vrot.slane %v3782, 1
      %v3785 = vor.u32 %v3780, %v3784
      %v3787 = vshll.u32 %v3697, 16
      %v3789 = vrot.slane %v3787, 1
      %v3790 = vsel %vm1491, %v3785, %v3789
      %v3792 = vshrl.u32 %v3634, 16
      %v3794 = vshll.u32 %v3634, 16
      %v3796 = vrot.slane %v3794, 1
      %v3797 = vor.u32 %v3792, %v3796
      %v3799 = vshll.u32 %v3698, 16
      %v3801 = vrot.slane %v3799, 1
      %v3802 = vsel %vm1491, %v3797, %v3801
      %v3804 = vshrl.u32 %v3635, 16
      %v3806 = vshll.u32 %v3635, 16
      %v3808 = vrot.slane %v3806, 1
      %v3809 = vor.u32 %v3804, %v3808
      %v3811 = vshll.u32 %v3699, 16
      %v3813 = vrot.slane %v3811, 1
      %v3814 = vsel %vm1491, %v3809, %v3813
      %v3816 = vshrl.u32 %v3636, 16
      %v3818 = vshll.u32 %v3636, 16
      %v3820 = vrot.slane %v3818, 1
      %v3821 = vor.u32 %v3816, %v3820
      %v3823 = vshll.u32 %v3700, 16
      %v3825 = vrot.slane %v3823, 1
      %v3826 = vsel %vm1491, %v3821, %v3825
      %v3828 = vshrl.u32 %v3637, 16
      %v3830 = vshll.u32 %v3637, 16
      %v3832 = vrot.slane %v3830, 1
      %v3833 = vor.u32 %v3828, %v3832
      %v3835 = vshll.u32 %v3701, 16
      %v3837 = vrot.slane %v3835, 1
      %v3838 = vsel %vm1491, %v3833, %v3837
      %v3840 = vshrl.u32 %v3638, 16
      %v3842 = vshll.u32 %v3638, 16
      %v3844 = vrot.slane %v3842, 1
      %v3845 = vor.u32 %v3840, %v3844
      %v3847 = vshll.u32 %v3702, 16
      %v3849 = vrot.slane %v3847, 1
      %v3850 = vsel %vm1491, %v3845, %v3849
      %v3852 = vshrl.u32 %v3639, 16
      %v3854 = vshll.u32 %v3639, 16
      %v3856 = vrot.slane %v3854, 1
      %v3857 = vor.u32 %v3852, %v3856
      %v3859 = vshll.u32 %v3703, 16
      %v3861 = vrot.slane %v3859, 1
      %v3862 = vsel %vm1491, %v3857, %v3861
      %v3864 = vshrl.u32 %v3640, 16
      %v3866 = vshll.u32 %v3640, 16
      %v3868 = vrot.slane %v3866, 1
      %v3869 = vor.u32 %v3864, %v3868
      %v3871 = vshll.u32 %v3704, 16
      %v3873 = vrot.slane %v3871, 1
      %v3874 = vsel %vm1491, %v3869, %v3873
      %v3876 = vshrl.u32 %v3641, 16
      %v3878 = vshll.u32 %v3641, 16
      %v3880 = vrot.slane %v3878, 1
      %v3881 = vor.u32 %v3876, %v3880
      %v3883 = vshll.u32 %v3705, 16
      %v3885 = vrot.slane %v3883, 1
      %v3886 = vsel %vm1491, %v3881, %v3885
      %v3888 = vshrl.u32 %v3642, 16
      %v3890 = vshll.u32 %v3642, 16
      %v3892 = vrot.slane %v3890, 1
      %v3893 = vor.u32 %v3888, %v3892
      %v3895 = vshll.u32 %v3706, 16
      %v3897 = vrot.slane %v3895, 1
      %v3898 = vsel %vm1491, %v3893, %v3897
      %v3931 = vunpack.c.l.b16 %v3547
      %v3932 = vunpack.c.l.b16 %v3548
      %v3933 = vunpack.c.l.b16 %v3549
      %v3934 = vunpack.c.l.b16 %v3550
      %v3935 = vunpack.c.l.b16 %v3551
      %v3936 = vunpack.c.l.b16 %v3552
      %v3937 = vunpack.c.l.b16 %v3553
      %v3938 = vunpack.c.l.b16 %v3554
      %v3939 = vunpack.c.l.b16 %v3555
      %v3940 = vunpack.c.l.b16 %v3556
      %v3941 = vunpack.c.l.b16 %v3557
      %v3942 = vunpack.c.l.b16 %v3558
      %v3943 = vunpack.c.l.b16 %v3559
      %v3944 = vunpack.c.l.b16 %v3560
      %v3945 = vunpack.c.l.b16 %v3561
      %v3946 = vunpack.c.l.b16 %v3562
      %v3947 = vpack.c.b16 %v3596, %v3931
      %v3948 = vpack.c.b16 %v3598, %v3932
      %v3949 = vpack.c.b16 %v3600, %v3933
      %v3950 = vpack.c.b16 %v3602, %v3934
      %v3951 = vpack.c.b16 %v3604, %v3935
      %v3952 = vpack.c.b16 %v3606, %v3936
      %v3953 = vpack.c.b16 %v3608, %v3937
      %v3954 = vpack.c.b16 %v3610, %v3938
      %v3955 = vpack.c.b16 %v3612, %v3939
      %v3956 = vpack.c.b16 %v3614, %v3940
      %v3957 = vpack.c.b16 %v3616, %v3941
      %v3958 = vpack.c.b16 %v3618, %v3942
      %v3959 = vpack.c.b16 %v3620, %v3943
      %v3960 = vpack.c.b16 %v3622, %v3944
      %v3961 = vpack.c.b16 %v3624, %v3945
      %v3962 = vpack.c.b16 %v3626, %v3946
      %v3963 = vrot.slane %v3947, 1
      %v3964 = vrot.slane %v3691, 1
      %v3965 = vsel %vm1748, %v3963, %v3964
      %v3966 = vrot.slane %v3948, 1
      %v3967 = vrot.slane %v3692, 1
      %v3968 = vsel %vm1748, %v3966, %v3967
      %v3969 = vrot.slane %v3949, 1
      %v3970 = vrot.slane %v3693, 1
      %v3971 = vsel %vm1748, %v3969, %v3970
      %v3972 = vrot.slane %v3950, 1
      %v3973 = vrot.slane %v3694, 1
      %v3974 = vsel %vm1748, %v3972, %v3973
      %v3975 = vrot.slane %v3951, 1
      %v3976 = vrot.slane %v3695, 1
      %v3977 = vsel %vm1748, %v3975, %v3976
      %v3978 = vrot.slane %v3952, 1
      %v3979 = vrot.slane %v3696, 1
      %v3980 = vsel %vm1748, %v3978, %v3979
      %v3981 = vrot.slane %v3953, 1
      %v3982 = vrot.slane %v3697, 1
      %v3983 = vsel %vm1748, %v3981, %v3982
      %v3984 = vrot.slane %v3954, 1
      %v3985 = vrot.slane %v3698, 1
      %v3986 = vsel %vm1748, %v3984, %v3985
      %v3987 = vrot.slane %v3955, 1
      %v3988 = vrot.slane %v3699, 1
      %v3989 = vsel %vm1748, %v3987, %v3988
      %v3990 = vrot.slane %v3956, 1
      %v3991 = vrot.slane %v3700, 1
      %v3992 = vsel %vm1748, %v3990, %v3991
      %v3993 = vrot.slane %v3957, 1
      %v3994 = vrot.slane %v3701, 1
      %v3995 = vsel %vm1748, %v3993, %v3994
      %v3996 = vrot.slane %v3958, 1
      %v3997 = vrot.slane %v3702, 1
      %v3998 = vsel %vm1748, %v3996, %v3997
      %v3999 = vrot.slane %v3959, 1
      %v4000 = vrot.slane %v3703, 1
      %v4001 = vsel %vm1748, %v3999, %v4000
      %v4002 = vrot.slane %v3960, 1
      %v4003 = vrot.slane %v3704, 1
      %v4004 = vsel %vm1748, %v4002, %v4003
      %v4005 = vrot.slane %v3961, 1
      %v4006 = vrot.slane %v3705, 1
      %v4007 = vsel %vm1748, %v4005, %v4006
      %v4008 = vrot.slane %v3962, 1
      %v4009 = vrot.slane %v3706, 1
      %v4010 = vsel %vm1748, %v4008, %v4009
      %s4027 = scalar_lea.vmem %s1, 384
      %v4028 = vld [vmem:[%s4027] sm:$0xf]
      %v4029 = vld [vmem:[%s4027 + $0x4] sm:$0xf]
      %v4030 = vld [vmem:[%s4027 + $0x8] sm:$0xf]
      %v4031 = vld [vmem:[%s4027 + $0xc] sm:$0xf]
      %v4032 = vld [vmem:[%s4027 + $0x10] sm:$0xf]
      %v4033 = vld [vmem:[%s4027 + $0x14] sm:$0xf]
      %v4034 = vld [vmem:[%s4027 + $0x18] sm:$0xf]
      %v4035 = vld [vmem:[%s4027 + $0x1c] sm:$0xf]
      %v4036 = vld [vmem:[%s4027 + $0x20] sm:$0xf]
      %v4037 = vld [vmem:[%s4027 + $0x24] sm:$0xf]
      %v4038 = vld [vmem:[%s4027 + $0x28] sm:$0xf]
      %v4039 = vld [vmem:[%s4027 + $0x2c] sm:$0xf]
      %v4040 = vld [vmem:[%s4027 + $0x30] sm:$0xf]
      %v4041 = vld [vmem:[%s4027 + $0x34] sm:$0xf]
      %v4042 = vld [vmem:[%s4027 + $0x38] sm:$0xf]
      %v4043 = vld [vmem:[%s4027 + $0x3c] sm:$0xf]
      %v4044 = vld [vmem:[%s4027 + $0x40] sm:$0xf]
      %v4045 = vld [vmem:[%s4027 + $0x44] sm:$0xf]
      %v4046 = vld [vmem:[%s4027 + $0x48] sm:$0xf]
      %v4047 = vld [vmem:[%s4027 + $0x4c] sm:$0xf]
      %v4048 = vld [vmem:[%s4027 + $0x50] sm:$0xf]
      %v4049 = vld [vmem:[%s4027 + $0x54] sm:$0xf]
      %v4050 = vld [vmem:[%s4027 + $0x58] sm:$0xf]
      %v4051 = vld [vmem:[%s4027 + $0x5c] sm:$0xf]
      %v4052 = vld [vmem:[%s4027 + $0x60] sm:$0xf]
      %v4053 = vld [vmem:[%s4027 + $0x64] sm:$0xf]
      %v4054 = vld [vmem:[%s4027 + $0x68] sm:$0xf]
      %v4055 = vld [vmem:[%s4027 + $0x6c] sm:$0xf]
      %v4056 = vld [vmem:[%s4027 + $0x70] sm:$0xf]
      %v4057 = vld [vmem:[%s4027 + $0x74] sm:$0xf]
      %v4058 = vld [vmem:[%s4027 + $0x78] sm:$0xf]
      %v4059 = vld [vmem:[%s4027 + $0x7c] sm:$0xf]
      %v4060 = vld [vmem:[%s4027 + $0x80] sm:$0xf]
      %v4061 = vld [vmem:[%s4027 + $0x84] sm:$0xf]
      %v4062 = vld [vmem:[%s4027 + $0x88] sm:$0xf]
      %v4063 = vld [vmem:[%s4027 + $0x8c] sm:$0xf]
      %v4064 = vld [vmem:[%s4027 + $0x90] sm:$0xf]
      %v4065 = vld [vmem:[%s4027 + $0x94] sm:$0xf]
      %v4066 = vld [vmem:[%s4027 + $0x98] sm:$0xf]
      %v4067 = vld [vmem:[%s4027 + $0x9c] sm:$0xf]
      %v4068 = vld [vmem:[%s4027 + $0xa0] sm:$0xf]
      %v4069 = vld [vmem:[%s4027 + $0xa4] sm:$0xf]
      %v4070 = vld [vmem:[%s4027 + $0xa8] sm:$0xf]
      %v4071 = vld [vmem:[%s4027 + $0xac] sm:$0xf]
      %v4072 = vld [vmem:[%s4027 + $0xb0] sm:$0xf]
      %v4073 = vld [vmem:[%s4027 + $0xb4] sm:$0xf]
      %v4074 = vld [vmem:[%s4027 + $0xb8] sm:$0xf]
      %v4075 = vld [vmem:[%s4027 + $0xbc] sm:$0xf]
      %v4124 = vunpack.c.l.b16 %v4028
      %v4125 = vunpack.c.l.b16 %v4029
      %v4126 = vunpack.c.l.b16 %v4030
      %v4127 = vunpack.c.l.b16 %v4031
      %v4128 = vunpack.c.l.b16 %v4032
      %v4129 = vunpack.c.l.b16 %v4033
      %v4130 = vunpack.c.l.b16 %v4034
      %v4131 = vunpack.c.l.b16 %v4035
      %v4132 = vunpack.c.l.b16 %v4036
      %v4133 = vunpack.c.l.b16 %v4037
      %v4134 = vunpack.c.l.b16 %v4038
      %v4135 = vunpack.c.l.b16 %v4039
      %v4136 = vunpack.c.l.b16 %v4040
      %v4137 = vunpack.c.l.b16 %v4041
      %v4138 = vunpack.c.l.b16 %v4042
      %v4139 = vunpack.c.l.b16 %v4043
      %v4140 = vunpack.c.l.b16 %v4044
      %v4141 = vunpack.c.l.b16 %v4045
      %v4142 = vunpack.c.l.b16 %v4046
      %v4143 = vunpack.c.l.b16 %v4047
      %v4144 = vunpack.c.l.b16 %v4048
      %v4145 = vunpack.c.l.b16 %v4049
      %v4146 = vunpack.c.l.b16 %v4050
      %v4147 = vunpack.c.l.b16 %v4051
      %v4148 = vunpack.c.l.b16 %v4052
      %v4149 = vunpack.c.l.b16 %v4053
      %v4150 = vunpack.c.l.b16 %v4054
      %v4151 = vunpack.c.l.b16 %v4055
      %v4152 = vunpack.c.l.b16 %v4056
      %v4153 = vunpack.c.l.b16 %v4057
      %v4154 = vunpack.c.l.b16 %v4058
      %v4155 = vunpack.c.l.b16 %v4059
      %v4156 = vunpack.c.l.b16 %v4060
      %v4157 = vunpack.c.l.b16 %v4061
      %v4158 = vunpack.c.l.b16 %v4062
      %v4159 = vunpack.c.l.b16 %v4063
      %v4160 = vunpack.c.l.b16 %v4064
      %v4161 = vunpack.c.l.b16 %v4065
      %v4162 = vunpack.c.l.b16 %v4066
      %v4163 = vunpack.c.l.b16 %v4067
      %v4164 = vunpack.c.l.b16 %v4068
      %v4165 = vunpack.c.l.b16 %v4069
      %v4166 = vunpack.c.l.b16 %v4070
      %v4167 = vunpack.c.l.b16 %v4071
      %v4168 = vunpack.c.l.b16 %v4072
      %v4169 = vunpack.c.l.b16 %v4073
      %v4170 = vunpack.c.l.b16 %v4074
      %v4171 = vunpack.c.l.b16 %v4075
      %v4172 = vpack.c.b16 %v4125, %v4124
      %v4173 = vpack.c.b16 %v4127, %v4126
      %v4174 = vpack.c.b16 %v4129, %v4128
      %v4175 = vpack.c.b16 %v4131, %v4130
      %v4176 = vpack.c.b16 %v4133, %v4132
      %v4177 = vpack.c.b16 %v4135, %v4134
      %v4178 = vpack.c.b16 %v4137, %v4136
      %v4179 = vpack.c.b16 %v4139, %v4138
      %v4180 = vpack.c.b16 %v4141, %v4140
      %v4181 = vpack.c.b16 %v4143, %v4142
      %v4182 = vpack.c.b16 %v4145, %v4144
      %v4183 = vpack.c.b16 %v4147, %v4146
      %v4184 = vpack.c.b16 %v4149, %v4148
      %v4185 = vpack.c.b16 %v4151, %v4150
      %v4186 = vpack.c.b16 %v4153, %v4152
      %v4187 = vpack.c.b16 %v4155, %v4154
      %v4188 = vpack.c.b16 %v4157, %v4156
      %v4189 = vpack.c.b16 %v4159, %v4158
      %v4190 = vpack.c.b16 %v4161, %v4160
      %v4191 = vpack.c.b16 %v4163, %v4162
      %v4192 = vpack.c.b16 %v4165, %v4164
      %v4193 = vpack.c.b16 %v4167, %v4166
      %v4194 = vpack.c.b16 %v4169, %v4168
      %v4195 = vpack.c.b16 %v4171, %v4170
      %4220 = vmatprep.subr.bf16.mxu0 0
      %4221 = vmatpush1.bf16.msra.mxu0 %v4179
      %4222 = vmatprep.subr.bf16.mxu0 0
      %4223 = vmatpush1.bf16.msra.mxu0 %v4178
      %4224 = vmatprep.subr.bf16.mxu0 0
      %4225 = vmatpush1.bf16.msra.mxu0 %v4177
      %4226 = vmatprep.subr.bf16.mxu0 0
      %4227 = vmatpush1.bf16.msra.mxu0 %v4176
      %4228 = vmatprep.subr.bf16.mxu0 0
      %4229 = vmatpush1.bf16.msra.mxu0 %v4175
      %4230 = vmatprep.subr.bf16.mxu0 0
      %4231 = vmatpush1.bf16.msra.mxu0 %v4174
      %4232 = vmatprep.subr.bf16.mxu0 0
      %4233 = vmatpush1.bf16.msra.mxu0 %v4173
      %4234 = vmatprep.subr.bf16.mxu0 0
      %4235 = vmatpush1.bf16.msra.mxu0 %v4172
      %4236 = vmatprep.subr.bf16.mxu0 0
      %4237 = vmatpush2.bf16.msra.mxu0 %v4187
      %4238 = vmatprep.subr.bf16.mxu0 0
      %4239 = vmatpush2.bf16.msra.mxu0 %v4186
      %4240 = vmatprep.subr.bf16.mxu0 0
      %4241 = vmatpush2.bf16.msra.mxu0 %v4185
      %4242 = vmatprep.subr.bf16.mxu0 0
      %4243 = vmatpush2.bf16.msra.mxu0 %v4184
      %4244 = vmatprep.subr.bf16.mxu0 0
      %4245 = vmatpush2.bf16.msra.mxu0 %v4183
      %4246 = vmatprep.subr.bf16.mxu0 0
      %4247 = vmatpush2.bf16.msra.mxu0 %v4182
      %4248 = vmatprep.subr.bf16.mxu0 0
      %4249 = vmatpush2.bf16.msra.mxu0 %v4181
      %4250 = vmatprep.subr.bf16.mxu0 0
      %4251 = vmatpush2.bf16.msra.mxu0 %v4180
      %4252 = vmatprep.mubr.bf16.mxu0 %v3718
      %4253 = vmatmul.mubr.bf16.gmra.mxu0 %v3627
      %v4254 = vpop.f32.mrf.mxu0
      %v4255 = vadd.f32 0.0, %v4254
      %v4256 = vpop.f32.mrf.mxu0
      %v4257 = vpop.f32.mrf.mxu0
      %v4258 = vadd.f32 0.0, %v4257
      %v4259 = vpop.f32.mrf.mxu0
      %4260 = vmatprep.mubr.bf16.mxu0 %v3730
      %4261 = vmatmul.mubr.bf16.gmra.mxu0 %v3628
      %v4262 = vpop.f32.mrf.mxu0
      %v4263 = vadd.f32 0.0, %v4262
      %v4264 = vpop.f32.mrf.mxu0
      %v4265 = vpop.f32.mrf.mxu0
      %v4266 = vadd.f32 0.0, %v4265
      %v4267 = vpop.f32.mrf.mxu0
      %4268 = vmatprep.mubr.bf16.mxu0 %v3742
      %4269 = vmatmul.mubr.bf16.gmra.mxu0 %v3629
      %v4270 = vpop.f32.mrf.mxu0
      %v4271 = vadd.f32 0.0, %v4270
      %v4272 = vpop.f32.mrf.mxu0
      %v4273 = vpop.f32.mrf.mxu0
      %v4274 = vadd.f32 0.0, %v4273
      %v4275 = vpop.f32.mrf.mxu0
      %4276 = vmatprep.mubr.bf16.mxu0 %v3754
      %4277 = vmatmul.mubr.bf16.gmra.mxu0 %v3630
      %v4278 = vpop.f32.mrf.mxu0
      %v4279 = vadd.f32 0.0, %v4278
      %v4280 = vpop.f32.mrf.mxu0
      %v4281 = vpop.f32.mrf.mxu0
      %v4282 = vadd.f32 0.0, %v4281
      %v4283 = vpop.f32.mrf.mxu0
      %4284 = vmatprep.mubr.bf16.mxu0 %v3766
      %4285 = vmatmul.mubr.bf16.gmra.mxu0 %v3631
      %v4286 = vpop.f32.mrf.mxu0
      %v4287 = vadd.f32 0.0, %v4286
      %v4288 = vpop.f32.mrf.mxu0
      %v4289 = vpop.f32.mrf.mxu0
      %v4290 = vadd.f32 0.0, %v4289
      %v4291 = vpop.f32.mrf.mxu0
      %4292 = vmatprep.mubr.bf16.mxu0 %v3778
      %4293 = vmatmul.mubr.bf16.gmra.mxu0 %v3632
      %v4294 = vpop.f32.mrf.mxu0
      %v4295 = vadd.f32 0.0, %v4294
      %v4296 = vpop.f32.mrf.mxu0
      %v4297 = vpop.f32.mrf.mxu0
      %v4298 = vadd.f32 0.0, %v4297
      %v4299 = vpop.f32.mrf.mxu0
      %4300 = vmatprep.mubr.bf16.mxu0 %v3790
      %4301 = vmatmul.mubr.bf16.gmra.mxu0 %v3633
      %v4302 = vpop.f32.mrf.mxu0
      %v4303 = vadd.f32 0.0, %v4302
      %v4304 = vpop.f32.mrf.mxu0
      %v4305 = vpop.f32.mrf.mxu0
      %v4306 = vadd.f32 0.0, %v4305
      %v4307 = vpop.f32.mrf.mxu0
      %4308 = vmatprep.mubr.bf16.mxu0 %v3802
      %4309 = vmatmul.mubr.bf16.gmra.mxu0 %v3634
      %v4310 = vpop.f32.mrf.mxu0
      %v4311 = vadd.f32 0.0, %v4310
      %v4312 = vpop.f32.mrf.mxu0
      %v4313 = vpop.f32.mrf.mxu0
      %v4314 = vadd.f32 0.0, %v4313
      %v4315 = vpop.f32.mrf.mxu0
      %4316 = vmatprep.mubr.bf16.mxu0 %v3814
      %4317 = vmatmul.mubr.bf16.gmra.mxu0 %v3635
      %v4318 = vpop.f32.mrf.mxu0
      %v4319 = vadd.f32 0.0, %v4318
      %v4320 = vpop.f32.mrf.mxu0
      %v4321 = vpop.f32.mrf.mxu0
      %v4322 = vadd.f32 0.0, %v4321
      %v4323 = vpop.f32.mrf.mxu0
      %4324 = vmatprep.mubr.bf16.mxu0 %v3826
      %4325 = vmatmul.mubr.bf16.gmra.mxu0 %v3636
      %v4326 = vpop.f32.mrf.mxu0
      %v4327 = vadd.f32 0.0, %v4326
      %v4328 = vpop.f32.mrf.mxu0
      %v4329 = vpop.f32.mrf.mxu0
      %v4330 = vadd.f32 0.0, %v4329
      %v4331 = vpop.f32.mrf.mxu0
      %4332 = vmatprep.mubr.bf16.mxu0 %v3838
      %4333 = vmatmul.mubr.bf16.gmra.mxu0 %v3637
      %v4334 = vpop.f32.mrf.mxu0
      %v4335 = vadd.f32 0.0, %v4334
      %v4336 = vpop.f32.mrf.mxu0
      %v4337 = vpop.f32.mrf.mxu0
      %v4338 = vadd.f32 0.0, %v4337
      %v4339 = vpop.f32.mrf.mxu0
      %4340 = vmatprep.mubr.bf16.mxu0 %v3850
      %4341 = vmatmul.mubr.bf16.gmra.mxu0 %v3638
      %v4342 = vpop.f32.mrf.mxu0
      %v4343 = vadd.f32 0.0, %v4342
      %v4344 = vpop.f32.mrf.mxu0
      %v4345 = vpop.f32.mrf.mxu0
      %v4346 = vadd.f32 0.0, %v4345
      %v4347 = vpop.f32.mrf.mxu0
      %4348 = vmatprep.mubr.bf16.mxu0 %v3862
      %4349 = vmatmul.mubr.bf16.gmra.mxu0 %v3639
      %v4350 = vpop.f32.mrf.mxu0
      %v4351 = vadd.f32 0.0, %v4350
      %v4352 = vpop.f32.mrf.mxu0
      %v4353 = vpop.f32.mrf.mxu0
      %v4354 = vadd.f32 0.0, %v4353
      %v4355 = vpop.f32.mrf.mxu0
      %4356 = vmatprep.mubr.bf16.mxu0 %v3874
      %4357 = vmatmul.mubr.bf16.gmra.mxu0 %v3640
      %v4358 = vpop.f32.mrf.mxu0
      %v4359 = vadd.f32 0.0, %v4358
      %v4360 = vpop.f32.mrf.mxu0
      %v4361 = vpop.f32.mrf.mxu0
      %v4362 = vadd.f32 0.0, %v4361
      %v4363 = vpop.f32.mrf.mxu0
      %4364 = vmatprep.mubr.bf16.mxu0 %v3886
      %4365 = vmatmul.mubr.bf16.gmra.mxu0 %v3641
      %v4366 = vpop.f32.mrf.mxu0
      %v4367 = vadd.f32 0.0, %v4366
      %v4368 = vpop.f32.mrf.mxu0
      %v4369 = vpop.f32.mrf.mxu0
      %v4370 = vadd.f32 0.0, %v4369
      %v4371 = vpop.f32.mrf.mxu0
      %4372 = vmatprep.mubr.bf16.mxu0 %v3898
      %4373 = vmatmul.mubr.bf16.gmra.mxu0 %v3642
      %v4374 = vpop.f32.mrf.mxu0
      %v4375 = vadd.f32 0.0, %v4374
      %v4376 = vpop.f32.mrf.mxu0
      %v4377 = vpop.f32.mrf.mxu0
      %v4378 = vadd.f32 0.0, %v4377
      %v4379 = vpop.f32.mrf.mxu0
      %4380 = vdwg.mxu0
      %4381 = vmatprep.subr.bf16.mxu0 0
      %4382 = vmatpush1.bf16.msra.mxu0 %v4195
      %4383 = vmatprep.subr.bf16.mxu0 0
      %4384 = vmatpush1.bf16.msra.mxu0 %v4194
      %4385 = vmatprep.subr.bf16.mxu0 0
      %4386 = vmatpush1.bf16.msra.mxu0 %v4193
      %4387 = vmatprep.subr.bf16.mxu0 0
      %4388 = vmatpush1.bf16.msra.mxu0 %v4192
      %4389 = vmatprep.subr.bf16.mxu0 0
      %4390 = vmatpush1.bf16.msra.mxu0 %v4191
      %4391 = vmatprep.subr.bf16.mxu0 0
      %4392 = vmatpush1.bf16.msra.mxu0 %v4190
      %4393 = vmatprep.subr.bf16.mxu0 0
      %4394 = vmatpush1.bf16.msra.mxu0 %v4189
      %4395 = vmatprep.subr.bf16.mxu0 0
      %4396 = vmatpush1.bf16.msra.mxu0 %v4188
      %4397 = vmatprep.subr.bf16.mxu0 0
      %4398 = vmatpush2.bf16.msra.mxu0 0
      %4399 = vmatprep.subr.bf16.mxu0 0
      %4400 = vmatpush2.bf16.msra.mxu0 0
      %4401 = vmatprep.subr.bf16.mxu0 0
      %4402 = vmatpush2.bf16.msra.mxu0 0
      %4403 = vmatprep.subr.bf16.mxu0 0
      %4404 = vmatpush2.bf16.msra.mxu0 0
      %4405 = vmatprep.subr.bf16.mxu0 0
      %4406 = vmatpush2.bf16.msra.mxu0 0
      %4407 = vmatprep.subr.bf16.mxu0 0
      %4408 = vmatpush2.bf16.msra.mxu0 0
      %4409 = vmatprep.subr.bf16.mxu0 0
      %4410 = vmatpush2.bf16.msra.mxu0 0
      %4411 = vmatprep.subr.bf16.mxu0 0
      %4412 = vmatpush2.bf16.msra.mxu0 0
      %4413 = vmatprep.mubr.bf16.mxu0 0
      %4414 = vmatmul.mubr.bf16.gmra.mxu0 %v3965
      %v4415 = vpop.f32.mrf.mxu0
      %v4416 = vadd.f32 %v4255, %v4415
      %v4417 = vpop.f32.mrf.mxu0
      %v4418 = vpop.f32.mrf.mxu0
      %v4419 = vadd.f32 %v4258, %v4418
      %v4420 = vpop.f32.mrf.mxu0
      %4421 = vmatprep.mubr.bf16.mxu0 0
      %4422 = vmatmul.mubr.bf16.gmra.mxu0 %v3968
      %v4423 = vpop.f32.mrf.mxu0
      %v4424 = vadd.f32 %v4263, %v4423
      %v4425 = vpop.f32.mrf.mxu0
      %v4426 = vpop.f32.mrf.mxu0
      %v4427 = vadd.f32 %v4266, %v4426
      %v4428 = vpop.f32.mrf.mxu0
      %4429 = vmatprep.mubr.bf16.mxu0 0
      %4430 = vmatmul.mubr.bf16.gmra.mxu0 %v3971
      %v4431 = vpop.f32.mrf.mxu0
      %v4432 = vadd.f32 %v4271, %v4431
      %v4433 = vpop.f32.mrf.mxu0
      %v4434 = vpop.f32.mrf.mxu0
      %v4435 = vadd.f32 %v4274, %v4434
      %v4436 = vpop.f32.mrf.mxu0
      %4437 = vmatprep.mubr.bf16.mxu0 0
      %4438 = vmatmul.mubr.bf16.gmra.mxu0 %v3974
      %v4439 = vpop.f32.mrf.mxu0
      %v4440 = vadd.f32 %v4279, %v4439
      %v4441 = vpop.f32.mrf.mxu0
      %v4442 = vpop.f32.mrf.mxu0
      %v4443 = vadd.f32 %v4282, %v4442
      %v4444 = vpop.f32.mrf.mxu0
      %4445 = vmatprep.mubr.bf16.mxu0 0
      %4446 = vmatmul.mubr.bf16.gmra.mxu0 %v3977
      %v4447 = vpop.f32.mrf.mxu0
      %v4448 = vadd.f32 %v4287, %v4447
      %v4449 = vpop.f32.mrf.mxu0
      %v4450 = vpop.f32.mrf.mxu0
      %v4451 = vadd.f32 %v4290, %v4450
      %v4452 = vpop.f32.mrf.mxu0
      %4453 = vmatprep.mubr.bf16.mxu0 0
      %4454 = vmatmul.mubr.bf16.gmra.mxu0 %v3980
      %v4455 = vpop.f32.mrf.mxu0
      %v4456 = vadd.f32 %v4295, %v4455
      %v4457 = vpop.f32.mrf.mxu0
      %v4458 = vpop.f32.mrf.mxu0
      %v4459 = vadd.f32 %v4298, %v4458
      %v4460 = vpop.f32.mrf.mxu0
      %4461 = vmatprep.mubr.bf16.mxu0 0
      %4462 = vmatmul.mubr.bf16.gmra.mxu0 %v3983
      %v4463 = vpop.f32.mrf.mxu0
      %v4464 = vadd.f32 %v4303, %v4463
      %v4465 = vpop.f32.mrf.mxu0
      %v4466 = vpop.f32.mrf.mxu0
      %v4467 = vadd.f32 %v4306, %v4466
      %v4468 = vpop.f32.mrf.mxu0
      %4469 = vmatprep.mubr.bf16.mxu0 0
      %4470 = vmatmul.mubr.bf16.gmra.mxu0 %v3986
      %v4471 = vpop.f32.mrf.mxu0
      %v4472 = vadd.f32 %v4311, %v4471
      %v4473 = vpop.f32.mrf.mxu0
      %v4474 = vpop.f32.mrf.mxu0
      %v4475 = vadd.f32 %v4314, %v4474
      %v4476 = vpop.f32.mrf.mxu0
      %4477 = vmatprep.mubr.bf16.mxu0 0
      %4478 = vmatmul.mubr.bf16.gmra.mxu0 %v3989
      %v4479 = vpop.f32.mrf.mxu0
      %v4480 = vadd.f32 %v4319, %v4479
      %v4481 = vpop.f32.mrf.mxu0
      %v4482 = vpop.f32.mrf.mxu0
      %v4483 = vadd.f32 %v4322, %v4482
      %v4484 = vpop.f32.mrf.mxu0
      %4485 = vmatprep.mubr.bf16.mxu0 0
      %4486 = vmatmul.mubr.bf16.gmra.mxu0 %v3992
      %v4487 = vpop.f32.mrf.mxu0
      %v4488 = vadd.f32 %v4327, %v4487
      %v4489 = vpop.f32.mrf.mxu0
      %v4490 = vpop.f32.mrf.mxu0
      %v4491 = vadd.f32 %v4330, %v4490
      %v4492 = vpop.f32.mrf.mxu0
      %4493 = vmatprep.mubr.bf16.mxu0 0
      %4494 = vmatmul.mubr.bf16.gmra.mxu0 %v3995
      %v4495 = vpop.f32.mrf.mxu0
      %v4496 = vadd.f32 %v4335, %v4495
      %v4497 = vpop.f32.mrf.mxu0
      %v4498 = vpop.f32.mrf.mxu0
      %v4499 = vadd.f32 %v4338, %v4498
      %v4500 = vpop.f32.mrf.mxu0
      %4501 = vmatprep.mubr.bf16.mxu0 0
      %4502 = vmatmul.mubr.bf16.gmra.mxu0 %v3998
      %v4503 = vpop.f32.mrf.mxu0
      %v4504 = vadd.f32 %v4343, %v4503
      %v4505 = vpop.f32.mrf.mxu0
      %v4506 = vpop.f32.mrf.mxu0
      %v4507 = vadd.f32 %v4346, %v4506
      %v4508 = vpop.f32.mrf.mxu0
      %4509 = vmatprep.mubr.bf16.mxu0 0
      %4510 = vmatmul.mubr.bf16.gmra.mxu0 %v4001
      %v4511 = vpop.f32.mrf.mxu0
      %v4512 = vadd.f32 %v4351, %v4511
      %v4513 = vpop.f32.mrf.mxu0
      %v4514 = vpop.f32.mrf.mxu0
      %v4515 = vadd.f32 %v4354, %v4514
      %v4516 = vpop.f32.mrf.mxu0
      %4517 = vmatprep.mubr.bf16.mxu0 0
      %4518 = vmatmul.mubr.bf16.gmra.mxu0 %v4004
      %v4519 = vpop.f32.mrf.mxu0
      %v4520 = vadd.f32 %v4359, %v4519
      %v4521 = vpop.f32.mrf.mxu0
      %v4522 = vpop.f32.mrf.mxu0
      %v4523 = vadd.f32 %v4362, %v4522
      %v4524 = vpop.f32.mrf.mxu0
      %4525 = vmatprep.mubr.bf16.mxu0 0
      %4526 = vmatmul.mubr.bf16.gmra.mxu0 %v4007
      %v4527 = vpop.f32.mrf.mxu0
      %v4528 = vadd.f32 %v4367, %v4527
      %v4529 = vpop.f32.mrf.mxu0
      %v4530 = vpop.f32.mrf.mxu0
      %v4531 = vadd.f32 %v4370, %v4530
      %v4532 = vpop.f32.mrf.mxu0
      %4533 = vmatprep.mubr.bf16.mxu0 0
      %4534 = vmatmul.mubr.bf16.gmra.mxu0 %v4010
      %v4535 = vpop.f32.mrf.mxu0
      %v4536 = vadd.f32 %v4375, %v4535
      %v4537 = vpop.f32.mrf.mxu0
      %v4538 = vpop.f32.mrf.mxu0
      %v4539 = vadd.f32 %v4378, %v4538
      %v4540 = vpop.f32.mrf.mxu0
      %4541 = vdwg.mxu0
      %v4542 = vld [vmem:[#allocation3] sm:$0xff]
      %v4543 = vld [vmem:[#allocation3 + $0x8] sm:$0xff]
      %v4544 = vld [vmem:[#allocation3 + $0x10] sm:$0xff]
      %v4545 = vld [vmem:[#allocation3 + $0x18] sm:$0xff]
      %v4546 = vld [vmem:[#allocation3 + $0x20] sm:$0xff]
      %v4547 = vld [vmem:[#allocation3 + $0x28] sm:$0xff]
      %v4548 = vld [vmem:[#allocation3 + $0x30] sm:$0xff]
      %v4549 = vld [vmem:[#allocation3 + $0x38] sm:$0xff]
      %v4550 = vld [vmem:[#allocation3 + $0x40] sm:$0xff]
      %v4551 = vld [vmem:[#allocation3 + $0x48] sm:$0xff]
      %v4552 = vld [vmem:[#allocation3 + $0x50] sm:$0xff]
      %v4553 = vld [vmem:[#allocation3 + $0x58] sm:$0xff]
      %v4554 = vld [vmem:[#allocation3 + $0x60] sm:$0xff]
      %v4555 = vld [vmem:[#allocation3 + $0x68] sm:$0xff]
      %v4556 = vld [vmem:[#allocation3 + $0x70] sm:$0xff]
      %v4557 = vld [vmem:[#allocation3 + $0x78] sm:$0xff]
      %v4558 = vld [vmem:[#allocation3 + $0x80] sm:$0xff]
      %v4559 = vld [vmem:[#allocation3 + $0x88] sm:$0xff]
      %v4560 = vld [vmem:[#allocation3 + $0x90] sm:$0xff]
      %v4561 = vld [vmem:[#allocation3 + $0x98] sm:$0xff]
      %v4562 = vld [vmem:[#allocation3 + $0xa0] sm:$0xff]
      %v4563 = vld [vmem:[#allocation3 + $0xa8] sm:$0xff]
      %v4564 = vld [vmem:[#allocation3 + $0xb0] sm:$0xff]
      %v4565 = vld [vmem:[#allocation3 + $0xb8] sm:$0xff]
      %v4566 = vld [vmem:[#allocation3 + $0xc0] sm:$0xff]
      %v4567 = vld [vmem:[#allocation3 + $0xc8] sm:$0xff]
      %v4568 = vld [vmem:[#allocation3 + $0xd0] sm:$0xff]
      %v4569 = vld [vmem:[#allocation3 + $0xd8] sm:$0xff]
      %v4570 = vld [vmem:[#allocation3 + $0xe0] sm:$0xff]
      %v4571 = vld [vmem:[#allocation3 + $0xe8] sm:$0xff]
      %v4572 = vld [vmem:[#allocation3 + $0xf0] sm:$0xff]
      %v4573 = vld [vmem:[#allocation3 + $0xf8] sm:$0xff]
      %v4574 = vadd.f32 %v4542, %v4416
      %v4575 = vadd.f32 %v4543, %v4419
      %v4576 = vadd.f32 %v4544, %v4424
      %v4577 = vadd.f32 %v4545, %v4427
      %v4578 = vadd.f32 %v4546, %v4432
      %v4579 = vadd.f32 %v4547, %v4435
      %v4580 = vadd.f32 %v4548, %v4440
      %v4581 = vadd.f32 %v4549, %v4443
      %v4582 = vadd.f32 %v4550, %v4448
      %v4583 = vadd.f32 %v4551, %v4451
      %v4584 = vadd.f32 %v4552, %v4456
      %v4585 = vadd.f32 %v4553, %v4459
      %v4586 = vadd.f32 %v4554, %v4464
      %v4587 = vadd.f32 %v4555, %v4467
      %v4588 = vadd.f32 %v4556, %v4472
      %v4589 = vadd.f32 %v4557, %v4475
      %v4590 = vadd.f32 %v4558, %v4480
      %v4591 = vadd.f32 %v4559, %v4483
      %v4592 = vadd.f32 %v4560, %v4488
      %v4593 = vadd.f32 %v4561, %v4491
      %v4594 = vadd.f32 %v4562, %v4496
      %v4595 = vadd.f32 %v4563, %v4499
      %v4596 = vadd.f32 %v4564, %v4504
      %v4597 = vadd.f32 %v4565, %v4507
      %v4598 = vadd.f32 %v4566, %v4512
      %v4599 = vadd.f32 %v4567, %v4515
      %v4600 = vadd.f32 %v4568, %v4520
      %v4601 = vadd.f32 %v4569, %v4523
      %v4602 = vadd.f32 %v4570, %v4528
      %v4603 = vadd.f32 %v4571, %v4531
      %v4604 = vadd.f32 %v4572, %v4536
      %v4605 = vadd.f32 %v4573, %v4539
      %4606 = vst [vmem:[#allocation3] sm:$0xff] %v4574
      %4607 = vst [vmem:[#allocation3 + $0x8] sm:$0xff] %v4575
      %4608 = vst [vmem:[#allocation3 + $0x10] sm:$0xff] %v4576
      %4609 = vst [vmem:[#allocation3 + $0x18] sm:$0xff] %v4577
      %4610 = vst [vmem:[#allocation3 + $0x20] sm:$0xff] %v4578
      %4611 = vst [vmem:[#allocation3 + $0x28] sm:$0xff] %v4579
      %4612 = vst [vmem:[#allocation3 + $0x30] sm:$0xff] %v4580
      %4613 = vst [vmem:[#allocation3 + $0x38] sm:$0xff] %v4581
      %4614 = vst [vmem:[#allocation3 + $0x40] sm:$0xff] %v4582
      %4615 = vst [vmem:[#allocation3 + $0x48] sm:$0xff] %v4583
      %4616 = vst [vmem:[#allocation3 + $0x50] sm:$0xff] %v4584
      %4617 = vst [vmem:[#allocation3 + $0x58] sm:$0xff] %v4585
      %4618 = vst [vmem:[#allocation3 + $0x60] sm:$0xff] %v4586
      %4619 = vst [vmem:[#allocation3 + $0x68] sm:$0xff] %v4587
      %4620 = vst [vmem:[#allocation3 + $0x70] sm:$0xff] %v4588
      %4621 = vst [vmem:[#allocation3 + $0x78] sm:$0xff] %v4589
      %4622 = vst [vmem:[#allocation3 + $0x80] sm:$0xff] %v4590
      %4623 = vst [vmem:[#allocation3 + $0x88] sm:$0xff] %v4591
      %4624 = vst [vmem:[#allocation3 + $0x90] sm:$0xff] %v4592
      %4625 = vst [vmem:[#allocation3 + $0x98] sm:$0xff] %v4593
      %4626 = vst [vmem:[#allocation3 + $0xa0] sm:$0xff] %v4594
      %4627 = vst [vmem:[#allocation3 + $0xa8] sm:$0xff] %v4595
      %4628 = vst [vmem:[#allocation3 + $0xb0] sm:$0xff] %v4596
      %4629 = vst [vmem:[#allocation3 + $0xb8] sm:$0xff] %v4597
      %4630 = vst [vmem:[#allocation3 + $0xc0] sm:$0xff] %v4598
      %4631 = vst [vmem:[#allocation3 + $0xc8] sm:$0xff] %v4599
      %4632 = vst [vmem:[#allocation3 + $0xd0] sm:$0xff] %v4600
      %4633 = vst [vmem:[#allocation3 + $0xd8] sm:$0xff] %v4601
      %4634 = vst [vmem:[#allocation3 + $0xe0] sm:$0xff] %v4602
      %4635 = vst [vmem:[#allocation3 + $0xe8] sm:$0xff] %v4603
      %4636 = vst [vmem:[#allocation3 + $0xf0] sm:$0xff] %v4604
      %4637 = vst [vmem:[#allocation3 + $0xf8] sm:$0xff] %v4605
      %v4638 = vld [vmem:[#allocation3] sm:$0xff]
      %v4639 = vld [vmem:[#allocation3 + $0x8] sm:$0xff]
      %v4640 = vld [vmem:[#allocation3 + $0x10] sm:$0xff]
      %v4641 = vld [vmem:[#allocation3 + $0x18] sm:$0xff]
      %v4642 = vld [vmem:[#allocation3 + $0x20] sm:$0xff]
      %v4643 = vld [vmem:[#allocation3 + $0x28] sm:$0xff]
      %v4644 = vld [vmem:[#allocation3 + $0x30] sm:$0xff]
      %v4645 = vld [vmem:[#allocation3 + $0x38] sm:$0xff]
      %v4646 = vld [vmem:[#allocation3 + $0x40] sm:$0xff]
      %v4647 = vld [vmem:[#allocation3 + $0x48] sm:$0xff]
      %v4648 = vld [vmem:[#allocation3 + $0x50] sm:$0xff]
      %v4649 = vld [vmem:[#allocation3 + $0x58] sm:$0xff]
      %v4650 = vld [vmem:[#allocation3 + $0x60] sm:$0xff]
      %v4651 = vld [vmem:[#allocation3 + $0x68] sm:$0xff]
      %v4652 = vld [vmem:[#allocation3 + $0x70] sm:$0xff]
      %v4653 = vld [vmem:[#allocation3 + $0x78] sm:$0xff]
      %v4654 = vld [vmem:[#allocation3 + $0x80] sm:$0xff]
      %v4655 = vld [vmem:[#allocation3 + $0x88] sm:$0xff]
      %v4656 = vld [vmem:[#allocation3 + $0x90] sm:$0xff]
      %v4657 = vld [vmem:[#allocation3 + $0x98] sm:$0xff]
      %v4658 = vld [vmem:[#allocation3 + $0xa0] sm:$0xff]
      %v4659 = vld [vmem:[#allocation3 + $0xa8] sm:$0xff]
      %v4660 = vld [vmem:[#allocation3 + $0xb0] sm:$0xff]
      %v4661 = vld [vmem:[#allocation3 + $0xb8] sm:$0xff]
      %v4662 = vld [vmem:[#allocation3 + $0xc0] sm:$0xff]
      %v4663 = vld [vmem:[#allocation3 + $0xc8] sm:$0xff]
      %v4664 = vld [vmem:[#allocation3 + $0xd0] sm:$0xff]
      %v4665 = vld [vmem:[#allocation3 + $0xd8] sm:$0xff]
      %v4666 = vld [vmem:[#allocation3 + $0xe0] sm:$0xff]
      %v4667 = vld [vmem:[#allocation3 + $0xe8] sm:$0xff]
      %v4668 = vld [vmem:[#allocation3 + $0xf0] sm:$0xff]
      %v4669 = vld [vmem:[#allocation3 + $0xf8] sm:$0xff]
      %v4670 = vld [vmem:[%s6] sm:$0x1]
      %v4671 = vadd.f32 %v4638, %v4639
      %v4672 = vadd.f32 %v4671, %v4640
      %v4673 = vadd.f32 %v4672, %v4641
      %v4674 = vadd.f32 %v4673, %v4642
      %v4675 = vadd.f32 %v4674, %v4643
      %v4676 = vadd.f32 %v4675, %v4644
      %v4677 = vadd.f32 %v4676, %v4645
      %v4678 = vadd.f32 %v4677, %v4646
      %v4679 = vadd.f32 %v4678, %v4647
      %v4680 = vadd.f32 %v4679, %v4648
      %v4681 = vadd.f32 %v4680, %v4649
      %v4682 = vadd.f32 %v4681, %v4650
      %v4683 = vadd.f32 %v4682, %v4651
      %v4684 = vadd.f32 %v4683, %v4652
      %v4685 = vadd.f32 %v4684, %v4653
      %v4686 = vadd.f32 %v4685, %v4654
      %v4687 = vadd.f32 %v4686, %v4655
      %v4688 = vadd.f32 %v4687, %v4656
      %v4689 = vadd.f32 %v4688, %v4657
      %v4690 = vadd.f32 %v4689, %v4658
      %v4691 = vadd.f32 %v4690, %v4659
      %v4692 = vadd.f32 %v4691, %v4660
      %v4693 = vadd.f32 %v4692, %v4661
      %v4694 = vadd.f32 %v4693, %v4662
      %v4695 = vadd.f32 %v4694, %v4663
      %v4696 = vadd.f32 %v4695, %v4664
      %v4697 = vadd.f32 %v4696, %v4665
      %v4698 = vadd.f32 %v4697, %v4666
      %v4699 = vadd.f32 %v4698, %v4667
      %v4700 = vadd.f32 %v4699, %v4668
      %v4701 = vadd.f32 %v4700, %v4669
      %v4702 = vrot.slane %v4701, 4
      %v4703 = vadd.f32 %v4701, %v4702
      %v4704 = vrot.slane %v4703, 2
      %v4705 = vadd.f32 %v4703, %v4704
      %v4706 = vrot.slane %v4705, 1
      %v4707 = vadd.f32 %v4705, %v4706
      %v4708 = vadd.f32 %v4670, %v4707
      %4709 = vst [vmem:[%s6] sm:$0x1] %v4708
      %v4710 = vld [vmem:[%s6 + $0x1] sm:$0x1]
      %v4711 = vmul.f32 %v4638, %v4638
      %v4712 = vmul.f32 %v4639, %v4639
      %v4713 = vmul.f32 %v4640, %v4640
      %v4714 = vmul.f32 %v4641, %v4641
      %v4715 = vmul.f32 %v4642, %v4642
      %v4716 = vmul.f32 %v4643, %v4643
      %v4717 = vmul.f32 %v4644, %v4644
      %v4718 = vmul.f32 %v4645, %v4645
      %v4719 = vmul.f32 %v4646, %v4646
      %v4720 = vmul.f32 %v4647, %v4647
      %v4721 = vmul.f32 %v4648, %v4648
      %v4722 = vmul.f32 %v4649, %v4649
      %v4723 = vmul.f32 %v4650, %v4650
      %v4724 = vmul.f32 %v4651, %v4651
      %v4725 = vmul.f32 %v4652, %v4652
      %v4726 = vmul.f32 %v4653, %v4653
      %v4727 = vmul.f32 %v4654, %v4654
      %v4728 = vmul.f32 %v4655, %v4655
      %v4729 = vmul.f32 %v4656, %v4656
      %v4730 = vmul.f32 %v4657, %v4657
      %v4731 = vmul.f32 %v4658, %v4658
      %v4732 = vmul.f32 %v4659, %v4659
      %v4733 = vmul.f32 %v4660, %v4660
      %v4734 = vmul.f32 %v4661, %v4661
      %v4735 = vmul.f32 %v4662, %v4662
      %v4736 = vmul.f32 %v4663, %v4663
      %v4737 = vmul.f32 %v4664, %v4664
      %v4738 = vmul.f32 %v4665, %v4665
      %v4739 = vmul.f32 %v4666, %v4666
      %v4740 = vmul.f32 %v4667, %v4667
      %v4741 = vmul.f32 %v4668, %v4668
      %v4742 = vmul.f32 %v4669, %v4669
      %v4743 = vadd.f32 %v4711, %v4712
      %v4744 = vadd.f32 %v4743, %v4713
      %v4745 = vadd.f32 %v4744, %v4714
      %v4746 = vadd.f32 %v4745, %v4715
      %v4747 = vadd.f32 %v4746, %v4716
      %v4748 = vadd.f32 %v4747, %v4717
      %v4749 = vadd.f32 %v4748, %v4718
      %v4750 = vadd.f32 %v4749, %v4719
      %v4751 = vadd.f32 %v4750, %v4720
      %v4752 = vadd.f32 %v4751, %v4721
      %v4753 = vadd.f32 %v4752, %v4722
      %v4754 = vadd.f32 %v4753, %v4723
      %v4755 = vadd.f32 %v4754, %v4724
      %v4756 = vadd.f32 %v4755, %v4725
      %v4757 = vadd.f32 %v4756, %v4726
      %v4758 = vadd.f32 %v4757, %v4727
      %v4759 = vadd.f32 %v4758, %v4728
      %v4760 = vadd.f32 %v4759, %v4729
      %v4761 = vadd.f32 %v4760, %v4730
      %v4762 = vadd.f32 %v4761, %v4731
      %v4763 = vadd.f32 %v4762, %v4732
      %v4764 = vadd.f32 %v4763, %v4733
      %v4765 = vadd.f32 %v4764, %v4734
      %v4766 = vadd.f32 %v4765, %v4735
      %v4767 = vadd.f32 %v4766, %v4736
      %v4768 = vadd.f32 %v4767, %v4737
      %v4769 = vadd.f32 %v4768, %v4738
      %v4770 = vadd.f32 %v4769, %v4739
      %v4771 = vadd.f32 %v4770, %v4740
      %v4772 = vadd.f32 %v4771, %v4741
      %v4773 = vadd.f32 %v4772, %v4742
      %v4774 = vrot.slane %v4773, 4
      %v4775 = vadd.f32 %v4773, %v4774
      %v4776 = vrot.slane %v4775, 2
      %v4777 = vadd.f32 %v4775, %v4776
      %v4778 = vrot.slane %v4777, 1
      %v4779 = vadd.f32 %v4777, %v4778
      %v4780 = vadd.f32 %v4710, %v4779
      %4781 = vst [vmem:[%s6 + $0x1] sm:$0x1] %v4780
      %v4782 = vpack.c.bf16 %v4639, %v4638
      %v4783 = vpack.c.bf16 %v4641, %v4640
      %v4784 = vpack.c.bf16 %v4643, %v4642
      %v4785 = vpack.c.bf16 %v4645, %v4644
      %v4786 = vpack.c.bf16 %v4647, %v4646
      %v4787 = vpack.c.bf16 %v4649, %v4648
      %v4788 = vpack.c.bf16 %v4651, %v4650
      %v4789 = vpack.c.bf16 %v4653, %v4652
      %v4790 = vpack.c.bf16 %v4655, %v4654
      %v4791 = vpack.c.bf16 %v4657, %v4656
      %v4792 = vpack.c.bf16 %v4659, %v4658
      %v4793 = vpack.c.bf16 %v4661, %v4660
      %v4794 = vpack.c.bf16 %v4663, %v4662
      %v4795 = vpack.c.bf16 %v4665, %v4664
      %v4796 = vpack.c.bf16 %v4667, %v4666
      %v4797 = vpack.c.bf16 %v4669, %v4668
      %v4814 = vunpack.c.l.b16 %v4782
      %v4815 = vunpack.c.h.b16 %v4782
      %v4816 = vunpack.c.l.b16 %v4783
      %v4817 = vunpack.c.h.b16 %v4783
      %v4818 = vunpack.c.l.b16 %v4784
      %v4819 = vunpack.c.h.b16 %v4784
      %v4820 = vunpack.c.l.b16 %v4785
      %v4821 = vunpack.c.h.b16 %v4785
      %v4822 = vunpack.c.l.b16 %v4786
      %v4823 = vunpack.c.h.b16 %v4786
      %v4824 = vunpack.c.l.b16 %v4787
      %v4825 = vunpack.c.h.b16 %v4787
      %v4826 = vunpack.c.l.b16 %v4788
      %v4827 = vunpack.c.h.b16 %v4788
      %v4828 = vunpack.c.l.b16 %v4789
      %v4829 = vunpack.c.h.b16 %v4789
      %v4830 = vunpack.c.l.b16 %v4790
      %v4831 = vunpack.c.h.b16 %v4790
      %v4832 = vunpack.c.l.b16 %v4791
      %v4833 = vunpack.c.h.b16 %v4791
      %v4834 = vunpack.c.l.b16 %v4792
      %v4835 = vunpack.c.h.b16 %v4792
      %v4836 = vunpack.c.l.b16 %v4793
      %v4837 = vunpack.c.h.b16 %v4793
      %v4838 = vunpack.c.l.b16 %v4794
      %v4839 = vunpack.c.h.b16 %v4794
      %v4840 = vunpack.c.l.b16 %v4795
      %v4841 = vunpack.c.h.b16 %v4795
      %v4842 = vunpack.c.l.b16 %v4796
      %v4843 = vunpack.c.h.b16 %v4796
      %v4844 = vunpack.c.l.b16 %v4797
      %v4845 = vunpack.c.h.b16 %v4797
      %v4846 = vpack.c.b16 %v4814, %v4814
      %v4847 = vpack.c.b16 %v4815, %v4815
      %v4848 = vpack.c.b16 %v4816, %v4816
      %v4849 = vpack.c.b16 %v4817, %v4817
      %v4850 = vpack.c.b16 %v4818, %v4818
      %v4851 = vpack.c.b16 %v4819, %v4819
      %v4852 = vpack.c.b16 %v4820, %v4820
      %v4853 = vpack.c.b16 %v4821, %v4821
      %v4854 = vpack.c.b16 %v4822, %v4822
      %v4855 = vpack.c.b16 %v4823, %v4823
      %v4856 = vpack.c.b16 %v4824, %v4824
      %v4857 = vpack.c.b16 %v4825, %v4825
      %v4858 = vpack.c.b16 %v4826, %v4826
      %v4859 = vpack.c.b16 %v4827, %v4827
      %v4860 = vpack.c.b16 %v4828, %v4828
      %v4861 = vpack.c.b16 %v4829, %v4829
      %v4862 = vpack.c.b16 %v4830, %v4830
      %v4863 = vpack.c.b16 %v4831, %v4831
      %v4864 = vpack.c.b16 %v4832, %v4832
      %v4865 = vpack.c.b16 %v4833, %v4833
      %v4866 = vpack.c.b16 %v4834, %v4834
      %v4867 = vpack.c.b16 %v4835, %v4835
      %v4868 = vpack.c.b16 %v4836, %v4836
      %v4869 = vpack.c.b16 %v4837, %v4837
      %v4870 = vpack.c.b16 %v4838, %v4838
      %v4871 = vpack.c.b16 %v4839, %v4839
      %v4872 = vpack.c.b16 %v4840, %v4840
      %v4873 = vpack.c.b16 %v4841, %v4841
      %v4874 = vpack.c.b16 %v4842, %v4842
      %v4875 = vpack.c.b16 %v4843, %v4843
      %v4876 = vpack.c.b16 %v4844, %v4844
      %v4877 = vpack.c.b16 %v4845, %v4845
      %4910 = vst [vmem:[%s256] sm:$0xf] %v4846
      %4911 = vst [vmem:[%s256 + $0x4] sm:$0xf] %v4847
      %4912 = vst [vmem:[%s256 + $0x8] sm:$0xf] %v4848
      %4913 = vst [vmem:[%s256 + $0xc] sm:$0xf] %v4849
      %4914 = vst [vmem:[%s256 + $0x10] sm:$0xf] %v4850
      %4915 = vst [vmem:[%s256 + $0x14] sm:$0xf] %v4851
      %4916 = vst [vmem:[%s256 + $0x18] sm:$0xf] %v4852
      %4917 = vst [vmem:[%s256 + $0x1c] sm:$0xf] %v4853
      %4918 = vst [vmem:[%s256 + $0x20] sm:$0xf] %v4854
      %4919 = vst [vmem:[%s256 + $0x24] sm:$0xf] %v4855
      %4920 = vst [vmem:[%s256 + $0x28] sm:$0xf] %v4856
      %4921 = vst [vmem:[%s256 + $0x2c] sm:$0xf] %v4857
      %4922 = vst [vmem:[%s256 + $0x30] sm:$0xf] %v4858
      %4923 = vst [vmem:[%s256 + $0x34] sm:$0xf] %v4859
      %4924 = vst [vmem:[%s256 + $0x38] sm:$0xf] %v4860
      %4925 = vst [vmem:[%s256 + $0x3c] sm:$0xf] %v4861
      %4926 = vst [vmem:[%s256 + $0x40] sm:$0xf] %v4862
      %4927 = vst [vmem:[%s256 + $0x44] sm:$0xf] %v4863
      %4928 = vst [vmem:[%s256 + $0x48] sm:$0xf] %v4864
      %4929 = vst [vmem:[%s256 + $0x4c] sm:$0xf] %v4865
      %4930 = vst [vmem:[%s256 + $0x50] sm:$0xf] %v4866
      %4931 = vst [vmem:[%s256 + $0x54] sm:$0xf] %v4867
      %4932 = vst [vmem:[%s256 + $0x58] sm:$0xf] %v4868
      %4933 = vst [vmem:[%s256 + $0x5c] sm:$0xf] %v4869
      %4934 = vst [vmem:[%s256 + $0x60] sm:$0xf] %v4870
      %4935 = vst [vmem:[%s256 + $0x64] sm:$0xf] %v4871
      %4936 = vst [vmem:[%s256 + $0x68] sm:$0xf] %v4872
      %4937 = vst [vmem:[%s256 + $0x6c] sm:$0xf] %v4873
      %4938 = vst [vmem:[%s256 + $0x70] sm:$0xf] %v4874
      %4939 = vst [vmem:[%s256 + $0x74] sm:$0xf] %v4875
      %4940 = vst [vmem:[%s256 + $0x78] sm:$0xf] %v4876
      %4941 = vst [vmem:[%s256 + $0x7c] sm:$0xf] %v4877
      %p4942 = scmp.lt.s32.totalorder %s18, 1
      %s4943 = scalar_select %p4942, %s18, 1
      %s4944 = smul.addr %s4943, 32
      %s4945 = smul.addr %s4944, 4
      %s4946 = scalar_lea.vmem %s4, %s4945
      %p4947 = scmp.lt.s32.totalorder %s18, 1
      %s4948 = scalar_select %p4947, %s18, 1
      %s4949 = smul.addr %s4948, 32
      %s4950 = smul.addr %s4949, 4
      %s4951 = scalar_lea.vmem %s5, %s4950
      // Predicated region
      $region41: #{residual_block_forward.3} parent=35 // pred_check
        %p4952 = pneg %p125
      $region42: #{residual_block_forward.3} parent=35 // pred_check_branch
        %4954 = sbr.rel (%p4952) target = $region44
      $region43: #{residual_block_forward.3} parent=35 // pred_region
        _
      $region44: #{residual_block_forward.3} parent=35 // pred_fallthru
        _
      // Predicated region
      $region45: #{residual_block_forward.3} parent=35 // pred_check
        %p4955 = pneg %p151
      $region46: #{residual_block_forward.3} parent=35 // pred_check_branch
        %4957 = sbr.rel (%p4955) target = $region48
      $region47: #{residual_block_forward.3} parent=35 // pred_region
        _
      $region48: #{residual_block_forward.3} parent=35 // pred_fallthru
        _
      // Predicated region
      $region49: #{residual_block_forward.3} parent=35 // pred_check
        %p4958 = pneg %p172
      $region50: #{residual_block_forward.3} parent=35 // pred_check_branch
        %4960 = sbr.rel (%p4958) target = $region52
      $region51: #{residual_block_forward.3} parent=35 // pred_region
        _
      $region52: #{residual_block_forward.3} parent=35 // pred_fallthru
        _
      // Predicated region
      $region53: #{residual_block_forward.3} parent=35 // pred_check
        %p4961 = pneg %p172
      $region54: #{residual_block_forward.3} parent=35 // pred_check_branch
        %4963 = sbr.rel (%p4961) target = $region56
      $region55: #{residual_block_forward.3} parent=35 // pred_region
        _
      $region56: #{residual_block_forward.3} parent=35 // pred_fallthru
        _
    $region36: #{residual_block_forward.3} parent=5 // pred_fallthru
      _
    %p4964 = scmp.le.s32.totalorder 2, %s13
    // Predicated region
    $region57: #{residual_block_forward.3} parent=5 // pred_check
      %p4965 = pneg %p4964
    $region58: #{residual_block_forward.3} parent=5 // pred_check_branch
      %4967 = sbr.rel (%p4965) target = $region60
    $region59: #{residual_block_forward.3} parent=5 // pred_region
      %s4968 = ssub.s32 %s13, 2
      // Predicated region
      $region61: #{residual_block_forward.3} parent=59 // pred_check
        %p4969 = pneg %p131
      $region62: #{residual_block_forward.3} parent=59 // pred_check_branch
        %4971 = sbr.rel (%p4969) target = $region64
      $region63: #{residual_block_forward.3} parent=59 // pred_region
        %p4972 = scmp.lt.s32.totalorder %s19, 1
        %s4973 = scalar_select %p4972, %s19, 1
        %s4974 = smul.addr %s4973, 32
        %s4975 = smul.addr %s4974, 4
        %s4976 = scalar_lea.vmem %s4, %s4975
      $region64: #{residual_block_forward.3} parent=59 // pred_fallthru
        _
      // Predicated region
      $region65: #{residual_block_forward.3} parent=59 // pred_check
        %p4977 = pneg %p157
      $region66: #{residual_block_forward.3} parent=59 // pred_check_branch
        %4979 = sbr.rel (%p4977) target = $region68
      $region67: #{residual_block_forward.3} parent=59 // pred_region
        %p4980 = scmp.lt.s32.totalorder %s19, 1
        %s4981 = scalar_select %p4980, %s19, 1
        %s4982 = smul.addr %s4981, 32
        %s4983 = smul.addr %s4982, 4
        %s4984 = scalar_lea.vmem %s5, %s4983
      $region68: #{residual_block_forward.3} parent=59 // pred_fallthru
        _
    $region60: #{residual_block_forward.3} parent=5 // pred_fallthru
      _
  $region6: #{residual_block_forward.3} parent=0 // loop_footer
    %s17 = sadd.s32 1, %s13
  $region7: #{residual_block_forward.3} parent=0 // loop_footer_branch
    %12 = sbr.rel target = $region3
  $region8: #{residual_block_forward.3} parent=0 // loop_exit
    _

</llo_original>
